<compile_context>
chip_gen: v7x
topology: tpu7x:2x2x1
jax: 0.10.0
libtpu: 0.0.40
codegen_flags: <defaults>
</compile_context>

<pallas_src>
import jax
import jax.numpy as jnp
from jax import lax
from jax.experimental import pallas as pl
from jax.experimental.pallas import tpu as pltpu

NEG = -1e30  # -inf surrogate for maxpool padding (Python float; never wins a max)


def _round_up(a, m):
    return (a + m - 1) // m * m


# ----------------------------- in-kernel helpers -----------------------------
def _maxpool3x3s2(x, oh, ow):
    """3x3 / stride-2 max pool on (H, W, B, C).

    Output (oi, oj) = max over rows {2oi, 2oi+1, 2oi+2} x cols {2oj, 2oj+1,
    2oj+2} of x.  Only rows/cols [0, 2*oh] / [0, 2*ow] are read, so x may carry
    unread trailing rows/cols.  Uses only unit-stride slices of the leading
    (untiled) dims and leading-dim reshapes -> no lane/sublane shuffles."""
    H, W, B, C = x.shape
    a = x[0:2 * oh].reshape(oh, 2, W, B, C)          # a[:,0]=row 2oi, a[:,1]=2oi+1
    b = x[1:2 * oh + 1].reshape(oh, 2, W, B, C)      # b[:,1]=row 2oi+2
    r = jnp.maximum(jnp.maximum(a[:, 0], a[:, 1]), b[:, 1])       # (oh, W, B, C)
    ra = r[:, 0:2 * ow].reshape(oh, ow, 2, B, C)
    rb = r[:, 1:2 * ow + 1].reshape(oh, ow, 2, B, C)
    return jnp.maximum(jnp.maximum(ra[:, :, 0], ra[:, :, 1]), rb[:, :, 1])


def _conv_prelu_bn(x, w_ref, b, a, s, t, *, kh, kw, cout):
    """Valid (no-pad, stride-1) conv as ONE im2col matmul on the MXU with bf16
    operands / f32 accumulation, then bias + PReLU + folded eval-mode BN (f32).

    x: (H, W, B, Cin) f32 value; w_ref: (kh*kw*Cin, Cout) bf16 VMEM ref whose
    rows are in (di, dj, cin) order, matching the tap concatenation below."""
    H, W, B, cin = x.shape
    oh, ow = H - kh + 1, W - kw + 1
    n = oh * ow * B
    taps = [x[di:di + oh, dj:dj + ow, :, :].reshape(n, cin)
            for di in range(kh) for dj in range(kw)]
    xs = jnp.concatenate(taps, axis=-1).astype(jnp.bfloat16)      # (n, kh*kw*cin)
    h = jnp.dot(xs, w_ref[...], preferred_element_type=jnp.float32) + b
    h = jnp.where(h > 0, h, h * a)                                 # PReLU (1 param)
    h = h * s + t                                                  # BN (eval, folded)
    return h.reshape(oh, ow, B, cout)


def _stable_sigmoid(z):
    ez = jnp.exp(-jnp.abs(z))                                      # <= 1, no overflow
    return jnp.where(z >= 0, 1.0 / (1.0 + ez), ez / (1.0 + ez))


# --------------------------------- the kernel --------------------------------
def rnet3_kernel(x_ref,
                 w2, b2, a2, s2, t2,
                 w3, b3, a3, s3, t3,
                 wfc, bfc, a4, s4, t4,
                 wh, bh,
                 out_ref):
    # x block: (1, 24, 24, Bt, 28) bf16 = stage-1 activation (conv1+PReLU+BN)
    # with a NEG 1-pixel spatial border baked in (pool-1 padding=1 semantics).
    x = x_ref[...].reshape(x_ref.shape[1:]).astype(jnp.float32)   # (24,24,Bt,28)

    # ---- maxpool 3x3 / stride 2 / pad 1 (pad already in the border) ---------
    h = _maxpool3x3s2(x, 11, 11)                                  # (11,11,Bt,28)

    # ---- conv2 (3x3, 28->48) + PReLU + BN ------------------------------------
    h = _conv_prelu_bn(h, w2, b2[...], a2[...], s2[...], t2[...],
                       kh=3, kw=3, cout=48)                       # (9,9,Bt,48)

    # ---- maxpool 3x3 / stride 2 / no pad (reads rows/cols 0..8 only) --------
    h = _maxpool3x3s2(h, 4, 4)                                    # (4,4,Bt,48)

    # ---- conv3 (2x2, 48->64) + PReLU + BN ------------------------------------
    h = _conv_prelu_bn(h, w3, b3[...], a3[...], s3[...], t3[...],
                       kh=2, kw=2, cout=64)                       # (3,3,Bt,64)

    # ---- fc: flatten in (i, j, c) order; wfc rows pre-permuted to match -----
    hf = jnp.concatenate([h[i, j] for i in range(3) for j in range(3)],
                         axis=-1).astype(jnp.bfloat16)            # (Bt, 576)
    fc = jnp.dot(hf, wfc[...], preferred_element_type=jnp.float32) + bfc[...]
    fc = jnp.where(fc > 0, fc, fc * a4[...])                      # PReLU
    fc = fc * s4[...] + t4[...]                                   # BatchNorm1d (eval)

    # ---- fused heads: [cls | box | lmk] in one (128, 15) matmul -------------
    z = jnp.dot(fc.astype(jnp.bfloat16), wh[...],
                preferred_element_type=jnp.float32) + bh[...]
    lane = lax.broadcasted_iota(jnp.int32, z.shape, 1)
    out_ref[...] = jnp.where(lane == 0, _stable_sigmoid(z), z)    # (Bt, 15)


# --------------------------- tiling / param plumbing --------------------------
def _pick_tiling(batch, batch_tile):
    """Generation-aware batch tile + explicit VMEM limit.

    v7x-class chips: 64 MiB VMEM per TensorCore, 2 TensorCores -> smaller tiles
    and >= 2 batch blocks so the 'parallel' axis feeds both cores.
    v5e/v6e: 128 MiB VMEM, single core -> bias toward the largest tile."""
    vmem_cap = 64 << 20                      # conservative default if unknown
    try:
        vmem_cap = int(pltpu.get_tpu_info().vmem_capacity_bytes)
    except Exception:
        pass
    small_vmem = vmem_cap <= (64 << 20)
    if batch_tile is None:
        batch_tile = 32 if small_vmem else 64
    bt = min(_round_up(batch, 8), _round_up(batch_tile, 8))
    if small_vmem and batch > 8:
        # 2 TensorCores: make sure the parallel grid axis has >= 2 blocks.
        bt = min(bt, max(8, _round_up((batch + 1) // 2, 8)))
    vmem_limit = (56 << 20) if small_vmem else (100 << 20)
    return bt, vmem_limit


def _prepare_kernel_params(p):
    """Flatten conv weights to (kh*kw*cin, cout) im2col row order, permute the
    fc weight to the kernel's (i, j, c) flatten order, fuse the 3 heads, and
    cast every MXU operand to bf16 (biases / PReLU / BN stay f32)."""
    f32, bf16 = jnp.float32, jnp.bfloat16

    def row(v):  # -> (1, C) f32 for in-kernel broadcasting
        return jnp.asarray(v, f32).reshape(1, -1)

    # HWIO -> rows in (di, dj, cin) order.
    w2 = jnp.asarray(p['w2'], f32).reshape(9 * 28, 48).astype(bf16)
    w3 = jnp.asarray(p['w3'], f32).reshape(4 * 48, 64).astype(bf16)
    # PyTorch Linear weight is (128, 576) with input index c*9 + i*3 + j (NCHW
    # flatten); the kernel flattens in (i, j, c) order -> permute accordingly.
    wfc = jnp.transpose(jnp.asarray(p['wfc'], f32).reshape(128, 64, 3, 3),
                        (2, 3, 1, 0)).reshape(576, 128).astype(bf16)
    # Heads fused into one (128, 15) matmul: [cls | box | lmk].
    wh = jnp.concatenate([jnp.asarray(p['w_cls'], f32).T,
                          jnp.asarray(p['w_box'], f32).T,
                          jnp.asarray(p['w_lmk'], f32).T], axis=1).astype(bf16)
    bh = jnp.concatenate([row(p['b_cls']), row(p['b_box']), row(p['b_lmk'])],
                         axis=1)

    return (w2, row(p['b2']), row(p['a2']), row(p['s2']), row(p['t2']),
            w3, row(p['b3']), row(p['a3']), row(p['s3']), row(p['t3']),
            wfc, row(p['bfc']), row(p['a4']), row(p['s4']), row(p['t4']),
            wh, bh)


# ----------------------------------- wrapper ----------------------------------
def rnet3_forward(x_nchw, params, *, batch_tile=None):
    p = params
    B = x_nchw.shape[0]

    # ---- stage 1 in XLA: conv1 (3->28, 3x3 valid) + PReLU + BN (eval) -------
    # (3 input channels would waste 125/128 lanes inside the kernel.)
    x = jnp.transpose(x_nchw, (0, 2, 3, 1)).astype(jnp.float32)          # NHWC
    h1 = lax.conv_general_dilated(
        x, jnp.asarray(p['w1'], jnp.float32), window_strides=(1, 1),
        padding='VALID', dimension_numbers=('NHWC', 'HWIO', 'NHWC')) + p['b1']
    h1 = jnp.where(h1 > 0, h1, h1 * p['a1'])                             # PReLU
    h1 = h1 * p['s1'] + p['t1']                                          # (B,22,22,28)

    # ---- batch pad, NEG spatial border (MaxPool2d(3,2,padding=1)), bf16 -----
    bt, vmem_limit = _pick_tiling(B, batch_tile)
    B_pad = _round_up(B, bt)
    nblk = B_pad // bt
    if B_pad != B:
        h1 = jnp.pad(h1, ((0, B_pad - B), (0, 0), (0, 0), (0, 0)))
    h1 = jnp.pad(h1, ((0, 0), (1, 1), (1, 1), (0, 0)), constant_values=NEG)
    # Pre-block to (nblk, 24, 24, bt, 28): each grid block = one contiguous
    # HBM slab (single linear DMA per step); layout inside a block is HWBC.
    h1 = jnp.transpose(h1.reshape(nblk, bt, 24, 24, 28),
                       (0, 2, 3, 1, 4)).astype(jnp.bfloat16)

    kparams = _prepare_kernel_params(p)
    in_specs = [pl.BlockSpec((1, 24, 24, bt, 28), lambda i: (i, 0, 0, 0, 0))]
    for kp in kparams:                                   # whole-array params
        zero = (0,) * kp.ndim
        in_specs.append(pl.BlockSpec(kp.shape, lambda i, z=zero: z))

    grid_spec = pltpu.PrefetchScalarGridSpec(
        num_scalar_prefetch=0,
        grid=(nblk,),
        in_specs=in_specs,
        out_specs=pl.BlockSpec((bt, 15), lambda i: (i, 0)),
    )
    out = pl.pallas_call(
        rnet3_kernel,
        out_shape=jax.ShapeDtypeStruct((B_pad, 15), jnp.float32),
        grid_spec=grid_spec,
        compiler_params=pltpu.CompilerParams(
            dimension_semantics=("parallel",),
            vmem_limit_bytes=vmem_limit),
    )(h1, *kparams)

    cls = out[:B, 0:1]
    box = out[:B, 1:5]
    lmk = out[:B, 5:15]
    return cls, box, lmk


# ------------------------- deterministic parameter init ----------------------
def init_params(key):
    """Deterministic params in PyTorch-like layouts (convs HWIO - for real
    PyTorch OIHW weights transpose (2,3,1,0) -, linears (out, in)).
    BatchNorm is folded to eval-mode (scale, shift)."""
    eps = 1e-5
    keys = iter(jax.random.split(key, 64))

    def unif(shape, bound):
        return jax.random.uniform(next(keys), shape, jnp.float32, -bound, bound)

    def bn(c):  # eval-mode BatchNorm folded to (scale, shift)
        gamma = jax.random.uniform(next(keys), (c,), jnp.float32, 0.5, 1.5)
        beta = jax.random.uniform(next(keys), (c,), jnp.float32, -0.1, 0.1)
        mean = jax.random.uniform(next(keys), (c,), jnp.float32, -0.1, 0.1)
        var = jax.random.uniform(next(keys), (c,), jnp.float32, 0.5, 1.5)
        scale = gamma / jnp.sqrt(var + eps)
        shift = beta - mean * scale
        return scale, shift

    def conv(kh, kw, cin, cout):
        bound = 1.0 / (cin * kh * kw) ** 0.5
        return unif((kh, kw, cin, cout), bound), unif((cout,), bound)

    prelu = jnp.float32(0.25)  # nn.PReLU() default: one shared parameter

    p = {}
    p['w1'], p['b1'] = conv(3, 3, 3, 28);   p['a1'] = prelu; p['s1'], p['t1'] = bn(28)
    p['w2'], p['b2'] = conv(3, 3, 28, 48);  p['a2'] = prelu; p['s2'], p['t2'] = bn(48)
    p['w3'], p['b3'] = conv(2, 2, 48, 64);  p['a3'] = prelu; p['s3'], p['t3'] = bn(64)

    bound = 1.0 / (576 ** 0.5)
    p['wfc'] = unif((128, 576), bound)      # PyTorch Linear layout (out, in)
    p['bfc'] = unif((128,), bound)
    p['a4'] = prelu
    p['s4'], p['t4'] = bn(128)

    bound = 1.0 / (128 ** 0.5)
    p['w_cls'], p['b_cls'] = unif((1, 128), bound), unif((1,), bound)
    p['w_box'], p['b_box'] = unif((4, 128), bound), unif((4,), bound)
    p['w_lmk'], p['b_lmk'] = unif((10, 128), bound), unif((10,), bound)
    return p


if __name__ == "__main__":
    key = jax.random.PRNGKey(0)
    kx, kp = jax.random.split(key)
    # R-Net input is 3x24x24 (required so the flatten is exactly 64*3*3).
    x = jax.random.normal(kx, (2, 3, 24, 24), jnp.float32)
    params = init_params(kp)

    cls, box, lmk = rnet3_forward(x, params)
    jax.block_until_ready((cls, box, lmk))

    assert cls.shape == (2, 1) and box.shape == (2, 4) and lmk.shape == (2, 10)
    assert bool(jnp.all(jnp.isfinite(cls))) and bool(jnp.all(jnp.isfinite(box)))
    assert bool(jnp.all(jnp.isfinite(lmk)))
    assert bool(jnp.all((cls >= 0.0) & (cls <= 1.0)))
    print("KERNEL_OK")
</pallas_src>

<mosaic_0001>
module attributes {stable_mosaic.version = 11 : i64} {
  func.func @rnet3_kernel(%arg0: i32, %arg1: memref<1x24x24x8x28xbf16, #tpu.memory_space<vmem>>, %arg2: memref<252x48xbf16, #tpu.memory_space<vmem>>, %arg3: memref<1x48xf32, #tpu.memory_space<vmem>>, %arg4: memref<1x1xf32, #tpu.memory_space<vmem>>, %arg5: memref<1x48xf32, #tpu.memory_space<vmem>>, %arg6: memref<1x48xf32, #tpu.memory_space<vmem>>, %arg7: memref<192x64xbf16, #tpu.memory_space<vmem>>, %arg8: memref<1x64xf32, #tpu.memory_space<vmem>>, %arg9: memref<1x1xf32, #tpu.memory_space<vmem>>, %arg10: memref<1x64xf32, #tpu.memory_space<vmem>>, %arg11: memref<1x64xf32, #tpu.memory_space<vmem>>, %arg12: memref<576x128xbf16, #tpu.memory_space<vmem>>, %arg13: memref<1x128xf32, #tpu.memory_space<vmem>>, %arg14: memref<1x1xf32, #tpu.memory_space<vmem>>, %arg15: memref<1x128xf32, #tpu.memory_space<vmem>>, %arg16: memref<1x128xf32, #tpu.memory_space<vmem>>, %arg17: memref<128x15xbf16, #tpu.memory_space<vmem>>, %arg18: memref<1x15xf32, #tpu.memory_space<vmem>>, %arg19: memref<8x15xf32, #tpu.memory_space<vmem>>) attributes {dimension_semantics = [#tpu.dimension_semantics<parallel>], iteration_bounds = array<i64: 1>, scalar_prefetch = 0 : i64, scratch_operands = 0 : i64, tpu.core_type = #tpu.core_type<tc>, window_params = [{transform_indices = @transform_0, window_bounds = array<i64: 1, 24, 24, 8, 28>}, {pipeline_mode = #tpu.pipeline_mode<synchronous>, transform_indices = @transform_1, window_bounds = array<i64: 252, 48>}, {pipeline_mode = #tpu.pipeline_mode<synchronous>, transform_indices = @transform_2, window_bounds = array<i64: 1, 48>}, {pipeline_mode = #tpu.pipeline_mode<synchronous>, transform_indices = @transform_3, window_bounds = array<i64: 1, 1>}, {pipeline_mode = #tpu.pipeline_mode<synchronous>, transform_indices = @transform_4, window_bounds = array<i64: 1, 48>}, {pipeline_mode = #tpu.pipeline_mode<synchronous>, transform_indices = @transform_5, window_bounds = array<i64: 1, 48>}, {pipeline_mode = #tpu.pipeline_mode<synchronous>, transform_indices = @transform_6, window_bounds = array<i64: 192, 64>}, {pipeline_mode = #tpu.pipeline_mode<synchronous>, transform_indices = @transform_7, window_bounds = array<i64: 1, 64>}, {pipeline_mode = #tpu.pipeline_mode<synchronous>, transform_indices = @transform_8, window_bounds = array<i64: 1, 1>}, {pipeline_mode = #tpu.pipeline_mode<synchronous>, transform_indices = @transform_9, window_bounds = array<i64: 1, 64>}, {pipeline_mode = #tpu.pipeline_mode<synchronous>, transform_indices = @transform_10, window_bounds = array<i64: 1, 64>}, {pipeline_mode = #tpu.pipeline_mode<synchronous>, transform_indices = @transform_11, window_bounds = array<i64: 576, 128>}, {pipeline_mode = #tpu.pipeline_mode<synchronous>, transform_indices = @transform_12, window_bounds = array<i64: 1, 128>}, {pipeline_mode = #tpu.pipeline_mode<synchronous>, transform_indices = @transform_13, window_bounds = array<i64: 1, 1>}, {pipeline_mode = #tpu.pipeline_mode<synchronous>, transform_indices = @transform_14, window_bounds = array<i64: 1, 128>}, {pipeline_mode = #tpu.pipeline_mode<synchronous>, transform_indices = @transform_15, window_bounds = array<i64: 1, 128>}, {pipeline_mode = #tpu.pipeline_mode<synchronous>, transform_indices = @transform_16, window_bounds = array<i64: 128, 15>}, {pipeline_mode = #tpu.pipeline_mode<synchronous>, transform_indices = @transform_17, window_bounds = array<i64: 1, 15>}, {transform_indices = @transform_18, window_bounds = array<i64: 8, 15>}]} {
    %c0 = arith.constant 0 : index
    %c0_0 = arith.constant 0 : index
    %c0_1 = arith.constant 0 : index
    %c0_2 = arith.constant 0 : index
    %c0_3 = arith.constant 0 : index
    %0 = vector.load %arg1[%c0, %c0_0, %c0_1, %c0_2, %c0_3] : memref<1x24x24x8x28xbf16, #tpu.memory_space<vmem>>, vector<1x24x24x8x28xbf16>
    %1 = vector.shape_cast %0 : vector<1x24x24x8x28xbf16> to vector<24x24x8x28xbf16>
    %2 = arith.extf %1 : vector<24x24x8x28xbf16> to vector<24x24x8x28xf32>
    %3 = vector.extract_strided_slice %2 {offsets = [0, 0, 0, 0], sizes = [22, 24, 8, 28], strides = [1, 1, 1, 1]} : vector<24x24x8x28xf32> to vector<22x24x8x28xf32>
    %4 = vector.shape_cast %3 : vector<22x24x8x28xf32> to vector<11x2x24x8x28xf32>
    %5 = vector.extract_strided_slice %2 {offsets = [1, 0, 0, 0], sizes = [22, 24, 8, 28], strides = [1, 1, 1, 1]} : vector<24x24x8x28xf32> to vector<22x24x8x28xf32>
    %6 = vector.shape_cast %5 : vector<22x24x8x28xf32> to vector<11x2x24x8x28xf32>
    %7 = vector.extract_strided_slice %4 {offsets = [0, 0, 0, 0, 0], sizes = [11, 1, 24, 8, 28], strides = [1, 1, 1, 1, 1]} : vector<11x2x24x8x28xf32> to vector<11x1x24x8x28xf32>
    %8 = vector.shape_cast %7 : vector<11x1x24x8x28xf32> to vector<11x24x8x28xf32>
    %9 = vector.extract_strided_slice %4 {offsets = [0, 1, 0, 0, 0], sizes = [11, 1, 24, 8, 28], strides = [1, 1, 1, 1, 1]} : vector<11x2x24x8x28xf32> to vector<11x1x24x8x28xf32>
    %10 = vector.shape_cast %9 : vector<11x1x24x8x28xf32> to vector<11x24x8x28xf32>
    %11 = arith.maximumf %8, %10 : vector<11x24x8x28xf32>
    %12 = vector.extract_strided_slice %6 {offsets = [0, 1, 0, 0, 0], sizes = [11, 1, 24, 8, 28], strides = [1, 1, 1, 1, 1]} : vector<11x2x24x8x28xf32> to vector<11x1x24x8x28xf32>
    %13 = vector.shape_cast %12 : vector<11x1x24x8x28xf32> to vector<11x24x8x28xf32>
    %14 = arith.maximumf %11, %13 : vector<11x24x8x28xf32>
    %15 = vector.extract_strided_slice %14 {offsets = [0, 0, 0, 0], sizes = [11, 22, 8, 28], strides = [1, 1, 1, 1]} : vector<11x24x8x28xf32> to vector<11x22x8x28xf32>
    %16 = vector.shape_cast %15 : vector<11x22x8x28xf32> to vector<11x11x2x8x28xf32>
    %17 = vector.extract_strided_slice %14 {offsets = [0, 1, 0, 0], sizes = [11, 22, 8, 28], strides = [1, 1, 1, 1]} : vector<11x24x8x28xf32> to vector<11x22x8x28xf32>
    %18 = vector.shape_cast %17 : vector<11x22x8x28xf32> to vector<11x11x2x8x28xf32>
    %19 = vector.extract_strided_slice %16 {offsets = [0, 0, 0, 0, 0], sizes = [11, 11, 1, 8, 28], strides = [1, 1, 1, 1, 1]} : vector<11x11x2x8x28xf32> to vector<11x11x1x8x28xf32>
    %20 = vector.shape_cast %19 : vector<11x11x1x8x28xf32> to vector<11x11x8x28xf32>
    %21 = vector.extract_strided_slice %16 {offsets = [0, 0, 1, 0, 0], sizes = [11, 11, 1, 8, 28], strides = [1, 1, 1, 1, 1]} : vector<11x11x2x8x28xf32> to vector<11x11x1x8x28xf32>
    %22 = vector.shape_cast %21 : vector<11x11x1x8x28xf32> to vector<11x11x8x28xf32>
    %23 = arith.maximumf %20, %22 : vector<11x11x8x28xf32>
    %24 = vector.extract_strided_slice %18 {offsets = [0, 0, 1, 0, 0], sizes = [11, 11, 1, 8, 28], strides = [1, 1, 1, 1, 1]} : vector<11x11x2x8x28xf32> to vector<11x11x1x8x28xf32>
    %25 = vector.shape_cast %24 : vector<11x11x1x8x28xf32> to vector<11x11x8x28xf32>
    %26 = arith.maximumf %23, %25 : vector<11x11x8x28xf32>
    %c0_4 = arith.constant 0 : index
    %c0_5 = arith.constant 0 : index
    %27 = vector.load %arg3[%c0_4, %c0_5] : memref<1x48xf32, #tpu.memory_space<vmem>>, vector<1x48xf32>
    %c0_6 = arith.constant 0 : index
    %c0_7 = arith.constant 0 : index
    %28 = vector.load %arg4[%c0_6, %c0_7] : memref<1x1xf32, #tpu.memory_space<vmem>>, vector<1x1xf32>
    %c0_8 = arith.constant 0 : index
    %c0_9 = arith.constant 0 : index
    %29 = vector.load %arg5[%c0_8, %c0_9] : memref<1x48xf32, #tpu.memory_space<vmem>>, vector<1x48xf32>
    %c0_10 = arith.constant 0 : index
    %c0_11 = arith.constant 0 : index
    %30 = vector.load %arg6[%c0_10, %c0_11] : memref<1x48xf32, #tpu.memory_space<vmem>>, vector<1x48xf32>
    %31 = vector.extract_strided_slice %26 {offsets = [0, 0, 0, 0], sizes = [9, 9, 8, 28], strides = [1, 1, 1, 1]} : vector<11x11x8x28xf32> to vector<9x9x8x28xf32>
    %32 = vector.shape_cast %31 : vector<9x9x8x28xf32> to vector<648x28xf32>
    %33 = vector.extract_strided_slice %26 {offsets = [0, 1, 0, 0], sizes = [9, 9, 8, 28], strides = [1, 1, 1, 1]} : vector<11x11x8x28xf32> to vector<9x9x8x28xf32>
    %34 = vector.shape_cast %33 : vector<9x9x8x28xf32> to vector<648x28xf32>
    %35 = vector.extract_strided_slice %26 {offsets = [0, 2, 0, 0], sizes = [9, 9, 8, 28], strides = [1, 1, 1, 1]} : vector<11x11x8x28xf32> to vector<9x9x8x28xf32>
    %36 = vector.shape_cast %35 : vector<9x9x8x28xf32> to vector<648x28xf32>
    %37 = vector.extract_strided_slice %26 {offsets = [1, 0, 0, 0], sizes = [9, 9, 8, 28], strides = [1, 1, 1, 1]} : vector<11x11x8x28xf32> to vector<9x9x8x28xf32>
    %38 = vector.shape_cast %37 : vector<9x9x8x28xf32> to vector<648x28xf32>
    %39 = vector.extract_strided_slice %26 {offsets = [1, 1, 0, 0], sizes = [9, 9, 8, 28], strides = [1, 1, 1, 1]} : vector<11x11x8x28xf32> to vector<9x9x8x28xf32>
    %40 = vector.shape_cast %39 : vector<9x9x8x28xf32> to vector<648x28xf32>
    %41 = vector.extract_strided_slice %26 {offsets = [1, 2, 0, 0], sizes = [9, 9, 8, 28], strides = [1, 1, 1, 1]} : vector<11x11x8x28xf32> to vector<9x9x8x28xf32>
    %42 = vector.shape_cast %41 : vector<9x9x8x28xf32> to vector<648x28xf32>
    %43 = vector.extract_strided_slice %26 {offsets = [2, 0, 0, 0], sizes = [9, 9, 8, 28], strides = [1, 1, 1, 1]} : vector<11x11x8x28xf32> to vector<9x9x8x28xf32>
    %44 = vector.shape_cast %43 : vector<9x9x8x28xf32> to vector<648x28xf32>
    %45 = vector.extract_strided_slice %26 {offsets = [2, 1, 0, 0], sizes = [9, 9, 8, 28], strides = [1, 1, 1, 1]} : vector<11x11x8x28xf32> to vector<9x9x8x28xf32>
    %46 = vector.shape_cast %45 : vector<9x9x8x28xf32> to vector<648x28xf32>
    %47 = vector.extract_strided_slice %26 {offsets = [2, 2, 0, 0], sizes = [9, 9, 8, 28], strides = [1, 1, 1, 1]} : vector<11x11x8x28xf32> to vector<9x9x8x28xf32>
    %48 = vector.shape_cast %47 : vector<9x9x8x28xf32> to vector<648x28xf32>
    %49 = tpu.concatenate %32, %34, %36, %38, %40, %42, %44, %46, %48 in 1 : vector<648x28xf32>, vector<648x28xf32>, vector<648x28xf32>, vector<648x28xf32>, vector<648x28xf32>, vector<648x28xf32>, vector<648x28xf32>, vector<648x28xf32>, vector<648x28xf32> -> vector<648x252xf32>
    %50 = arith.truncf %49 : vector<648x252xf32> to vector<648x252xbf16>
    %c0_12 = arith.constant 0 : index
    %c0_13 = arith.constant 0 : index
    %51 = vector.load %arg2[%c0_12, %c0_13] : memref<252x48xbf16, #tpu.memory_space<vmem>>, vector<252x48xbf16>
    %cst = arith.constant dense<0.000000e+00> : vector<648x48xf32>
    %52 = tpu.matmul %50, %51, %cst {dimension_numbers = #tpu.dot_dimension_numbers<[1], [0], [0], [1], [0, 0, 1, 1], [], []>} : vector<648x252xbf16>, vector<252x48xbf16>, vector<648x48xf32> -> vector<648x48xf32>
    %53 = vector.broadcast %27 : vector<1x48xf32> to vector<648x48xf32>
    %54 = arith.addf %52, %53 : vector<648x48xf32>
    %cst_14 = arith.constant 0.000000e+00 : f32
    %55 = vector.broadcast %cst_14 : f32 to vector<648x48xf32>
    %56 = arith.cmpf ogt, %54, %55 : vector<648x48xf32>
    %57 = vector.broadcast %28 : vector<1x1xf32> to vector<648x48xf32>
    %58 = arith.mulf %54, %57 : vector<648x48xf32>
    %59 = arith.select %56, %54, %58 : vector<648x48xi1>, vector<648x48xf32>
    %60 = vector.broadcast %29 : vector<1x48xf32> to vector<648x48xf32>
    %61 = arith.mulf %59, %60 : vector<648x48xf32>
    %62 = vector.broadcast %30 : vector<1x48xf32> to vector<648x48xf32>
    %63 = arith.addf %61, %62 : vector<648x48xf32>
    %64 = vector.shape_cast %63 : vector<648x48xf32> to vector<9x9x8x48xf32>
    %65 = vector.extract_strided_slice %64 {offsets = [0, 0, 0, 0], sizes = [8, 9, 8, 48], strides = [1, 1, 1, 1]} : vector<9x9x8x48xf32> to vector<8x9x8x48xf32>
    %66 = vector.shape_cast %65 : vector<8x9x8x48xf32> to vector<4x2x9x8x48xf32>
    %67 = vector.extract_strided_slice %64 {offsets = [1, 0, 0, 0], sizes = [8, 9, 8, 48], strides = [1, 1, 1, 1]} : vector<9x9x8x48xf32> to vector<8x9x8x48xf32>
    %68 = vector.shape_cast %67 : vector<8x9x8x48xf32> to vector<4x2x9x8x48xf32>
    %69 = vector.extract_strided_slice %66 {offsets = [0, 0, 0, 0, 0], sizes = [4, 1, 9, 8, 48], strides = [1, 1, 1, 1, 1]} : vector<4x2x9x8x48xf32> to vector<4x1x9x8x48xf32>
    %70 = vector.shape_cast %69 : vector<4x1x9x8x48xf32> to vector<4x9x8x48xf32>
    %71 = vector.extract_strided_slice %66 {offsets = [0, 1, 0, 0, 0], sizes = [4, 1, 9, 8, 48], strides = [1, 1, 1, 1, 1]} : vector<4x2x9x8x48xf32> to vector<4x1x9x8x48xf32>
    %72 = vector.shape_cast %71 : vector<4x1x9x8x48xf32> to vector<4x9x8x48xf32>
    %73 = arith.maximumf %70, %72 : vector<4x9x8x48xf32>
    %74 = vector.extract_strided_slice %68 {offsets = [0, 1, 0, 0, 0], sizes = [4, 1, 9, 8, 48], strides = [1, 1, 1, 1, 1]} : vector<4x2x9x8x48xf32> to vector<4x1x9x8x48xf32>
    %75 = vector.shape_cast %74 : vector<4x1x9x8x48xf32> to vector<4x9x8x48xf32>
    %76 = arith.maximumf %73, %75 : vector<4x9x8x48xf32>
    %77 = vector.extract_strided_slice %76 {offsets = [0, 0, 0, 0], sizes = [4, 8, 8, 48], strides = [1, 1, 1, 1]} : vector<4x9x8x48xf32> to vector<4x8x8x48xf32>
    %78 = vector.shape_cast %77 : vector<4x8x8x48xf32> to vector<4x4x2x8x48xf32>
    %79 = vector.extract_strided_slice %76 {offsets = [0, 1, 0, 0], sizes = [4, 8, 8, 48], strides = [1, 1, 1, 1]} : vector<4x9x8x48xf32> to vector<4x8x8x48xf32>
    %80 = vector.shape_cast %79 : vector<4x8x8x48xf32> to vector<4x4x2x8x48xf32>
    %81 = vector.extract_strided_slice %78 {offsets = [0, 0, 0, 0, 0], sizes = [4, 4, 1, 8, 48], strides = [1, 1, 1, 1, 1]} : vector<4x4x2x8x48xf32> to vector<4x4x1x8x48xf32>
    %82 = vector.shape_cast %81 : vector<4x4x1x8x48xf32> to vector<4x4x8x48xf32>
    %83 = vector.extract_strided_slice %78 {offsets = [0, 0, 1, 0, 0], sizes = [4, 4, 1, 8, 48], strides = [1, 1, 1, 1, 1]} : vector<4x4x2x8x48xf32> to vector<4x4x1x8x48xf32>
    %84 = vector.shape_cast %83 : vector<4x4x1x8x48xf32> to vector<4x4x8x48xf32>
    %85 = arith.maximumf %82, %84 : vector<4x4x8x48xf32>
    %86 = vector.extract_strided_slice %80 {offsets = [0, 0, 1, 0, 0], sizes = [4, 4, 1, 8, 48], strides = [1, 1, 1, 1, 1]} : vector<4x4x2x8x48xf32> to vector<4x4x1x8x48xf32>
    %87 = vector.shape_cast %86 : vector<4x4x1x8x48xf32> to vector<4x4x8x48xf32>
    %88 = arith.maximumf %85, %87 : vector<4x4x8x48xf32>
    %c0_15 = arith.constant 0 : index
    %c0_16 = arith.constant 0 : index
    %89 = vector.load %arg8[%c0_15, %c0_16] : memref<1x64xf32, #tpu.memory_space<vmem>>, vector<1x64xf32>
    %c0_17 = arith.constant 0 : index
    %c0_18 = arith.constant 0 : index
    %90 = vector.load %arg9[%c0_17, %c0_18] : memref<1x1xf32, #tpu.memory_space<vmem>>, vector<1x1xf32>
    %c0_19 = arith.constant 0 : index
    %c0_20 = arith.constant 0 : index
    %91 = vector.load %arg10[%c0_19, %c0_20] : memref<1x64xf32, #tpu.memory_space<vmem>>, vector<1x64xf32>
    %c0_21 = arith.constant 0 : index
    %c0_22 = arith.constant 0 : index
    %92 = vector.load %arg11[%c0_21, %c0_22] : memref<1x64xf32, #tpu.memory_space<vmem>>, vector<1x64xf32>
    %93 = vector.extract_strided_slice %88 {offsets = [0, 0, 0, 0], sizes = [3, 3, 8, 48], strides = [1, 1, 1, 1]} : vector<4x4x8x48xf32> to vector<3x3x8x48xf32>
    %94 = vector.shape_cast %93 : vector<3x3x8x48xf32> to vector<72x48xf32>
    %95 = vector.extract_strided_slice %88 {offsets = [0, 1, 0, 0], sizes = [3, 3, 8, 48], strides = [1, 1, 1, 1]} : vector<4x4x8x48xf32> to vector<3x3x8x48xf32>
    %96 = vector.shape_cast %95 : vector<3x3x8x48xf32> to vector<72x48xf32>
    %97 = vector.extract_strided_slice %88 {offsets = [1, 0, 0, 0], sizes = [3, 3, 8, 48], strides = [1, 1, 1, 1]} : vector<4x4x8x48xf32> to vector<3x3x8x48xf32>
    %98 = vector.shape_cast %97 : vector<3x3x8x48xf32> to vector<72x48xf32>
    %99 = vector.extract_strided_slice %88 {offsets = [1, 1, 0, 0], sizes = [3, 3, 8, 48], strides = [1, 1, 1, 1]} : vector<4x4x8x48xf32> to vector<3x3x8x48xf32>
    %100 = vector.shape_cast %99 : vector<3x3x8x48xf32> to vector<72x48xf32>
    %101 = tpu.concatenate %94, %96, %98, %100 in 1 : vector<72x48xf32>, vector<72x48xf32>, vector<72x48xf32>, vector<72x48xf32> -> vector<72x192xf32>
    %102 = arith.truncf %101 : vector<72x192xf32> to vector<72x192xbf16>
    %c0_23 = arith.constant 0 : index
    %c0_24 = arith.constant 0 : index
    %103 = vector.load %arg7[%c0_23, %c0_24] : memref<192x64xbf16, #tpu.memory_space<vmem>>, vector<192x64xbf16>
    %cst_25 = arith.constant dense<0.000000e+00> : vector<72x64xf32>
    %104 = tpu.matmul %102, %103, %cst_25 {dimension_numbers = #tpu.dot_dimension_numbers<[1], [0], [0], [1], [0, 0, 1, 1], [], []>} : vector<72x192xbf16>, vector<192x64xbf16>, vector<72x64xf32> -> vector<72x64xf32>
    %105 = vector.broadcast %89 : vector<1x64xf32> to vector<72x64xf32>
    %106 = arith.addf %104, %105 : vector<72x64xf32>
    %cst_26 = arith.constant 0.000000e+00 : f32
    %107 = vector.broadcast %cst_26 : f32 to vector<72x64xf32>
    %108 = arith.cmpf ogt, %106, %107 : vector<72x64xf32>
    %109 = vector.broadcast %90 : vector<1x1xf32> to vector<72x64xf32>
    %110 = arith.mulf %106, %109 : vector<72x64xf32>
    %111 = arith.select %108, %106, %110 : vector<72x64xi1>, vector<72x64xf32>
    %112 = vector.broadcast %91 : vector<1x64xf32> to vector<72x64xf32>
    %113 = arith.mulf %111, %112 : vector<72x64xf32>
    %114 = vector.broadcast %92 : vector<1x64xf32> to vector<72x64xf32>
    %115 = arith.addf %113, %114 : vector<72x64xf32>
    %116 = vector.shape_cast %115 : vector<72x64xf32> to vector<3x3x8x64xf32>
    %117 = vector.extract_strided_slice %116 {offsets = [0, 0, 0, 0], sizes = [1, 1, 8, 64], strides = [1, 1, 1, 1]} : vector<3x3x8x64xf32> to vector<1x1x8x64xf32>
    %118 = vector.shape_cast %117 : vector<1x1x8x64xf32> to vector<8x64xf32>
    %119 = vector.extract_strided_slice %116 {offsets = [0, 1, 0, 0], sizes = [1, 1, 8, 64], strides = [1, 1, 1, 1]} : vector<3x3x8x64xf32> to vector<1x1x8x64xf32>
    %120 = vector.shape_cast %119 : vector<1x1x8x64xf32> to vector<8x64xf32>
    %121 = vector.extract_strided_slice %116 {offsets = [0, 2, 0, 0], sizes = [1, 1, 8, 64], strides = [1, 1, 1, 1]} : vector<3x3x8x64xf32> to vector<1x1x8x64xf32>
    %122 = vector.shape_cast %121 : vector<1x1x8x64xf32> to vector<8x64xf32>
    %123 = vector.extract_strided_slice %116 {offsets = [1, 0, 0, 0], sizes = [1, 1, 8, 64], strides = [1, 1, 1, 1]} : vector<3x3x8x64xf32> to vector<1x1x8x64xf32>
    %124 = vector.shape_cast %123 : vector<1x1x8x64xf32> to vector<8x64xf32>
    %125 = vector.extract_strided_slice %116 {offsets = [1, 1, 0, 0], sizes = [1, 1, 8, 64], strides = [1, 1, 1, 1]} : vector<3x3x8x64xf32> to vector<1x1x8x64xf32>
    %126 = vector.shape_cast %125 : vector<1x1x8x64xf32> to vector<8x64xf32>
    %127 = vector.extract_strided_slice %116 {offsets = [1, 2, 0, 0], sizes = [1, 1, 8, 64], strides = [1, 1, 1, 1]} : vector<3x3x8x64xf32> to vector<1x1x8x64xf32>
    %128 = vector.shape_cast %127 : vector<1x1x8x64xf32> to vector<8x64xf32>
    %129 = vector.extract_strided_slice %116 {offsets = [2, 0, 0, 0], sizes = [1, 1, 8, 64], strides = [1, 1, 1, 1]} : vector<3x3x8x64xf32> to vector<1x1x8x64xf32>
    %130 = vector.shape_cast %129 : vector<1x1x8x64xf32> to vector<8x64xf32>
    %131 = vector.extract_strided_slice %116 {offsets = [2, 1, 0, 0], sizes = [1, 1, 8, 64], strides = [1, 1, 1, 1]} : vector<3x3x8x64xf32> to vector<1x1x8x64xf32>
    %132 = vector.shape_cast %131 : vector<1x1x8x64xf32> to vector<8x64xf32>
    %133 = vector.extract_strided_slice %116 {offsets = [2, 2, 0, 0], sizes = [1, 1, 8, 64], strides = [1, 1, 1, 1]} : vector<3x3x8x64xf32> to vector<1x1x8x64xf32>
    %134 = vector.shape_cast %133 : vector<1x1x8x64xf32> to vector<8x64xf32>
    %135 = tpu.concatenate %118, %120, %122, %124, %126, %128, %130, %132, %134 in 1 : vector<8x64xf32>, vector<8x64xf32>, vector<8x64xf32>, vector<8x64xf32>, vector<8x64xf32>, vector<8x64xf32>, vector<8x64xf32>, vector<8x64xf32>, vector<8x64xf32> -> vector<8x576xf32>
    %136 = arith.truncf %135 : vector<8x576xf32> to vector<8x576xbf16>
    %c0_27 = arith.constant 0 : index
    %c0_28 = arith.constant 0 : index
    %137 = vector.load %arg12[%c0_27, %c0_28] : memref<576x128xbf16, #tpu.memory_space<vmem>>, vector<576x128xbf16>
    %cst_29 = arith.constant dense<0.000000e+00> : vector<8x128xf32>
    %138 = tpu.matmul %136, %137, %cst_29 {dimension_numbers = #tpu.dot_dimension_numbers<[1], [0], [0], [1], [0, 0, 1, 1], [], []>} : vector<8x576xbf16>, vector<576x128xbf16>, vector<8x128xf32> -> vector<8x128xf32>
    %c0_30 = arith.constant 0 : index
    %c0_31 = arith.constant 0 : index
    %139 = vector.load %arg13[%c0_30, %c0_31] : memref<1x128xf32, #tpu.memory_space<vmem>>, vector<1x128xf32>
    %140 = vector.broadcast %139 : vector<1x128xf32> to vector<8x128xf32>
    %141 = arith.addf %138, %140 : vector<8x128xf32>
    %cst_32 = arith.constant 0.000000e+00 : f32
    %142 = vector.broadcast %cst_32 : f32 to vector<8x128xf32>
    %143 = arith.cmpf ogt, %141, %142 : vector<8x128xf32>
    %c0_33 = arith.constant 0 : index
    %c0_34 = arith.constant 0 : index
    %144 = vector.load %arg14[%c0_33, %c0_34] : memref<1x1xf32, #tpu.memory_space<vmem>>, vector<1x1xf32>
    %145 = vector.broadcast %144 : vector<1x1xf32> to vector<8x128xf32>
    %146 = arith.mulf %141, %145 : vector<8x128xf32>
    %147 = arith.select %143, %141, %146 : vector<8x128xi1>, vector<8x128xf32>
    %c0_35 = arith.constant 0 : index
    %c0_36 = arith.constant 0 : index
    %148 = vector.load %arg15[%c0_35, %c0_36] : memref<1x128xf32, #tpu.memory_space<vmem>>, vector<1x128xf32>
    %149 = vector.broadcast %148 : vector<1x128xf32> to vector<8x128xf32>
    %150 = arith.mulf %147, %149 : vector<8x128xf32>
    %c0_37 = arith.constant 0 : index
    %c0_38 = arith.constant 0 : index
    %151 = vector.load %arg16[%c0_37, %c0_38] : memref<1x128xf32, #tpu.memory_space<vmem>>, vector<1x128xf32>
    %152 = vector.broadcast %151 : vector<1x128xf32> to vector<8x128xf32>
    %153 = arith.addf %150, %152 : vector<8x128xf32>
    %154 = arith.truncf %153 : vector<8x128xf32> to vector<8x128xbf16>
    %c0_39 = arith.constant 0 : index
    %c0_40 = arith.constant 0 : index
    %155 = vector.load %arg17[%c0_39, %c0_40] : memref<128x15xbf16, #tpu.memory_space<vmem>>, vector<128x15xbf16>
    %cst_41 = arith.constant dense<0.000000e+00> : vector<8x15xf32>
    %156 = tpu.matmul %154, %155, %cst_41 {dimension_numbers = #tpu.dot_dimension_numbers<[1], [0], [0], [1], [0, 0, 1, 1], [], []>} : vector<8x128xbf16>, vector<128x15xbf16>, vector<8x15xf32> -> vector<8x15xf32>
    %c0_42 = arith.constant 0 : index
    %c0_43 = arith.constant 0 : index
    %157 = vector.load %arg18[%c0_42, %c0_43] : memref<1x15xf32, #tpu.memory_space<vmem>>, vector<1x15xf32>
    %158 = vector.broadcast %157 : vector<1x15xf32> to vector<8x15xf32>
    %159 = arith.addf %156, %158 : vector<8x15xf32>
    %160 = tpu.iota {dimensions = array<i32: 1>} : vector<8x15xi32>
    %c0_i32 = arith.constant 0 : i32
    %161 = vector.broadcast %c0_i32 : i32 to vector<8x15xi32>
    %162 = arith.cmpi eq, %160, %161 : vector<8x15xi32>
    %163 = math.absf %159 : vector<8x15xf32>
    %cst_44 = arith.constant 0.000000e+00 : f32
    %164 = vector.broadcast %cst_44 : f32 to vector<8x15xf32>
    %165 = arith.subf %164, %163 : vector<8x15xf32>
    %166 = math.exp %165 : vector<8x15xf32>
    %cst_45 = arith.constant 0.000000e+00 : f32
    %167 = vector.broadcast %cst_45 : f32 to vector<8x15xf32>
    %168 = arith.cmpf oge, %159, %167 : vector<8x15xf32>
    %cst_46 = arith.constant 1.000000e+00 : f32
    %169 = vector.broadcast %cst_46 : f32 to vector<8x15xf32>
    %170 = arith.addf %169, %166 : vector<8x15xf32>
    %cst_47 = arith.constant 1.000000e+00 : f32
    %171 = vector.broadcast %cst_47 : f32 to vector<8x15xf32>
    %172 = arith.divf %171, %170 : vector<8x15xf32>
    %cst_48 = arith.constant 1.000000e+00 : f32
    %173 = vector.broadcast %cst_48 : f32 to vector<8x15xf32>
    %174 = arith.addf %173, %166 : vector<8x15xf32>
    %175 = arith.divf %166, %174 : vector<8x15xf32>
    %176 = arith.select %168, %172, %175 : vector<8x15xi1>, vector<8x15xf32>
    %177 = arith.select %162, %176, %159 : vector<8x15xi1>, vector<8x15xf32>
    %c0_49 = arith.constant 0 : index
    %c0_50 = arith.constant 0 : index
    %178 = vector.load %arg19[%c0_49, %c0_50] : memref<8x15xf32, #tpu.memory_space<vmem>>, vector<8x15xf32>
    tpu.vector_store %arg19[%c0_49, %c0_50], %177 {strides = array<i32>} : memref<8x15xf32, #tpu.memory_space<vmem>>, vector<8x15xf32>,
    return
  }
  func.func @transform_0(%arg0: i32) -> (i32, i32, i32, i32, i32) {
    %c0_i32 = arith.constant 0 : i32
    %c0_i32_0 = arith.constant 0 : i32
    %c0_i32_1 = arith.constant 0 : i32
    %c0_i32_2 = arith.constant 0 : i32
    %c0_i32_3 = arith.constant 0 : i32
    return %arg0, %c0_i32, %c0_i32_0, %c0_i32_1, %c0_i32_2 : i32, i32, i32, i32, i32
  }
  func.func @transform_1(%arg0: i32) -> (i32, i32) {
    %c0_i32 = arith.constant 0 : i32
    %c0_i32_0 = arith.constant 0 : i32
    %c0_i32_1 = arith.constant 0 : i32
    return %c0_i32, %c0_i32_0 : i32, i32
  }
  func.func @transform_2(%arg0: i32) -> (i32, i32) {
    %c0_i32 = arith.constant 0 : i32
    %c0_i32_0 = arith.constant 0 : i32
    %c0_i32_1 = arith.constant 0 : i32
    return %c0_i32, %c0_i32_0 : i32, i32
  }
  func.func @transform_3(%arg0: i32) -> (i32, i32) {
    %c0_i32 = arith.constant 0 : i32
    %c0_i32_0 = arith.constant 0 : i32
    %c0_i32_1 = arith.constant 0 : i32
    return %c0_i32, %c0_i32_0 : i32, i32
  }
  func.func @transform_4(%arg0: i32) -> (i32, i32) {
    %c0_i32 = arith.constant 0 : i32
    %c0_i32_0 = arith.constant 0 : i32
    %c0_i32_1 = arith.constant 0 : i32
    return %c0_i32, %c0_i32_0 : i32, i32
  }
  func.func @transform_5(%arg0: i32) -> (i32, i32) {
    %c0_i32 = arith.constant 0 : i32
    %c0_i32_0 = arith.constant 0 : i32
    %c0_i32_1 = arith.constant 0 : i32
    return %c0_i32, %c0_i32_0 : i32, i32
  }
  func.func @transform_6(%arg0: i32) -> (i32, i32) {
    %c0_i32 = arith.constant 0 : i32
    %c0_i32_0 = arith.constant 0 : i32
    %c0_i32_1 = arith.constant 0 : i32
    return %c0_i32, %c0_i32_0 : i32, i32
  }
  func.func @transform_7(%arg0: i32) -> (i32, i32) {
    %c0_i32 = arith.constant 0 : i32
    %c0_i32_0 = arith.constant 0 : i32
    %c0_i32_1 = arith.constant 0 : i32
    return %c0_i32, %c0_i32_0 : i32, i32
  }
  func.func @transform_8(%arg0: i32) -> (i32, i32) {
    %c0_i32 = arith.constant 0 : i32
    %c0_i32_0 = arith.constant 0 : i32
    %c0_i32_1 = arith.constant 0 : i32
    return %c0_i32, %c0_i32_0 : i32, i32
  }
  func.func @transform_9(%arg0: i32) -> (i32, i32) {
    %c0_i32 = arith.constant 0 : i32
    %c0_i32_0 = arith.constant 0 : i32
    %c0_i32_1 = arith.constant 0 : i32
    return %c0_i32, %c0_i32_0 : i32, i32
  }
  func.func @transform_10(%arg0: i32) -> (i32, i32) {
    %c0_i32 = arith.constant 0 : i32
    %c0_i32_0 = arith.constant 0 : i32
    %c0_i32_1 = arith.constant 0 : i32
    return %c0_i32, %c0_i32_0 : i32, i32
  }
  func.func @transform_11(%arg0: i32) -> (i32, i32) {
    %c0_i32 = arith.constant 0 : i32
    %c0_i32_0 = arith.constant 0 : i32
    %c0_i32_1 = arith.constant 0 : i32
    return %c0_i32, %c0_i32_0 : i32, i32
  }
  func.func @transform_12(%arg0: i32) -> (i32, i32) {
    %c0_i32 = arith.constant 0 : i32
    %c0_i32_0 = arith.constant 0 : i32
    %c0_i32_1 = arith.constant 0 : i32
    return %c0_i32, %c0_i32_0 : i32, i32
  }
  func.func @transform_13(%arg0: i32) -> (i32, i32) {
    %c0_i32 = arith.constant 0 : i32
    %c0_i32_0 = arith.constant 0 : i32
    %c0_i32_1 = arith.constant 0 : i32
    return %c0_i32, %c0_i32_0 : i32, i32
  }
  func.func @transform_14(%arg0: i32) -> (i32, i32) {
    %c0_i32 = arith.constant 0 : i32
    %c0_i32_0 = arith.constant 0 : i32
    %c0_i32_1 = arith.constant 0 : i32
    return %c0_i32, %c0_i32_0 : i32, i32
  }
  func.func @transform_15(%arg0: i32) -> (i32, i32) {
    %c0_i32 = arith.constant 0 : i32
    %c0_i32_0 = arith.constant 0 : i32
    %c0_i32_1 = arith.constant 0 : i32
    return %c0_i32, %c0_i32_0 : i32, i32
  }
  func.func @transform_16(%arg0: i32) -> (i32, i32) {
    %c0_i32 = arith.constant 0 : i32
    %c0_i32_0 = arith.constant 0 : i32
    %c0_i32_1 = arith.constant 0 : i32
    return %c0_i32, %c0_i32_0 : i32, i32
  }
  func.func @transform_17(%arg0: i32) -> (i32, i32) {
    %c0_i32 = arith.constant 0 : i32
    %c0_i32_0 = arith.constant 0 : i32
    %c0_i32_1 = arith.constant 0 : i32
    return %c0_i32, %c0_i32_0 : i32, i32
  }
  func.func @transform_18(%arg0: i32) -> (i32, i32) {
    %c0_i32 = arith.constant 0 : i32
    %c0_i32_0 = arith.constant 0 : i32
    return %arg0, %c0_i32 : i32, i32
  }
}

</mosaic_0001>

<llo_original>
// kernel: tpu_custom_call.1
$region0: #{tpu_custom_call.1}
  #allocation0 [shape = 'u32[]', space=smem, size = 0x4, offset = 0x4, fixed_abs, tag = 'smem constant byte address 0x4 - core index']
  #allocation1 [shape = 'u32[144,128]{1,0:T(1,128)}', space=vmem, size = 0x12000, scoped, tag = 'internal scratch']
  #allocation2 [shape = 'f32[1,1]{1,0:T(1,128)S(1)}', space=vmem, size = 0x200, scoped, tag = 'scoped memory for tpu_custom_call.1']
  #allocation3 [shape = 'f32[1,1]{1,0:T(1,128)S(1)}', space=vmem, size = 0x200, scoped, tag = 'scoped memory for tpu_custom_call.1']
  #allocation4 [shape = 'f32[1,1]{1,0:T(1,128)S(1)}', space=vmem, size = 0x200, scoped, tag = 'scoped memory for tpu_custom_call.1']
  %s0 = inlined_call_operand.hbm [shape: bf16[1,24,24,8,28], index: 0, kind: input, shape index: {}]
  %s1 = inlined_call_operand.vmem [shape: bf16[252,48], index: 1, kind: input, shape index: {}]
  %s2 = inlined_call_operand.hbm [shape: f32[1,48], index: 2, kind: input, shape index: {}]
  %s3 = inlined_call_operand.<no memory space> [shape: f32[1,1], index: 3, kind: input, shape index: {}]
  %s4 = inlined_call_operand.hbm [shape: f32[1,48], index: 4, kind: input, shape index: {}]
  %s5 = inlined_call_operand.hbm [shape: f32[1,48], index: 5, kind: input, shape index: {}]
  %s6 = inlined_call_operand.vmem [shape: bf16[192,64], index: 6, kind: input, shape index: {}]
  %s7 = inlined_call_operand.hbm [shape: f32[1,64], index: 7, kind: input, shape index: {}]
  %s8 = inlined_call_operand.<no memory space> [shape: f32[1,1], index: 8, kind: input, shape index: {}]
  %s9 = inlined_call_operand.hbm [shape: f32[1,64], index: 9, kind: input, shape index: {}]
  %s10 = inlined_call_operand.hbm [shape: f32[1,64], index: 10, kind: input, shape index: {}]
  %s11 = inlined_call_operand.hbm [shape: bf16[576,128], index: 11, kind: input, shape index: {}]
  %s12 = inlined_call_operand.hbm [shape: f32[1,128], index: 12, kind: input, shape index: {}]
  %s13 = inlined_call_operand.<no memory space> [shape: f32[1,1], index: 13, kind: input, shape index: {}]
  %s14 = inlined_call_operand.hbm [shape: f32[1,128], index: 14, kind: input, shape index: {}]
  %s15 = inlined_call_operand.hbm [shape: f32[1,128], index: 15, kind: input, shape index: {}]
  %s16 = inlined_call_operand.vmem [shape: bf16[128,15], index: 16, kind: input, shape index: {}]
  %s17 = inlined_call_operand.hbm [shape: f32[1,15], index: 17, kind: input, shape index: {}]
  %s18 = inlined_call_operand.hbm [shape: f32[8,15], index: 18, kind: output, shape index: {}]
  %s19 = sld [smem:[#allocation0]]
  $region130: #{tpu_custom_call.1} parent=0
    _
  %s21 = ssub.s32 1, %s19
  %s22 = scalar_select 0, %s21, %s19
  %v23 = vstv %s3
  %24 = vst [vmem:[#allocation2] sm:$0x1] %v23
  %v25 = vstv %s8
  %26 = vst [vmem:[#allocation3] sm:$0x1] %v25
  %v27 = vstv %s13
  %28 = vst [vmem:[#allocation4] sm:$0x1] %v27
  $region1: #{tpu_custom_call.1} parent=0
    #allocation5 [shape = 'u8[1179648]{0}', space=vmem, size = 0x120000, scoped, tag = 'input window, operand 0, single buffered']
    #allocation6 [shape = 's32[1]{0}', space=sflag, size = 0x4, scoped, tag = 'scoped memory for tpu_custom_call.1']
    #allocation7 [shape = 's32[1]{0}', space=sflag, size = 0x4, scoped, tag = 'scoped memory for tpu_custom_call.1']
    #allocation8 [shape = 'u8[512]{0}', space=vmem, size = 0x400, scoped, tag = 'input window, operand 2, single buffered']
    #allocation9 [shape = 's32[1]{0}', space=sflag, size = 0x4, scoped, tag = 'scoped memory for tpu_custom_call.1']
    #allocation10 [shape = 'u8[512]{0}', space=vmem, size = 0x400, scoped, tag = 'input window, operand 4, single buffered']
    #allocation11 [shape = 'u8[512]{0}', space=vmem, size = 0x400, scoped, tag = 'input window, operand 5, single buffered']
    #allocation12 [shape = 's32[1]{0}', space=sflag, size = 0x4, scoped, tag = 'scoped memory for tpu_custom_call.1']
    #allocation13 [shape = 'u8[512]{0}', space=vmem, size = 0x400, scoped, tag = 'input window, operand 7, single buffered']
    #allocation14 [shape = 'u8[512]{0}', space=vmem, size = 0x400, scoped, tag = 'input window, operand 9, single buffered']
    #allocation15 [shape = 's32[1]{0}', space=sflag, size = 0x4, scoped, tag = 'scoped memory for tpu_custom_call.1']
    #allocation16 [shape = 'u8[512]{0}', space=vmem, size = 0x400, scoped, tag = 'input window, operand 10, single buffered']
    #allocation17 [shape = 'u8[147456]{0}', space=vmem, size = 0x24000, scoped, tag = 'input window, operand 11, single buffered']
    #allocation18 [shape = 's32[1]{0}', space=sflag, size = 0x4, scoped, tag = 'scoped memory for tpu_custom_call.1']
    #allocation19 [shape = 'u8[512]{0}', space=vmem, size = 0x400, scoped, tag = 'input window, operand 12, single buffered']
    #allocation20 [shape = 'u8[512]{0}', space=vmem, size = 0x400, scoped, tag = 'input window, operand 14, single buffered']
    #allocation21 [shape = 's32[1]{0}', space=sflag, size = 0x4, scoped, tag = 'scoped memory for tpu_custom_call.1']
    #allocation22 [shape = 'u8[512]{0}', space=vmem, size = 0x400, scoped, tag = 'input window, operand 15, single buffered']
    #allocation23 [shape = 'u8[512]{0}', space=vmem, size = 0x400, scoped, tag = 'input window, operand 17, single buffered']
    #allocation24 [shape = 's32[1]{0}', space=sflag, size = 0x4, scoped, tag = 'scoped memory for tpu_custom_call.1']
    #allocation25 [shape = 'u8[4096]{0}', space=vmem, size = 0x1000, scoped, tag = 'output window, operand 0, single buffered']
    %29 = vsyncpa [#allocation6], 0
    %30 = vsyncpa [#allocation9], 0
    %31 = vsyncpa [#allocation12], 0
    %32 = vsyncpa [#allocation15], 0
    %33 = vsyncpa [#allocation18], 0
    %34 = vsyncpa [#allocation21], 0
    %35 = vsyncpa [#allocation24], 0
    %36 = vsyncpa [#allocation7], 0
    // Predicated region
    $region2: #{tpu_custom_call.1} parent=1 // pred_check
      _
    $region3: #{tpu_custom_call.1} parent=1 // pred_check_branch
      %38 = sbr.rel (0) target = $region5
    $region4: #{tpu_custom_call.1} parent=1 // pred_region
      %s40 = ssub.s32 36864, 36864
      %41 = vsyncadd [#allocation6], %s40
      %s42 = sshll.u32 [#allocation5], 4
      %s43 = int_to_ptr.vmem [resolvable:$true] %s42
      %48 = dma.hbm_to_vmem [thread:$0]  %s0, 36864, %s43, [#allocation6], 64, 64, 4
    $region5: #{tpu_custom_call.1} parent=1 // pred_fallthru
      _
    // Predicated region
    $region6: #{tpu_custom_call.1} parent=1 // pred_check
      _
    $region7: #{tpu_custom_call.1} parent=1 // pred_check_branch
      %50 = sbr.rel (0) target = $region9
    $region8: #{tpu_custom_call.1} parent=1 // pred_region
      _
    $region9: #{tpu_custom_call.1} parent=1 // pred_fallthru
      _
    // Predicated region
    $region10: #{tpu_custom_call.1} parent=1 // pred_check
      _
    $region11: #{tpu_custom_call.1} parent=1 // pred_check_branch
      %52 = sbr.rel (0) target = $region13
    $region12: #{tpu_custom_call.1} parent=1 // pred_region
      %s54 = ssub.s32 16, 16
      %55 = vsyncadd [#allocation9], %s54
      %s57 = sshll.u32 [#allocation8], 4
      %s58 = int_to_ptr.vmem [resolvable:$true] %s57
      %60 = dma.hbm_to_vmem [thread:$0]  %s2, 16, %s58, [#allocation9]
    $region13: #{tpu_custom_call.1} parent=1 // pred_fallthru
      _
    // Predicated region
    $region14: #{tpu_custom_call.1} parent=1 // pred_check
      _
    $region15: #{tpu_custom_call.1} parent=1 // pred_check_branch
      %62 = sbr.rel (0) target = $region17
    $region16: #{tpu_custom_call.1} parent=1 // pred_region
      _
    $region17: #{tpu_custom_call.1} parent=1 // pred_fallthru
      _
    // Predicated region
    $region18: #{tpu_custom_call.1} parent=1 // pred_check
      _
    $region19: #{tpu_custom_call.1} parent=1 // pred_check_branch
      %64 = sbr.rel (0) target = $region21
    $region20: #{tpu_custom_call.1} parent=1 // pred_region
      %s66 = ssub.s32 16, 16
      %67 = vsyncadd [#allocation9], %s66
      %s69 = sshll.u32 [#allocation10], 4
      %s70 = int_to_ptr.vmem [resolvable:$true] %s69
      %72 = dma.hbm_to_vmem [thread:$0]  %s4, 16, %s70, [#allocation9]
    $region21: #{tpu_custom_call.1} parent=1 // pred_fallthru
      _
    // Predicated region
    $region22: #{tpu_custom_call.1} parent=1 // pred_check
      _
    $region23: #{tpu_custom_call.1} parent=1 // pred_check_branch
      %74 = sbr.rel (0) target = $region25
    $region24: #{tpu_custom_call.1} parent=1 // pred_region
      %s76 = ssub.s32 16, 16
      %77 = vsyncadd [#allocation12], %s76
      %s79 = sshll.u32 [#allocation11], 4
      %s80 = int_to_ptr.vmem [resolvable:$true] %s79
      %82 = dma.hbm_to_vmem [thread:$0]  %s5, 16, %s80, [#allocation12]
    $region25: #{tpu_custom_call.1} parent=1 // pred_fallthru
      _
    // Predicated region
    $region26: #{tpu_custom_call.1} parent=1 // pred_check
      _
    $region27: #{tpu_custom_call.1} parent=1 // pred_check_branch
      %84 = sbr.rel (0) target = $region29
    $region28: #{tpu_custom_call.1} parent=1 // pred_region
      _
    $region29: #{tpu_custom_call.1} parent=1 // pred_fallthru
      _
    // Predicated region
    $region30: #{tpu_custom_call.1} parent=1 // pred_check
      _
    $region31: #{tpu_custom_call.1} parent=1 // pred_check_branch
      %86 = sbr.rel (0) target = $region33
    $region32: #{tpu_custom_call.1} parent=1 // pred_region
      %s88 = ssub.s32 16, 16
      %89 = vsyncadd [#allocation12], %s88
      %s91 = sshll.u32 [#allocation13], 4
      %s92 = int_to_ptr.vmem [resolvable:$true] %s91
      %94 = dma.hbm_to_vmem [thread:$0]  %s7, 16, %s92, [#allocation12]
    $region33: #{tpu_custom_call.1} parent=1 // pred_fallthru
      _
    // Predicated region
    $region34: #{tpu_custom_call.1} parent=1 // pred_check
      _
    $region35: #{tpu_custom_call.1} parent=1 // pred_check_branch
      %96 = sbr.rel (0) target = $region37
    $region36: #{tpu_custom_call.1} parent=1 // pred_region
      _
    $region37: #{tpu_custom_call.1} parent=1 // pred_fallthru
      _
    // Predicated region
    $region38: #{tpu_custom_call.1} parent=1 // pred_check
      _
    $region39: #{tpu_custom_call.1} parent=1 // pred_check_branch
      %98 = sbr.rel (0) target = $region41
    $region40: #{tpu_custom_call.1} parent=1 // pred_region
      %s100 = ssub.s32 16, 16
      %101 = vsyncadd [#allocation15], %s100
      %s103 = sshll.u32 [#allocation14], 4
      %s104 = int_to_ptr.vmem [resolvable:$true] %s103
      %106 = dma.hbm_to_vmem [thread:$0]  %s9, 16, %s104, [#allocation15]
    $region41: #{tpu_custom_call.1} parent=1 // pred_fallthru
      _
    // Predicated region
    $region42: #{tpu_custom_call.1} parent=1 // pred_check
      _
    $region43: #{tpu_custom_call.1} parent=1 // pred_check_branch
      %108 = sbr.rel (0) target = $region45
    $region44: #{tpu_custom_call.1} parent=1 // pred_region
      %s110 = ssub.s32 16, 16
      %111 = vsyncadd [#allocation15], %s110
      %s113 = sshll.u32 [#allocation16], 4
      %s114 = int_to_ptr.vmem [resolvable:$true] %s113
      %116 = dma.hbm_to_vmem [thread:$0]  %s10, 16, %s114, [#allocation15]
    $region45: #{tpu_custom_call.1} parent=1 // pred_fallthru
      _
    // Predicated region
    $region46: #{tpu_custom_call.1} parent=1 // pred_check
      _
    $region47: #{tpu_custom_call.1} parent=1 // pred_check_branch
      %118 = sbr.rel (0) target = $region49
    $region48: #{tpu_custom_call.1} parent=1 // pred_region
      %s120 = ssub.s32 4608, 4608
      %121 = vsyncadd [#allocation18], %s120
      %s122 = sshll.u32 [#allocation17], 4
      %s123 = int_to_ptr.vmem [resolvable:$true] %s122
      %128 = dma.hbm_to_vmem [thread:$0]  %s11, 4608, %s123, [#allocation18], 64, 64, 4
    $region49: #{tpu_custom_call.1} parent=1 // pred_fallthru
      _
    // Predicated region
    $region50: #{tpu_custom_call.1} parent=1 // pred_check
      _
    $region51: #{tpu_custom_call.1} parent=1 // pred_check_branch
      %130 = sbr.rel (0) target = $region53
    $region52: #{tpu_custom_call.1} parent=1 // pred_region
      %s132 = ssub.s32 16, 16
      %133 = vsyncadd [#allocation18], %s132
      %s135 = sshll.u32 [#allocation19], 4
      %s136 = int_to_ptr.vmem [resolvable:$true] %s135
      %138 = dma.hbm_to_vmem [thread:$0]  %s12, 16, %s136, [#allocation18]
    $region53: #{tpu_custom_call.1} parent=1 // pred_fallthru
      _
    // Predicated region
    $region54: #{tpu_custom_call.1} parent=1 // pred_check
      _
    $region55: #{tpu_custom_call.1} parent=1 // pred_check_branch
      %140 = sbr.rel (0) target = $region57
    $region56: #{tpu_custom_call.1} parent=1 // pred_region
      _
    $region57: #{tpu_custom_call.1} parent=1 // pred_fallthru
      _
    // Predicated region
    $region58: #{tpu_custom_call.1} parent=1 // pred_check
      _
    $region59: #{tpu_custom_call.1} parent=1 // pred_check_branch
      %142 = sbr.rel (0) target = $region61
    $region60: #{tpu_custom_call.1} parent=1 // pred_region
      %s144 = ssub.s32 16, 16
      %145 = vsyncadd [#allocation21], %s144
      %s147 = sshll.u32 [#allocation20], 4
      %s148 = int_to_ptr.vmem [resolvable:$true] %s147
      %150 = dma.hbm_to_vmem [thread:$0]  %s14, 16, %s148, [#allocation21]
    $region61: #{tpu_custom_call.1} parent=1 // pred_fallthru
      _
    // Predicated region
    $region62: #{tpu_custom_call.1} parent=1 // pred_check
      _
    $region63: #{tpu_custom_call.1} parent=1 // pred_check_branch
      %152 = sbr.rel (0) target = $region65
    $region64: #{tpu_custom_call.1} parent=1 // pred_region
      %s154 = ssub.s32 16, 16
      %155 = vsyncadd [#allocation21], %s154
      %s157 = sshll.u32 [#allocation22], 4
      %s158 = int_to_ptr.vmem [resolvable:$true] %s157
      %160 = dma.hbm_to_vmem [thread:$0]  %s15, 16, %s158, [#allocation21]
    $region65: #{tpu_custom_call.1} parent=1 // pred_fallthru
      _
    // Predicated region
    $region66: #{tpu_custom_call.1} parent=1 // pred_check
      _
    $region67: #{tpu_custom_call.1} parent=1 // pred_check_branch
      %162 = sbr.rel (0) target = $region69
    $region68: #{tpu_custom_call.1} parent=1 // pred_region
      _
    $region69: #{tpu_custom_call.1} parent=1 // pred_fallthru
      _
    // Predicated region
    $region70: #{tpu_custom_call.1} parent=1 // pred_check
      _
    $region71: #{tpu_custom_call.1} parent=1 // pred_check_branch
      %164 = sbr.rel (0) target = $region73
    $region72: #{tpu_custom_call.1} parent=1 // pred_region
      %s166 = ssub.s32 16, 16
      %167 = vsyncadd [#allocation24], %s166
      %s169 = sshll.u32 [#allocation23], 4
      %s170 = int_to_ptr.vmem [resolvable:$true] %s169
      %172 = dma.hbm_to_vmem [thread:$0]  %s17, 16, %s170, [#allocation24]
    $region73: #{tpu_custom_call.1} parent=1 // pred_fallthru
      _
    // Predicated region
    $region74: #{tpu_custom_call.1} parent=1 // pred_check
      _
    $region75: #{tpu_custom_call.1} parent=1 // pred_check_branch
      %174 = sbr.rel (0) target = $region77
    $region76: #{tpu_custom_call.1} parent=1 // pred_region
      %175 = dma.done [#allocation6], 36864
    $region77: #{tpu_custom_call.1} parent=1 // pred_fallthru
      _
    // Predicated region
    $region78: #{tpu_custom_call.1} parent=1 // pred_check
      _
    $region79: #{tpu_custom_call.1} parent=1 // pred_check_branch
      %177 = sbr.rel (0) target = $region81
    $region80: #{tpu_custom_call.1} parent=1 // pred_region
      %178 = dma.done [#allocation9], 16
    $region81: #{tpu_custom_call.1} parent=1 // pred_fallthru
      _
    // Predicated region
    $region82: #{tpu_custom_call.1} parent=1 // pred_check
      _
    $region83: #{tpu_custom_call.1} parent=1 // pred_check_branch
      %180 = sbr.rel (0) target = $region85
    $region84: #{tpu_custom_call.1} parent=1 // pred_region
      %181 = dma.done [#allocation9], 16
    $region85: #{tpu_custom_call.1} parent=1 // pred_fallthru
      _
    // Predicated region
    $region86: #{tpu_custom_call.1} parent=1 // pred_check
      _
    $region87: #{tpu_custom_call.1} parent=1 // pred_check_branch
      %183 = sbr.rel (0) target = $region89
    $region88: #{tpu_custom_call.1} parent=1 // pred_region
      %184 = dma.done [#allocation12], 16
    $region89: #{tpu_custom_call.1} parent=1 // pred_fallthru
      _
    // Predicated region
    $region90: #{tpu_custom_call.1} parent=1 // pred_check
      _
    $region91: #{tpu_custom_call.1} parent=1 // pred_check_branch
      %186 = sbr.rel (0) target = $region93
    $region92: #{tpu_custom_call.1} parent=1 // pred_region
      %187 = dma.done [#allocation12], 16
    $region93: #{tpu_custom_call.1} parent=1 // pred_fallthru
      _
    // Predicated region
    $region94: #{tpu_custom_call.1} parent=1 // pred_check
      _
    $region95: #{tpu_custom_call.1} parent=1 // pred_check_branch
      %189 = sbr.rel (0) target = $region97
    $region96: #{tpu_custom_call.1} parent=1 // pred_region
      %190 = dma.done [#allocation15], 16
    $region97: #{tpu_custom_call.1} parent=1 // pred_fallthru
      _
    // Predicated region
    $region98: #{tpu_custom_call.1} parent=1 // pred_check
      _
    $region99: #{tpu_custom_call.1} parent=1 // pred_check_branch
      %192 = sbr.rel (0) target = $region101
    $region100: #{tpu_custom_call.1} parent=1 // pred_region
      %193 = dma.done [#allocation15], 16
    $region101: #{tpu_custom_call.1} parent=1 // pred_fallthru
      _
    // Predicated region
    $region102: #{tpu_custom_call.1} parent=1 // pred_check
      _
    $region103: #{tpu_custom_call.1} parent=1 // pred_check_branch
      %195 = sbr.rel (0) target = $region105
    $region104: #{tpu_custom_call.1} parent=1 // pred_region
      %196 = dma.done [#allocation18], 4608
    $region105: #{tpu_custom_call.1} parent=1 // pred_fallthru
      _
    // Predicated region
    $region106: #{tpu_custom_call.1} parent=1 // pred_check
      _
    $region107: #{tpu_custom_call.1} parent=1 // pred_check_branch
      %198 = sbr.rel (0) target = $region109
    $region108: #{tpu_custom_call.1} parent=1 // pred_region
      %199 = dma.done [#allocation18], 16
    $region109: #{tpu_custom_call.1} parent=1 // pred_fallthru
      _
    // Predicated region
    $region110: #{tpu_custom_call.1} parent=1 // pred_check
      _
    $region111: #{tpu_custom_call.1} parent=1 // pred_check_branch
      %201 = sbr.rel (0) target = $region113
    $region112: #{tpu_custom_call.1} parent=1 // pred_region
      %202 = dma.done [#allocation21], 16
    $region113: #{tpu_custom_call.1} parent=1 // pred_fallthru
      _
    // Predicated region
    $region114: #{tpu_custom_call.1} parent=1 // pred_check
      _
    $region115: #{tpu_custom_call.1} parent=1 // pred_check_branch
      %204 = sbr.rel (0) target = $region117
    $region116: #{tpu_custom_call.1} parent=1 // pred_region
      %205 = dma.done [#allocation21], 16
    $region117: #{tpu_custom_call.1} parent=1 // pred_fallthru
      _
    // Predicated region
    $region118: #{tpu_custom_call.1} parent=1 // pred_check
      _
    $region119: #{tpu_custom_call.1} parent=1 // pred_check_branch
      %207 = sbr.rel (0) target = $region121
    $region120: #{tpu_custom_call.1} parent=1 // pred_region
      %208 = dma.done [#allocation24], 16
    $region121: #{tpu_custom_call.1} parent=1 // pred_fallthru
      _
    %v210 = vld [vmem:[#allocation5] sm:$0xf]
    %v211 = vld [vmem:[#allocation5 + $0x4] sm:$0xf]
    %v212 = vld [vmem:[#allocation5 + $0x8] sm:$0xf]
    %v213 = vld [vmem:[#allocation5 + $0xc] sm:$0xf]
    %v214 = vld [vmem:[#allocation5 + $0x10] sm:$0xf]
    %v215 = vld [vmem:[#allocation5 + $0x14] sm:$0xf]
    %v216 = vld [vmem:[#allocation5 + $0x18] sm:$0xf]
    %v217 = vld [vmem:[#allocation5 + $0x1c] sm:$0xf]
    %v218 = vld [vmem:[#allocation5 + $0x20] sm:$0xf]
    %v219 = vld [vmem:[#allocation5 + $0x24] sm:$0xf]
    %v220 = vld [vmem:[#allocation5 + $0x28] sm:$0xf]
    %v221 = vld [vmem:[#allocation5 + $0x2c] sm:$0xf]
    %v222 = vld [vmem:[#allocation5 + $0x30] sm:$0xf]
    %v223 = vld [vmem:[#allocation5 + $0x34] sm:$0xf]
    %v224 = vld [vmem:[#allocation5 + $0x38] sm:$0xf]
    %v225 = vld [vmem:[#allocation5 + $0x3c] sm:$0xf]
    %v226 = vld [vmem:[#allocation5 + $0x40] sm:$0xf]
    %v227 = vld [vmem:[#allocation5 + $0x44] sm:$0xf]
    %v228 = vld [vmem:[#allocation5 + $0x48] sm:$0xf]
    %v229 = vld [vmem:[#allocation5 + $0x4c] sm:$0xf]
    %v230 = vld [vmem:[#allocation5 + $0x50] sm:$0xf]
    %v231 = vld [vmem:[#allocation5 + $0x54] sm:$0xf]
    %v232 = vld [vmem:[#allocation5 + $0x58] sm:$0xf]
    %v233 = vld [vmem:[#allocation5 + $0x60] sm:$0xf]
    %v234 = vld [vmem:[#allocation5 + $0x64] sm:$0xf]
    %v235 = vld [vmem:[#allocation5 + $0x68] sm:$0xf]
    %v236 = vld [vmem:[#allocation5 + $0x6c] sm:$0xf]
    %v237 = vld [vmem:[#allocation5 + $0x70] sm:$0xf]
    %v238 = vld [vmem:[#allocation5 + $0x74] sm:$0xf]
    %v239 = vld [vmem:[#allocation5 + $0x78] sm:$0xf]
    %v240 = vld [vmem:[#allocation5 + $0x7c] sm:$0xf]
    %v241 = vld [vmem:[#allocation5 + $0x80] sm:$0xf]
    %v242 = vld [vmem:[#allocation5 + $0x84] sm:$0xf]
    %v243 = vld [vmem:[#allocation5 + $0x88] sm:$0xf]
    %v244 = vld [vmem:[#allocation5 + $0x8c] sm:$0xf]
    %v245 = vld [vmem:[#allocation5 + $0x90] sm:$0xf]
    %v246 = vld [vmem:[#allocation5 + $0x94] sm:$0xf]
    %v247 = vld [vmem:[#allocation5 + $0x98] sm:$0xf]
    %v248 = vld [vmem:[#allocation5 + $0x9c] sm:$0xf]
    %v249 = vld [vmem:[#allocation5 + $0xa0] sm:$0xf]
    %v250 = vld [vmem:[#allocation5 + $0xa4] sm:$0xf]
    %v251 = vld [vmem:[#allocation5 + $0xa8] sm:$0xf]
    %v252 = vld [vmem:[#allocation5 + $0xac] sm:$0xf]
    %v253 = vld [vmem:[#allocation5 + $0xb0] sm:$0xf]
    %v254 = vld [vmem:[#allocation5 + $0xb4] sm:$0xf]
    %v255 = vld [vmem:[#allocation5 + $0xb8] sm:$0xf]
    %v256 = vld [vmem:[#allocation5 + $0xc0] sm:$0xf]
    %v257 = vld [vmem:[#allocation5 + $0xc4] sm:$0xf]
    %v258 = vld [vmem:[#allocation5 + $0xc8] sm:$0xf]
    %v259 = vld [vmem:[#allocation5 + $0xcc] sm:$0xf]
    %v260 = vld [vmem:[#allocation5 + $0xd0] sm:$0xf]
    %v261 = vld [vmem:[#allocation5 + $0xd4] sm:$0xf]
    %v262 = vld [vmem:[#allocation5 + $0xd8] sm:$0xf]
    %v263 = vld [vmem:[#allocation5 + $0xdc] sm:$0xf]
    %v264 = vld [vmem:[#allocation5 + $0xe0] sm:$0xf]
    %v265 = vld [vmem:[#allocation5 + $0xe4] sm:$0xf]
    %v266 = vld [vmem:[#allocation5 + $0xe8] sm:$0xf]
    %v267 = vld [vmem:[#allocation5 + $0xec] sm:$0xf]
    %v268 = vld [vmem:[#allocation5 + $0xf0] sm:$0xf]
    %v269 = vld [vmem:[#allocation5 + $0xf4] sm:$0xf]
    %v270 = vld [vmem:[#allocation5 + $0xf8] sm:$0xf]
    %v271 = vld [vmem:[#allocation5 + $0xfc] sm:$0xf]
    %v272 = vld [vmem:[#allocation5 + $0x100] sm:$0xf]
    %v273 = vld [vmem:[#allocation5 + $0x104] sm:$0xf]
    %v274 = vld [vmem:[#allocation5 + $0x108] sm:$0xf]
    %v275 = vld [vmem:[#allocation5 + $0x10c] sm:$0xf]
    %v276 = vld [vmem:[#allocation5 + $0x110] sm:$0xf]
    %v277 = vld [vmem:[#allocation5 + $0x114] sm:$0xf]
    %v278 = vld [vmem:[#allocation5 + $0x118] sm:$0xf]
    %v279 = vld [vmem:[#allocation5 + $0x120] sm:$0xf]
    %v280 = vld [vmem:[#allocation5 + $0x124] sm:$0xf]
    %v281 = vld [vmem:[#allocation5 + $0x128] sm:$0xf]
    %v282 = vld [vmem:[#allocation5 + $0x12c] sm:$0xf]
    %v283 = vld [vmem:[#allocation5 + $0x130] sm:$0xf]
    %v284 = vld [vmem:[#allocation5 + $0x134] sm:$0xf]
    %v285 = vld [vmem:[#allocation5 + $0x138] sm:$0xf]
    %v286 = vld [vmem:[#allocation5 + $0x13c] sm:$0xf]
    %v287 = vld [vmem:[#allocation5 + $0x140] sm:$0xf]
    %v288 = vld [vmem:[#allocation5 + $0x144] sm:$0xf]
    %v289 = vld [vmem:[#allocation5 + $0x148] sm:$0xf]
    %v290 = vld [vmem:[#allocation5 + $0x14c] sm:$0xf]
    %v291 = vld [vmem:[#allocation5 + $0x150] sm:$0xf]
    %v292 = vld [vmem:[#allocation5 + $0x154] sm:$0xf]
    %v293 = vld [vmem:[#allocation5 + $0x158] sm:$0xf]
    %v294 = vld [vmem:[#allocation5 + $0x15c] sm:$0xf]
    %v295 = vld [vmem:[#allocation5 + $0x160] sm:$0xf]
    %v296 = vld [vmem:[#allocation5 + $0x164] sm:$0xf]
    %v297 = vld [vmem:[#allocation5 + $0x168] sm:$0xf]
    %v298 = vld [vmem:[#allocation5 + $0x16c] sm:$0xf]
    %v299 = vld [vmem:[#allocation5 + $0x170] sm:$0xf]
    %v300 = vld [vmem:[#allocation5 + $0x174] sm:$0xf]
    %v301 = vld [vmem:[#allocation5 + $0x178] sm:$0xf]
    %v302 = vld [vmem:[#allocation5 + $0x180] sm:$0xf]
    %v303 = vld [vmem:[#allocation5 + $0x184] sm:$0xf]
    %v304 = vld [vmem:[#allocation5 + $0x188] sm:$0xf]
    %v305 = vld [vmem:[#allocation5 + $0x18c] sm:$0xf]
    %v306 = vld [vmem:[#allocation5 + $0x190] sm:$0xf]
    %v307 = vld [vmem:[#allocation5 + $0x194] sm:$0xf]
    %v308 = vld [vmem:[#allocation5 + $0x198] sm:$0xf]
    %v309 = vld [vmem:[#allocation5 + $0x19c] sm:$0xf]
    %v310 = vld [vmem:[#allocation5 + $0x1a0] sm:$0xf]
    %v311 = vld [vmem:[#allocation5 + $0x1a4] sm:$0xf]
    %v312 = vld [vmem:[#allocation5 + $0x1a8] sm:$0xf]
    %v313 = vld [vmem:[#allocation5 + $0x1ac] sm:$0xf]
    %v314 = vld [vmem:[#allocation5 + $0x1b0] sm:$0xf]
    %v315 = vld [vmem:[#allocation5 + $0x1b4] sm:$0xf]
    %v316 = vld [vmem:[#allocation5 + $0x1b8] sm:$0xf]
    %v317 = vld [vmem:[#allocation5 + $0x1bc] sm:$0xf]
    %v318 = vld [vmem:[#allocation5 + $0x1c0] sm:$0xf]
    %v319 = vld [vmem:[#allocation5 + $0x1c4] sm:$0xf]
    %v320 = vld [vmem:[#allocation5 + $0x1c8] sm:$0xf]
    %v321 = vld [vmem:[#allocation5 + $0x1cc] sm:$0xf]
    %v322 = vld [vmem:[#allocation5 + $0x1d0] sm:$0xf]
    %v323 = vld [vmem:[#allocation5 + $0x1d4] sm:$0xf]
    %v324 = vld [vmem:[#allocation5 + $0x1d8] sm:$0xf]
    %v325 = vld [vmem:[#allocation5 + $0x1e0] sm:$0xf]
    %v326 = vld [vmem:[#allocation5 + $0x1e4] sm:$0xf]
    %v327 = vld [vmem:[#allocation5 + $0x1e8] sm:$0xf]
    %v328 = vld [vmem:[#allocation5 + $0x1ec] sm:$0xf]
    %v329 = vld [vmem:[#allocation5 + $0x1f0] sm:$0xf]
    %v330 = vld [vmem:[#allocation5 + $0x1f4] sm:$0xf]
    %v331 = vld [vmem:[#allocation5 + $0x1f8] sm:$0xf]
    %v332 = vld [vmem:[#allocation5 + $0x1fc] sm:$0xf]
    %v333 = vld [vmem:[#allocation5 + $0x200] sm:$0xf]
    %v334 = vld [vmem:[#allocation5 + $0x204] sm:$0xf]
    %v335 = vld [vmem:[#allocation5 + $0x208] sm:$0xf]
    %v336 = vld [vmem:[#allocation5 + $0x20c] sm:$0xf]
    %v337 = vld [vmem:[#allocation5 + $0x210] sm:$0xf]
    %v338 = vld [vmem:[#allocation5 + $0x214] sm:$0xf]
    %v339 = vld [vmem:[#allocation5 + $0x218] sm:$0xf]
    %v340 = vld [vmem:[#allocation5 + $0x21c] sm:$0xf]
    %v341 = vld [vmem:[#allocation5 + $0x220] sm:$0xf]
    %v342 = vld [vmem:[#allocation5 + $0x224] sm:$0xf]
    %v343 = vld [vmem:[#allocation5 + $0x228] sm:$0xf]
    %v344 = vld [vmem:[#allocation5 + $0x22c] sm:$0xf]
    %v345 = vld [vmem:[#allocation5 + $0x230] sm:$0xf]
    %v346 = vld [vmem:[#allocation5 + $0x234] sm:$0xf]
    %v347 = vld [vmem:[#allocation5 + $0x238] sm:$0xf]
    %v348 = vld [vmem:[#allocation5 + $0x240] sm:$0xf]
    %v349 = vld [vmem:[#allocation5 + $0x244] sm:$0xf]
    %v350 = vld [vmem:[#allocation5 + $0x248] sm:$0xf]
    %v351 = vld [vmem:[#allocation5 + $0x24c] sm:$0xf]
    %v352 = vld [vmem:[#allocation5 + $0x250] sm:$0xf]
    %v353 = vld [vmem:[#allocation5 + $0x254] sm:$0xf]
    %v354 = vld [vmem:[#allocation5 + $0x258] sm:$0xf]
    %v355 = vld [vmem:[#allocation5 + $0x25c] sm:$0xf]
    %v356 = vld [vmem:[#allocation5 + $0x260] sm:$0xf]
    %v357 = vld [vmem:[#allocation5 + $0x264] sm:$0xf]
    %v358 = vld [vmem:[#allocation5 + $0x268] sm:$0xf]
    %v359 = vld [vmem:[#allocation5 + $0x26c] sm:$0xf]
    %v360 = vld [vmem:[#allocation5 + $0x270] sm:$0xf]
    %v361 = vld [vmem:[#allocation5 + $0x274] sm:$0xf]
    %v362 = vld [vmem:[#allocation5 + $0x278] sm:$0xf]
    %v363 = vld [vmem:[#allocation5 + $0x27c] sm:$0xf]
    %v364 = vld [vmem:[#allocation5 + $0x280] sm:$0xf]
    %v365 = vld [vmem:[#allocation5 + $0x284] sm:$0xf]
    %v366 = vld [vmem:[#allocation5 + $0x288] sm:$0xf]
    %v367 = vld [vmem:[#allocation5 + $0x28c] sm:$0xf]
    %v368 = vld [vmem:[#allocation5 + $0x290] sm:$0xf]
    %v369 = vld [vmem:[#allocation5 + $0x294] sm:$0xf]
    %v370 = vld [vmem:[#allocation5 + $0x298] sm:$0xf]
    %v371 = vld [vmem:[#allocation5 + $0x2a0] sm:$0xf]
    %v372 = vld [vmem:[#allocation5 + $0x2a4] sm:$0xf]
    %v373 = vld [vmem:[#allocation5 + $0x2a8] sm:$0xf]
    %v374 = vld [vmem:[#allocation5 + $0x2ac] sm:$0xf]
    %v375 = vld [vmem:[#allocation5 + $0x2b0] sm:$0xf]
    %v376 = vld [vmem:[#allocation5 + $0x2b4] sm:$0xf]
    %v377 = vld [vmem:[#allocation5 + $0x2b8] sm:$0xf]
    %v378 = vld [vmem:[#allocation5 + $0x2bc] sm:$0xf]
    %v379 = vld [vmem:[#allocation5 + $0x2c0] sm:$0xf]
    %v380 = vld [vmem:[#allocation5 + $0x2c4] sm:$0xf]
    %v381 = vld [vmem:[#allocation5 + $0x2c8] sm:$0xf]
    %v382 = vld [vmem:[#allocation5 + $0x2cc] sm:$0xf]
    %v383 = vld [vmem:[#allocation5 + $0x2d0] sm:$0xf]
    %v384 = vld [vmem:[#allocation5 + $0x2d4] sm:$0xf]
    %v385 = vld [vmem:[#allocation5 + $0x2d8] sm:$0xf]
    %v386 = vld [vmem:[#allocation5 + $0x2dc] sm:$0xf]
    %v387 = vld [vmem:[#allocation5 + $0x2e0] sm:$0xf]
    %v388 = vld [vmem:[#allocation5 + $0x2e4] sm:$0xf]
    %v389 = vld [vmem:[#allocation5 + $0x2e8] sm:$0xf]
    %v390 = vld [vmem:[#allocation5 + $0x2ec] sm:$0xf]
    %v391 = vld [vmem:[#allocation5 + $0x2f0] sm:$0xf]
    %v392 = vld [vmem:[#allocation5 + $0x2f4] sm:$0xf]
    %v393 = vld [vmem:[#allocation5 + $0x2f8] sm:$0xf]
    %v394 = vld [vmem:[#allocation5 + $0x300] sm:$0xf]
    %v395 = vld [vmem:[#allocation5 + $0x304] sm:$0xf]
    %v396 = vld [vmem:[#allocation5 + $0x308] sm:$0xf]
    %v397 = vld [vmem:[#allocation5 + $0x30c] sm:$0xf]
    %v398 = vld [vmem:[#allocation5 + $0x310] sm:$0xf]
    %v399 = vld [vmem:[#allocation5 + $0x314] sm:$0xf]
    %v400 = vld [vmem:[#allocation5 + $0x318] sm:$0xf]
    %v401 = vld [vmem:[#allocation5 + $0x31c] sm:$0xf]
    %v402 = vld [vmem:[#allocation5 + $0x320] sm:$0xf]
    %v403 = vld [vmem:[#allocation5 + $0x324] sm:$0xf]
    %v404 = vld [vmem:[#allocation5 + $0x328] sm:$0xf]
    %v405 = vld [vmem:[#allocation5 + $0x32c] sm:$0xf]
    %v406 = vld [vmem:[#allocation5 + $0x330] sm:$0xf]
    %v407 = vld [vmem:[#allocation5 + $0x334] sm:$0xf]
    %v408 = vld [vmem:[#allocation5 + $0x338] sm:$0xf]
    %v409 = vld [vmem:[#allocation5 + $0x33c] sm:$0xf]
    %v410 = vld [vmem:[#allocation5 + $0x340] sm:$0xf]
    %v411 = vld [vmem:[#allocation5 + $0x344] sm:$0xf]
    %v412 = vld [vmem:[#allocation5 + $0x348] sm:$0xf]
    %v413 = vld [vmem:[#allocation5 + $0x34c] sm:$0xf]
    %v414 = vld [vmem:[#allocation5 + $0x350] sm:$0xf]
    %v415 = vld [vmem:[#allocation5 + $0x354] sm:$0xf]
    %v416 = vld [vmem:[#allocation5 + $0x358] sm:$0xf]
    %v417 = vld [vmem:[#allocation5 + $0x360] sm:$0xf]
    %v418 = vld [vmem:[#allocation5 + $0x364] sm:$0xf]
    %v419 = vld [vmem:[#allocation5 + $0x368] sm:$0xf]
    %v420 = vld [vmem:[#allocation5 + $0x36c] sm:$0xf]
    %v421 = vld [vmem:[#allocation5 + $0x370] sm:$0xf]
    %v422 = vld [vmem:[#allocation5 + $0x374] sm:$0xf]
    %v423 = vld [vmem:[#allocation5 + $0x378] sm:$0xf]
    %v424 = vld [vmem:[#allocation5 + $0x37c] sm:$0xf]
    %v425 = vld [vmem:[#allocation5 + $0x380] sm:$0xf]
    %v426 = vld [vmem:[#allocation5 + $0x384] sm:$0xf]
    %v427 = vld [vmem:[#allocation5 + $0x388] sm:$0xf]
    %v428 = vld [vmem:[#allocation5 + $0x38c] sm:$0xf]
    %v429 = vld [vmem:[#allocation5 + $0x390] sm:$0xf]
    %v430 = vld [vmem:[#allocation5 + $0x394] sm:$0xf]
    %v431 = vld [vmem:[#allocation5 + $0x398] sm:$0xf]
    %v432 = vld [vmem:[#allocation5 + $0x39c] sm:$0xf]
    %v433 = vld [vmem:[#allocation5 + $0x3a0] sm:$0xf]
    %v434 = vld [vmem:[#allocation5 + $0x3a4] sm:$0xf]
    %v435 = vld [vmem:[#allocation5 + $0x3a8] sm:$0xf]
    %v436 = vld [vmem:[#allocation5 + $0x3ac] sm:$0xf]
    %v437 = vld [vmem:[#allocation5 + $0x3b0] sm:$0xf]
    %v438 = vld [vmem:[#allocation5 + $0x3b4] sm:$0xf]
    %v439 = vld [vmem:[#allocation5 + $0x3b8] sm:$0xf]
    %v440 = vld [vmem:[#allocation5 + $0x3c0] sm:$0xf]
    %v441 = vld [vmem:[#allocation5 + $0x3c4] sm:$0xf]
    %v442 = vld [vmem:[#allocation5 + $0x3c8] sm:$0xf]
    %v443 = vld [vmem:[#allocation5 + $0x3cc] sm:$0xf]
    %v444 = vld [vmem:[#allocation5 + $0x3d0] sm:$0xf]
    %v445 = vld [vmem:[#allocation5 + $0x3d4] sm:$0xf]
    %v446 = vld [vmem:[#allocation5 + $0x3d8] sm:$0xf]
    %v447 = vld [vmem:[#allocation5 + $0x3dc] sm:$0xf]
    %v448 = vld [vmem:[#allocation5 + $0x3e0] sm:$0xf]
    %v449 = vld [vmem:[#allocation5 + $0x3e4] sm:$0xf]
    %v450 = vld [vmem:[#allocation5 + $0x3e8] sm:$0xf]
    %v451 = vld [vmem:[#allocation5 + $0x3ec] sm:$0xf]
    %v452 = vld [vmem:[#allocation5 + $0x3f0] sm:$0xf]
    %v453 = vld [vmem:[#allocation5 + $0x3f4] sm:$0xf]
    %v454 = vld [vmem:[#allocation5 + $0x3f8] sm:$0xf]
    %v455 = vld [vmem:[#allocation5 + $0x3fc] sm:$0xf]
    %v456 = vld [vmem:[#allocation5 + $0x400] sm:$0xf]
    %v457 = vld [vmem:[#allocation5 + $0x404] sm:$0xf]
    %v458 = vld [vmem:[#allocation5 + $0x408] sm:$0xf]
    %v459 = vld [vmem:[#allocation5 + $0x40c] sm:$0xf]
    %v460 = vld [vmem:[#allocation5 + $0x410] sm:$0xf]
    %v461 = vld [vmem:[#allocation5 + $0x414] sm:$0xf]
    %v462 = vld [vmem:[#allocation5 + $0x418] sm:$0xf]
    %v463 = vld [vmem:[#allocation5 + $0x420] sm:$0xf]
    %v464 = vld [vmem:[#allocation5 + $0x424] sm:$0xf]
    %v465 = vld [vmem:[#allocation5 + $0x428] sm:$0xf]
    %v466 = vld [vmem:[#allocation5 + $0x42c] sm:$0xf]
    %v467 = vld [vmem:[#allocation5 + $0x430] sm:$0xf]
    %v468 = vld [vmem:[#allocation5 + $0x434] sm:$0xf]
    %v469 = vld [vmem:[#allocation5 + $0x438] sm:$0xf]
    %v470 = vld [vmem:[#allocation5 + $0x43c] sm:$0xf]
    %v471 = vld [vmem:[#allocation5 + $0x440] sm:$0xf]
    %v472 = vld [vmem:[#allocation5 + $0x444] sm:$0xf]
    %v473 = vld [vmem:[#allocation5 + $0x448] sm:$0xf]
    %v474 = vld [vmem:[#allocation5 + $0x44c] sm:$0xf]
    %v475 = vld [vmem:[#allocation5 + $0x450] sm:$0xf]
    %v476 = vld [vmem:[#allocation5 + $0x454] sm:$0xf]
    %v477 = vld [vmem:[#allocation5 + $0x458] sm:$0xf]
    %v478 = vld [vmem:[#allocation5 + $0x45c] sm:$0xf]
    %v479 = vld [vmem:[#allocation5 + $0x460] sm:$0xf]
    %v480 = vld [vmem:[#allocation5 + $0x464] sm:$0xf]
    %v481 = vld [vmem:[#allocation5 + $0x468] sm:$0xf]
    %v482 = vld [vmem:[#allocation5 + $0x46c] sm:$0xf]
    %v483 = vld [vmem:[#allocation5 + $0x470] sm:$0xf]
    %v484 = vld [vmem:[#allocation5 + $0x474] sm:$0xf]
    %v485 = vld [vmem:[#allocation5 + $0x478] sm:$0xf]
    %v486 = vld [vmem:[#allocation5 + $0x480] sm:$0xf]
    %v487 = vld [vmem:[#allocation5 + $0x484] sm:$0xf]
    %v488 = vld [vmem:[#allocation5 + $0x488] sm:$0xf]
    %v489 = vld [vmem:[#allocation5 + $0x48c] sm:$0xf]
    %v490 = vld [vmem:[#allocation5 + $0x490] sm:$0xf]
    %v491 = vld [vmem:[#allocation5 + $0x494] sm:$0xf]
    %v492 = vld [vmem:[#allocation5 + $0x498] sm:$0xf]
    %v493 = vld [vmem:[#allocation5 + $0x49c] sm:$0xf]
    %v494 = vld [vmem:[#allocation5 + $0x4a0] sm:$0xf]
    %v495 = vld [vmem:[#allocation5 + $0x4a4] sm:$0xf]
    %v496 = vld [vmem:[#allocation5 + $0x4a8] sm:$0xf]
    %v497 = vld [vmem:[#allocation5 + $0x4ac] sm:$0xf]
    %v498 = vld [vmem:[#allocation5 + $0x4b0] sm:$0xf]
    %v499 = vld [vmem:[#allocation5 + $0x4b4] sm:$0xf]
    %v500 = vld [vmem:[#allocation5 + $0x4b8] sm:$0xf]
    %v501 = vld [vmem:[#allocation5 + $0x4bc] sm:$0xf]
    %v502 = vld [vmem:[#allocation5 + $0x4c0] sm:$0xf]
    %v503 = vld [vmem:[#allocation5 + $0x4c4] sm:$0xf]
    %v504 = vld [vmem:[#allocation5 + $0x4c8] sm:$0xf]
    %v505 = vld [vmem:[#allocation5 + $0x4cc] sm:$0xf]
    %v506 = vld [vmem:[#allocation5 + $0x4d0] sm:$0xf]
    %v507 = vld [vmem:[#allocation5 + $0x4d4] sm:$0xf]
    %v508 = vld [vmem:[#allocation5 + $0x4d8] sm:$0xf]
    %v509 = vld [vmem:[#allocation5 + $0x4e0] sm:$0xf]
    %v510 = vld [vmem:[#allocation5 + $0x4e4] sm:$0xf]
    %v511 = vld [vmem:[#allocation5 + $0x4e8] sm:$0xf]
    %v512 = vld [vmem:[#allocation5 + $0x4ec] sm:$0xf]
    %v513 = vld [vmem:[#allocation5 + $0x4f0] sm:$0xf]
    %v514 = vld [vmem:[#allocation5 + $0x4f4] sm:$0xf]
    %v515 = vld [vmem:[#allocation5 + $0x4f8] sm:$0xf]
    %v516 = vld [vmem:[#allocation5 + $0x4fc] sm:$0xf]
    %v517 = vld [vmem:[#allocation5 + $0x500] sm:$0xf]
    %v518 = vld [vmem:[#allocation5 + $0x504] sm:$0xf]
    %v519 = vld [vmem:[#allocation5 + $0x508] sm:$0xf]
    %v520 = vld [vmem:[#allocation5 + $0x50c] sm:$0xf]
    %v521 = vld [vmem:[#allocation5 + $0x510] sm:$0xf]
    %v522 = vld [vmem:[#allocation5 + $0x514] sm:$0xf]
    %v523 = vld [vmem:[#allocation5 + $0x518] sm:$0xf]
    %v524 = vld [vmem:[#allocation5 + $0x51c] sm:$0xf]
    %v525 = vld [vmem:[#allocation5 + $0x520] sm:$0xf]
    %v526 = vld [vmem:[#allocation5 + $0x524] sm:$0xf]
    %v527 = vld [vmem:[#allocation5 + $0x528] sm:$0xf]
    %v528 = vld [vmem:[#allocation5 + $0x52c] sm:$0xf]
    %v529 = vld [vmem:[#allocation5 + $0x530] sm:$0xf]
    %v530 = vld [vmem:[#allocation5 + $0x534] sm:$0xf]
    %v531 = vld [vmem:[#allocation5 + $0x538] sm:$0xf]
    %v532 = vld [vmem:[#allocation5 + $0x540] sm:$0xf]
    %v533 = vld [vmem:[#allocation5 + $0x544] sm:$0xf]
    %v534 = vld [vmem:[#allocation5 + $0x548] sm:$0xf]
    %v535 = vld [vmem:[#allocation5 + $0x54c] sm:$0xf]
    %v536 = vld [vmem:[#allocation5 + $0x550] sm:$0xf]
    %v537 = vld [vmem:[#allocation5 + $0x554] sm:$0xf]
    %v538 = vld [vmem:[#allocation5 + $0x558] sm:$0xf]
    %v539 = vld [vmem:[#allocation5 + $0x55c] sm:$0xf]
    %v540 = vld [vmem:[#allocation5 + $0x560] sm:$0xf]
    %v541 = vld [vmem:[#allocation5 + $0x564] sm:$0xf]
    %v542 = vld [vmem:[#allocation5 + $0x568] sm:$0xf]
    %v543 = vld [vmem:[#allocation5 + $0x56c] sm:$0xf]
    %v544 = vld [vmem:[#allocation5 + $0x570] sm:$0xf]
    %v545 = vld [vmem:[#allocation5 + $0x574] sm:$0xf]
    %v546 = vld [vmem:[#allocation5 + $0x578] sm:$0xf]
    %v547 = vld [vmem:[#allocation5 + $0x57c] sm:$0xf]
    %v548 = vld [vmem:[#allocation5 + $0x580] sm:$0xf]
    %v549 = vld [vmem:[#allocation5 + $0x584] sm:$0xf]
    %v550 = vld [vmem:[#allocation5 + $0x588] sm:$0xf]
    %v551 = vld [vmem:[#allocation5 + $0x58c] sm:$0xf]
    %v552 = vld [vmem:[#allocation5 + $0x590] sm:$0xf]
    %v553 = vld [vmem:[#allocation5 + $0x594] sm:$0xf]
    %v554 = vld [vmem:[#allocation5 + $0x598] sm:$0xf]
    %v555 = vld [vmem:[#allocation5 + $0x5a0] sm:$0xf]
    %v556 = vld [vmem:[#allocation5 + $0x5a4] sm:$0xf]
    %v557 = vld [vmem:[#allocation5 + $0x5a8] sm:$0xf]
    %v558 = vld [vmem:[#allocation5 + $0x5ac] sm:$0xf]
    %v559 = vld [vmem:[#allocation5 + $0x5b0] sm:$0xf]
    %v560 = vld [vmem:[#allocation5 + $0x5b4] sm:$0xf]
    %v561 = vld [vmem:[#allocation5 + $0x5b8] sm:$0xf]
    %v562 = vld [vmem:[#allocation5 + $0x5bc] sm:$0xf]
    %v563 = vld [vmem:[#allocation5 + $0x5c0] sm:$0xf]
    %v564 = vld [vmem:[#allocation5 + $0x5c4] sm:$0xf]
    %v565 = vld [vmem:[#allocation5 + $0x5c8] sm:$0xf]
    %v566 = vld [vmem:[#allocation5 + $0x5cc] sm:$0xf]
    %v567 = vld [vmem:[#allocation5 + $0x5d0] sm:$0xf]
    %v568 = vld [vmem:[#allocation5 + $0x5d4] sm:$0xf]
    %v569 = vld [vmem:[#allocation5 + $0x5d8] sm:$0xf]
    %v570 = vld [vmem:[#allocation5 + $0x5dc] sm:$0xf]
    %v571 = vld [vmem:[#allocation5 + $0x5e0] sm:$0xf]
    %v572 = vld [vmem:[#allocation5 + $0x5e4] sm:$0xf]
    %v573 = vld [vmem:[#allocation5 + $0x5e8] sm:$0xf]
    %v574 = vld [vmem:[#allocation5 + $0x5ec] sm:$0xf]
    %v575 = vld [vmem:[#allocation5 + $0x5f0] sm:$0xf]
    %v576 = vld [vmem:[#allocation5 + $0x5f4] sm:$0xf]
    %v577 = vld [vmem:[#allocation5 + $0x5f8] sm:$0xf]
    %v578 = vld [vmem:[#allocation5 + $0x600] sm:$0xf]
    %v579 = vld [vmem:[#allocation5 + $0x604] sm:$0xf]
    %v580 = vld [vmem:[#allocation5 + $0x608] sm:$0xf]
    %v581 = vld [vmem:[#allocation5 + $0x60c] sm:$0xf]
    %v582 = vld [vmem:[#allocation5 + $0x610] sm:$0xf]
    %v583 = vld [vmem:[#allocation5 + $0x614] sm:$0xf]
    %v584 = vld [vmem:[#allocation5 + $0x618] sm:$0xf]
    %v585 = vld [vmem:[#allocation5 + $0x61c] sm:$0xf]
    %v586 = vld [vmem:[#allocation5 + $0x620] sm:$0xf]
    %v587 = vld [vmem:[#allocation5 + $0x624] sm:$0xf]
    %v588 = vld [vmem:[#allocation5 + $0x628] sm:$0xf]
    %v589 = vld [vmem:[#allocation5 + $0x62c] sm:$0xf]
    %v590 = vld [vmem:[#allocation5 + $0x630] sm:$0xf]
    %v591 = vld [vmem:[#allocation5 + $0x634] sm:$0xf]
    %v592 = vld [vmem:[#allocation5 + $0x638] sm:$0xf]
    %v593 = vld [vmem:[#allocation5 + $0x63c] sm:$0xf]
    %v594 = vld [vmem:[#allocation5 + $0x640] sm:$0xf]
    %v595 = vld [vmem:[#allocation5 + $0x644] sm:$0xf]
    %v596 = vld [vmem:[#allocation5 + $0x648] sm:$0xf]
    %v597 = vld [vmem:[#allocation5 + $0x64c] sm:$0xf]
    %v598 = vld [vmem:[#allocation5 + $0x650] sm:$0xf]
    %v599 = vld [vmem:[#allocation5 + $0x654] sm:$0xf]
    %v600 = vld [vmem:[#allocation5 + $0x658] sm:$0xf]
    %v601 = vld [vmem:[#allocation5 + $0x660] sm:$0xf]
    %v602 = vld [vmem:[#allocation5 + $0x664] sm:$0xf]
    %v603 = vld [vmem:[#allocation5 + $0x668] sm:$0xf]
    %v604 = vld [vmem:[#allocation5 + $0x66c] sm:$0xf]
    %v605 = vld [vmem:[#allocation5 + $0x670] sm:$0xf]
    %v606 = vld [vmem:[#allocation5 + $0x674] sm:$0xf]
    %v607 = vld [vmem:[#allocation5 + $0x678] sm:$0xf]
    %v608 = vld [vmem:[#allocation5 + $0x67c] sm:$0xf]
    %v609 = vld [vmem:[#allocation5 + $0x680] sm:$0xf]
    %v610 = vld [vmem:[#allocation5 + $0x684] sm:$0xf]
    %v611 = vld [vmem:[#allocation5 + $0x688] sm:$0xf]
    %v612 = vld [vmem:[#allocation5 + $0x68c] sm:$0xf]
    %v613 = vld [vmem:[#allocation5 + $0x690] sm:$0xf]
    %v614 = vld [vmem:[#allocation5 + $0x694] sm:$0xf]
    %v615 = vld [vmem:[#allocation5 + $0x698] sm:$0xf]
    %v616 = vld [vmem:[#allocation5 + $0x69c] sm:$0xf]
    %v617 = vld [vmem:[#allocation5 + $0x6a0] sm:$0xf]
    %v618 = vld [vmem:[#allocation5 + $0x6a4] sm:$0xf]
    %v619 = vld [vmem:[#allocation5 + $0x6a8] sm:$0xf]
    %v620 = vld [vmem:[#allocation5 + $0x6ac] sm:$0xf]
    %v621 = vld [vmem:[#allocation5 + $0x6b0] sm:$0xf]
    %v622 = vld [vmem:[#allocation5 + $0x6b4] sm:$0xf]
    %v623 = vld [vmem:[#allocation5 + $0x6b8] sm:$0xf]
    %v624 = vld [vmem:[#allocation5 + $0x6c0] sm:$0xf]
    %v625 = vld [vmem:[#allocation5 + $0x6c4] sm:$0xf]
    %v626 = vld [vmem:[#allocation5 + $0x6c8] sm:$0xf]
    %v627 = vld [vmem:[#allocation5 + $0x6cc] sm:$0xf]
    %v628 = vld [vmem:[#allocation5 + $0x6d0] sm:$0xf]
    %v629 = vld [vmem:[#allocation5 + $0x6d4] sm:$0xf]
    %v630 = vld [vmem:[#allocation5 + $0x6d8] sm:$0xf]
    %v631 = vld [vmem:[#allocation5 + $0x6dc] sm:$0xf]
    %v632 = vld [vmem:[#allocation5 + $0x6e0] sm:$0xf]
    %v633 = vld [vmem:[#allocation5 + $0x6e4] sm:$0xf]
    %v634 = vld [vmem:[#allocation5 + $0x6e8] sm:$0xf]
    %v635 = vld [vmem:[#allocation5 + $0x6ec] sm:$0xf]
    %v636 = vld [vmem:[#allocation5 + $0x6f0] sm:$0xf]
    %v637 = vld [vmem:[#allocation5 + $0x6f4] sm:$0xf]
    %v638 = vld [vmem:[#allocation5 + $0x6f8] sm:$0xf]
    %v639 = vld [vmem:[#allocation5 + $0x6fc] sm:$0xf]
    %v640 = vld [vmem:[#allocation5 + $0x700] sm:$0xf]
    %v641 = vld [vmem:[#allocation5 + $0x704] sm:$0xf]
    %v642 = vld [vmem:[#allocation5 + $0x708] sm:$0xf]
    %v643 = vld [vmem:[#allocation5 + $0x70c] sm:$0xf]
    %v644 = vld [vmem:[#allocation5 + $0x710] sm:$0xf]
    %v645 = vld [vmem:[#allocation5 + $0x714] sm:$0xf]
    %v646 = vld [vmem:[#allocation5 + $0x718] sm:$0xf]
    %v647 = vld [vmem:[#allocation5 + $0x720] sm:$0xf]
    %v648 = vld [vmem:[#allocation5 + $0x724] sm:$0xf]
    %v649 = vld [vmem:[#allocation5 + $0x728] sm:$0xf]
    %v650 = vld [vmem:[#allocation5 + $0x72c] sm:$0xf]
    %v651 = vld [vmem:[#allocation5 + $0x730] sm:$0xf]
    %v652 = vld [vmem:[#allocation5 + $0x734] sm:$0xf]
    %v653 = vld [vmem:[#allocation5 + $0x738] sm:$0xf]
    %v654 = vld [vmem:[#allocation5 + $0x73c] sm:$0xf]
    %v655 = vld [vmem:[#allocation5 + $0x740] sm:$0xf]
    %v656 = vld [vmem:[#allocation5 + $0x744] sm:$0xf]
    %v657 = vld [vmem:[#allocation5 + $0x748] sm:$0xf]
    %v658 = vld [vmem:[#allocation5 + $0x74c] sm:$0xf]
    %v659 = vld [vmem:[#allocation5 + $0x750] sm:$0xf]
    %v660 = vld [vmem:[#allocation5 + $0x754] sm:$0xf]
    %v661 = vld [vmem:[#allocation5 + $0x758] sm:$0xf]
    %v662 = vld [vmem:[#allocation5 + $0x75c] sm:$0xf]
    %v663 = vld [vmem:[#allocation5 + $0x760] sm:$0xf]
    %v664 = vld [vmem:[#allocation5 + $0x764] sm:$0xf]
    %v665 = vld [vmem:[#allocation5 + $0x768] sm:$0xf]
    %v666 = vld [vmem:[#allocation5 + $0x76c] sm:$0xf]
    %v667 = vld [vmem:[#allocation5 + $0x770] sm:$0xf]
    %v668 = vld [vmem:[#allocation5 + $0x774] sm:$0xf]
    %v669 = vld [vmem:[#allocation5 + $0x778] sm:$0xf]
    %v670 = vld [vmem:[#allocation5 + $0x780] sm:$0xf]
    %v671 = vld [vmem:[#allocation5 + $0x784] sm:$0xf]
    %v672 = vld [vmem:[#allocation5 + $0x788] sm:$0xf]
    %v673 = vld [vmem:[#allocation5 + $0x78c] sm:$0xf]
    %v674 = vld [vmem:[#allocation5 + $0x790] sm:$0xf]
    %v675 = vld [vmem:[#allocation5 + $0x794] sm:$0xf]
    %v676 = vld [vmem:[#allocation5 + $0x798] sm:$0xf]
    %v677 = vld [vmem:[#allocation5 + $0x79c] sm:$0xf]
    %v678 = vld [vmem:[#allocation5 + $0x7a0] sm:$0xf]
    %v679 = vld [vmem:[#allocation5 + $0x7a4] sm:$0xf]
    %v680 = vld [vmem:[#allocation5 + $0x7a8] sm:$0xf]
    %v681 = vld [vmem:[#allocation5 + $0x7ac] sm:$0xf]
    %v682 = vld [vmem:[#allocation5 + $0x7b0] sm:$0xf]
    %v683 = vld [vmem:[#allocation5 + $0x7b4] sm:$0xf]
    %v684 = vld [vmem:[#allocation5 + $0x7b8] sm:$0xf]
    %v685 = vld [vmem:[#allocation5 + $0x7bc] sm:$0xf]
    %v686 = vld [vmem:[#allocation5 + $0x7c0] sm:$0xf]
    %v687 = vld [vmem:[#allocation5 + $0x7c4] sm:$0xf]
    %v688 = vld [vmem:[#allocation5 + $0x7c8] sm:$0xf]
    %v689 = vld [vmem:[#allocation5 + $0x7cc] sm:$0xf]
    %v690 = vld [vmem:[#allocation5 + $0x7d0] sm:$0xf]
    %v691 = vld [vmem:[#allocation5 + $0x7d4] sm:$0xf]
    %v692 = vld [vmem:[#allocation5 + $0x7d8] sm:$0xf]
    %v693 = vld [vmem:[#allocation5 + $0x7e0] sm:$0xf]
    %v694 = vld [vmem:[#allocation5 + $0x7e4] sm:$0xf]
    %v695 = vld [vmem:[#allocation5 + $0x7e8] sm:$0xf]
    %v696 = vld [vmem:[#allocation5 + $0x7ec] sm:$0xf]
    %v697 = vld [vmem:[#allocation5 + $0x7f0] sm:$0xf]
    %v698 = vld [vmem:[#allocation5 + $0x7f4] sm:$0xf]
    %v699 = vld [vmem:[#allocation5 + $0x7f8] sm:$0xf]
    %v700 = vld [vmem:[#allocation5 + $0x7fc] sm:$0xf]
    %v701 = vld [vmem:[#allocation5 + $0x800] sm:$0xf]
    %v702 = vld [vmem:[#allocation5 + $0x804] sm:$0xf]
    %v703 = vld [vmem:[#allocation5 + $0x808] sm:$0xf]
    %v704 = vld [vmem:[#allocation5 + $0x80c] sm:$0xf]
    %v705 = vld [vmem:[#allocation5 + $0x810] sm:$0xf]
    %v706 = vld [vmem:[#allocation5 + $0x814] sm:$0xf]
    %v707 = vld [vmem:[#allocation5 + $0x818] sm:$0xf]
    %v708 = vld [vmem:[#allocation5 + $0x81c] sm:$0xf]
    %v709 = vld [vmem:[#allocation5 + $0x820] sm:$0xf]
    %v710 = vld [vmem:[#allocation5 + $0x824] sm:$0xf]
    %v711 = vld [vmem:[#allocation5 + $0x828] sm:$0xf]
    %v712 = vld [vmem:[#allocation5 + $0x82c] sm:$0xf]
    %v713 = vld [vmem:[#allocation5 + $0x830] sm:$0xf]
    %v714 = vld [vmem:[#allocation5 + $0x834] sm:$0xf]
    %v715 = vld [vmem:[#allocation5 + $0x838] sm:$0xf]
    %v716 = vld [vmem:[#allocation5 + $0x840] sm:$0xf]
    %v717 = vld [vmem:[#allocation5 + $0x844] sm:$0xf]
    %v718 = vld [vmem:[#allocation5 + $0x848] sm:$0xf]
    %v719 = vld [vmem:[#allocation5 + $0x84c] sm:$0xf]
    %v720 = vld [vmem:[#allocation5 + $0x850] sm:$0xf]
    %v721 = vld [vmem:[#allocation5 + $0x854] sm:$0xf]
    %v722 = vld [vmem:[#allocation5 + $0x858] sm:$0xf]
    %v723 = vld [vmem:[#allocation5 + $0x85c] sm:$0xf]
    %v724 = vld [vmem:[#allocation5 + $0x860] sm:$0xf]
    %v725 = vld [vmem:[#allocation5 + $0x864] sm:$0xf]
    %v726 = vld [vmem:[#allocation5 + $0x868] sm:$0xf]
    %v727 = vld [vmem:[#allocation5 + $0x86c] sm:$0xf]
    %v728 = vld [vmem:[#allocation5 + $0x870] sm:$0xf]
    %v729 = vld [vmem:[#allocation5 + $0x874] sm:$0xf]
    %v730 = vld [vmem:[#allocation5 + $0x878] sm:$0xf]
    %v731 = vld [vmem:[#allocation5 + $0x87c] sm:$0xf]
    %v732 = vld [vmem:[#allocation5 + $0x880] sm:$0xf]
    %v733 = vld [vmem:[#allocation5 + $0x884] sm:$0xf]
    %v734 = vld [vmem:[#allocation5 + $0x888] sm:$0xf]
    %v735 = vld [vmem:[#allocation5 + $0x88c] sm:$0xf]
    %v736 = vld [vmem:[#allocation5 + $0x890] sm:$0xf]
    %v737 = vld [vmem:[#allocation5 + $0x894] sm:$0xf]
    %v738 = vld [vmem:[#allocation5 + $0x898] sm:$0xf]
    %v739 = vunpack.c.l.bf16 %v210
    %v740 = vunpack.c.l.bf16 %v211
    %v741 = vunpack.c.l.bf16 %v212
    %v742 = vunpack.c.l.bf16 %v213
    %v743 = vunpack.c.l.bf16 %v214
    %v744 = vunpack.c.l.bf16 %v215
    %v745 = vunpack.c.l.bf16 %v216
    %v746 = vunpack.c.l.bf16 %v217
    %v747 = vunpack.c.l.bf16 %v218
    %v748 = vunpack.c.l.bf16 %v219
    %v749 = vunpack.c.l.bf16 %v220
    %v750 = vunpack.c.l.bf16 %v221
    %v751 = vunpack.c.l.bf16 %v222
    %v752 = vunpack.c.l.bf16 %v223
    %v753 = vunpack.c.l.bf16 %v224
    %v754 = vunpack.c.l.bf16 %v225
    %v755 = vunpack.c.l.bf16 %v226
    %v756 = vunpack.c.l.bf16 %v227
    %v757 = vunpack.c.l.bf16 %v228
    %v758 = vunpack.c.l.bf16 %v229
    %v759 = vunpack.c.l.bf16 %v230
    %v760 = vunpack.c.l.bf16 %v231
    %v761 = vunpack.c.l.bf16 %v232
    %v762 = vunpack.c.l.bf16 %v233
    %v763 = vunpack.c.l.bf16 %v234
    %v764 = vunpack.c.l.bf16 %v235
    %v765 = vunpack.c.l.bf16 %v236
    %v766 = vunpack.c.l.bf16 %v237
    %v767 = vunpack.c.l.bf16 %v238
    %v768 = vunpack.c.l.bf16 %v239
    %v769 = vunpack.c.l.bf16 %v240
    %v770 = vunpack.c.l.bf16 %v241
    %v771 = vunpack.c.l.bf16 %v242
    %v772 = vunpack.c.l.bf16 %v243
    %v773 = vunpack.c.l.bf16 %v244
    %v774 = vunpack.c.l.bf16 %v245
    %v775 = vunpack.c.l.bf16 %v246
    %v776 = vunpack.c.l.bf16 %v247
    %v777 = vunpack.c.l.bf16 %v248
    %v778 = vunpack.c.l.bf16 %v249
    %v779 = vunpack.c.l.bf16 %v250
    %v780 = vunpack.c.l.bf16 %v251
    %v781 = vunpack.c.l.bf16 %v252
    %v782 = vunpack.c.l.bf16 %v253
    %v783 = vunpack.c.l.bf16 %v254
    %v784 = vunpack.c.l.bf16 %v255
    %v785 = vunpack.c.l.bf16 %v256
    %v786 = vunpack.c.l.bf16 %v257
    %v787 = vunpack.c.l.bf16 %v258
    %v788 = vunpack.c.l.bf16 %v259
    %v789 = vunpack.c.l.bf16 %v260
    %v790 = vunpack.c.l.bf16 %v261
    %v791 = vunpack.c.l.bf16 %v262
    %v792 = vunpack.c.l.bf16 %v263
    %v793 = vunpack.c.l.bf16 %v264
    %v794 = vunpack.c.l.bf16 %v265
    %v795 = vunpack.c.l.bf16 %v266
    %v796 = vunpack.c.l.bf16 %v267
    %v797 = vunpack.c.l.bf16 %v268
    %v798 = vunpack.c.l.bf16 %v269
    %v799 = vunpack.c.l.bf16 %v270
    %v800 = vunpack.c.l.bf16 %v271
    %v801 = vunpack.c.l.bf16 %v272
    %v802 = vunpack.c.l.bf16 %v273
    %v803 = vunpack.c.l.bf16 %v274
    %v804 = vunpack.c.l.bf16 %v275
    %v805 = vunpack.c.l.bf16 %v276
    %v806 = vunpack.c.l.bf16 %v277
    %v807 = vunpack.c.l.bf16 %v278
    %v808 = vunpack.c.l.bf16 %v279
    %v809 = vunpack.c.l.bf16 %v280
    %v810 = vunpack.c.l.bf16 %v281
    %v811 = vunpack.c.l.bf16 %v282
    %v812 = vunpack.c.l.bf16 %v283
    %v813 = vunpack.c.l.bf16 %v284
    %v814 = vunpack.c.l.bf16 %v285
    %v815 = vunpack.c.l.bf16 %v286
    %v816 = vunpack.c.l.bf16 %v287
    %v817 = vunpack.c.l.bf16 %v288
    %v818 = vunpack.c.l.bf16 %v289
    %v819 = vunpack.c.l.bf16 %v290
    %v820 = vunpack.c.l.bf16 %v291
    %v821 = vunpack.c.l.bf16 %v292
    %v822 = vunpack.c.l.bf16 %v293
    %v823 = vunpack.c.l.bf16 %v294
    %v824 = vunpack.c.l.bf16 %v295
    %v825 = vunpack.c.l.bf16 %v296
    %v826 = vunpack.c.l.bf16 %v297
    %v827 = vunpack.c.l.bf16 %v298
    %v828 = vunpack.c.l.bf16 %v299
    %v829 = vunpack.c.l.bf16 %v300
    %v830 = vunpack.c.l.bf16 %v301
    %v831 = vunpack.c.l.bf16 %v302
    %v832 = vunpack.c.l.bf16 %v303
    %v833 = vunpack.c.l.bf16 %v304
    %v834 = vunpack.c.l.bf16 %v305
    %v835 = vunpack.c.l.bf16 %v306
    %v836 = vunpack.c.l.bf16 %v307
    %v837 = vunpack.c.l.bf16 %v308
    %v838 = vunpack.c.l.bf16 %v309
    %v839 = vunpack.c.l.bf16 %v310
    %v840 = vunpack.c.l.bf16 %v311
    %v841 = vunpack.c.l.bf16 %v312
    %v842 = vunpack.c.l.bf16 %v313
    %v843 = vunpack.c.l.bf16 %v314
    %v844 = vunpack.c.l.bf16 %v315
    %v845 = vunpack.c.l.bf16 %v316
    %v846 = vunpack.c.l.bf16 %v317
    %v847 = vunpack.c.l.bf16 %v318
    %v848 = vunpack.c.l.bf16 %v319
    %v849 = vunpack.c.l.bf16 %v320
    %v850 = vunpack.c.l.bf16 %v321
    %v851 = vunpack.c.l.bf16 %v322
    %v852 = vunpack.c.l.bf16 %v323
    %v853 = vunpack.c.l.bf16 %v324
    %v854 = vunpack.c.l.bf16 %v325
    %v855 = vunpack.c.l.bf16 %v326
    %v856 = vunpack.c.l.bf16 %v327
    %v857 = vunpack.c.l.bf16 %v328
    %v858 = vunpack.c.l.bf16 %v329
    %v859 = vunpack.c.l.bf16 %v330
    %v860 = vunpack.c.l.bf16 %v331
    %v861 = vunpack.c.l.bf16 %v332
    %v862 = vunpack.c.l.bf16 %v333
    %v863 = vunpack.c.l.bf16 %v334
    %v864 = vunpack.c.l.bf16 %v335
    %v865 = vunpack.c.l.bf16 %v336
    %v866 = vunpack.c.l.bf16 %v337
    %v867 = vunpack.c.l.bf16 %v338
    %v868 = vunpack.c.l.bf16 %v339
    %v869 = vunpack.c.l.bf16 %v340
    %v870 = vunpack.c.l.bf16 %v341
    %v871 = vunpack.c.l.bf16 %v342
    %v872 = vunpack.c.l.bf16 %v343
    %v873 = vunpack.c.l.bf16 %v344
    %v874 = vunpack.c.l.bf16 %v345
    %v875 = vunpack.c.l.bf16 %v346
    %v876 = vunpack.c.l.bf16 %v347
    %v877 = vunpack.c.l.bf16 %v348
    %v878 = vunpack.c.l.bf16 %v349
    %v879 = vunpack.c.l.bf16 %v350
    %v880 = vunpack.c.l.bf16 %v351
    %v881 = vunpack.c.l.bf16 %v352
    %v882 = vunpack.c.l.bf16 %v353
    %v883 = vunpack.c.l.bf16 %v354
    %v884 = vunpack.c.l.bf16 %v355
    %v885 = vunpack.c.l.bf16 %v356
    %v886 = vunpack.c.l.bf16 %v357
    %v887 = vunpack.c.l.bf16 %v358
    %v888 = vunpack.c.l.bf16 %v359
    %v889 = vunpack.c.l.bf16 %v360
    %v890 = vunpack.c.l.bf16 %v361
    %v891 = vunpack.c.l.bf16 %v362
    %v892 = vunpack.c.l.bf16 %v363
    %v893 = vunpack.c.l.bf16 %v364
    %v894 = vunpack.c.l.bf16 %v365
    %v895 = vunpack.c.l.bf16 %v366
    %v896 = vunpack.c.l.bf16 %v367
    %v897 = vunpack.c.l.bf16 %v368
    %v898 = vunpack.c.l.bf16 %v369
    %v899 = vunpack.c.l.bf16 %v370
    %v900 = vunpack.c.l.bf16 %v371
    %v901 = vunpack.c.l.bf16 %v372
    %v902 = vunpack.c.l.bf16 %v373
    %v903 = vunpack.c.l.bf16 %v374
    %v904 = vunpack.c.l.bf16 %v375
    %v905 = vunpack.c.l.bf16 %v376
    %v906 = vunpack.c.l.bf16 %v377
    %v907 = vunpack.c.l.bf16 %v378
    %v908 = vunpack.c.l.bf16 %v379
    %v909 = vunpack.c.l.bf16 %v380
    %v910 = vunpack.c.l.bf16 %v381
    %v911 = vunpack.c.l.bf16 %v382
    %v912 = vunpack.c.l.bf16 %v383
    %v913 = vunpack.c.l.bf16 %v384
    %v914 = vunpack.c.l.bf16 %v385
    %v915 = vunpack.c.l.bf16 %v386
    %v916 = vunpack.c.l.bf16 %v387
    %v917 = vunpack.c.l.bf16 %v388
    %v918 = vunpack.c.l.bf16 %v389
    %v919 = vunpack.c.l.bf16 %v390
    %v920 = vunpack.c.l.bf16 %v391
    %v921 = vunpack.c.l.bf16 %v392
    %v922 = vunpack.c.l.bf16 %v393
    %v923 = vunpack.c.l.bf16 %v394
    %v924 = vunpack.c.l.bf16 %v395
    %v925 = vunpack.c.l.bf16 %v396
    %v926 = vunpack.c.l.bf16 %v397
    %v927 = vunpack.c.l.bf16 %v398
    %v928 = vunpack.c.l.bf16 %v399
    %v929 = vunpack.c.l.bf16 %v400
    %v930 = vunpack.c.l.bf16 %v401
    %v931 = vunpack.c.l.bf16 %v402
    %v932 = vunpack.c.l.bf16 %v403
    %v933 = vunpack.c.l.bf16 %v404
    %v934 = vunpack.c.l.bf16 %v405
    %v935 = vunpack.c.l.bf16 %v406
    %v936 = vunpack.c.l.bf16 %v407
    %v937 = vunpack.c.l.bf16 %v408
    %v938 = vunpack.c.l.bf16 %v409
    %v939 = vunpack.c.l.bf16 %v410
    %v940 = vunpack.c.l.bf16 %v411
    %v941 = vunpack.c.l.bf16 %v412
    %v942 = vunpack.c.l.bf16 %v413
    %v943 = vunpack.c.l.bf16 %v414
    %v944 = vunpack.c.l.bf16 %v415
    %v945 = vunpack.c.l.bf16 %v416
    %v946 = vunpack.c.l.bf16 %v417
    %v947 = vunpack.c.l.bf16 %v418
    %v948 = vunpack.c.l.bf16 %v419
    %v949 = vunpack.c.l.bf16 %v420
    %v950 = vunpack.c.l.bf16 %v421
    %v951 = vunpack.c.l.bf16 %v422
    %v952 = vunpack.c.l.bf16 %v423
    %v953 = vunpack.c.l.bf16 %v424
    %v954 = vunpack.c.l.bf16 %v425
    %v955 = vunpack.c.l.bf16 %v426
    %v956 = vunpack.c.l.bf16 %v427
    %v957 = vunpack.c.l.bf16 %v428
    %v958 = vunpack.c.l.bf16 %v429
    %v959 = vunpack.c.l.bf16 %v430
    %v960 = vunpack.c.l.bf16 %v431
    %v961 = vunpack.c.l.bf16 %v432
    %v962 = vunpack.c.l.bf16 %v433
    %v963 = vunpack.c.l.bf16 %v434
    %v964 = vunpack.c.l.bf16 %v435
    %v965 = vunpack.c.l.bf16 %v436
    %v966 = vunpack.c.l.bf16 %v437
    %v967 = vunpack.c.l.bf16 %v438
    %v968 = vunpack.c.l.bf16 %v439
    %v969 = vunpack.c.l.bf16 %v440
    %v970 = vunpack.c.l.bf16 %v441
    %v971 = vunpack.c.l.bf16 %v442
    %v972 = vunpack.c.l.bf16 %v443
    %v973 = vunpack.c.l.bf16 %v444
    %v974 = vunpack.c.l.bf16 %v445
    %v975 = vunpack.c.l.bf16 %v446
    %v976 = vunpack.c.l.bf16 %v447
    %v977 = vunpack.c.l.bf16 %v448
    %v978 = vunpack.c.l.bf16 %v449
    %v979 = vunpack.c.l.bf16 %v450
    %v980 = vunpack.c.l.bf16 %v451
    %v981 = vunpack.c.l.bf16 %v452
    %v982 = vunpack.c.l.bf16 %v453
    %v983 = vunpack.c.l.bf16 %v454
    %v984 = vunpack.c.l.bf16 %v455
    %v985 = vunpack.c.l.bf16 %v456
    %v986 = vunpack.c.l.bf16 %v457
    %v987 = vunpack.c.l.bf16 %v458
    %v988 = vunpack.c.l.bf16 %v459
    %v989 = vunpack.c.l.bf16 %v460
    %v990 = vunpack.c.l.bf16 %v461
    %v991 = vunpack.c.l.bf16 %v462
    %v992 = vunpack.c.l.bf16 %v463
    %v993 = vunpack.c.l.bf16 %v464
    %v994 = vunpack.c.l.bf16 %v465
    %v995 = vunpack.c.l.bf16 %v466
    %v996 = vunpack.c.l.bf16 %v467
    %v997 = vunpack.c.l.bf16 %v468
    %v998 = vunpack.c.l.bf16 %v469
    %v999 = vunpack.c.l.bf16 %v470
    %v1000 = vunpack.c.l.bf16 %v471
    %v1001 = vunpack.c.l.bf16 %v472
    %v1002 = vunpack.c.l.bf16 %v473
    %v1003 = vunpack.c.l.bf16 %v474
    %v1004 = vunpack.c.l.bf16 %v475
    %v1005 = vunpack.c.l.bf16 %v476
    %v1006 = vunpack.c.l.bf16 %v477
    %v1007 = vunpack.c.l.bf16 %v478
    %v1008 = vunpack.c.l.bf16 %v479
    %v1009 = vunpack.c.l.bf16 %v480
    %v1010 = vunpack.c.l.bf16 %v481
    %v1011 = vunpack.c.l.bf16 %v482
    %v1012 = vunpack.c.l.bf16 %v483
    %v1013 = vunpack.c.l.bf16 %v484
    %v1014 = vunpack.c.l.bf16 %v485
    %v1015 = vunpack.c.l.bf16 %v486
    %v1016 = vunpack.c.l.bf16 %v487
    %v1017 = vunpack.c.l.bf16 %v488
    %v1018 = vunpack.c.l.bf16 %v489
    %v1019 = vunpack.c.l.bf16 %v490
    %v1020 = vunpack.c.l.bf16 %v491
    %v1021 = vunpack.c.l.bf16 %v492
    %v1022 = vunpack.c.l.bf16 %v493
    %v1023 = vunpack.c.l.bf16 %v494
    %v1024 = vunpack.c.l.bf16 %v495
    %v1025 = vunpack.c.l.bf16 %v496
    %v1026 = vunpack.c.l.bf16 %v497
    %v1027 = vunpack.c.l.bf16 %v498
    %v1028 = vunpack.c.l.bf16 %v499
    %v1029 = vunpack.c.l.bf16 %v500
    %v1030 = vunpack.c.l.bf16 %v501
    %v1031 = vunpack.c.l.bf16 %v502
    %v1032 = vunpack.c.l.bf16 %v503
    %v1033 = vunpack.c.l.bf16 %v504
    %v1034 = vunpack.c.l.bf16 %v505
    %v1035 = vunpack.c.l.bf16 %v506
    %v1036 = vunpack.c.l.bf16 %v507
    %v1037 = vunpack.c.l.bf16 %v508
    %v1038 = vunpack.c.l.bf16 %v509
    %v1039 = vunpack.c.l.bf16 %v510
    %v1040 = vunpack.c.l.bf16 %v511
    %v1041 = vunpack.c.l.bf16 %v512
    %v1042 = vunpack.c.l.bf16 %v513
    %v1043 = vunpack.c.l.bf16 %v514
    %v1044 = vunpack.c.l.bf16 %v515
    %v1045 = vunpack.c.l.bf16 %v516
    %v1046 = vunpack.c.l.bf16 %v517
    %v1047 = vunpack.c.l.bf16 %v518
    %v1048 = vunpack.c.l.bf16 %v519
    %v1049 = vunpack.c.l.bf16 %v520
    %v1050 = vunpack.c.l.bf16 %v521
    %v1051 = vunpack.c.l.bf16 %v522
    %v1052 = vunpack.c.l.bf16 %v523
    %v1053 = vunpack.c.l.bf16 %v524
    %v1054 = vunpack.c.l.bf16 %v525
    %v1055 = vunpack.c.l.bf16 %v526
    %v1056 = vunpack.c.l.bf16 %v527
    %v1057 = vunpack.c.l.bf16 %v528
    %v1058 = vunpack.c.l.bf16 %v529
    %v1059 = vunpack.c.l.bf16 %v530
    %v1060 = vunpack.c.l.bf16 %v531
    %v1061 = vunpack.c.l.bf16 %v532
    %v1062 = vunpack.c.l.bf16 %v533
    %v1063 = vunpack.c.l.bf16 %v534
    %v1064 = vunpack.c.l.bf16 %v535
    %v1065 = vunpack.c.l.bf16 %v536
    %v1066 = vunpack.c.l.bf16 %v537
    %v1067 = vunpack.c.l.bf16 %v538
    %v1068 = vunpack.c.l.bf16 %v539
    %v1069 = vunpack.c.l.bf16 %v540
    %v1070 = vunpack.c.l.bf16 %v541
    %v1071 = vunpack.c.l.bf16 %v542
    %v1072 = vunpack.c.l.bf16 %v543
    %v1073 = vunpack.c.l.bf16 %v544
    %v1074 = vunpack.c.l.bf16 %v545
    %v1075 = vunpack.c.l.bf16 %v546
    %v1076 = vunpack.c.l.bf16 %v547
    %v1077 = vunpack.c.l.bf16 %v548
    %v1078 = vunpack.c.l.bf16 %v549
    %v1079 = vunpack.c.l.bf16 %v550
    %v1080 = vunpack.c.l.bf16 %v551
    %v1081 = vunpack.c.l.bf16 %v552
    %v1082 = vunpack.c.l.bf16 %v553
    %v1083 = vunpack.c.l.bf16 %v554
    %v1084 = vunpack.c.l.bf16 %v555
    %v1085 = vunpack.c.l.bf16 %v556
    %v1086 = vunpack.c.l.bf16 %v557
    %v1087 = vunpack.c.l.bf16 %v558
    %v1088 = vunpack.c.l.bf16 %v559
    %v1089 = vunpack.c.l.bf16 %v560
    %v1090 = vunpack.c.l.bf16 %v561
    %v1091 = vunpack.c.l.bf16 %v562
    %v1092 = vunpack.c.l.bf16 %v563
    %v1093 = vunpack.c.l.bf16 %v564
    %v1094 = vunpack.c.l.bf16 %v565
    %v1095 = vunpack.c.l.bf16 %v566
    %v1096 = vunpack.c.l.bf16 %v567
    %v1097 = vunpack.c.l.bf16 %v568
    %v1098 = vunpack.c.l.bf16 %v569
    %v1099 = vunpack.c.l.bf16 %v570
    %v1100 = vunpack.c.l.bf16 %v571
    %v1101 = vunpack.c.l.bf16 %v572
    %v1102 = vunpack.c.l.bf16 %v573
    %v1103 = vunpack.c.l.bf16 %v574
    %v1104 = vunpack.c.l.bf16 %v575
    %v1105 = vunpack.c.l.bf16 %v576
    %v1106 = vunpack.c.l.bf16 %v577
    %v1107 = vunpack.c.l.bf16 %v578
    %v1108 = vunpack.c.l.bf16 %v579
    %v1109 = vunpack.c.l.bf16 %v580
    %v1110 = vunpack.c.l.bf16 %v581
    %v1111 = vunpack.c.l.bf16 %v582
    %v1112 = vunpack.c.l.bf16 %v583
    %v1113 = vunpack.c.l.bf16 %v584
    %v1114 = vunpack.c.l.bf16 %v585
    %v1115 = vunpack.c.l.bf16 %v586
    %v1116 = vunpack.c.l.bf16 %v587
    %v1117 = vunpack.c.l.bf16 %v588
    %v1118 = vunpack.c.l.bf16 %v589
    %v1119 = vunpack.c.l.bf16 %v590
    %v1120 = vunpack.c.l.bf16 %v591
    %v1121 = vunpack.c.l.bf16 %v592
    %v1122 = vunpack.c.l.bf16 %v593
    %v1123 = vunpack.c.l.bf16 %v594
    %v1124 = vunpack.c.l.bf16 %v595
    %v1125 = vunpack.c.l.bf16 %v596
    %v1126 = vunpack.c.l.bf16 %v597
    %v1127 = vunpack.c.l.bf16 %v598
    %v1128 = vunpack.c.l.bf16 %v599
    %v1129 = vunpack.c.l.bf16 %v600
    %v1130 = vunpack.c.l.bf16 %v601
    %v1131 = vunpack.c.l.bf16 %v602
    %v1132 = vunpack.c.l.bf16 %v603
    %v1133 = vunpack.c.l.bf16 %v604
    %v1134 = vunpack.c.l.bf16 %v605
    %v1135 = vunpack.c.l.bf16 %v606
    %v1136 = vunpack.c.l.bf16 %v607
    %v1137 = vunpack.c.l.bf16 %v608
    %v1138 = vunpack.c.l.bf16 %v609
    %v1139 = vunpack.c.l.bf16 %v610
    %v1140 = vunpack.c.l.bf16 %v611
    %v1141 = vunpack.c.l.bf16 %v612
    %v1142 = vunpack.c.l.bf16 %v613
    %v1143 = vunpack.c.l.bf16 %v614
    %v1144 = vunpack.c.l.bf16 %v615
    %v1145 = vunpack.c.l.bf16 %v616
    %v1146 = vunpack.c.l.bf16 %v617
    %v1147 = vunpack.c.l.bf16 %v618
    %v1148 = vunpack.c.l.bf16 %v619
    %v1149 = vunpack.c.l.bf16 %v620
    %v1150 = vunpack.c.l.bf16 %v621
    %v1151 = vunpack.c.l.bf16 %v622
    %v1152 = vunpack.c.l.bf16 %v623
    %v1153 = vunpack.c.l.bf16 %v624
    %v1154 = vunpack.c.l.bf16 %v625
    %v1155 = vunpack.c.l.bf16 %v626
    %v1156 = vunpack.c.l.bf16 %v627
    %v1157 = vunpack.c.l.bf16 %v628
    %v1158 = vunpack.c.l.bf16 %v629
    %v1159 = vunpack.c.l.bf16 %v630
    %v1160 = vunpack.c.l.bf16 %v631
    %v1161 = vunpack.c.l.bf16 %v632
    %v1162 = vunpack.c.l.bf16 %v633
    %v1163 = vunpack.c.l.bf16 %v634
    %v1164 = vunpack.c.l.bf16 %v635
    %v1165 = vunpack.c.l.bf16 %v636
    %v1166 = vunpack.c.l.bf16 %v637
    %v1167 = vunpack.c.l.bf16 %v638
    %v1168 = vunpack.c.l.bf16 %v639
    %v1169 = vunpack.c.l.bf16 %v640
    %v1170 = vunpack.c.l.bf16 %v641
    %v1171 = vunpack.c.l.bf16 %v642
    %v1172 = vunpack.c.l.bf16 %v643
    %v1173 = vunpack.c.l.bf16 %v644
    %v1174 = vunpack.c.l.bf16 %v645
    %v1175 = vunpack.c.l.bf16 %v646
    %v1176 = vunpack.c.l.bf16 %v647
    %v1177 = vunpack.c.l.bf16 %v648
    %v1178 = vunpack.c.l.bf16 %v649
    %v1179 = vunpack.c.l.bf16 %v650
    %v1180 = vunpack.c.l.bf16 %v651
    %v1181 = vunpack.c.l.bf16 %v652
    %v1182 = vunpack.c.l.bf16 %v653
    %v1183 = vunpack.c.l.bf16 %v654
    %v1184 = vunpack.c.l.bf16 %v655
    %v1185 = vunpack.c.l.bf16 %v656
    %v1186 = vunpack.c.l.bf16 %v657
    %v1187 = vunpack.c.l.bf16 %v658
    %v1188 = vunpack.c.l.bf16 %v659
    %v1189 = vunpack.c.l.bf16 %v660
    %v1190 = vunpack.c.l.bf16 %v661
    %v1191 = vunpack.c.l.bf16 %v662
    %v1192 = vunpack.c.l.bf16 %v663
    %v1193 = vunpack.c.l.bf16 %v664
    %v1194 = vunpack.c.l.bf16 %v665
    %v1195 = vunpack.c.l.bf16 %v666
    %v1196 = vunpack.c.l.bf16 %v667
    %v1197 = vunpack.c.l.bf16 %v668
    %v1198 = vunpack.c.l.bf16 %v669
    %v1199 = vunpack.c.l.bf16 %v670
    %v1200 = vunpack.c.l.bf16 %v671
    %v1201 = vunpack.c.l.bf16 %v672
    %v1202 = vunpack.c.l.bf16 %v673
    %v1203 = vunpack.c.l.bf16 %v674
    %v1204 = vunpack.c.l.bf16 %v675
    %v1205 = vunpack.c.l.bf16 %v676
    %v1206 = vunpack.c.l.bf16 %v677
    %v1207 = vunpack.c.l.bf16 %v678
    %v1208 = vunpack.c.l.bf16 %v679
    %v1209 = vunpack.c.l.bf16 %v680
    %v1210 = vunpack.c.l.bf16 %v681
    %v1211 = vunpack.c.l.bf16 %v682
    %v1212 = vunpack.c.l.bf16 %v683
    %v1213 = vunpack.c.l.bf16 %v684
    %v1214 = vunpack.c.l.bf16 %v685
    %v1215 = vunpack.c.l.bf16 %v686
    %v1216 = vunpack.c.l.bf16 %v687
    %v1217 = vunpack.c.l.bf16 %v688
    %v1218 = vunpack.c.l.bf16 %v689
    %v1219 = vunpack.c.l.bf16 %v690
    %v1220 = vunpack.c.l.bf16 %v691
    %v1221 = vunpack.c.l.bf16 %v692
    %v1222 = vunpack.c.l.bf16 %v693
    %v1223 = vunpack.c.l.bf16 %v694
    %v1224 = vunpack.c.l.bf16 %v695
    %v1225 = vunpack.c.l.bf16 %v696
    %v1226 = vunpack.c.l.bf16 %v697
    %v1227 = vunpack.c.l.bf16 %v698
    %v1228 = vunpack.c.l.bf16 %v699
    %v1229 = vunpack.c.l.bf16 %v700
    %v1230 = vunpack.c.l.bf16 %v701
    %v1231 = vunpack.c.l.bf16 %v702
    %v1232 = vunpack.c.l.bf16 %v703
    %v1233 = vunpack.c.l.bf16 %v704
    %v1234 = vunpack.c.l.bf16 %v705
    %v1235 = vunpack.c.l.bf16 %v706
    %v1236 = vunpack.c.l.bf16 %v707
    %v1237 = vunpack.c.l.bf16 %v708
    %v1238 = vunpack.c.l.bf16 %v709
    %v1239 = vunpack.c.l.bf16 %v710
    %v1240 = vunpack.c.l.bf16 %v711
    %v1241 = vunpack.c.l.bf16 %v712
    %v1242 = vunpack.c.l.bf16 %v713
    %v1243 = vunpack.c.l.bf16 %v714
    %v1244 = vunpack.c.l.bf16 %v715
    %v1245 = vunpack.c.l.bf16 %v716
    %v1246 = vunpack.c.l.bf16 %v717
    %v1247 = vunpack.c.l.bf16 %v718
    %v1248 = vunpack.c.l.bf16 %v719
    %v1249 = vunpack.c.l.bf16 %v720
    %v1250 = vunpack.c.l.bf16 %v721
    %v1251 = vunpack.c.l.bf16 %v722
    %v1252 = vunpack.c.l.bf16 %v723
    %v1253 = vunpack.c.l.bf16 %v724
    %v1254 = vunpack.c.l.bf16 %v725
    %v1255 = vunpack.c.l.bf16 %v726
    %v1256 = vunpack.c.l.bf16 %v727
    %v1257 = vunpack.c.l.bf16 %v728
    %v1258 = vunpack.c.l.bf16 %v729
    %v1259 = vunpack.c.l.bf16 %v730
    %v1260 = vunpack.c.l.bf16 %v731
    %v1261 = vunpack.c.l.bf16 %v732
    %v1262 = vunpack.c.l.bf16 %v733
    %v1263 = vunpack.c.l.bf16 %v734
    %v1264 = vunpack.c.l.bf16 %v735
    %v1265 = vunpack.c.l.bf16 %v736
    %v1266 = vunpack.c.l.bf16 %v737
    %v1267 = vunpack.c.l.bf16 %v738
    %v1268 = vmax.f32 %v739, %v762
    %v1269 = vmax.f32 %v740, %v763
    %v1270 = vmax.f32 %v741, %v764
    %v1271 = vmax.f32 %v742, %v765
    %v1272 = vmax.f32 %v743, %v766
    %v1273 = vmax.f32 %v744, %v767
    %v1274 = vmax.f32 %v745, %v768
    %v1275 = vmax.f32 %v746, %v769
    %v1276 = vmax.f32 %v747, %v770
    %v1277 = vmax.f32 %v748, %v771
    %v1278 = vmax.f32 %v749, %v772
    %v1279 = vmax.f32 %v750, %v773
    %v1280 = vmax.f32 %v751, %v774
    %v1281 = vmax.f32 %v752, %v775
    %v1282 = vmax.f32 %v753, %v776
    %v1283 = vmax.f32 %v754, %v777
    %v1284 = vmax.f32 %v755, %v778
    %v1285 = vmax.f32 %v756, %v779
    %v1286 = vmax.f32 %v757, %v780
    %v1287 = vmax.f32 %v758, %v781
    %v1288 = vmax.f32 %v759, %v782
    %v1289 = vmax.f32 %v760, %v783
    %v1290 = vmax.f32 %v761, %v784
    %v1291 = vmax.f32 %v785, %v808
    %v1292 = vmax.f32 %v786, %v809
    %v1293 = vmax.f32 %v787, %v810
    %v1294 = vmax.f32 %v788, %v811
    %v1295 = vmax.f32 %v789, %v812
    %v1296 = vmax.f32 %v790, %v813
    %v1297 = vmax.f32 %v791, %v814
    %v1298 = vmax.f32 %v792, %v815
    %v1299 = vmax.f32 %v793, %v816
    %v1300 = vmax.f32 %v794, %v817
    %v1301 = vmax.f32 %v795, %v818
    %v1302 = vmax.f32 %v796, %v819
    %v1303 = vmax.f32 %v797, %v820
    %v1304 = vmax.f32 %v798, %v821
    %v1305 = vmax.f32 %v799, %v822
    %v1306 = vmax.f32 %v800, %v823
    %v1307 = vmax.f32 %v801, %v824
    %v1308 = vmax.f32 %v802, %v825
    %v1309 = vmax.f32 %v803, %v826
    %v1310 = vmax.f32 %v804, %v827
    %v1311 = vmax.f32 %v805, %v828
    %v1312 = vmax.f32 %v806, %v829
    %v1313 = vmax.f32 %v807, %v830
    %v1314 = vmax.f32 %v831, %v854
    %v1315 = vmax.f32 %v832, %v855
    %v1316 = vmax.f32 %v833, %v856
    %v1317 = vmax.f32 %v834, %v857
    %v1318 = vmax.f32 %v835, %v858
    %v1319 = vmax.f32 %v836, %v859
    %v1320 = vmax.f32 %v837, %v860
    %v1321 = vmax.f32 %v838, %v861
    %v1322 = vmax.f32 %v839, %v862
    %v1323 = vmax.f32 %v840, %v863
    %v1324 = vmax.f32 %v841, %v864
    %v1325 = vmax.f32 %v842, %v865
    %v1326 = vmax.f32 %v843, %v866
    %v1327 = vmax.f32 %v844, %v867
    %v1328 = vmax.f32 %v845, %v868
    %v1329 = vmax.f32 %v846, %v869
    %v1330 = vmax.f32 %v847, %v870
    %v1331 = vmax.f32 %v848, %v871
    %v1332 = vmax.f32 %v849, %v872
    %v1333 = vmax.f32 %v850, %v873
    %v1334 = vmax.f32 %v851, %v874
    %v1335 = vmax.f32 %v852, %v875
    %v1336 = vmax.f32 %v853, %v876
    %v1337 = vmax.f32 %v877, %v900
    %v1338 = vmax.f32 %v878, %v901
    %v1339 = vmax.f32 %v879, %v902
    %v1340 = vmax.f32 %v880, %v903
    %v1341 = vmax.f32 %v881, %v904
    %v1342 = vmax.f32 %v882, %v905
    %v1343 = vmax.f32 %v883, %v906
    %v1344 = vmax.f32 %v884, %v907
    %v1345 = vmax.f32 %v885, %v908
    %v1346 = vmax.f32 %v886, %v909
    %v1347 = vmax.f32 %v887, %v910
    %v1348 = vmax.f32 %v888, %v911
    %v1349 = vmax.f32 %v889, %v912
    %v1350 = vmax.f32 %v890, %v913
    %v1351 = vmax.f32 %v891, %v914
    %v1352 = vmax.f32 %v892, %v915
    %v1353 = vmax.f32 %v893, %v916
    %v1354 = vmax.f32 %v894, %v917
    %v1355 = vmax.f32 %v895, %v918
    %v1356 = vmax.f32 %v896, %v919
    %v1357 = vmax.f32 %v897, %v920
    %v1358 = vmax.f32 %v898, %v921
    %v1359 = vmax.f32 %v899, %v922
    %v1360 = vmax.f32 %v923, %v946
    %v1361 = vmax.f32 %v924, %v947
    %v1362 = vmax.f32 %v925, %v948
    %v1363 = vmax.f32 %v926, %v949
    %v1364 = vmax.f32 %v927, %v950
    %v1365 = vmax.f32 %v928, %v951
    %v1366 = vmax.f32 %v929, %v952
    %v1367 = vmax.f32 %v930, %v953
    %v1368 = vmax.f32 %v931, %v954
    %v1369 = vmax.f32 %v932, %v955
    %v1370 = vmax.f32 %v933, %v956
    %v1371 = vmax.f32 %v934, %v957
    %v1372 = vmax.f32 %v935, %v958
    %v1373 = vmax.f32 %v936, %v959
    %v1374 = vmax.f32 %v937, %v960
    %v1375 = vmax.f32 %v938, %v961
    %v1376 = vmax.f32 %v939, %v962
    %v1377 = vmax.f32 %v940, %v963
    %v1378 = vmax.f32 %v941, %v964
    %v1379 = vmax.f32 %v942, %v965
    %v1380 = vmax.f32 %v943, %v966
    %v1381 = vmax.f32 %v944, %v967
    %v1382 = vmax.f32 %v945, %v968
    %v1383 = vmax.f32 %v969, %v992
    %v1384 = vmax.f32 %v970, %v993
    %v1385 = vmax.f32 %v971, %v994
    %v1386 = vmax.f32 %v972, %v995
    %v1387 = vmax.f32 %v973, %v996
    %v1388 = vmax.f32 %v974, %v997
    %v1389 = vmax.f32 %v975, %v998
    %v1390 = vmax.f32 %v976, %v999
    %v1391 = vmax.f32 %v977, %v1000
    %v1392 = vmax.f32 %v978, %v1001
    %v1393 = vmax.f32 %v979, %v1002
    %v1394 = vmax.f32 %v980, %v1003
    %v1395 = vmax.f32 %v981, %v1004
    %v1396 = vmax.f32 %v982, %v1005
    %v1397 = vmax.f32 %v983, %v1006
    %v1398 = vmax.f32 %v984, %v1007
    %v1399 = vmax.f32 %v985, %v1008
    %v1400 = vmax.f32 %v986, %v1009
    %v1401 = vmax.f32 %v987, %v1010
    %v1402 = vmax.f32 %v988, %v1011
    %v1403 = vmax.f32 %v989, %v1012
    %v1404 = vmax.f32 %v990, %v1013
    %v1405 = vmax.f32 %v991, %v1014
    %v1406 = vmax.f32 %v1015, %v1038
    %v1407 = vmax.f32 %v1016, %v1039
    %v1408 = vmax.f32 %v1017, %v1040
    %v1409 = vmax.f32 %v1018, %v1041
    %v1410 = vmax.f32 %v1019, %v1042
    %v1411 = vmax.f32 %v1020, %v1043
    %v1412 = vmax.f32 %v1021, %v1044
    %v1413 = vmax.f32 %v1022, %v1045
    %v1414 = vmax.f32 %v1023, %v1046
    %v1415 = vmax.f32 %v1024, %v1047
    %v1416 = vmax.f32 %v1025, %v1048
    %v1417 = vmax.f32 %v1026, %v1049
    %v1418 = vmax.f32 %v1027, %v1050
    %v1419 = vmax.f32 %v1028, %v1051
    %v1420 = vmax.f32 %v1029, %v1052
    %v1421 = vmax.f32 %v1030, %v1053
    %v1422 = vmax.f32 %v1031, %v1054
    %v1423 = vmax.f32 %v1032, %v1055
    %v1424 = vmax.f32 %v1033, %v1056
    %v1425 = vmax.f32 %v1034, %v1057
    %v1426 = vmax.f32 %v1035, %v1058
    %v1427 = vmax.f32 %v1036, %v1059
    %v1428 = vmax.f32 %v1037, %v1060
    %v1429 = vmax.f32 %v1061, %v1084
    %v1430 = vmax.f32 %v1062, %v1085
    %v1431 = vmax.f32 %v1063, %v1086
    %v1432 = vmax.f32 %v1064, %v1087
    %v1433 = vmax.f32 %v1065, %v1088
    %v1434 = vmax.f32 %v1066, %v1089
    %v1435 = vmax.f32 %v1067, %v1090
    %v1436 = vmax.f32 %v1068, %v1091
    %v1437 = vmax.f32 %v1069, %v1092
    %v1438 = vmax.f32 %v1070, %v1093
    %v1439 = vmax.f32 %v1071, %v1094
    %v1440 = vmax.f32 %v1072, %v1095
    %v1441 = vmax.f32 %v1073, %v1096
    %v1442 = vmax.f32 %v1074, %v1097
    %v1443 = vmax.f32 %v1075, %v1098
    %v1444 = vmax.f32 %v1076, %v1099
    %v1445 = vmax.f32 %v1077, %v1100
    %v1446 = vmax.f32 %v1078, %v1101
    %v1447 = vmax.f32 %v1079, %v1102
    %v1448 = vmax.f32 %v1080, %v1103
    %v1449 = vmax.f32 %v1081, %v1104
    %v1450 = vmax.f32 %v1082, %v1105
    %v1451 = vmax.f32 %v1083, %v1106
    %v1452 = vmax.f32 %v1107, %v1130
    %v1453 = vmax.f32 %v1108, %v1131
    %v1454 = vmax.f32 %v1109, %v1132
    %v1455 = vmax.f32 %v1110, %v1133
    %v1456 = vmax.f32 %v1111, %v1134
    %v1457 = vmax.f32 %v1112, %v1135
    %v1458 = vmax.f32 %v1113, %v1136
    %v1459 = vmax.f32 %v1114, %v1137
    %v1460 = vmax.f32 %v1115, %v1138
    %v1461 = vmax.f32 %v1116, %v1139
    %v1462 = vmax.f32 %v1117, %v1140
    %v1463 = vmax.f32 %v1118, %v1141
    %v1464 = vmax.f32 %v1119, %v1142
    %v1465 = vmax.f32 %v1120, %v1143
    %v1466 = vmax.f32 %v1121, %v1144
    %v1467 = vmax.f32 %v1122, %v1145
    %v1468 = vmax.f32 %v1123, %v1146
    %v1469 = vmax.f32 %v1124, %v1147
    %v1470 = vmax.f32 %v1125, %v1148
    %v1471 = vmax.f32 %v1126, %v1149
    %v1472 = vmax.f32 %v1127, %v1150
    %v1473 = vmax.f32 %v1128, %v1151
    %v1474 = vmax.f32 %v1129, %v1152
    %v1475 = vmax.f32 %v1153, %v1176
    %v1476 = vmax.f32 %v1154, %v1177
    %v1477 = vmax.f32 %v1155, %v1178
    %v1478 = vmax.f32 %v1156, %v1179
    %v1479 = vmax.f32 %v1157, %v1180
    %v1480 = vmax.f32 %v1158, %v1181
    %v1481 = vmax.f32 %v1159, %v1182
    %v1482 = vmax.f32 %v1160, %v1183
    %v1483 = vmax.f32 %v1161, %v1184
    %v1484 = vmax.f32 %v1162, %v1185
    %v1485 = vmax.f32 %v1163, %v1186
    %v1486 = vmax.f32 %v1164, %v1187
    %v1487 = vmax.f32 %v1165, %v1188
    %v1488 = vmax.f32 %v1166, %v1189
    %v1489 = vmax.f32 %v1167, %v1190
    %v1490 = vmax.f32 %v1168, %v1191
    %v1491 = vmax.f32 %v1169, %v1192
    %v1492 = vmax.f32 %v1170, %v1193
    %v1493 = vmax.f32 %v1171, %v1194
    %v1494 = vmax.f32 %v1172, %v1195
    %v1495 = vmax.f32 %v1173, %v1196
    %v1496 = vmax.f32 %v1174, %v1197
    %v1497 = vmax.f32 %v1175, %v1198
    %v1498 = vmax.f32 %v1199, %v1222
    %v1499 = vmax.f32 %v1200, %v1223
    %v1500 = vmax.f32 %v1201, %v1224
    %v1501 = vmax.f32 %v1202, %v1225
    %v1502 = vmax.f32 %v1203, %v1226
    %v1503 = vmax.f32 %v1204, %v1227
    %v1504 = vmax.f32 %v1205, %v1228
    %v1505 = vmax.f32 %v1206, %v1229
    %v1506 = vmax.f32 %v1207, %v1230
    %v1507 = vmax.f32 %v1208, %v1231
    %v1508 = vmax.f32 %v1209, %v1232
    %v1509 = vmax.f32 %v1210, %v1233
    %v1510 = vmax.f32 %v1211, %v1234
    %v1511 = vmax.f32 %v1212, %v1235
    %v1512 = vmax.f32 %v1213, %v1236
    %v1513 = vmax.f32 %v1214, %v1237
    %v1514 = vmax.f32 %v1215, %v1238
    %v1515 = vmax.f32 %v1216, %v1239
    %v1516 = vmax.f32 %v1217, %v1240
    %v1517 = vmax.f32 %v1218, %v1241
    %v1518 = vmax.f32 %v1219, %v1242
    %v1519 = vmax.f32 %v1220, %v1243
    %v1520 = vmax.f32 %v1221, %v1244
    %v1521 = vmax.f32 %v1268, %v785
    %v1522 = vmax.f32 %v1269, %v786
    %v1523 = vmax.f32 %v1270, %v787
    %v1524 = vmax.f32 %v1271, %v788
    %v1525 = vmax.f32 %v1272, %v789
    %v1526 = vmax.f32 %v1273, %v790
    %v1527 = vmax.f32 %v1274, %v791
    %v1528 = vmax.f32 %v1275, %v792
    %v1529 = vmax.f32 %v1276, %v793
    %v1530 = vmax.f32 %v1277, %v794
    %v1531 = vmax.f32 %v1278, %v795
    %v1532 = vmax.f32 %v1279, %v796
    %v1533 = vmax.f32 %v1280, %v797
    %v1534 = vmax.f32 %v1281, %v798
    %v1535 = vmax.f32 %v1282, %v799
    %v1536 = vmax.f32 %v1283, %v800
    %v1537 = vmax.f32 %v1284, %v801
    %v1538 = vmax.f32 %v1285, %v802
    %v1539 = vmax.f32 %v1286, %v803
    %v1540 = vmax.f32 %v1287, %v804
    %v1541 = vmax.f32 %v1288, %v805
    %v1542 = vmax.f32 %v1289, %v806
    %v1543 = vmax.f32 %v1290, %v807
    %v1544 = vmax.f32 %v1291, %v831
    %v1545 = vmax.f32 %v1292, %v832
    %v1546 = vmax.f32 %v1293, %v833
    %v1547 = vmax.f32 %v1294, %v834
    %v1548 = vmax.f32 %v1295, %v835
    %v1549 = vmax.f32 %v1296, %v836
    %v1550 = vmax.f32 %v1297, %v837
    %v1551 = vmax.f32 %v1298, %v838
    %v1552 = vmax.f32 %v1299, %v839
    %v1553 = vmax.f32 %v1300, %v840
    %v1554 = vmax.f32 %v1301, %v841
    %v1555 = vmax.f32 %v1302, %v842
    %v1556 = vmax.f32 %v1303, %v843
    %v1557 = vmax.f32 %v1304, %v844
    %v1558 = vmax.f32 %v1305, %v845
    %v1559 = vmax.f32 %v1306, %v846
    %v1560 = vmax.f32 %v1307, %v847
    %v1561 = vmax.f32 %v1308, %v848
    %v1562 = vmax.f32 %v1309, %v849
    %v1563 = vmax.f32 %v1310, %v850
    %v1564 = vmax.f32 %v1311, %v851
    %v1565 = vmax.f32 %v1312, %v852
    %v1566 = vmax.f32 %v1313, %v853
    %v1567 = vmax.f32 %v1314, %v877
    %v1568 = vmax.f32 %v1315, %v878
    %v1569 = vmax.f32 %v1316, %v879
    %v1570 = vmax.f32 %v1317, %v880
    %v1571 = vmax.f32 %v1318, %v881
    %v1572 = vmax.f32 %v1319, %v882
    %v1573 = vmax.f32 %v1320, %v883
    %v1574 = vmax.f32 %v1321, %v884
    %v1575 = vmax.f32 %v1322, %v885
    %v1576 = vmax.f32 %v1323, %v886
    %v1577 = vmax.f32 %v1324, %v887
    %v1578 = vmax.f32 %v1325, %v888
    %v1579 = vmax.f32 %v1326, %v889
    %v1580 = vmax.f32 %v1327, %v890
    %v1581 = vmax.f32 %v1328, %v891
    %v1582 = vmax.f32 %v1329, %v892
    %v1583 = vmax.f32 %v1330, %v893
    %v1584 = vmax.f32 %v1331, %v894
    %v1585 = vmax.f32 %v1332, %v895
    %v1586 = vmax.f32 %v1333, %v896
    %v1587 = vmax.f32 %v1334, %v897
    %v1588 = vmax.f32 %v1335, %v898
    %v1589 = vmax.f32 %v1336, %v899
    %v1590 = vmax.f32 %v1337, %v923
    %v1591 = vmax.f32 %v1338, %v924
    %v1592 = vmax.f32 %v1339, %v925
    %v1593 = vmax.f32 %v1340, %v926
    %v1594 = vmax.f32 %v1341, %v927
    %v1595 = vmax.f32 %v1342, %v928
    %v1596 = vmax.f32 %v1343, %v929
    %v1597 = vmax.f32 %v1344, %v930
    %v1598 = vmax.f32 %v1345, %v931
    %v1599 = vmax.f32 %v1346, %v932
    %v1600 = vmax.f32 %v1347, %v933
    %v1601 = vmax.f32 %v1348, %v934
    %v1602 = vmax.f32 %v1349, %v935
    %v1603 = vmax.f32 %v1350, %v936
    %v1604 = vmax.f32 %v1351, %v937
    %v1605 = vmax.f32 %v1352, %v938
    %v1606 = vmax.f32 %v1353, %v939
    %v1607 = vmax.f32 %v1354, %v940
    %v1608 = vmax.f32 %v1355, %v941
    %v1609 = vmax.f32 %v1356, %v942
    %v1610 = vmax.f32 %v1357, %v943
    %v1611 = vmax.f32 %v1358, %v944
    %v1612 = vmax.f32 %v1359, %v945
    %v1613 = vmax.f32 %v1360, %v969
    %v1614 = vmax.f32 %v1361, %v970
    %v1615 = vmax.f32 %v1362, %v971
    %v1616 = vmax.f32 %v1363, %v972
    %v1617 = vmax.f32 %v1364, %v973
    %v1618 = vmax.f32 %v1365, %v974
    %v1619 = vmax.f32 %v1366, %v975
    %v1620 = vmax.f32 %v1367, %v976
    %v1621 = vmax.f32 %v1368, %v977
    %v1622 = vmax.f32 %v1369, %v978
    %v1623 = vmax.f32 %v1370, %v979
    %v1624 = vmax.f32 %v1371, %v980
    %v1625 = vmax.f32 %v1372, %v981
    %v1626 = vmax.f32 %v1373, %v982
    %v1627 = vmax.f32 %v1374, %v983
    %v1628 = vmax.f32 %v1375, %v984
    %v1629 = vmax.f32 %v1376, %v985
    %v1630 = vmax.f32 %v1377, %v986
    %v1631 = vmax.f32 %v1378, %v987
    %v1632 = vmax.f32 %v1379, %v988
    %v1633 = vmax.f32 %v1380, %v989
    %v1634 = vmax.f32 %v1381, %v990
    %v1635 = vmax.f32 %v1382, %v991
    %v1636 = vmax.f32 %v1383, %v1015
    %v1637 = vmax.f32 %v1384, %v1016
    %v1638 = vmax.f32 %v1385, %v1017
    %v1639 = vmax.f32 %v1386, %v1018
    %v1640 = vmax.f32 %v1387, %v1019
    %v1641 = vmax.f32 %v1388, %v1020
    %v1642 = vmax.f32 %v1389, %v1021
    %v1643 = vmax.f32 %v1390, %v1022
    %v1644 = vmax.f32 %v1391, %v1023
    %v1645 = vmax.f32 %v1392, %v1024
    %v1646 = vmax.f32 %v1393, %v1025
    %v1647 = vmax.f32 %v1394, %v1026
    %v1648 = vmax.f32 %v1395, %v1027
    %v1649 = vmax.f32 %v1396, %v1028
    %v1650 = vmax.f32 %v1397, %v1029
    %v1651 = vmax.f32 %v1398, %v1030
    %v1652 = vmax.f32 %v1399, %v1031
    %v1653 = vmax.f32 %v1400, %v1032
    %v1654 = vmax.f32 %v1401, %v1033
    %v1655 = vmax.f32 %v1402, %v1034
    %v1656 = vmax.f32 %v1403, %v1035
    %v1657 = vmax.f32 %v1404, %v1036
    %v1658 = vmax.f32 %v1405, %v1037
    %v1659 = vmax.f32 %v1406, %v1061
    %v1660 = vmax.f32 %v1407, %v1062
    %v1661 = vmax.f32 %v1408, %v1063
    %v1662 = vmax.f32 %v1409, %v1064
    %v1663 = vmax.f32 %v1410, %v1065
    %v1664 = vmax.f32 %v1411, %v1066
    %v1665 = vmax.f32 %v1412, %v1067
    %v1666 = vmax.f32 %v1413, %v1068
    %v1667 = vmax.f32 %v1414, %v1069
    %v1668 = vmax.f32 %v1415, %v1070
    %v1669 = vmax.f32 %v1416, %v1071
    %v1670 = vmax.f32 %v1417, %v1072
    %v1671 = vmax.f32 %v1418, %v1073
    %v1672 = vmax.f32 %v1419, %v1074
    %v1673 = vmax.f32 %v1420, %v1075
    %v1674 = vmax.f32 %v1421, %v1076
    %v1675 = vmax.f32 %v1422, %v1077
    %v1676 = vmax.f32 %v1423, %v1078
    %v1677 = vmax.f32 %v1424, %v1079
    %v1678 = vmax.f32 %v1425, %v1080
    %v1679 = vmax.f32 %v1426, %v1081
    %v1680 = vmax.f32 %v1427, %v1082
    %v1681 = vmax.f32 %v1428, %v1083
    %v1682 = vmax.f32 %v1429, %v1107
    %v1683 = vmax.f32 %v1430, %v1108
    %v1684 = vmax.f32 %v1431, %v1109
    %v1685 = vmax.f32 %v1432, %v1110
    %v1686 = vmax.f32 %v1433, %v1111
    %v1687 = vmax.f32 %v1434, %v1112
    %v1688 = vmax.f32 %v1435, %v1113
    %v1689 = vmax.f32 %v1436, %v1114
    %v1690 = vmax.f32 %v1437, %v1115
    %v1691 = vmax.f32 %v1438, %v1116
    %v1692 = vmax.f32 %v1439, %v1117
    %v1693 = vmax.f32 %v1440, %v1118
    %v1694 = vmax.f32 %v1441, %v1119
    %v1695 = vmax.f32 %v1442, %v1120
    %v1696 = vmax.f32 %v1443, %v1121
    %v1697 = vmax.f32 %v1444, %v1122
    %v1698 = vmax.f32 %v1445, %v1123
    %v1699 = vmax.f32 %v1446, %v1124
    %v1700 = vmax.f32 %v1447, %v1125
    %v1701 = vmax.f32 %v1448, %v1126
    %v1702 = vmax.f32 %v1449, %v1127
    %v1703 = vmax.f32 %v1450, %v1128
    %v1704 = vmax.f32 %v1451, %v1129
    %v1705 = vmax.f32 %v1452, %v1153
    %v1706 = vmax.f32 %v1453, %v1154
    %v1707 = vmax.f32 %v1454, %v1155
    %v1708 = vmax.f32 %v1455, %v1156
    %v1709 = vmax.f32 %v1456, %v1157
    %v1710 = vmax.f32 %v1457, %v1158
    %v1711 = vmax.f32 %v1458, %v1159
    %v1712 = vmax.f32 %v1459, %v1160
    %v1713 = vmax.f32 %v1460, %v1161
    %v1714 = vmax.f32 %v1461, %v1162
    %v1715 = vmax.f32 %v1462, %v1163
    %v1716 = vmax.f32 %v1463, %v1164
    %v1717 = vmax.f32 %v1464, %v1165
    %v1718 = vmax.f32 %v1465, %v1166
    %v1719 = vmax.f32 %v1466, %v1167
    %v1720 = vmax.f32 %v1467, %v1168
    %v1721 = vmax.f32 %v1468, %v1169
    %v1722 = vmax.f32 %v1469, %v1170
    %v1723 = vmax.f32 %v1470, %v1171
    %v1724 = vmax.f32 %v1471, %v1172
    %v1725 = vmax.f32 %v1472, %v1173
    %v1726 = vmax.f32 %v1473, %v1174
    %v1727 = vmax.f32 %v1474, %v1175
    %v1728 = vmax.f32 %v1475, %v1199
    %v1729 = vmax.f32 %v1476, %v1200
    %v1730 = vmax.f32 %v1477, %v1201
    %v1731 = vmax.f32 %v1478, %v1202
    %v1732 = vmax.f32 %v1479, %v1203
    %v1733 = vmax.f32 %v1480, %v1204
    %v1734 = vmax.f32 %v1481, %v1205
    %v1735 = vmax.f32 %v1482, %v1206
    %v1736 = vmax.f32 %v1483, %v1207
    %v1737 = vmax.f32 %v1484, %v1208
    %v1738 = vmax.f32 %v1485, %v1209
    %v1739 = vmax.f32 %v1486, %v1210
    %v1740 = vmax.f32 %v1487, %v1211
    %v1741 = vmax.f32 %v1488, %v1212
    %v1742 = vmax.f32 %v1489, %v1213
    %v1743 = vmax.f32 %v1490, %v1214
    %v1744 = vmax.f32 %v1491, %v1215
    %v1745 = vmax.f32 %v1492, %v1216
    %v1746 = vmax.f32 %v1493, %v1217
    %v1747 = vmax.f32 %v1494, %v1218
    %v1748 = vmax.f32 %v1495, %v1219
    %v1749 = vmax.f32 %v1496, %v1220
    %v1750 = vmax.f32 %v1497, %v1221
    %v1751 = vmax.f32 %v1498, %v1245
    %v1752 = vmax.f32 %v1499, %v1246
    %v1753 = vmax.f32 %v1500, %v1247
    %v1754 = vmax.f32 %v1501, %v1248
    %v1755 = vmax.f32 %v1502, %v1249
    %v1756 = vmax.f32 %v1503, %v1250
    %v1757 = vmax.f32 %v1504, %v1251
    %v1758 = vmax.f32 %v1505, %v1252
    %v1759 = vmax.f32 %v1506, %v1253
    %v1760 = vmax.f32 %v1507, %v1254
    %v1761 = vmax.f32 %v1508, %v1255
    %v1762 = vmax.f32 %v1509, %v1256
    %v1763 = vmax.f32 %v1510, %v1257
    %v1764 = vmax.f32 %v1511, %v1258
    %v1765 = vmax.f32 %v1512, %v1259
    %v1766 = vmax.f32 %v1513, %v1260
    %v1767 = vmax.f32 %v1514, %v1261
    %v1768 = vmax.f32 %v1515, %v1262
    %v1769 = vmax.f32 %v1516, %v1263
    %v1770 = vmax.f32 %v1517, %v1264
    %v1771 = vmax.f32 %v1518, %v1265
    %v1772 = vmax.f32 %v1519, %v1266
    %v1773 = vmax.f32 %v1520, %v1267
    %v1774 = vmax.f32 %v1521, %v1522
    %v1775 = vmax.f32 %v1523, %v1524
    %v1776 = vmax.f32 %v1525, %v1526
    %v1777 = vmax.f32 %v1527, %v1528
    %v1778 = vmax.f32 %v1529, %v1530
    %v1779 = vmax.f32 %v1531, %v1532
    %v1780 = vmax.f32 %v1533, %v1534
    %v1781 = vmax.f32 %v1535, %v1536
    %v1782 = vmax.f32 %v1537, %v1538
    %v1783 = vmax.f32 %v1539, %v1540
    %v1784 = vmax.f32 %v1541, %v1542
    %v1785 = vmax.f32 %v1544, %v1545
    %v1786 = vmax.f32 %v1546, %v1547
    %v1787 = vmax.f32 %v1548, %v1549
    %v1788 = vmax.f32 %v1550, %v1551
    %v1789 = vmax.f32 %v1552, %v1553
    %v1790 = vmax.f32 %v1554, %v1555
    %v1791 = vmax.f32 %v1556, %v1557
    %v1792 = vmax.f32 %v1558, %v1559
    %v1793 = vmax.f32 %v1560, %v1561
    %v1794 = vmax.f32 %v1562, %v1563
    %v1795 = vmax.f32 %v1564, %v1565
    %v1796 = vmax.f32 %v1567, %v1568
    %v1797 = vmax.f32 %v1569, %v1570
    %v1798 = vmax.f32 %v1571, %v1572
    %v1799 = vmax.f32 %v1573, %v1574
    %v1800 = vmax.f32 %v1575, %v1576
    %v1801 = vmax.f32 %v1577, %v1578
    %v1802 = vmax.f32 %v1579, %v1580
    %v1803 = vmax.f32 %v1581, %v1582
    %v1804 = vmax.f32 %v1583, %v1584
    %v1805 = vmax.f32 %v1585, %v1586
    %v1806 = vmax.f32 %v1587, %v1588
    %v1807 = vmax.f32 %v1590, %v1591
    %v1808 = vmax.f32 %v1592, %v1593
    %v1809 = vmax.f32 %v1594, %v1595
    %v1810 = vmax.f32 %v1596, %v1597
    %v1811 = vmax.f32 %v1598, %v1599
    %v1812 = vmax.f32 %v1600, %v1601
    %v1813 = vmax.f32 %v1602, %v1603
    %v1814 = vmax.f32 %v1604, %v1605
    %v1815 = vmax.f32 %v1606, %v1607
    %v1816 = vmax.f32 %v1608, %v1609
    %v1817 = vmax.f32 %v1610, %v1611
    %v1818 = vmax.f32 %v1613, %v1614
    %v1819 = vmax.f32 %v1615, %v1616
    %v1820 = vmax.f32 %v1617, %v1618
    %v1821 = vmax.f32 %v1619, %v1620
    %v1822 = vmax.f32 %v1621, %v1622
    %v1823 = vmax.f32 %v1623, %v1624
    %v1824 = vmax.f32 %v1625, %v1626
    %v1825 = vmax.f32 %v1627, %v1628
    %v1826 = vmax.f32 %v1629, %v1630
    %v1827 = vmax.f32 %v1631, %v1632
    %v1828 = vmax.f32 %v1633, %v1634
    %v1829 = vmax.f32 %v1636, %v1637
    %v1830 = vmax.f32 %v1638, %v1639
    %v1831 = vmax.f32 %v1640, %v1641
    %v1832 = vmax.f32 %v1642, %v1643
    %v1833 = vmax.f32 %v1644, %v1645
    %v1834 = vmax.f32 %v1646, %v1647
    %v1835 = vmax.f32 %v1648, %v1649
    %v1836 = vmax.f32 %v1650, %v1651
    %v1837 = vmax.f32 %v1652, %v1653
    %v1838 = vmax.f32 %v1654, %v1655
    %v1839 = vmax.f32 %v1656, %v1657
    %v1840 = vmax.f32 %v1659, %v1660
    %v1841 = vmax.f32 %v1661, %v1662
    %v1842 = vmax.f32 %v1663, %v1664
    %v1843 = vmax.f32 %v1665, %v1666
    %v1844 = vmax.f32 %v1667, %v1668
    %v1845 = vmax.f32 %v1669, %v1670
    %v1846 = vmax.f32 %v1671, %v1672
    %v1847 = vmax.f32 %v1673, %v1674
    %v1848 = vmax.f32 %v1675, %v1676
    %v1849 = vmax.f32 %v1677, %v1678
    %v1850 = vmax.f32 %v1679, %v1680
    %v1851 = vmax.f32 %v1682, %v1683
    %v1852 = vmax.f32 %v1684, %v1685
    %v1853 = vmax.f32 %v1686, %v1687
    %v1854 = vmax.f32 %v1688, %v1689
    %v1855 = vmax.f32 %v1690, %v1691
    %v1856 = vmax.f32 %v1692, %v1693
    %v1857 = vmax.f32 %v1694, %v1695
    %v1858 = vmax.f32 %v1696, %v1697
    %v1859 = vmax.f32 %v1698, %v1699
    %v1860 = vmax.f32 %v1700, %v1701
    %v1861 = vmax.f32 %v1702, %v1703
    %v1862 = vmax.f32 %v1705, %v1706
    %v1863 = vmax.f32 %v1707, %v1708
    %v1864 = vmax.f32 %v1709, %v1710
    %v1865 = vmax.f32 %v1711, %v1712
    %v1866 = vmax.f32 %v1713, %v1714
    %v1867 = vmax.f32 %v1715, %v1716
    %v1868 = vmax.f32 %v1717, %v1718
    %v1869 = vmax.f32 %v1719, %v1720
    %v1870 = vmax.f32 %v1721, %v1722
    %v1871 = vmax.f32 %v1723, %v1724
    %v1872 = vmax.f32 %v1725, %v1726
    %v1873 = vmax.f32 %v1728, %v1729
    %v1874 = vmax.f32 %v1730, %v1731
    %v1875 = vmax.f32 %v1732, %v1733
    %v1876 = vmax.f32 %v1734, %v1735
    %v1877 = vmax.f32 %v1736, %v1737
    %v1878 = vmax.f32 %v1738, %v1739
    %v1879 = vmax.f32 %v1740, %v1741
    %v1880 = vmax.f32 %v1742, %v1743
    %v1881 = vmax.f32 %v1744, %v1745
    %v1882 = vmax.f32 %v1746, %v1747
    %v1883 = vmax.f32 %v1748, %v1749
    %v1884 = vmax.f32 %v1751, %v1752
    %v1885 = vmax.f32 %v1753, %v1754
    %v1886 = vmax.f32 %v1755, %v1756
    %v1887 = vmax.f32 %v1757, %v1758
    %v1888 = vmax.f32 %v1759, %v1760
    %v1889 = vmax.f32 %v1761, %v1762
    %v1890 = vmax.f32 %v1763, %v1764
    %v1891 = vmax.f32 %v1765, %v1766
    %v1892 = vmax.f32 %v1767, %v1768
    %v1893 = vmax.f32 %v1769, %v1770
    %v1894 = vmax.f32 %v1771, %v1772
    %v1895 = vmax.f32 %v1774, %v1523
    %v1896 = vmax.f32 %v1775, %v1525
    %v1897 = vmax.f32 %v1776, %v1527
    %v1898 = vmax.f32 %v1777, %v1529
    %v1899 = vmax.f32 %v1778, %v1531
    %v1900 = vmax.f32 %v1779, %v1533
    %v1901 = vmax.f32 %v1780, %v1535
    %v1902 = vmax.f32 %v1781, %v1537
    %v1903 = vmax.f32 %v1782, %v1539
    %v1904 = vmax.f32 %v1783, %v1541
    %v1905 = vmax.f32 %v1784, %v1543
    %v1906 = vmax.f32 %v1785, %v1546
    %v1907 = vmax.f32 %v1786, %v1548
    %v1908 = vmax.f32 %v1787, %v1550
    %v1909 = vmax.f32 %v1788, %v1552
    %v1910 = vmax.f32 %v1789, %v1554
    %v1911 = vmax.f32 %v1790, %v1556
    %v1912 = vmax.f32 %v1791, %v1558
    %v1913 = vmax.f32 %v1792, %v1560
    %v1914 = vmax.f32 %v1793, %v1562
    %v1915 = vmax.f32 %v1794, %v1564
    %v1916 = vmax.f32 %v1795, %v1566
    %v1917 = vmax.f32 %v1796, %v1569
    %v1918 = vmax.f32 %v1797, %v1571
    %v1919 = vmax.f32 %v1798, %v1573
    %v1920 = vmax.f32 %v1799, %v1575
    %v1921 = vmax.f32 %v1800, %v1577
    %v1922 = vmax.f32 %v1801, %v1579
    %v1923 = vmax.f32 %v1802, %v1581
    %v1924 = vmax.f32 %v1803, %v1583
    %v1925 = vmax.f32 %v1804, %v1585
    %v1926 = vmax.f32 %v1805, %v1587
    %v1927 = vmax.f32 %v1806, %v1589
    %v1928 = vmax.f32 %v1807, %v1592
    %v1929 = vmax.f32 %v1808, %v1594
    %v1930 = vmax.f32 %v1809, %v1596
    %v1931 = vmax.f32 %v1810, %v1598
    %v1932 = vmax.f32 %v1811, %v1600
    %v1933 = vmax.f32 %v1812, %v1602
    %v1934 = vmax.f32 %v1813, %v1604
    %v1935 = vmax.f32 %v1814, %v1606
    %v1936 = vmax.f32 %v1815, %v1608
    %v1937 = vmax.f32 %v1816, %v1610
    %v1938 = vmax.f32 %v1817, %v1612
    %v1939 = vmax.f32 %v1818, %v1615
    %v1940 = vmax.f32 %v1819, %v1617
    %v1941 = vmax.f32 %v1820, %v1619
    %v1942 = vmax.f32 %v1821, %v1621
    %v1943 = vmax.f32 %v1822, %v1623
    %v1944 = vmax.f32 %v1823, %v1625
    %v1945 = vmax.f32 %v1824, %v1627
    %v1946 = vmax.f32 %v1825, %v1629
    %v1947 = vmax.f32 %v1826, %v1631
    %v1948 = vmax.f32 %v1827, %v1633
    %v1949 = vmax.f32 %v1828, %v1635
    %v1950 = vmax.f32 %v1829, %v1638
    %v1951 = vmax.f32 %v1830, %v1640
    %v1952 = vmax.f32 %v1831, %v1642
    %v1953 = vmax.f32 %v1832, %v1644
    %v1954 = vmax.f32 %v1833, %v1646
    %v1955 = vmax.f32 %v1834, %v1648
    %v1956 = vmax.f32 %v1835, %v1650
    %v1957 = vmax.f32 %v1836, %v1652
    %v1958 = vmax.f32 %v1837, %v1654
    %v1959 = vmax.f32 %v1838, %v1656
    %v1960 = vmax.f32 %v1839, %v1658
    %v1961 = vmax.f32 %v1840, %v1661
    %v1962 = vmax.f32 %v1841, %v1663
    %v1963 = vmax.f32 %v1842, %v1665
    %v1964 = vmax.f32 %v1843, %v1667
    %v1965 = vmax.f32 %v1844, %v1669
    %v1966 = vmax.f32 %v1845, %v1671
    %v1967 = vmax.f32 %v1846, %v1673
    %v1968 = vmax.f32 %v1847, %v1675
    %v1969 = vmax.f32 %v1848, %v1677
    %v1970 = vmax.f32 %v1849, %v1679
    %v1971 = vmax.f32 %v1850, %v1681
    %v1972 = vmax.f32 %v1851, %v1684
    %v1973 = vmax.f32 %v1852, %v1686
    %v1974 = vmax.f32 %v1853, %v1688
    %v1975 = vmax.f32 %v1854, %v1690
    %v1976 = vmax.f32 %v1855, %v1692
    %v1977 = vmax.f32 %v1856, %v1694
    %v1978 = vmax.f32 %v1857, %v1696
    %v1979 = vmax.f32 %v1858, %v1698
    %v1980 = vmax.f32 %v1859, %v1700
    %v1981 = vmax.f32 %v1860, %v1702
    %v1982 = vmax.f32 %v1861, %v1704
    %v1983 = vmax.f32 %v1862, %v1707
    %v1984 = vmax.f32 %v1863, %v1709
    %v1985 = vmax.f32 %v1864, %v1711
    %v1986 = vmax.f32 %v1865, %v1713
    %v1987 = vmax.f32 %v1866, %v1715
    %v1988 = vmax.f32 %v1867, %v1717
    %v1989 = vmax.f32 %v1868, %v1719
    %v1990 = vmax.f32 %v1869, %v1721
    %v1991 = vmax.f32 %v1870, %v1723
    %v1992 = vmax.f32 %v1871, %v1725
    %v1993 = vmax.f32 %v1872, %v1727
    %v1994 = vmax.f32 %v1873, %v1730
    %v1995 = vmax.f32 %v1874, %v1732
    %v1996 = vmax.f32 %v1875, %v1734
    %v1997 = vmax.f32 %v1876, %v1736
    %v1998 = vmax.f32 %v1877, %v1738
    %v1999 = vmax.f32 %v1878, %v1740
    %v2000 = vmax.f32 %v1879, %v1742
    %v2001 = vmax.f32 %v1880, %v1744
    %v2002 = vmax.f32 %v1881, %v1746
    %v2003 = vmax.f32 %v1882, %v1748
    %v2004 = vmax.f32 %v1883, %v1750
    %v2005 = vmax.f32 %v1884, %v1753
    %v2006 = vmax.f32 %v1885, %v1755
    %v2007 = vmax.f32 %v1886, %v1757
    %v2008 = vmax.f32 %v1887, %v1759
    %v2009 = vmax.f32 %v1888, %v1761
    %v2010 = vmax.f32 %v1889, %v1763
    %v2011 = vmax.f32 %v1890, %v1765
    %v2012 = vmax.f32 %v1891, %v1767
    %v2013 = vmax.f32 %v1892, %v1769
    %v2014 = vmax.f32 %v1893, %v1771
    %v2015 = vmax.f32 %v1894, %v1773
    %v2016 = vld [vmem:[#allocation8] sm:$0x1]
    %v2017 = vld [vmem:[#allocation2] sm:$0x1]
    %v2018 = vld [vmem:[#allocation10] sm:$0x1]
    %v2019 = vld [vmem:[#allocation11] sm:$0x1]
    %2101 = vrot.lane.b32.xlu0 %v1896, 28
    %v2102 = vpop.permute.xlu0 %2101
    %2103 = vrot.lane.b32.xlu0 %v1897, 28
    %v2104 = vpop.permute.xlu0 %2103
    %2105 = vrot.lane.b32.xlu0 %v1898, 28
    %v2106 = vpop.permute.xlu0 %2105
    %2107 = vrot.lane.b32.xlu0 %v1899, 28
    %v2108 = vpop.permute.xlu0 %2107
    %2109 = vrot.lane.b32.xlu0 %v1900, 28
    %v2110 = vpop.permute.xlu0 %2109
    %2111 = vrot.lane.b32.xlu0 %v1901, 28
    %v2112 = vpop.permute.xlu0 %2111
    %2113 = vrot.lane.b32.xlu0 %v1902, 28
    %v2114 = vpop.permute.xlu0 %2113
    %2115 = vrot.lane.b32.xlu0 %v1903, 28
    %v2116 = vpop.permute.xlu0 %2115
    %2117 = vrot.lane.b32.xlu0 %v1904, 28
    %v2118 = vpop.permute.xlu0 %2117
    %2119 = vrot.lane.b32.xlu0 %v1907, 28
    %v2120 = vpop.permute.xlu0 %2119
    %2121 = vrot.lane.b32.xlu0 %v1908, 28
    %v2122 = vpop.permute.xlu0 %2121
    %2123 = vrot.lane.b32.xlu0 %v1909, 28
    %v2124 = vpop.permute.xlu0 %2123
    %2125 = vrot.lane.b32.xlu0 %v1910, 28
    %v2126 = vpop.permute.xlu0 %2125
    %2127 = vrot.lane.b32.xlu0 %v1911, 28
    %v2128 = vpop.permute.xlu0 %2127
    %2129 = vrot.lane.b32.xlu0 %v1912, 28
    %v2130 = vpop.permute.xlu0 %2129
    %2131 = vrot.lane.b32.xlu0 %v1913, 28
    %v2132 = vpop.permute.xlu0 %2131
    %2133 = vrot.lane.b32.xlu0 %v1914, 28
    %v2134 = vpop.permute.xlu0 %2133
    %2135 = vrot.lane.b32.xlu0 %v1915, 28
    %v2136 = vpop.permute.xlu0 %2135
    %2137 = vrot.lane.b32.xlu0 %v1918, 28
    %v2138 = vpop.permute.xlu0 %2137
    %2139 = vrot.lane.b32.xlu0 %v1919, 28
    %v2140 = vpop.permute.xlu0 %2139
    %2141 = vrot.lane.b32.xlu0 %v1920, 28
    %v2142 = vpop.permute.xlu0 %2141
    %2143 = vrot.lane.b32.xlu0 %v1921, 28
    %v2144 = vpop.permute.xlu0 %2143
    %2145 = vrot.lane.b32.xlu0 %v1922, 28
    %v2146 = vpop.permute.xlu0 %2145
    %2147 = vrot.lane.b32.xlu0 %v1923, 28
    %v2148 = vpop.permute.xlu0 %2147
    %2149 = vrot.lane.b32.xlu0 %v1924, 28
    %v2150 = vpop.permute.xlu0 %2149
    %2151 = vrot.lane.b32.xlu0 %v1925, 28
    %v2152 = vpop.permute.xlu0 %2151
    %2153 = vrot.lane.b32.xlu0 %v1926, 28
    %v2154 = vpop.permute.xlu0 %2153
    %2155 = vrot.lane.b32.xlu0 %v1929, 28
    %v2156 = vpop.permute.xlu0 %2155
    %2157 = vrot.lane.b32.xlu0 %v1930, 28
    %v2158 = vpop.permute.xlu0 %2157
    %2159 = vrot.lane.b32.xlu0 %v1931, 28
    %v2160 = vpop.permute.xlu0 %2159
    %2161 = vrot.lane.b32.xlu0 %v1932, 28
    %v2162 = vpop.permute.xlu0 %2161
    %2163 = vrot.lane.b32.xlu0 %v1933, 28
    %v2164 = vpop.permute.xlu0 %2163
    %2165 = vrot.lane.b32.xlu0 %v1934, 28
    %v2166 = vpop.permute.xlu0 %2165
    %2167 = vrot.lane.b32.xlu0 %v1935, 28
    %v2168 = vpop.permute.xlu0 %2167
    %2169 = vrot.lane.b32.xlu0 %v1936, 28
    %v2170 = vpop.permute.xlu0 %2169
    %2171 = vrot.lane.b32.xlu0 %v1937, 28
    %v2172 = vpop.permute.xlu0 %2171
    %2173 = vrot.lane.b32.xlu0 %v1940, 28
    %v2174 = vpop.permute.xlu0 %2173
    %2175 = vrot.lane.b32.xlu0 %v1941, 28
    %v2176 = vpop.permute.xlu0 %2175
    %2177 = vrot.lane.b32.xlu0 %v1942, 28
    %v2178 = vpop.permute.xlu0 %2177
    %2179 = vrot.lane.b32.xlu0 %v1943, 28
    %v2180 = vpop.permute.xlu0 %2179
    %2181 = vrot.lane.b32.xlu0 %v1944, 28
    %v2182 = vpop.permute.xlu0 %2181
    %2183 = vrot.lane.b32.xlu0 %v1945, 28
    %v2184 = vpop.permute.xlu0 %2183
    %2185 = vrot.lane.b32.xlu0 %v1946, 28
    %v2186 = vpop.permute.xlu0 %2185
    %2187 = vrot.lane.b32.xlu0 %v1947, 28
    %v2188 = vpop.permute.xlu0 %2187
    %2189 = vrot.lane.b32.xlu0 %v1948, 28
    %v2190 = vpop.permute.xlu0 %2189
    %2191 = vrot.lane.b32.xlu0 %v1951, 28
    %v2192 = vpop.permute.xlu0 %2191
    %2193 = vrot.lane.b32.xlu0 %v1952, 28
    %v2194 = vpop.permute.xlu0 %2193
    %2195 = vrot.lane.b32.xlu0 %v1953, 28
    %v2196 = vpop.permute.xlu0 %2195
    %2197 = vrot.lane.b32.xlu0 %v1954, 28
    %v2198 = vpop.permute.xlu0 %2197
    %2199 = vrot.lane.b32.xlu0 %v1955, 28
    %v2200 = vpop.permute.xlu0 %2199
    %2201 = vrot.lane.b32.xlu0 %v1956, 28
    %v2202 = vpop.permute.xlu0 %2201
    %2203 = vrot.lane.b32.xlu0 %v1957, 28
    %v2204 = vpop.permute.xlu0 %2203
    %2205 = vrot.lane.b32.xlu0 %v1958, 28
    %v2206 = vpop.permute.xlu0 %2205
    %2207 = vrot.lane.b32.xlu0 %v1959, 28
    %v2208 = vpop.permute.xlu0 %2207
    %2209 = vrot.lane.b32.xlu0 %v1962, 28
    %v2210 = vpop.permute.xlu0 %2209
    %2211 = vrot.lane.b32.xlu0 %v1963, 28
    %v2212 = vpop.permute.xlu0 %2211
    %2213 = vrot.lane.b32.xlu0 %v1964, 28
    %v2214 = vpop.permute.xlu0 %2213
    %2215 = vrot.lane.b32.xlu0 %v1965, 28
    %v2216 = vpop.permute.xlu0 %2215
    %2217 = vrot.lane.b32.xlu0 %v1966, 28
    %v2218 = vpop.permute.xlu0 %2217
    %2219 = vrot.lane.b32.xlu0 %v1967, 28
    %v2220 = vpop.permute.xlu0 %2219
    %2221 = vrot.lane.b32.xlu0 %v1968, 28
    %v2222 = vpop.permute.xlu0 %2221
    %2223 = vrot.lane.b32.xlu0 %v1969, 28
    %v2224 = vpop.permute.xlu0 %2223
    %2225 = vrot.lane.b32.xlu0 %v1970, 28
    %v2226 = vpop.permute.xlu0 %2225
    %2227 = vrot.lane.b32.xlu0 %v1973, 28
    %v2228 = vpop.permute.xlu0 %2227
    %2229 = vrot.lane.b32.xlu0 %v1974, 28
    %v2230 = vpop.permute.xlu0 %2229
    %2231 = vrot.lane.b32.xlu0 %v1975, 28
    %v2232 = vpop.permute.xlu0 %2231
    %2233 = vrot.lane.b32.xlu0 %v1976, 28
    %v2234 = vpop.permute.xlu0 %2233
    %2235 = vrot.lane.b32.xlu0 %v1977, 28
    %v2236 = vpop.permute.xlu0 %2235
    %2237 = vrot.lane.b32.xlu0 %v1978, 28
    %v2238 = vpop.permute.xlu0 %2237
    %2239 = vrot.lane.b32.xlu0 %v1979, 28
    %v2240 = vpop.permute.xlu0 %2239
    %2241 = vrot.lane.b32.xlu0 %v1980, 28
    %v2242 = vpop.permute.xlu0 %2241
    %2243 = vrot.lane.b32.xlu0 %v1981, 28
    %v2244 = vpop.permute.xlu0 %2243
    %2245 = vrot.lane.b32.xlu0 %v1984, 28
    %v2246 = vpop.permute.xlu0 %2245
    %2247 = vrot.lane.b32.xlu0 %v1985, 28
    %v2248 = vpop.permute.xlu0 %2247
    %2249 = vrot.lane.b32.xlu0 %v1986, 28
    %v2250 = vpop.permute.xlu0 %2249
    %2251 = vrot.lane.b32.xlu0 %v1987, 28
    %v2252 = vpop.permute.xlu0 %2251
    %2253 = vrot.lane.b32.xlu0 %v1988, 28
    %v2254 = vpop.permute.xlu0 %2253
    %2255 = vrot.lane.b32.xlu0 %v1989, 28
    %v2256 = vpop.permute.xlu0 %2255
    %2257 = vrot.lane.b32.xlu0 %v1990, 28
    %v2258 = vpop.permute.xlu0 %2257
    %2259 = vrot.lane.b32.xlu0 %v1991, 28
    %v2260 = vpop.permute.xlu0 %2259
    %2261 = vrot.lane.b32.xlu0 %v1992, 28
    %v2262 = vpop.permute.xlu0 %2261
    %2353 = vrot.lane.b32.xlu0 %v1897, 56
    %v2354 = vpop.permute.xlu0 %2353
    %2355 = vrot.lane.b32.xlu0 %v1898, 56
    %v2356 = vpop.permute.xlu0 %2355
    %2357 = vrot.lane.b32.xlu0 %v1899, 56
    %v2358 = vpop.permute.xlu0 %2357
    %2359 = vrot.lane.b32.xlu0 %v1900, 56
    %v2360 = vpop.permute.xlu0 %2359
    %2361 = vrot.lane.b32.xlu0 %v1901, 56
    %v2362 = vpop.permute.xlu0 %2361
    %2363 = vrot.lane.b32.xlu0 %v1902, 56
    %v2364 = vpop.permute.xlu0 %2363
    %2365 = vrot.lane.b32.xlu0 %v1903, 56
    %v2366 = vpop.permute.xlu0 %2365
    %2367 = vrot.lane.b32.xlu0 %v1904, 56
    %v2368 = vpop.permute.xlu0 %2367
    %2369 = vrot.lane.b32.xlu0 %v1905, 56
    %v2370 = vpop.permute.xlu0 %2369
    %2371 = vrot.lane.b32.xlu0 %v1908, 56
    %v2372 = vpop.permute.xlu0 %2371
    %2373 = vrot.lane.b32.xlu0 %v1909, 56
    %v2374 = vpop.permute.xlu0 %2373
    %2375 = vrot.lane.b32.xlu0 %v1910, 56
    %v2376 = vpop.permute.xlu0 %2375
    %2377 = vrot.lane.b32.xlu0 %v1911, 56
    %v2378 = vpop.permute.xlu0 %2377
    %2379 = vrot.lane.b32.xlu0 %v1912, 56
    %v2380 = vpop.permute.xlu0 %2379
    %2381 = vrot.lane.b32.xlu0 %v1913, 56
    %v2382 = vpop.permute.xlu0 %2381
    %2383 = vrot.lane.b32.xlu0 %v1914, 56
    %v2384 = vpop.permute.xlu0 %2383
    %2385 = vrot.lane.b32.xlu0 %v1915, 56
    %v2386 = vpop.permute.xlu0 %2385
    %2387 = vrot.lane.b32.xlu0 %v1916, 56
    %v2388 = vpop.permute.xlu0 %2387
    %2389 = vrot.lane.b32.xlu0 %v1919, 56
    %v2390 = vpop.permute.xlu0 %2389
    %2391 = vrot.lane.b32.xlu0 %v1920, 56
    %v2392 = vpop.permute.xlu0 %2391
    %2393 = vrot.lane.b32.xlu0 %v1921, 56
    %v2394 = vpop.permute.xlu0 %2393
    %2395 = vrot.lane.b32.xlu0 %v1922, 56
    %v2396 = vpop.permute.xlu0 %2395
    %2397 = vrot.lane.b32.xlu0 %v1923, 56
    %v2398 = vpop.permute.xlu0 %2397
    %2399 = vrot.lane.b32.xlu0 %v1924, 56
    %v2400 = vpop.permute.xlu0 %2399
    %2401 = vrot.lane.b32.xlu0 %v1925, 56
    %v2402 = vpop.permute.xlu0 %2401
    %2403 = vrot.lane.b32.xlu0 %v1926, 56
    %v2404 = vpop.permute.xlu0 %2403
    %2405 = vrot.lane.b32.xlu0 %v1927, 56
    %v2406 = vpop.permute.xlu0 %2405
    %2407 = vrot.lane.b32.xlu0 %v1930, 56
    %v2408 = vpop.permute.xlu0 %2407
    %2409 = vrot.lane.b32.xlu0 %v1931, 56
    %v2410 = vpop.permute.xlu0 %2409
    %2411 = vrot.lane.b32.xlu0 %v1932, 56
    %v2412 = vpop.permute.xlu0 %2411
    %2413 = vrot.lane.b32.xlu0 %v1933, 56
    %v2414 = vpop.permute.xlu0 %2413
    %2415 = vrot.lane.b32.xlu0 %v1934, 56
    %v2416 = vpop.permute.xlu0 %2415
    %2417 = vrot.lane.b32.xlu0 %v1935, 56
    %v2418 = vpop.permute.xlu0 %2417
    %2419 = vrot.lane.b32.xlu0 %v1936, 56
    %v2420 = vpop.permute.xlu0 %2419
    %2421 = vrot.lane.b32.xlu0 %v1937, 56
    %v2422 = vpop.permute.xlu0 %2421
    %2423 = vrot.lane.b32.xlu0 %v1938, 56
    %v2424 = vpop.permute.xlu0 %2423
    %2425 = vrot.lane.b32.xlu0 %v1941, 56
    %v2426 = vpop.permute.xlu0 %2425
    %2427 = vrot.lane.b32.xlu0 %v1942, 56
    %v2428 = vpop.permute.xlu0 %2427
    %2429 = vrot.lane.b32.xlu0 %v1943, 56
    %v2430 = vpop.permute.xlu0 %2429
    %2431 = vrot.lane.b32.xlu0 %v1944, 56
    %v2432 = vpop.permute.xlu0 %2431
    %2433 = vrot.lane.b32.xlu0 %v1945, 56
    %v2434 = vpop.permute.xlu0 %2433
    %2435 = vrot.lane.b32.xlu0 %v1946, 56
    %v2436 = vpop.permute.xlu0 %2435
    %2437 = vrot.lane.b32.xlu0 %v1947, 56
    %v2438 = vpop.permute.xlu0 %2437
    %2439 = vrot.lane.b32.xlu0 %v1948, 56
    %v2440 = vpop.permute.xlu0 %2439
    %2441 = vrot.lane.b32.xlu0 %v1949, 56
    %v2442 = vpop.permute.xlu0 %2441
    %2443 = vrot.lane.b32.xlu0 %v1952, 56
    %v2444 = vpop.permute.xlu0 %2443
    %2445 = vrot.lane.b32.xlu0 %v1953, 56
    %v2446 = vpop.permute.xlu0 %2445
    %2447 = vrot.lane.b32.xlu0 %v1954, 56
    %v2448 = vpop.permute.xlu0 %2447
    %2449 = vrot.lane.b32.xlu0 %v1955, 56
    %v2450 = vpop.permute.xlu0 %2449
    %2451 = vrot.lane.b32.xlu0 %v1956, 56
    %v2452 = vpop.permute.xlu0 %2451
    %2453 = vrot.lane.b32.xlu0 %v1957, 56
    %v2454 = vpop.permute.xlu0 %2453
    %2455 = vrot.lane.b32.xlu0 %v1958, 56
    %v2456 = vpop.permute.xlu0 %2455
    %2457 = vrot.lane.b32.xlu0 %v1959, 56
    %v2458 = vpop.permute.xlu0 %2457
    %2459 = vrot.lane.b32.xlu0 %v1960, 56
    %v2460 = vpop.permute.xlu0 %2459
    %2461 = vrot.lane.b32.xlu0 %v1963, 56
    %v2462 = vpop.permute.xlu0 %2461
    %2463 = vrot.lane.b32.xlu0 %v1964, 56
    %v2464 = vpop.permute.xlu0 %2463
    %2465 = vrot.lane.b32.xlu0 %v1965, 56
    %v2466 = vpop.permute.xlu0 %2465
    %2467 = vrot.lane.b32.xlu0 %v1966, 56
    %v2468 = vpop.permute.xlu0 %2467
    %2469 = vrot.lane.b32.xlu0 %v1967, 56
    %v2470 = vpop.permute.xlu0 %2469
    %2471 = vrot.lane.b32.xlu0 %v1968, 56
    %v2472 = vpop.permute.xlu0 %2471
    %2473 = vrot.lane.b32.xlu0 %v1969, 56
    %v2474 = vpop.permute.xlu0 %2473
    %2475 = vrot.lane.b32.xlu0 %v1970, 56
    %v2476 = vpop.permute.xlu0 %2475
    %2477 = vrot.lane.b32.xlu0 %v1971, 56
    %v2478 = vpop.permute.xlu0 %2477
    %2479 = vrot.lane.b32.xlu0 %v1974, 56
    %v2480 = vpop.permute.xlu0 %2479
    %2481 = vrot.lane.b32.xlu0 %v1975, 56
    %v2482 = vpop.permute.xlu0 %2481
    %2483 = vrot.lane.b32.xlu0 %v1976, 56
    %v2484 = vpop.permute.xlu0 %2483
    %2485 = vrot.lane.b32.xlu0 %v1977, 56
    %v2486 = vpop.permute.xlu0 %2485
    %2487 = vrot.lane.b32.xlu0 %v1978, 56
    %v2488 = vpop.permute.xlu0 %2487
    %2489 = vrot.lane.b32.xlu0 %v1979, 56
    %v2490 = vpop.permute.xlu0 %2489
    %2491 = vrot.lane.b32.xlu0 %v1980, 56
    %v2492 = vpop.permute.xlu0 %2491
    %2493 = vrot.lane.b32.xlu0 %v1981, 56
    %v2494 = vpop.permute.xlu0 %2493
    %2495 = vrot.lane.b32.xlu0 %v1982, 56
    %v2496 = vpop.permute.xlu0 %2495
    %2497 = vrot.lane.b32.xlu0 %v1985, 56
    %v2498 = vpop.permute.xlu0 %2497
    %2499 = vrot.lane.b32.xlu0 %v1986, 56
    %v2500 = vpop.permute.xlu0 %2499
    %2501 = vrot.lane.b32.xlu0 %v1987, 56
    %v2502 = vpop.permute.xlu0 %2501
    %2503 = vrot.lane.b32.xlu0 %v1988, 56
    %v2504 = vpop.permute.xlu0 %2503
    %2505 = vrot.lane.b32.xlu0 %v1989, 56
    %v2506 = vpop.permute.xlu0 %2505
    %2507 = vrot.lane.b32.xlu0 %v1990, 56
    %v2508 = vpop.permute.xlu0 %2507
    %2509 = vrot.lane.b32.xlu0 %v1991, 56
    %v2510 = vpop.permute.xlu0 %2509
    %2511 = vrot.lane.b32.xlu0 %v1992, 56
    %v2512 = vpop.permute.xlu0 %2511
    %2513 = vrot.lane.b32.xlu0 %v1993, 56
    %v2514 = vpop.permute.xlu0 %2513
    %2613 = vrot.lane.b32.xlu0 %v1906, 84
    %v2614 = vpop.permute.xlu0 %2613
    %2615 = vrot.lane.b32.xlu0 %v1907, 84
    %v2616 = vpop.permute.xlu0 %2615
    %2617 = vrot.lane.b32.xlu0 %v1908, 84
    %v2618 = vpop.permute.xlu0 %2617
    %2619 = vrot.lane.b32.xlu0 %v1909, 84
    %v2620 = vpop.permute.xlu0 %2619
    %2621 = vrot.lane.b32.xlu0 %v1910, 84
    %v2622 = vpop.permute.xlu0 %2621
    %2623 = vrot.lane.b32.xlu0 %v1911, 84
    %v2624 = vpop.permute.xlu0 %2623
    %2625 = vrot.lane.b32.xlu0 %v1912, 84
    %v2626 = vpop.permute.xlu0 %2625
    %2627 = vrot.lane.b32.xlu0 %v1913, 84
    %v2628 = vpop.permute.xlu0 %2627
    %2629 = vrot.lane.b32.xlu0 %v1914, 84
    %v2630 = vpop.permute.xlu0 %2629
    %2631 = vrot.lane.b32.xlu0 %v1917, 84
    %v2632 = vpop.permute.xlu0 %2631
    %2633 = vrot.lane.b32.xlu0 %v1918, 84
    %v2634 = vpop.permute.xlu0 %2633
    %2635 = vrot.lane.b32.xlu0 %v1919, 84
    %v2636 = vpop.permute.xlu0 %2635
    %2637 = vrot.lane.b32.xlu0 %v1920, 84
    %v2638 = vpop.permute.xlu0 %2637
    %2639 = vrot.lane.b32.xlu0 %v1921, 84
    %v2640 = vpop.permute.xlu0 %2639
    %2641 = vrot.lane.b32.xlu0 %v1922, 84
    %v2642 = vpop.permute.xlu0 %2641
    %2643 = vrot.lane.b32.xlu0 %v1923, 84
    %v2644 = vpop.permute.xlu0 %2643
    %2645 = vrot.lane.b32.xlu0 %v1924, 84
    %v2646 = vpop.permute.xlu0 %2645
    %2647 = vrot.lane.b32.xlu0 %v1925, 84
    %v2648 = vpop.permute.xlu0 %2647
    %2649 = vrot.lane.b32.xlu0 %v1928, 84
    %v2650 = vpop.permute.xlu0 %2649
    %2651 = vrot.lane.b32.xlu0 %v1929, 84
    %v2652 = vpop.permute.xlu0 %2651
    %2653 = vrot.lane.b32.xlu0 %v1930, 84
    %v2654 = vpop.permute.xlu0 %2653
    %2655 = vrot.lane.b32.xlu0 %v1931, 84
    %v2656 = vpop.permute.xlu0 %2655
    %2657 = vrot.lane.b32.xlu0 %v1932, 84
    %v2658 = vpop.permute.xlu0 %2657
    %2659 = vrot.lane.b32.xlu0 %v1933, 84
    %v2660 = vpop.permute.xlu0 %2659
    %2661 = vrot.lane.b32.xlu0 %v1934, 84
    %v2662 = vpop.permute.xlu0 %2661
    %2663 = vrot.lane.b32.xlu0 %v1935, 84
    %v2664 = vpop.permute.xlu0 %2663
    %2665 = vrot.lane.b32.xlu0 %v1936, 84
    %v2666 = vpop.permute.xlu0 %2665
    %2667 = vrot.lane.b32.xlu0 %v1939, 84
    %v2668 = vpop.permute.xlu0 %2667
    %2669 = vrot.lane.b32.xlu0 %v1940, 84
    %v2670 = vpop.permute.xlu0 %2669
    %2671 = vrot.lane.b32.xlu0 %v1941, 84
    %v2672 = vpop.permute.xlu0 %2671
    %2673 = vrot.lane.b32.xlu0 %v1942, 84
    %v2674 = vpop.permute.xlu0 %2673
    %2675 = vrot.lane.b32.xlu0 %v1943, 84
    %v2676 = vpop.permute.xlu0 %2675
    %2677 = vrot.lane.b32.xlu0 %v1944, 84
    %v2678 = vpop.permute.xlu0 %2677
    %2679 = vrot.lane.b32.xlu0 %v1945, 84
    %v2680 = vpop.permute.xlu0 %2679
    %2681 = vrot.lane.b32.xlu0 %v1946, 84
    %v2682 = vpop.permute.xlu0 %2681
    %2683 = vrot.lane.b32.xlu0 %v1947, 84
    %v2684 = vpop.permute.xlu0 %2683
    %2685 = vrot.lane.b32.xlu0 %v1950, 84
    %v2686 = vpop.permute.xlu0 %2685
    %2687 = vrot.lane.b32.xlu0 %v1951, 84
    %v2688 = vpop.permute.xlu0 %2687
    %2689 = vrot.lane.b32.xlu0 %v1952, 84
    %v2690 = vpop.permute.xlu0 %2689
    %2691 = vrot.lane.b32.xlu0 %v1953, 84
    %v2692 = vpop.permute.xlu0 %2691
    %2693 = vrot.lane.b32.xlu0 %v1954, 84
    %v2694 = vpop.permute.xlu0 %2693
    %2695 = vrot.lane.b32.xlu0 %v1955, 84
    %v2696 = vpop.permute.xlu0 %2695
    %2697 = vrot.lane.b32.xlu0 %v1956, 84
    %v2698 = vpop.permute.xlu0 %2697
    %2699 = vrot.lane.b32.xlu0 %v1957, 84
    %v2700 = vpop.permute.xlu0 %2699
    %2701 = vrot.lane.b32.xlu0 %v1958, 84
    %v2702 = vpop.permute.xlu0 %2701
    %2703 = vrot.lane.b32.xlu0 %v1961, 84
    %v2704 = vpop.permute.xlu0 %2703
    %2705 = vrot.lane.b32.xlu0 %v1962, 84
    %v2706 = vpop.permute.xlu0 %2705
    %2707 = vrot.lane.b32.xlu0 %v1963, 84
    %v2708 = vpop.permute.xlu0 %2707
    %2709 = vrot.lane.b32.xlu0 %v1964, 84
    %v2710 = vpop.permute.xlu0 %2709
    %2711 = vrot.lane.b32.xlu0 %v1965, 84
    %v2712 = vpop.permute.xlu0 %2711
    %2713 = vrot.lane.b32.xlu0 %v1966, 84
    %v2714 = vpop.permute.xlu0 %2713
    %2715 = vrot.lane.b32.xlu0 %v1967, 84
    %v2716 = vpop.permute.xlu0 %2715
    %2717 = vrot.lane.b32.xlu0 %v1968, 84
    %v2718 = vpop.permute.xlu0 %2717
    %2719 = vrot.lane.b32.xlu0 %v1969, 84
    %v2720 = vpop.permute.xlu0 %2719
    %2721 = vrot.lane.b32.xlu0 %v1972, 84
    %v2722 = vpop.permute.xlu0 %2721
    %2723 = vrot.lane.b32.xlu0 %v1973, 84
    %v2724 = vpop.permute.xlu0 %2723
    %2725 = vrot.lane.b32.xlu0 %v1974, 84
    %v2726 = vpop.permute.xlu0 %2725
    %2727 = vrot.lane.b32.xlu0 %v1975, 84
    %v2728 = vpop.permute.xlu0 %2727
    %2729 = vrot.lane.b32.xlu0 %v1976, 84
    %v2730 = vpop.permute.xlu0 %2729
    %2731 = vrot.lane.b32.xlu0 %v1977, 84
    %v2732 = vpop.permute.xlu0 %2731
    %2733 = vrot.lane.b32.xlu0 %v1978, 84
    %v2734 = vpop.permute.xlu0 %2733
    %2735 = vrot.lane.b32.xlu0 %v1979, 84
    %v2736 = vpop.permute.xlu0 %2735
    %2737 = vrot.lane.b32.xlu0 %v1980, 84
    %v2738 = vpop.permute.xlu0 %2737
    %2739 = vrot.lane.b32.xlu0 %v1983, 84
    %v2740 = vpop.permute.xlu0 %2739
    %2741 = vrot.lane.b32.xlu0 %v1984, 84
    %v2742 = vpop.permute.xlu0 %2741
    %2743 = vrot.lane.b32.xlu0 %v1985, 84
    %v2744 = vpop.permute.xlu0 %2743
    %2745 = vrot.lane.b32.xlu0 %v1986, 84
    %v2746 = vpop.permute.xlu0 %2745
    %2747 = vrot.lane.b32.xlu0 %v1987, 84
    %v2748 = vpop.permute.xlu0 %2747
    %2749 = vrot.lane.b32.xlu0 %v1988, 84
    %v2750 = vpop.permute.xlu0 %2749
    %2751 = vrot.lane.b32.xlu0 %v1989, 84
    %v2752 = vpop.permute.xlu0 %2751
    %2753 = vrot.lane.b32.xlu0 %v1990, 84
    %v2754 = vpop.permute.xlu0 %2753
    %2755 = vrot.lane.b32.xlu0 %v1991, 84
    %v2756 = vpop.permute.xlu0 %2755
    %2757 = vrot.lane.b32.xlu0 %v1994, 84
    %v2758 = vpop.permute.xlu0 %2757
    %2759 = vrot.lane.b32.xlu0 %v1995, 84
    %v2760 = vpop.permute.xlu0 %2759
    %2761 = vrot.lane.b32.xlu0 %v1996, 84
    %v2762 = vpop.permute.xlu0 %2761
    %2763 = vrot.lane.b32.xlu0 %v1997, 84
    %v2764 = vpop.permute.xlu0 %2763
    %2765 = vrot.lane.b32.xlu0 %v1998, 84
    %v2766 = vpop.permute.xlu0 %2765
    %2767 = vrot.lane.b32.xlu0 %v1999, 84
    %v2768 = vpop.permute.xlu0 %2767
    %2769 = vrot.lane.b32.xlu0 %v2000, 84
    %v2770 = vpop.permute.xlu0 %2769
    %2771 = vrot.lane.b32.xlu0 %v2001, 84
    %v2772 = vpop.permute.xlu0 %2771
    %2773 = vrot.lane.b32.xlu0 %v2002, 84
    %v2774 = vpop.permute.xlu0 %2773
    %2857 = vrot.lane.b32.xlu0 %v1907, 112
    %v2858 = vpop.permute.xlu0 %2857
    %2859 = vrot.lane.b32.xlu0 %v1908, 112
    %v2860 = vpop.permute.xlu0 %2859
    %2861 = vrot.lane.b32.xlu0 %v1909, 112
    %v2862 = vpop.permute.xlu0 %2861
    %2863 = vrot.lane.b32.xlu0 %v1910, 112
    %v2864 = vpop.permute.xlu0 %2863
    %2865 = vrot.lane.b32.xlu0 %v1911, 112
    %v2866 = vpop.permute.xlu0 %2865
    %2867 = vrot.lane.b32.xlu0 %v1912, 112
    %v2868 = vpop.permute.xlu0 %2867
    %2869 = vrot.lane.b32.xlu0 %v1913, 112
    %v2870 = vpop.permute.xlu0 %2869
    %2871 = vrot.lane.b32.xlu0 %v1914, 112
    %v2872 = vpop.permute.xlu0 %2871
    %2873 = vrot.lane.b32.xlu0 %v1915, 112
    %v2874 = vpop.permute.xlu0 %2873
    %2875 = vrot.lane.b32.xlu0 %v1918, 112
    %v2876 = vpop.permute.xlu0 %2875
    %2877 = vrot.lane.b32.xlu0 %v1919, 112
    %v2878 = vpop.permute.xlu0 %2877
    %2879 = vrot.lane.b32.xlu0 %v1920, 112
    %v2880 = vpop.permute.xlu0 %2879
    %2881 = vrot.lane.b32.xlu0 %v1921, 112
    %v2882 = vpop.permute.xlu0 %2881
    %2883 = vrot.lane.b32.xlu0 %v1922, 112
    %v2884 = vpop.permute.xlu0 %2883
    %2885 = vrot.lane.b32.xlu0 %v1923, 112
    %v2886 = vpop.permute.xlu0 %2885
    %2887 = vrot.lane.b32.xlu0 %v1924, 112
    %v2888 = vpop.permute.xlu0 %2887
    %2889 = vrot.lane.b32.xlu0 %v1925, 112
    %v2890 = vpop.permute.xlu0 %2889
    %2891 = vrot.lane.b32.xlu0 %v1926, 112
    %v2892 = vpop.permute.xlu0 %2891
    %2893 = vrot.lane.b32.xlu0 %v1929, 112
    %v2894 = vpop.permute.xlu0 %2893
    %2895 = vrot.lane.b32.xlu0 %v1930, 112
    %v2896 = vpop.permute.xlu0 %2895
    %2897 = vrot.lane.b32.xlu0 %v1931, 112
    %v2898 = vpop.permute.xlu0 %2897
    %2899 = vrot.lane.b32.xlu0 %v1932, 112
    %v2900 = vpop.permute.xlu0 %2899
    %2901 = vrot.lane.b32.xlu0 %v1933, 112
    %v2902 = vpop.permute.xlu0 %2901
    %2903 = vrot.lane.b32.xlu0 %v1934, 112
    %v2904 = vpop.permute.xlu0 %2903
    %2905 = vrot.lane.b32.xlu0 %v1935, 112
    %v2906 = vpop.permute.xlu0 %2905
    %2907 = vrot.lane.b32.xlu0 %v1936, 112
    %v2908 = vpop.permute.xlu0 %2907
    %2909 = vrot.lane.b32.xlu0 %v1937, 112
    %v2910 = vpop.permute.xlu0 %2909
    %2911 = vrot.lane.b32.xlu0 %v1940, 112
    %v2912 = vpop.permute.xlu0 %2911
    %2913 = vrot.lane.b32.xlu0 %v1941, 112
    %v2914 = vpop.permute.xlu0 %2913
    %2915 = vrot.lane.b32.xlu0 %v1942, 112
    %v2916 = vpop.permute.xlu0 %2915
    %2917 = vrot.lane.b32.xlu0 %v1943, 112
    %v2918 = vpop.permute.xlu0 %2917
    %2919 = vrot.lane.b32.xlu0 %v1944, 112
    %v2920 = vpop.permute.xlu0 %2919
    %2921 = vrot.lane.b32.xlu0 %v1945, 112
    %v2922 = vpop.permute.xlu0 %2921
    %2923 = vrot.lane.b32.xlu0 %v1946, 112
    %v2924 = vpop.permute.xlu0 %2923
    %2925 = vrot.lane.b32.xlu0 %v1947, 112
    %v2926 = vpop.permute.xlu0 %2925
    %2927 = vrot.lane.b32.xlu0 %v1948, 112
    %v2928 = vpop.permute.xlu0 %2927
    %2929 = vrot.lane.b32.xlu0 %v1951, 112
    %v2930 = vpop.permute.xlu0 %2929
    %2931 = vrot.lane.b32.xlu0 %v1952, 112
    %v2932 = vpop.permute.xlu0 %2931
    %2933 = vrot.lane.b32.xlu0 %v1953, 112
    %v2934 = vpop.permute.xlu0 %2933
    %2935 = vrot.lane.b32.xlu0 %v1954, 112
    %v2936 = vpop.permute.xlu0 %2935
    %2937 = vrot.lane.b32.xlu0 %v1955, 112
    %v2938 = vpop.permute.xlu0 %2937
    %2939 = vrot.lane.b32.xlu0 %v1956, 112
    %v2940 = vpop.permute.xlu0 %2939
    %2941 = vrot.lane.b32.xlu0 %v1957, 112
    %v2942 = vpop.permute.xlu0 %2941
    %2943 = vrot.lane.b32.xlu0 %v1958, 112
    %v2944 = vpop.permute.xlu0 %2943
    %2945 = vrot.lane.b32.xlu0 %v1959, 112
    %v2946 = vpop.permute.xlu0 %2945
    %2947 = vrot.lane.b32.xlu0 %v1962, 112
    %v2948 = vpop.permute.xlu0 %2947
    %2949 = vrot.lane.b32.xlu0 %v1963, 112
    %v2950 = vpop.permute.xlu0 %2949
    %2951 = vrot.lane.b32.xlu0 %v1964, 112
    %v2952 = vpop.permute.xlu0 %2951
    %2953 = vrot.lane.b32.xlu0 %v1965, 112
    %v2954 = vpop.permute.xlu0 %2953
    %2955 = vrot.lane.b32.xlu0 %v1966, 112
    %v2956 = vpop.permute.xlu0 %2955
    %2957 = vrot.lane.b32.xlu0 %v1967, 112
    %v2958 = vpop.permute.xlu0 %2957
    %2959 = vrot.lane.b32.xlu0 %v1968, 112
    %v2960 = vpop.permute.xlu0 %2959
    %2961 = vrot.lane.b32.xlu0 %v1969, 112
    %v2962 = vpop.permute.xlu0 %2961
    %2963 = vrot.lane.b32.xlu0 %v1970, 112
    %v2964 = vpop.permute.xlu0 %2963
    %2965 = vrot.lane.b32.xlu0 %v1973, 112
    %v2966 = vpop.permute.xlu0 %2965
    %2967 = vrot.lane.b32.xlu0 %v1974, 112
    %v2968 = vpop.permute.xlu0 %2967
    %2969 = vrot.lane.b32.xlu0 %v1975, 112
    %v2970 = vpop.permute.xlu0 %2969
    %2971 = vrot.lane.b32.xlu0 %v1976, 112
    %v2972 = vpop.permute.xlu0 %2971
    %2973 = vrot.lane.b32.xlu0 %v1977, 112
    %v2974 = vpop.permute.xlu0 %2973
    %2975 = vrot.lane.b32.xlu0 %v1978, 112
    %v2976 = vpop.permute.xlu0 %2975
    %2977 = vrot.lane.b32.xlu0 %v1979, 112
    %v2978 = vpop.permute.xlu0 %2977
    %2979 = vrot.lane.b32.xlu0 %v1980, 112
    %v2980 = vpop.permute.xlu0 %2979
    %2981 = vrot.lane.b32.xlu0 %v1981, 112
    %v2982 = vpop.permute.xlu0 %2981
    %2983 = vrot.lane.b32.xlu0 %v1984, 112
    %v2984 = vpop.permute.xlu0 %2983
    %2985 = vrot.lane.b32.xlu0 %v1985, 112
    %v2986 = vpop.permute.xlu0 %2985
    %2987 = vrot.lane.b32.xlu0 %v1986, 112
    %v2988 = vpop.permute.xlu0 %2987
    %2989 = vrot.lane.b32.xlu0 %v1987, 112
    %v2990 = vpop.permute.xlu0 %2989
    %2991 = vrot.lane.b32.xlu0 %v1988, 112
    %v2992 = vpop.permute.xlu0 %2991
    %2993 = vrot.lane.b32.xlu0 %v1989, 112
    %v2994 = vpop.permute.xlu0 %2993
    %2995 = vrot.lane.b32.xlu0 %v1990, 112
    %v2996 = vpop.permute.xlu0 %2995
    %2997 = vrot.lane.b32.xlu0 %v1991, 112
    %v2998 = vpop.permute.xlu0 %2997
    %2999 = vrot.lane.b32.xlu0 %v1992, 112
    %v3000 = vpop.permute.xlu0 %2999
    %3001 = vrot.lane.b32.xlu0 %v1995, 112
    %v3002 = vpop.permute.xlu0 %3001
    %3003 = vrot.lane.b32.xlu0 %v1996, 112
    %v3004 = vpop.permute.xlu0 %3003
    %3005 = vrot.lane.b32.xlu0 %v1997, 112
    %v3006 = vpop.permute.xlu0 %3005
    %3007 = vrot.lane.b32.xlu0 %v1998, 112
    %v3008 = vpop.permute.xlu0 %3007
    %3009 = vrot.lane.b32.xlu0 %v1999, 112
    %v3010 = vpop.permute.xlu0 %3009
    %3011 = vrot.lane.b32.xlu0 %v2000, 112
    %v3012 = vpop.permute.xlu0 %3011
    %3013 = vrot.lane.b32.xlu0 %v2001, 112
    %v3014 = vpop.permute.xlu0 %3013
    %3015 = vrot.lane.b32.xlu0 %v2002, 112
    %v3016 = vpop.permute.xlu0 %3015
    %3017 = vrot.lane.b32.xlu0 %v2003, 112
    %v3018 = vpop.permute.xlu0 %3017
    %3101 = vrot.lane.b32.xlu0 %v1908, 12
    %v3102 = vpop.permute.xlu0 %3101
    %3103 = vrot.lane.b32.xlu0 %v1909, 12
    %v3104 = vpop.permute.xlu0 %3103
    %3105 = vrot.lane.b32.xlu0 %v1910, 12
    %v3106 = vpop.permute.xlu0 %3105
    %3107 = vrot.lane.b32.xlu0 %v1911, 12
    %v3108 = vpop.permute.xlu0 %3107
    %3109 = vrot.lane.b32.xlu0 %v1912, 12
    %v3110 = vpop.permute.xlu0 %3109
    %3111 = vrot.lane.b32.xlu0 %v1913, 12
    %v3112 = vpop.permute.xlu0 %3111
    %3113 = vrot.lane.b32.xlu0 %v1914, 12
    %v3114 = vpop.permute.xlu0 %3113
    %3115 = vrot.lane.b32.xlu0 %v1915, 12
    %v3116 = vpop.permute.xlu0 %3115
    %3117 = vrot.lane.b32.xlu0 %v1916, 12
    %v3118 = vpop.permute.xlu0 %3117
    %3119 = vrot.lane.b32.xlu0 %v1919, 12
    %v3120 = vpop.permute.xlu0 %3119
    %3121 = vrot.lane.b32.xlu0 %v1920, 12
    %v3122 = vpop.permute.xlu0 %3121
    %3123 = vrot.lane.b32.xlu0 %v1921, 12
    %v3124 = vpop.permute.xlu0 %3123
    %3125 = vrot.lane.b32.xlu0 %v1922, 12
    %v3126 = vpop.permute.xlu0 %3125
    %3127 = vrot.lane.b32.xlu0 %v1923, 12
    %v3128 = vpop.permute.xlu0 %3127
    %3129 = vrot.lane.b32.xlu0 %v1924, 12
    %v3130 = vpop.permute.xlu0 %3129
    %3131 = vrot.lane.b32.xlu0 %v1925, 12
    %v3132 = vpop.permute.xlu0 %3131
    %3133 = vrot.lane.b32.xlu0 %v1926, 12
    %v3134 = vpop.permute.xlu0 %3133
    %3135 = vrot.lane.b32.xlu0 %v1927, 12
    %v3136 = vpop.permute.xlu0 %3135
    %3137 = vrot.lane.b32.xlu0 %v1930, 12
    %v3138 = vpop.permute.xlu0 %3137
    %3139 = vrot.lane.b32.xlu0 %v1931, 12
    %v3140 = vpop.permute.xlu0 %3139
    %3141 = vrot.lane.b32.xlu0 %v1932, 12
    %v3142 = vpop.permute.xlu0 %3141
    %3143 = vrot.lane.b32.xlu0 %v1933, 12
    %v3144 = vpop.permute.xlu0 %3143
    %3145 = vrot.lane.b32.xlu0 %v1934, 12
    %v3146 = vpop.permute.xlu0 %3145
    %3147 = vrot.lane.b32.xlu0 %v1935, 12
    %v3148 = vpop.permute.xlu0 %3147
    %3149 = vrot.lane.b32.xlu0 %v1936, 12
    %v3150 = vpop.permute.xlu0 %3149
    %3151 = vrot.lane.b32.xlu0 %v1937, 12
    %v3152 = vpop.permute.xlu0 %3151
    %3153 = vrot.lane.b32.xlu0 %v1938, 12
    %v3154 = vpop.permute.xlu0 %3153
    %3155 = vrot.lane.b32.xlu0 %v1941, 12
    %v3156 = vpop.permute.xlu0 %3155
    %3157 = vrot.lane.b32.xlu0 %v1942, 12
    %v3158 = vpop.permute.xlu0 %3157
    %3159 = vrot.lane.b32.xlu0 %v1943, 12
    %v3160 = vpop.permute.xlu0 %3159
    %3161 = vrot.lane.b32.xlu0 %v1944, 12
    %v3162 = vpop.permute.xlu0 %3161
    %3163 = vrot.lane.b32.xlu0 %v1945, 12
    %v3164 = vpop.permute.xlu0 %3163
    %3165 = vrot.lane.b32.xlu0 %v1946, 12
    %v3166 = vpop.permute.xlu0 %3165
    %3167 = vrot.lane.b32.xlu0 %v1947, 12
    %v3168 = vpop.permute.xlu0 %3167
    %3169 = vrot.lane.b32.xlu0 %v1948, 12
    %v3170 = vpop.permute.xlu0 %3169
    %3171 = vrot.lane.b32.xlu0 %v1949, 12
    %v3172 = vpop.permute.xlu0 %3171
    %3173 = vrot.lane.b32.xlu0 %v1952, 12
    %v3174 = vpop.permute.xlu0 %3173
    %3175 = vrot.lane.b32.xlu0 %v1953, 12
    %v3176 = vpop.permute.xlu0 %3175
    %3177 = vrot.lane.b32.xlu0 %v1954, 12
    %v3178 = vpop.permute.xlu0 %3177
    %3179 = vrot.lane.b32.xlu0 %v1955, 12
    %v3180 = vpop.permute.xlu0 %3179
    %3181 = vrot.lane.b32.xlu0 %v1956, 12
    %v3182 = vpop.permute.xlu0 %3181
    %3183 = vrot.lane.b32.xlu0 %v1957, 12
    %v3184 = vpop.permute.xlu0 %3183
    %3185 = vrot.lane.b32.xlu0 %v1958, 12
    %v3186 = vpop.permute.xlu0 %3185
    %3187 = vrot.lane.b32.xlu0 %v1959, 12
    %v3188 = vpop.permute.xlu0 %3187
    %3189 = vrot.lane.b32.xlu0 %v1960, 12
    %v3190 = vpop.permute.xlu0 %3189
    %3191 = vrot.lane.b32.xlu0 %v1963, 12
    %v3192 = vpop.permute.xlu0 %3191
    %3193 = vrot.lane.b32.xlu0 %v1964, 12
    %v3194 = vpop.permute.xlu0 %3193
    %3195 = vrot.lane.b32.xlu0 %v1965, 12
    %v3196 = vpop.permute.xlu0 %3195
    %3197 = vrot.lane.b32.xlu0 %v1966, 12
    %v3198 = vpop.permute.xlu0 %3197
    %3199 = vrot.lane.b32.xlu0 %v1967, 12
    %v3200 = vpop.permute.xlu0 %3199
    %3201 = vrot.lane.b32.xlu0 %v1968, 12
    %v3202 = vpop.permute.xlu0 %3201
    %3203 = vrot.lane.b32.xlu0 %v1969, 12
    %v3204 = vpop.permute.xlu0 %3203
    %3205 = vrot.lane.b32.xlu0 %v1970, 12
    %v3206 = vpop.permute.xlu0 %3205
    %3207 = vrot.lane.b32.xlu0 %v1971, 12
    %v3208 = vpop.permute.xlu0 %3207
    %3209 = vrot.lane.b32.xlu0 %v1974, 12
    %v3210 = vpop.permute.xlu0 %3209
    %3211 = vrot.lane.b32.xlu0 %v1975, 12
    %v3212 = vpop.permute.xlu0 %3211
    %3213 = vrot.lane.b32.xlu0 %v1976, 12
    %v3214 = vpop.permute.xlu0 %3213
    %3215 = vrot.lane.b32.xlu0 %v1977, 12
    %v3216 = vpop.permute.xlu0 %3215
    %3217 = vrot.lane.b32.xlu0 %v1978, 12
    %v3218 = vpop.permute.xlu0 %3217
    %3219 = vrot.lane.b32.xlu0 %v1979, 12
    %v3220 = vpop.permute.xlu0 %3219
    %3221 = vrot.lane.b32.xlu0 %v1980, 12
    %v3222 = vpop.permute.xlu0 %3221
    %3223 = vrot.lane.b32.xlu0 %v1981, 12
    %v3224 = vpop.permute.xlu0 %3223
    %3225 = vrot.lane.b32.xlu0 %v1982, 12
    %v3226 = vpop.permute.xlu0 %3225
    %3227 = vrot.lane.b32.xlu0 %v1985, 12
    %v3228 = vpop.permute.xlu0 %3227
    %3229 = vrot.lane.b32.xlu0 %v1986, 12
    %v3230 = vpop.permute.xlu0 %3229
    %3231 = vrot.lane.b32.xlu0 %v1987, 12
    %v3232 = vpop.permute.xlu0 %3231
    %3233 = vrot.lane.b32.xlu0 %v1988, 12
    %v3234 = vpop.permute.xlu0 %3233
    %3235 = vrot.lane.b32.xlu0 %v1989, 12
    %v3236 = vpop.permute.xlu0 %3235
    %3237 = vrot.lane.b32.xlu0 %v1990, 12
    %v3238 = vpop.permute.xlu0 %3237
    %3239 = vrot.lane.b32.xlu0 %v1991, 12
    %v3240 = vpop.permute.xlu0 %3239
    %3241 = vrot.lane.b32.xlu0 %v1992, 12
    %v3242 = vpop.permute.xlu0 %3241
    %3243 = vrot.lane.b32.xlu0 %v1993, 12
    %v3244 = vpop.permute.xlu0 %3243
    %3245 = vrot.lane.b32.xlu0 %v1996, 12
    %v3246 = vpop.permute.xlu0 %3245
    %3247 = vrot.lane.b32.xlu0 %v1997, 12
    %v3248 = vpop.permute.xlu0 %3247
    %3249 = vrot.lane.b32.xlu0 %v1998, 12
    %v3250 = vpop.permute.xlu0 %3249
    %3251 = vrot.lane.b32.xlu0 %v1999, 12
    %v3252 = vpop.permute.xlu0 %3251
    %3253 = vrot.lane.b32.xlu0 %v2000, 12
    %v3254 = vpop.permute.xlu0 %3253
    %3255 = vrot.lane.b32.xlu0 %v2001, 12
    %v3256 = vpop.permute.xlu0 %3255
    %3257 = vrot.lane.b32.xlu0 %v2002, 12
    %v3258 = vpop.permute.xlu0 %3257
    %3259 = vrot.lane.b32.xlu0 %v2003, 12
    %v3260 = vpop.permute.xlu0 %3259
    %3261 = vrot.lane.b32.xlu0 %v2004, 12
    %v3262 = vpop.permute.xlu0 %3261
    %3353 = vrot.lane.b32.xlu0 %v1917, 40
    %v3354 = vpop.permute.xlu0 %3353
    %3355 = vrot.lane.b32.xlu0 %v1918, 40
    %v3356 = vpop.permute.xlu0 %3355
    %3357 = vrot.lane.b32.xlu0 %v1919, 40
    %v3358 = vpop.permute.xlu0 %3357
    %3359 = vrot.lane.b32.xlu0 %v1920, 40
    %v3360 = vpop.permute.xlu0 %3359
    %3361 = vrot.lane.b32.xlu0 %v1921, 40
    %v3362 = vpop.permute.xlu0 %3361
    %3363 = vrot.lane.b32.xlu0 %v1922, 40
    %v3364 = vpop.permute.xlu0 %3363
    %3365 = vrot.lane.b32.xlu0 %v1923, 40
    %v3366 = vpop.permute.xlu0 %3365
    %3367 = vrot.lane.b32.xlu0 %v1924, 40
    %v3368 = vpop.permute.xlu0 %3367
    %3369 = vrot.lane.b32.xlu0 %v1925, 40
    %v3370 = vpop.permute.xlu0 %3369
    %3371 = vrot.lane.b32.xlu0 %v1928, 40
    %v3372 = vpop.permute.xlu0 %3371
    %3373 = vrot.lane.b32.xlu0 %v1929, 40
    %v3374 = vpop.permute.xlu0 %3373
    %3375 = vrot.lane.b32.xlu0 %v1930, 40
    %v3376 = vpop.permute.xlu0 %3375
    %3377 = vrot.lane.b32.xlu0 %v1931, 40
    %v3378 = vpop.permute.xlu0 %3377
    %3379 = vrot.lane.b32.xlu0 %v1932, 40
    %v3380 = vpop.permute.xlu0 %3379
    %3381 = vrot.lane.b32.xlu0 %v1933, 40
    %v3382 = vpop.permute.xlu0 %3381
    %3383 = vrot.lane.b32.xlu0 %v1934, 40
    %v3384 = vpop.permute.xlu0 %3383
    %3385 = vrot.lane.b32.xlu0 %v1935, 40
    %v3386 = vpop.permute.xlu0 %3385
    %3387 = vrot.lane.b32.xlu0 %v1936, 40
    %v3388 = vpop.permute.xlu0 %3387
    %3389 = vrot.lane.b32.xlu0 %v1939, 40
    %v3390 = vpop.permute.xlu0 %3389
    %3391 = vrot.lane.b32.xlu0 %v1940, 40
    %v3392 = vpop.permute.xlu0 %3391
    %3393 = vrot.lane.b32.xlu0 %v1941, 40
    %v3394 = vpop.permute.xlu0 %3393
    %3395 = vrot.lane.b32.xlu0 %v1942, 40
    %v3396 = vpop.permute.xlu0 %3395
    %3397 = vrot.lane.b32.xlu0 %v1943, 40
    %v3398 = vpop.permute.xlu0 %3397
    %3399 = vrot.lane.b32.xlu0 %v1944, 40
    %v3400 = vpop.permute.xlu0 %3399
    %3401 = vrot.lane.b32.xlu0 %v1945, 40
    %v3402 = vpop.permute.xlu0 %3401
    %3403 = vrot.lane.b32.xlu0 %v1946, 40
    %v3404 = vpop.permute.xlu0 %3403
    %3405 = vrot.lane.b32.xlu0 %v1947, 40
    %v3406 = vpop.permute.xlu0 %3405
    %3407 = vrot.lane.b32.xlu0 %v1950, 40
    %v3408 = vpop.permute.xlu0 %3407
    %3409 = vrot.lane.b32.xlu0 %v1951, 40
    %v3410 = vpop.permute.xlu0 %3409
    %3411 = vrot.lane.b32.xlu0 %v1952, 40
    %v3412 = vpop.permute.xlu0 %3411
    %3413 = vrot.lane.b32.xlu0 %v1953, 40
    %v3414 = vpop.permute.xlu0 %3413
    %3415 = vrot.lane.b32.xlu0 %v1954, 40
    %v3416 = vpop.permute.xlu0 %3415
    %3417 = vrot.lane.b32.xlu0 %v1955, 40
    %v3418 = vpop.permute.xlu0 %3417
    %3419 = vrot.lane.b32.xlu0 %v1956, 40
    %v3420 = vpop.permute.xlu0 %3419
    %3421 = vrot.lane.b32.xlu0 %v1957, 40
    %v3422 = vpop.permute.xlu0 %3421
    %3423 = vrot.lane.b32.xlu0 %v1958, 40
    %v3424 = vpop.permute.xlu0 %3423
    %3425 = vrot.lane.b32.xlu0 %v1961, 40
    %v3426 = vpop.permute.xlu0 %3425
    %3427 = vrot.lane.b32.xlu0 %v1962, 40
    %v3428 = vpop.permute.xlu0 %3427
    %3429 = vrot.lane.b32.xlu0 %v1963, 40
    %v3430 = vpop.permute.xlu0 %3429
    %3431 = vrot.lane.b32.xlu0 %v1964, 40
    %v3432 = vpop.permute.xlu0 %3431
    %3433 = vrot.lane.b32.xlu0 %v1965, 40
    %v3434 = vpop.permute.xlu0 %3433
    %3435 = vrot.lane.b32.xlu0 %v1966, 40
    %v3436 = vpop.permute.xlu0 %3435
    %3437 = vrot.lane.b32.xlu0 %v1967, 40
    %v3438 = vpop.permute.xlu0 %3437
    %3439 = vrot.lane.b32.xlu0 %v1968, 40
    %v3440 = vpop.permute.xlu0 %3439
    %3441 = vrot.lane.b32.xlu0 %v1969, 40
    %v3442 = vpop.permute.xlu0 %3441
    %3443 = vrot.lane.b32.xlu0 %v1972, 40
    %v3444 = vpop.permute.xlu0 %3443
    %3445 = vrot.lane.b32.xlu0 %v1973, 40
    %v3446 = vpop.permute.xlu0 %3445
    %3447 = vrot.lane.b32.xlu0 %v1974, 40
    %v3448 = vpop.permute.xlu0 %3447
    %3449 = vrot.lane.b32.xlu0 %v1975, 40
    %v3450 = vpop.permute.xlu0 %3449
    %3451 = vrot.lane.b32.xlu0 %v1976, 40
    %v3452 = vpop.permute.xlu0 %3451
    %3453 = vrot.lane.b32.xlu0 %v1977, 40
    %v3454 = vpop.permute.xlu0 %3453
    %3455 = vrot.lane.b32.xlu0 %v1978, 40
    %v3456 = vpop.permute.xlu0 %3455
    %3457 = vrot.lane.b32.xlu0 %v1979, 40
    %v3458 = vpop.permute.xlu0 %3457
    %3459 = vrot.lane.b32.xlu0 %v1980, 40
    %v3460 = vpop.permute.xlu0 %3459
    %3461 = vrot.lane.b32.xlu0 %v1983, 40
    %v3462 = vpop.permute.xlu0 %3461
    %3463 = vrot.lane.b32.xlu0 %v1984, 40
    %v3464 = vpop.permute.xlu0 %3463
    %3465 = vrot.lane.b32.xlu0 %v1985, 40
    %v3466 = vpop.permute.xlu0 %3465
    %3467 = vrot.lane.b32.xlu0 %v1986, 40
    %v3468 = vpop.permute.xlu0 %3467
    %3469 = vrot.lane.b32.xlu0 %v1987, 40
    %v3470 = vpop.permute.xlu0 %3469
    %3471 = vrot.lane.b32.xlu0 %v1988, 40
    %v3472 = vpop.permute.xlu0 %3471
    %3473 = vrot.lane.b32.xlu0 %v1989, 40
    %v3474 = vpop.permute.xlu0 %3473
    %3475 = vrot.lane.b32.xlu0 %v1990, 40
    %v3476 = vpop.permute.xlu0 %3475
    %3477 = vrot.lane.b32.xlu0 %v1991, 40
    %v3478 = vpop.permute.xlu0 %3477
    %3479 = vrot.lane.b32.xlu0 %v1994, 40
    %v3480 = vpop.permute.xlu0 %3479
    %3481 = vrot.lane.b32.xlu0 %v1995, 40
    %v3482 = vpop.permute.xlu0 %3481
    %3483 = vrot.lane.b32.xlu0 %v1996, 40
    %v3484 = vpop.permute.xlu0 %3483
    %3485 = vrot.lane.b32.xlu0 %v1997, 40
    %v3486 = vpop.permute.xlu0 %3485
    %3487 = vrot.lane.b32.xlu0 %v1998, 40
    %v3488 = vpop.permute.xlu0 %3487
    %3489 = vrot.lane.b32.xlu0 %v1999, 40
    %v3490 = vpop.permute.xlu0 %3489
    %3491 = vrot.lane.b32.xlu0 %v2000, 40
    %v3492 = vpop.permute.xlu0 %3491
    %3493 = vrot.lane.b32.xlu0 %v2001, 40
    %v3494 = vpop.permute.xlu0 %3493
    %3495 = vrot.lane.b32.xlu0 %v2002, 40
    %v3496 = vpop.permute.xlu0 %3495
    %3497 = vrot.lane.b32.xlu0 %v2005, 40
    %v3498 = vpop.permute.xlu0 %3497
    %3499 = vrot.lane.b32.xlu0 %v2006, 40
    %v3500 = vpop.permute.xlu0 %3499
    %3501 = vrot.lane.b32.xlu0 %v2007, 40
    %v3502 = vpop.permute.xlu0 %3501
    %3503 = vrot.lane.b32.xlu0 %v2008, 40
    %v3504 = vpop.permute.xlu0 %3503
    %3505 = vrot.lane.b32.xlu0 %v2009, 40
    %v3506 = vpop.permute.xlu0 %3505
    %3507 = vrot.lane.b32.xlu0 %v2010, 40
    %v3508 = vpop.permute.xlu0 %3507
    %3509 = vrot.lane.b32.xlu0 %v2011, 40
    %v3510 = vpop.permute.xlu0 %3509
    %3511 = vrot.lane.b32.xlu0 %v2012, 40
    %v3512 = vpop.permute.xlu0 %3511
    %3513 = vrot.lane.b32.xlu0 %v2013, 40
    %v3514 = vpop.permute.xlu0 %3513
    %3597 = vrot.lane.b32.xlu0 %v1918, 68
    %v3598 = vpop.permute.xlu0 %3597
    %3599 = vrot.lane.b32.xlu0 %v1919, 68
    %v3600 = vpop.permute.xlu0 %3599
    %3601 = vrot.lane.b32.xlu0 %v1920, 68
    %v3602 = vpop.permute.xlu0 %3601
    %3603 = vrot.lane.b32.xlu0 %v1921, 68
    %v3604 = vpop.permute.xlu0 %3603
    %3605 = vrot.lane.b32.xlu0 %v1922, 68
    %v3606 = vpop.permute.xlu0 %3605
    %3607 = vrot.lane.b32.xlu0 %v1923, 68
    %v3608 = vpop.permute.xlu0 %3607
    %3609 = vrot.lane.b32.xlu0 %v1924, 68
    %v3610 = vpop.permute.xlu0 %3609
    %3611 = vrot.lane.b32.xlu0 %v1925, 68
    %v3612 = vpop.permute.xlu0 %3611
    %3613 = vrot.lane.b32.xlu0 %v1926, 68
    %v3614 = vpop.permute.xlu0 %3613
    %3615 = vrot.lane.b32.xlu0 %v1929, 68
    %v3616 = vpop.permute.xlu0 %3615
    %3617 = vrot.lane.b32.xlu0 %v1930, 68
    %v3618 = vpop.permute.xlu0 %3617
    %3619 = vrot.lane.b32.xlu0 %v1931, 68
    %v3620 = vpop.permute.xlu0 %3619
    %3621 = vrot.lane.b32.xlu0 %v1932, 68
    %v3622 = vpop.permute.xlu0 %3621
    %3623 = vrot.lane.b32.xlu0 %v1933, 68
    %v3624 = vpop.permute.xlu0 %3623
    %3625 = vrot.lane.b32.xlu0 %v1934, 68
    %v3626 = vpop.permute.xlu0 %3625
    %3627 = vrot.lane.b32.xlu0 %v1935, 68
    %v3628 = vpop.permute.xlu0 %3627
    %3629 = vrot.lane.b32.xlu0 %v1936, 68
    %v3630 = vpop.permute.xlu0 %3629
    %3631 = vrot.lane.b32.xlu0 %v1937, 68
    %v3632 = vpop.permute.xlu0 %3631
    %3633 = vrot.lane.b32.xlu0 %v1940, 68
    %v3634 = vpop.permute.xlu0 %3633
    %3635 = vrot.lane.b32.xlu0 %v1941, 68
    %v3636 = vpop.permute.xlu0 %3635
    %3637 = vrot.lane.b32.xlu0 %v1942, 68
    %v3638 = vpop.permute.xlu0 %3637
    %3639 = vrot.lane.b32.xlu0 %v1943, 68
    %v3640 = vpop.permute.xlu0 %3639
    %3641 = vrot.lane.b32.xlu0 %v1944, 68
    %v3642 = vpop.permute.xlu0 %3641
    %3643 = vrot.lane.b32.xlu0 %v1945, 68
    %v3644 = vpop.permute.xlu0 %3643
    %3645 = vrot.lane.b32.xlu0 %v1946, 68
    %v3646 = vpop.permute.xlu0 %3645
    %3647 = vrot.lane.b32.xlu0 %v1947, 68
    %v3648 = vpop.permute.xlu0 %3647
    %3649 = vrot.lane.b32.xlu0 %v1948, 68
    %v3650 = vpop.permute.xlu0 %3649
    %3651 = vrot.lane.b32.xlu0 %v1951, 68
    %v3652 = vpop.permute.xlu0 %3651
    %3653 = vrot.lane.b32.xlu0 %v1952, 68
    %v3654 = vpop.permute.xlu0 %3653
    %3655 = vrot.lane.b32.xlu0 %v1953, 68
    %v3656 = vpop.permute.xlu0 %3655
    %3657 = vrot.lane.b32.xlu0 %v1954, 68
    %v3658 = vpop.permute.xlu0 %3657
    %3659 = vrot.lane.b32.xlu0 %v1955, 68
    %v3660 = vpop.permute.xlu0 %3659
    %3661 = vrot.lane.b32.xlu0 %v1956, 68
    %v3662 = vpop.permute.xlu0 %3661
    %3663 = vrot.lane.b32.xlu0 %v1957, 68
    %v3664 = vpop.permute.xlu0 %3663
    %3665 = vrot.lane.b32.xlu0 %v1958, 68
    %v3666 = vpop.permute.xlu0 %3665
    %3667 = vrot.lane.b32.xlu0 %v1959, 68
    %v3668 = vpop.permute.xlu0 %3667
    %3669 = vrot.lane.b32.xlu0 %v1962, 68
    %v3670 = vpop.permute.xlu0 %3669
    %3671 = vrot.lane.b32.xlu0 %v1963, 68
    %v3672 = vpop.permute.xlu0 %3671
    %3673 = vrot.lane.b32.xlu0 %v1964, 68
    %v3674 = vpop.permute.xlu0 %3673
    %3675 = vrot.lane.b32.xlu0 %v1965, 68
    %v3676 = vpop.permute.xlu0 %3675
    %3677 = vrot.lane.b32.xlu0 %v1966, 68
    %v3678 = vpop.permute.xlu0 %3677
    %3679 = vrot.lane.b32.xlu0 %v1967, 68
    %v3680 = vpop.permute.xlu0 %3679
    %3681 = vrot.lane.b32.xlu0 %v1968, 68
    %v3682 = vpop.permute.xlu0 %3681
    %3683 = vrot.lane.b32.xlu0 %v1969, 68
    %v3684 = vpop.permute.xlu0 %3683
    %3685 = vrot.lane.b32.xlu0 %v1970, 68
    %v3686 = vpop.permute.xlu0 %3685
    %3687 = vrot.lane.b32.xlu0 %v1973, 68
    %v3688 = vpop.permute.xlu0 %3687
    %3689 = vrot.lane.b32.xlu0 %v1974, 68
    %v3690 = vpop.permute.xlu0 %3689
    %3691 = vrot.lane.b32.xlu0 %v1975, 68
    %v3692 = vpop.permute.xlu0 %3691
    %3693 = vrot.lane.b32.xlu0 %v1976, 68
    %v3694 = vpop.permute.xlu0 %3693
    %3695 = vrot.lane.b32.xlu0 %v1977, 68
    %v3696 = vpop.permute.xlu0 %3695
    %3697 = vrot.lane.b32.xlu0 %v1978, 68
    %v3698 = vpop.permute.xlu0 %3697
    %3699 = vrot.lane.b32.xlu0 %v1979, 68
    %v3700 = vpop.permute.xlu0 %3699
    %3701 = vrot.lane.b32.xlu0 %v1980, 68
    %v3702 = vpop.permute.xlu0 %3701
    %3703 = vrot.lane.b32.xlu0 %v1981, 68
    %v3704 = vpop.permute.xlu0 %3703
    %3705 = vrot.lane.b32.xlu0 %v1984, 68
    %v3706 = vpop.permute.xlu0 %3705
    %3707 = vrot.lane.b32.xlu0 %v1985, 68
    %v3708 = vpop.permute.xlu0 %3707
    %3709 = vrot.lane.b32.xlu0 %v1986, 68
    %v3710 = vpop.permute.xlu0 %3709
    %3711 = vrot.lane.b32.xlu0 %v1987, 68
    %v3712 = vpop.permute.xlu0 %3711
    %3713 = vrot.lane.b32.xlu0 %v1988, 68
    %v3714 = vpop.permute.xlu0 %3713
    %3715 = vrot.lane.b32.xlu0 %v1989, 68
    %v3716 = vpop.permute.xlu0 %3715
    %3717 = vrot.lane.b32.xlu0 %v1990, 68
    %v3718 = vpop.permute.xlu0 %3717
    %3719 = vrot.lane.b32.xlu0 %v1991, 68
    %v3720 = vpop.permute.xlu0 %3719
    %3721 = vrot.lane.b32.xlu0 %v1992, 68
    %v3722 = vpop.permute.xlu0 %3721
    %3723 = vrot.lane.b32.xlu0 %v1995, 68
    %v3724 = vpop.permute.xlu0 %3723
    %3725 = vrot.lane.b32.xlu0 %v1996, 68
    %v3726 = vpop.permute.xlu0 %3725
    %3727 = vrot.lane.b32.xlu0 %v1997, 68
    %v3728 = vpop.permute.xlu0 %3727
    %3729 = vrot.lane.b32.xlu0 %v1998, 68
    %v3730 = vpop.permute.xlu0 %3729
    %3731 = vrot.lane.b32.xlu0 %v1999, 68
    %v3732 = vpop.permute.xlu0 %3731
    %3733 = vrot.lane.b32.xlu0 %v2000, 68
    %v3734 = vpop.permute.xlu0 %3733
    %3735 = vrot.lane.b32.xlu0 %v2001, 68
    %v3736 = vpop.permute.xlu0 %3735
    %3737 = vrot.lane.b32.xlu0 %v2002, 68
    %v3738 = vpop.permute.xlu0 %3737
    %3739 = vrot.lane.b32.xlu0 %v2003, 68
    %v3740 = vpop.permute.xlu0 %3739
    %3741 = vrot.lane.b32.xlu0 %v2006, 68
    %v3742 = vpop.permute.xlu0 %3741
    %3743 = vrot.lane.b32.xlu0 %v2007, 68
    %v3744 = vpop.permute.xlu0 %3743
    %3745 = vrot.lane.b32.xlu0 %v2008, 68
    %v3746 = vpop.permute.xlu0 %3745
    %3747 = vrot.lane.b32.xlu0 %v2009, 68
    %v3748 = vpop.permute.xlu0 %3747
    %3749 = vrot.lane.b32.xlu0 %v2010, 68
    %v3750 = vpop.permute.xlu0 %3749
    %3751 = vrot.lane.b32.xlu0 %v2011, 68
    %v3752 = vpop.permute.xlu0 %3751
    %3753 = vrot.lane.b32.xlu0 %v2012, 68
    %v3754 = vpop.permute.xlu0 %3753
    %3755 = vrot.lane.b32.xlu0 %v2013, 68
    %v3756 = vpop.permute.xlu0 %3755
    %3757 = vrot.lane.b32.xlu0 %v2014, 68
    %v3758 = vpop.permute.xlu0 %3757
    %3841 = vrot.lane.b32.xlu0 %v1919, 96
    %v3842 = vpop.permute.xlu0 %3841
    %3843 = vrot.lane.b32.xlu0 %v1920, 96
    %v3844 = vpop.permute.xlu0 %3843
    %3845 = vrot.lane.b32.xlu0 %v1921, 96
    %v3846 = vpop.permute.xlu0 %3845
    %3847 = vrot.lane.b32.xlu0 %v1922, 96
    %v3848 = vpop.permute.xlu0 %3847
    %3849 = vrot.lane.b32.xlu0 %v1923, 96
    %v3850 = vpop.permute.xlu0 %3849
    %3851 = vrot.lane.b32.xlu0 %v1924, 96
    %v3852 = vpop.permute.xlu0 %3851
    %3853 = vrot.lane.b32.xlu0 %v1925, 96
    %v3854 = vpop.permute.xlu0 %3853
    %3855 = vrot.lane.b32.xlu0 %v1926, 96
    %v3856 = vpop.permute.xlu0 %3855
    %3857 = vrot.lane.b32.xlu0 %v1927, 96
    %v3858 = vpop.permute.xlu0 %3857
    %3859 = vrot.lane.b32.xlu0 %v1930, 96
    %v3860 = vpop.permute.xlu0 %3859
    %3861 = vrot.lane.b32.xlu0 %v1931, 96
    %v3862 = vpop.permute.xlu0 %3861
    %3863 = vrot.lane.b32.xlu0 %v1932, 96
    %v3864 = vpop.permute.xlu0 %3863
    %3865 = vrot.lane.b32.xlu0 %v1933, 96
    %v3866 = vpop.permute.xlu0 %3865
    %3867 = vrot.lane.b32.xlu0 %v1934, 96
    %v3868 = vpop.permute.xlu0 %3867
    %3869 = vrot.lane.b32.xlu0 %v1935, 96
    %v3870 = vpop.permute.xlu0 %3869
    %3871 = vrot.lane.b32.xlu0 %v1936, 96
    %v3872 = vpop.permute.xlu0 %3871
    %3873 = vrot.lane.b32.xlu0 %v1937, 96
    %v3874 = vpop.permute.xlu0 %3873
    %3875 = vrot.lane.b32.xlu0 %v1938, 96
    %v3876 = vpop.permute.xlu0 %3875
    %3877 = vrot.lane.b32.xlu0 %v1941, 96
    %v3878 = vpop.permute.xlu0 %3877
    %3879 = vrot.lane.b32.xlu0 %v1942, 96
    %v3880 = vpop.permute.xlu0 %3879
    %3881 = vrot.lane.b32.xlu0 %v1943, 96
    %v3882 = vpop.permute.xlu0 %3881
    %3883 = vrot.lane.b32.xlu0 %v1944, 96
    %v3884 = vpop.permute.xlu0 %3883
    %3885 = vrot.lane.b32.xlu0 %v1945, 96
    %v3886 = vpop.permute.xlu0 %3885
    %3887 = vrot.lane.b32.xlu0 %v1946, 96
    %v3888 = vpop.permute.xlu0 %3887
    %3889 = vrot.lane.b32.xlu0 %v1947, 96
    %v3890 = vpop.permute.xlu0 %3889
    %3891 = vrot.lane.b32.xlu0 %v1948, 96
    %v3892 = vpop.permute.xlu0 %3891
    %3893 = vrot.lane.b32.xlu0 %v1949, 96
    %v3894 = vpop.permute.xlu0 %3893
    %3895 = vrot.lane.b32.xlu0 %v1952, 96
    %v3896 = vpop.permute.xlu0 %3895
    %3897 = vrot.lane.b32.xlu0 %v1953, 96
    %v3898 = vpop.permute.xlu0 %3897
    %3899 = vrot.lane.b32.xlu0 %v1954, 96
    %v3900 = vpop.permute.xlu0 %3899
    %3901 = vrot.lane.b32.xlu0 %v1955, 96
    %v3902 = vpop.permute.xlu0 %3901
    %3903 = vrot.lane.b32.xlu0 %v1956, 96
    %v3904 = vpop.permute.xlu0 %3903
    %3905 = vrot.lane.b32.xlu0 %v1957, 96
    %v3906 = vpop.permute.xlu0 %3905
    %3907 = vrot.lane.b32.xlu0 %v1958, 96
    %v3908 = vpop.permute.xlu0 %3907
    %3909 = vrot.lane.b32.xlu0 %v1959, 96
    %v3910 = vpop.permute.xlu0 %3909
    %3911 = vrot.lane.b32.xlu0 %v1960, 96
    %v3912 = vpop.permute.xlu0 %3911
    %3913 = vrot.lane.b32.xlu0 %v1963, 96
    %v3914 = vpop.permute.xlu0 %3913
    %3915 = vrot.lane.b32.xlu0 %v1964, 96
    %v3916 = vpop.permute.xlu0 %3915
    %3917 = vrot.lane.b32.xlu0 %v1965, 96
    %v3918 = vpop.permute.xlu0 %3917
    %3919 = vrot.lane.b32.xlu0 %v1966, 96
    %v3920 = vpop.permute.xlu0 %3919
    %3921 = vrot.lane.b32.xlu0 %v1967, 96
    %v3922 = vpop.permute.xlu0 %3921
    %3923 = vrot.lane.b32.xlu0 %v1968, 96
    %v3924 = vpop.permute.xlu0 %3923
    %3925 = vrot.lane.b32.xlu0 %v1969, 96
    %v3926 = vpop.permute.xlu0 %3925
    %3927 = vrot.lane.b32.xlu0 %v1970, 96
    %v3928 = vpop.permute.xlu0 %3927
    %3929 = vrot.lane.b32.xlu0 %v1971, 96
    %v3930 = vpop.permute.xlu0 %3929
    %3931 = vrot.lane.b32.xlu0 %v1974, 96
    %v3932 = vpop.permute.xlu0 %3931
    %3933 = vrot.lane.b32.xlu0 %v1975, 96
    %v3934 = vpop.permute.xlu0 %3933
    %3935 = vrot.lane.b32.xlu0 %v1976, 96
    %v3936 = vpop.permute.xlu0 %3935
    %3937 = vrot.lane.b32.xlu0 %v1977, 96
    %v3938 = vpop.permute.xlu0 %3937
    %3939 = vrot.lane.b32.xlu0 %v1978, 96
    %v3940 = vpop.permute.xlu0 %3939
    %3941 = vrot.lane.b32.xlu0 %v1979, 96
    %v3942 = vpop.permute.xlu0 %3941
    %3943 = vrot.lane.b32.xlu0 %v1980, 96
    %v3944 = vpop.permute.xlu0 %3943
    %3945 = vrot.lane.b32.xlu0 %v1981, 96
    %v3946 = vpop.permute.xlu0 %3945
    %3947 = vrot.lane.b32.xlu0 %v1982, 96
    %v3948 = vpop.permute.xlu0 %3947
    %3949 = vrot.lane.b32.xlu0 %v1985, 96
    %v3950 = vpop.permute.xlu0 %3949
    %3951 = vrot.lane.b32.xlu0 %v1986, 96
    %v3952 = vpop.permute.xlu0 %3951
    %3953 = vrot.lane.b32.xlu0 %v1987, 96
    %v3954 = vpop.permute.xlu0 %3953
    %3955 = vrot.lane.b32.xlu0 %v1988, 96
    %v3956 = vpop.permute.xlu0 %3955
    %3957 = vrot.lane.b32.xlu0 %v1989, 96
    %v3958 = vpop.permute.xlu0 %3957
    %3959 = vrot.lane.b32.xlu0 %v1990, 96
    %v3960 = vpop.permute.xlu0 %3959
    %3961 = vrot.lane.b32.xlu0 %v1991, 96
    %v3962 = vpop.permute.xlu0 %3961
    %3963 = vrot.lane.b32.xlu0 %v1992, 96
    %v3964 = vpop.permute.xlu0 %3963
    %3965 = vrot.lane.b32.xlu0 %v1993, 96
    %v3966 = vpop.permute.xlu0 %3965
    %3967 = vrot.lane.b32.xlu0 %v1996, 96
    %v3968 = vpop.permute.xlu0 %3967
    %3969 = vrot.lane.b32.xlu0 %v1997, 96
    %v3970 = vpop.permute.xlu0 %3969
    %3971 = vrot.lane.b32.xlu0 %v1998, 96
    %v3972 = vpop.permute.xlu0 %3971
    %3973 = vrot.lane.b32.xlu0 %v1999, 96
    %v3974 = vpop.permute.xlu0 %3973
    %3975 = vrot.lane.b32.xlu0 %v2000, 96
    %v3976 = vpop.permute.xlu0 %3975
    %3977 = vrot.lane.b32.xlu0 %v2001, 96
    %v3978 = vpop.permute.xlu0 %3977
    %3979 = vrot.lane.b32.xlu0 %v2002, 96
    %v3980 = vpop.permute.xlu0 %3979
    %3981 = vrot.lane.b32.xlu0 %v2003, 96
    %v3982 = vpop.permute.xlu0 %3981
    %3983 = vrot.lane.b32.xlu0 %v2004, 96
    %v3984 = vpop.permute.xlu0 %3983
    %3985 = vrot.lane.b32.xlu0 %v2007, 96
    %v3986 = vpop.permute.xlu0 %3985
    %3987 = vrot.lane.b32.xlu0 %v2008, 96
    %v3988 = vpop.permute.xlu0 %3987
    %3989 = vrot.lane.b32.xlu0 %v2009, 96
    %v3990 = vpop.permute.xlu0 %3989
    %3991 = vrot.lane.b32.xlu0 %v2010, 96
    %v3992 = vpop.permute.xlu0 %3991
    %3993 = vrot.lane.b32.xlu0 %v2011, 96
    %v3994 = vpop.permute.xlu0 %3993
    %3995 = vrot.lane.b32.xlu0 %v2012, 96
    %v3996 = vpop.permute.xlu0 %3995
    %3997 = vrot.lane.b32.xlu0 %v2013, 96
    %v3998 = vpop.permute.xlu0 %3997
    %3999 = vrot.lane.b32.xlu0 %v2014, 96
    %v4000 = vpop.permute.xlu0 %3999
    %4001 = vrot.lane.b32.xlu0 %v2015, 96
    %v4002 = vpop.permute.xlu0 %4001
    %vm4084 = vcmask 228352
    %v4085 = vsel %vm4084, %v1895, %v2102
    %v4086 = vsel %vm4084, %v1896, %v2104
    %v4087 = vsel %vm4084, %v1897, %v2106
    %v4088 = vsel %vm4084, %v1898, %v2108
    %v4089 = vsel %vm4084, %v1899, %v2110
    %v4090 = vsel %vm4084, %v1900, %v2112
    %v4091 = vsel %vm4084, %v1901, %v2114
    %v4092 = vsel %vm4084, %v1902, %v2116
    %v4093 = vsel %vm4084, %v1903, %v2118
    %v4094 = vsel %vm4084, %v1906, %v2120
    %v4095 = vsel %vm4084, %v1907, %v2122
    %v4096 = vsel %vm4084, %v1908, %v2124
    %v4097 = vsel %vm4084, %v1909, %v2126
    %v4098 = vsel %vm4084, %v1910, %v2128
    %v4099 = vsel %vm4084, %v1911, %v2130
    %v4100 = vsel %vm4084, %v1912, %v2132
    %v4101 = vsel %vm4084, %v1913, %v2134
    %v4102 = vsel %vm4084, %v1914, %v2136
    %v4103 = vsel %vm4084, %v1917, %v2138
    %v4104 = vsel %vm4084, %v1918, %v2140
    %v4105 = vsel %vm4084, %v1919, %v2142
    %v4106 = vsel %vm4084, %v1920, %v2144
    %v4107 = vsel %vm4084, %v1921, %v2146
    %v4108 = vsel %vm4084, %v1922, %v2148
    %v4109 = vsel %vm4084, %v1923, %v2150
    %v4110 = vsel %vm4084, %v1924, %v2152
    %v4111 = vsel %vm4084, %v1925, %v2154
    %v4112 = vsel %vm4084, %v1928, %v2156
    %v4113 = vsel %vm4084, %v1929, %v2158
    %v4114 = vsel %vm4084, %v1930, %v2160
    %v4115 = vsel %vm4084, %v1931, %v2162
    %v4116 = vsel %vm4084, %v1932, %v2164
    %v4117 = vsel %vm4084, %v1933, %v2166
    %v4118 = vsel %vm4084, %v1934, %v2168
    %v4119 = vsel %vm4084, %v1935, %v2170
    %v4120 = vsel %vm4084, %v1936, %v2172
    %v4121 = vsel %vm4084, %v1939, %v2174
    %v4122 = vsel %vm4084, %v1940, %v2176
    %v4123 = vsel %vm4084, %v1941, %v2178
    %v4124 = vsel %vm4084, %v1942, %v2180
    %v4125 = vsel %vm4084, %v1943, %v2182
    %v4126 = vsel %vm4084, %v1944, %v2184
    %v4127 = vsel %vm4084, %v1945, %v2186
    %v4128 = vsel %vm4084, %v1946, %v2188
    %v4129 = vsel %vm4084, %v1947, %v2190
    %v4130 = vsel %vm4084, %v1950, %v2192
    %v4131 = vsel %vm4084, %v1951, %v2194
    %v4132 = vsel %vm4084, %v1952, %v2196
    %v4133 = vsel %vm4084, %v1953, %v2198
    %v4134 = vsel %vm4084, %v1954, %v2200
    %v4135 = vsel %vm4084, %v1955, %v2202
    %v4136 = vsel %vm4084, %v1956, %v2204
    %v4137 = vsel %vm4084, %v1957, %v2206
    %v4138 = vsel %vm4084, %v1958, %v2208
    %v4139 = vsel %vm4084, %v1961, %v2210
    %v4140 = vsel %vm4084, %v1962, %v2212
    %v4141 = vsel %vm4084, %v1963, %v2214
    %v4142 = vsel %vm4084, %v1964, %v2216
    %v4143 = vsel %vm4084, %v1965, %v2218
    %v4144 = vsel %vm4084, %v1966, %v2220
    %v4145 = vsel %vm4084, %v1967, %v2222
    %v4146 = vsel %vm4084, %v1968, %v2224
    %v4147 = vsel %vm4084, %v1969, %v2226
    %v4148 = vsel %vm4084, %v1972, %v2228
    %v4149 = vsel %vm4084, %v1973, %v2230
    %v4150 = vsel %vm4084, %v1974, %v2232
    %v4151 = vsel %vm4084, %v1975, %v2234
    %v4152 = vsel %vm4084, %v1976, %v2236
    %v4153 = vsel %vm4084, %v1977, %v2238
    %v4154 = vsel %vm4084, %v1978, %v2240
    %v4155 = vsel %vm4084, %v1979, %v2242
    %v4156 = vsel %vm4084, %v1980, %v2244
    %v4157 = vsel %vm4084, %v1983, %v2246
    %v4158 = vsel %vm4084, %v1984, %v2248
    %v4159 = vsel %vm4084, %v1985, %v2250
    %v4160 = vsel %vm4084, %v1986, %v2252
    %v4161 = vsel %vm4084, %v1987, %v2254
    %v4162 = vsel %vm4084, %v1988, %v2256
    %v4163 = vsel %vm4084, %v1989, %v2258
    %v4164 = vsel %vm4084, %v1990, %v2260
    %v4165 = vsel %vm4084, %v1991, %v2262
    %vm4166 = vcmask 457728
    %v4167 = vsel %vm4166, %v4085, %v2354
    %v4168 = vsel %vm4166, %v4086, %v2356
    %v4169 = vsel %vm4166, %v4087, %v2358
    %v4170 = vsel %vm4166, %v4088, %v2360
    %v4171 = vsel %vm4166, %v4089, %v2362
    %v4172 = vsel %vm4166, %v4090, %v2364
    %v4173 = vsel %vm4166, %v4091, %v2366
    %v4174 = vsel %vm4166, %v4092, %v2368
    %v4175 = vsel %vm4166, %v4093, %v2370
    %v4176 = vsel %vm4166, %v4094, %v2372
    %v4177 = vsel %vm4166, %v4095, %v2374
    %v4178 = vsel %vm4166, %v4096, %v2376
    %v4179 = vsel %vm4166, %v4097, %v2378
    %v4180 = vsel %vm4166, %v4098, %v2380
    %v4181 = vsel %vm4166, %v4099, %v2382
    %v4182 = vsel %vm4166, %v4100, %v2384
    %v4183 = vsel %vm4166, %v4101, %v2386
    %v4184 = vsel %vm4166, %v4102, %v2388
    %v4185 = vsel %vm4166, %v4103, %v2390
    %v4186 = vsel %vm4166, %v4104, %v2392
    %v4187 = vsel %vm4166, %v4105, %v2394
    %v4188 = vsel %vm4166, %v4106, %v2396
    %v4189 = vsel %vm4166, %v4107, %v2398
    %v4190 = vsel %vm4166, %v4108, %v2400
    %v4191 = vsel %vm4166, %v4109, %v2402
    %v4192 = vsel %vm4166, %v4110, %v2404
    %v4193 = vsel %vm4166, %v4111, %v2406
    %v4194 = vsel %vm4166, %v4112, %v2408
    %v4195 = vsel %vm4166, %v4113, %v2410
    %v4196 = vsel %vm4166, %v4114, %v2412
    %v4197 = vsel %vm4166, %v4115, %v2414
    %v4198 = vsel %vm4166, %v4116, %v2416
    %v4199 = vsel %vm4166, %v4117, %v2418
    %v4200 = vsel %vm4166, %v4118, %v2420
    %v4201 = vsel %vm4166, %v4119, %v2422
    %v4202 = vsel %vm4166, %v4120, %v2424
    %v4203 = vsel %vm4166, %v4121, %v2426
    %v4204 = vsel %vm4166, %v4122, %v2428
    %v4205 = vsel %vm4166, %v4123, %v2430
    %v4206 = vsel %vm4166, %v4124, %v2432
    %v4207 = vsel %vm4166, %v4125, %v2434
    %v4208 = vsel %vm4166, %v4126, %v2436
    %v4209 = vsel %vm4166, %v4127, %v2438
    %v4210 = vsel %vm4166, %v4128, %v2440
    %v4211 = vsel %vm4166, %v4129, %v2442
    %v4212 = vsel %vm4166, %v4130, %v2444
    %v4213 = vsel %vm4166, %v4131, %v2446
    %v4214 = vsel %vm4166, %v4132, %v2448
    %v4215 = vsel %vm4166, %v4133, %v2450
    %v4216 = vsel %vm4166, %v4134, %v2452
    %v4217 = vsel %vm4166, %v4135, %v2454
    %v4218 = vsel %vm4166, %v4136, %v2456
    %v4219 = vsel %vm4166, %v4137, %v2458
    %v4220 = vsel %vm4166, %v4138, %v2460
    %v4221 = vsel %vm4166, %v4139, %v2462
    %v4222 = vsel %vm4166, %v4140, %v2464
    %v4223 = vsel %vm4166, %v4141, %v2466
    %v4224 = vsel %vm4166, %v4142, %v2468
    %v4225 = vsel %vm4166, %v4143, %v2470
    %v4226 = vsel %vm4166, %v4144, %v2472
    %v4227 = vsel %vm4166, %v4145, %v2474
    %v4228 = vsel %vm4166, %v4146, %v2476
    %v4229 = vsel %vm4166, %v4147, %v2478
    %v4230 = vsel %vm4166, %v4148, %v2480
    %v4231 = vsel %vm4166, %v4149, %v2482
    %v4232 = vsel %vm4166, %v4150, %v2484
    %v4233 = vsel %vm4166, %v4151, %v2486
    %v4234 = vsel %vm4166, %v4152, %v2488
    %v4235 = vsel %vm4166, %v4153, %v2490
    %v4236 = vsel %vm4166, %v4154, %v2492
    %v4237 = vsel %vm4166, %v4155, %v2494
    %v4238 = vsel %vm4166, %v4156, %v2496
    %v4239 = vsel %vm4166, %v4157, %v2498
    %v4240 = vsel %vm4166, %v4158, %v2500
    %v4241 = vsel %vm4166, %v4159, %v2502
    %v4242 = vsel %vm4166, %v4160, %v2504
    %v4243 = vsel %vm4166, %v4161, %v2506
    %v4244 = vsel %vm4166, %v4162, %v2508
    %v4245 = vsel %vm4166, %v4163, %v2510
    %v4246 = vsel %vm4166, %v4164, %v2512
    %v4247 = vsel %vm4166, %v4165, %v2514
    %vm4248 = vcmask 687104
    %v4249 = vsel %vm4248, %v4167, %v2614
    %v4250 = vsel %vm4248, %v4168, %v2616
    %v4251 = vsel %vm4248, %v4169, %v2618
    %v4252 = vsel %vm4248, %v4170, %v2620
    %v4253 = vsel %vm4248, %v4171, %v2622
    %v4254 = vsel %vm4248, %v4172, %v2624
    %v4255 = vsel %vm4248, %v4173, %v2626
    %v4256 = vsel %vm4248, %v4174, %v2628
    %v4257 = vsel %vm4248, %v4175, %v2630
    %v4258 = vsel %vm4248, %v4176, %v2632
    %v4259 = vsel %vm4248, %v4177, %v2634
    %v4260 = vsel %vm4248, %v4178, %v2636
    %v4261 = vsel %vm4248, %v4179, %v2638
    %v4262 = vsel %vm4248, %v4180, %v2640
    %v4263 = vsel %vm4248, %v4181, %v2642
    %v4264 = vsel %vm4248, %v4182, %v2644
    %v4265 = vsel %vm4248, %v4183, %v2646
    %v4266 = vsel %vm4248, %v4184, %v2648
    %v4267 = vsel %vm4248, %v4185, %v2650
    %v4268 = vsel %vm4248, %v4186, %v2652
    %v4269 = vsel %vm4248, %v4187, %v2654
    %v4270 = vsel %vm4248, %v4188, %v2656
    %v4271 = vsel %vm4248, %v4189, %v2658
    %v4272 = vsel %vm4248, %v4190, %v2660
    %v4273 = vsel %vm4248, %v4191, %v2662
    %v4274 = vsel %vm4248, %v4192, %v2664
    %v4275 = vsel %vm4248, %v4193, %v2666
    %v4276 = vsel %vm4248, %v4194, %v2668
    %v4277 = vsel %vm4248, %v4195, %v2670
    %v4278 = vsel %vm4248, %v4196, %v2672
    %v4279 = vsel %vm4248, %v4197, %v2674
    %v4280 = vsel %vm4248, %v4198, %v2676
    %v4281 = vsel %vm4248, %v4199, %v2678
    %v4282 = vsel %vm4248, %v4200, %v2680
    %v4283 = vsel %vm4248, %v4201, %v2682
    %v4284 = vsel %vm4248, %v4202, %v2684
    %v4285 = vsel %vm4248, %v4203, %v2686
    %v4286 = vsel %vm4248, %v4204, %v2688
    %v4287 = vsel %vm4248, %v4205, %v2690
    %v4288 = vsel %vm4248, %v4206, %v2692
    %v4289 = vsel %vm4248, %v4207, %v2694
    %v4290 = vsel %vm4248, %v4208, %v2696
    %v4291 = vsel %vm4248, %v4209, %v2698
    %v4292 = vsel %vm4248, %v4210, %v2700
    %v4293 = vsel %vm4248, %v4211, %v2702
    %v4294 = vsel %vm4248, %v4212, %v2704
    %v4295 = vsel %vm4248, %v4213, %v2706
    %v4296 = vsel %vm4248, %v4214, %v2708
    %v4297 = vsel %vm4248, %v4215, %v2710
    %v4298 = vsel %vm4248, %v4216, %v2712
    %v4299 = vsel %vm4248, %v4217, %v2714
    %v4300 = vsel %vm4248, %v4218, %v2716
    %v4301 = vsel %vm4248, %v4219, %v2718
    %v4302 = vsel %vm4248, %v4220, %v2720
    %v4303 = vsel %vm4248, %v4221, %v2722
    %v4304 = vsel %vm4248, %v4222, %v2724
    %v4305 = vsel %vm4248, %v4223, %v2726
    %v4306 = vsel %vm4248, %v4224, %v2728
    %v4307 = vsel %vm4248, %v4225, %v2730
    %v4308 = vsel %vm4248, %v4226, %v2732
    %v4309 = vsel %vm4248, %v4227, %v2734
    %v4310 = vsel %vm4248, %v4228, %v2736
    %v4311 = vsel %vm4248, %v4229, %v2738
    %v4312 = vsel %vm4248, %v4230, %v2740
    %v4313 = vsel %vm4248, %v4231, %v2742
    %v4314 = vsel %vm4248, %v4232, %v2744
    %v4315 = vsel %vm4248, %v4233, %v2746
    %v4316 = vsel %vm4248, %v4234, %v2748
    %v4317 = vsel %vm4248, %v4235, %v2750
    %v4318 = vsel %vm4248, %v4236, %v2752
    %v4319 = vsel %vm4248, %v4237, %v2754
    %v4320 = vsel %vm4248, %v4238, %v2756
    %v4321 = vsel %vm4248, %v4239, %v2758
    %v4322 = vsel %vm4248, %v4240, %v2760
    %v4323 = vsel %vm4248, %v4241, %v2762
    %v4324 = vsel %vm4248, %v4242, %v2764
    %v4325 = vsel %vm4248, %v4243, %v2766
    %v4326 = vsel %vm4248, %v4244, %v2768
    %v4327 = vsel %vm4248, %v4245, %v2770
    %v4328 = vsel %vm4248, %v4246, %v2772
    %v4329 = vsel %vm4248, %v4247, %v2774
    %vm4330 = vcmask 916480
    %v4331 = vsel %vm4330, %v4249, %v2858
    %v4332 = vsel %vm4330, %v4250, %v2860
    %v4333 = vsel %vm4330, %v4251, %v2862
    %v4334 = vsel %vm4330, %v4252, %v2864
    %v4335 = vsel %vm4330, %v4253, %v2866
    %v4336 = vsel %vm4330, %v4254, %v2868
    %v4337 = vsel %vm4330, %v4255, %v2870
    %v4338 = vsel %vm4330, %v4256, %v2872
    %v4339 = vsel %vm4330, %v4257, %v2874
    %v4340 = vsel %vm4330, %v4258, %v2876
    %v4341 = vsel %vm4330, %v4259, %v2878
    %v4342 = vsel %vm4330, %v4260, %v2880
    %v4343 = vsel %vm4330, %v4261, %v2882
    %v4344 = vsel %vm4330, %v4262, %v2884
    %v4345 = vsel %vm4330, %v4263, %v2886
    %v4346 = vsel %vm4330, %v4264, %v2888
    %v4347 = vsel %vm4330, %v4265, %v2890
    %v4348 = vsel %vm4330, %v4266, %v2892
    %v4349 = vsel %vm4330, %v4267, %v2894
    %v4350 = vsel %vm4330, %v4268, %v2896
    %v4351 = vsel %vm4330, %v4269, %v2898
    %v4352 = vsel %vm4330, %v4270, %v2900
    %v4353 = vsel %vm4330, %v4271, %v2902
    %v4354 = vsel %vm4330, %v4272, %v2904
    %v4355 = vsel %vm4330, %v4273, %v2906
    %v4356 = vsel %vm4330, %v4274, %v2908
    %v4357 = vsel %vm4330, %v4275, %v2910
    %v4358 = vsel %vm4330, %v4276, %v2912
    %v4359 = vsel %vm4330, %v4277, %v2914
    %v4360 = vsel %vm4330, %v4278, %v2916
    %v4361 = vsel %vm4330, %v4279, %v2918
    %v4362 = vsel %vm4330, %v4280, %v2920
    %v4363 = vsel %vm4330, %v4281, %v2922
    %v4364 = vsel %vm4330, %v4282, %v2924
    %v4365 = vsel %vm4330, %v4283, %v2926
    %v4366 = vsel %vm4330, %v4284, %v2928
    %v4367 = vsel %vm4330, %v4285, %v2930
    %v4368 = vsel %vm4330, %v4286, %v2932
    %v4369 = vsel %vm4330, %v4287, %v2934
    %v4370 = vsel %vm4330, %v4288, %v2936
    %v4371 = vsel %vm4330, %v4289, %v2938
    %v4372 = vsel %vm4330, %v4290, %v2940
    %v4373 = vsel %vm4330, %v4291, %v2942
    %v4374 = vsel %vm4330, %v4292, %v2944
    %v4375 = vsel %vm4330, %v4293, %v2946
    %v4376 = vsel %vm4330, %v4294, %v2948
    %v4377 = vsel %vm4330, %v4295, %v2950
    %v4378 = vsel %vm4330, %v4296, %v2952
    %v4379 = vsel %vm4330, %v4297, %v2954
    %v4380 = vsel %vm4330, %v4298, %v2956
    %v4381 = vsel %vm4330, %v4299, %v2958
    %v4382 = vsel %vm4330, %v4300, %v2960
    %v4383 = vsel %vm4330, %v4301, %v2962
    %v4384 = vsel %vm4330, %v4302, %v2964
    %v4385 = vsel %vm4330, %v4303, %v2966
    %v4386 = vsel %vm4330, %v4304, %v2968
    %v4387 = vsel %vm4330, %v4305, %v2970
    %v4388 = vsel %vm4330, %v4306, %v2972
    %v4389 = vsel %vm4330, %v4307, %v2974
    %v4390 = vsel %vm4330, %v4308, %v2976
    %v4391 = vsel %vm4330, %v4309, %v2978
    %v4392 = vsel %vm4330, %v4310, %v2980
    %v4393 = vsel %vm4330, %v4311, %v2982
    %v4394 = vsel %vm4330, %v4312, %v2984
    %v4395 = vsel %vm4330, %v4313, %v2986
    %v4396 = vsel %vm4330, %v4314, %v2988
    %v4397 = vsel %vm4330, %v4315, %v2990
    %v4398 = vsel %vm4330, %v4316, %v2992
    %v4399 = vsel %vm4330, %v4317, %v2994
    %v4400 = vsel %vm4330, %v4318, %v2996
    %v4401 = vsel %vm4330, %v4319, %v2998
    %v4402 = vsel %vm4330, %v4320, %v3000
    %v4403 = vsel %vm4330, %v4321, %v3002
    %v4404 = vsel %vm4330, %v4322, %v3004
    %v4405 = vsel %vm4330, %v4323, %v3006
    %v4406 = vsel %vm4330, %v4324, %v3008
    %v4407 = vsel %vm4330, %v4325, %v3010
    %v4408 = vsel %vm4330, %v4326, %v3012
    %v4409 = vsel %vm4330, %v4327, %v3014
    %v4410 = vsel %vm4330, %v4328, %v3016
    %v4411 = vsel %vm4330, %v4329, %v3018
    %vm4412 = vcmask 97280
    %v4413 = vsel %vm4412, %v2858, %v3102
    %v4414 = vsel %vm4412, %v2860, %v3104
    %v4415 = vsel %vm4412, %v2862, %v3106
    %v4416 = vsel %vm4412, %v2864, %v3108
    %v4417 = vsel %vm4412, %v2866, %v3110
    %v4418 = vsel %vm4412, %v2868, %v3112
    %v4419 = vsel %vm4412, %v2870, %v3114
    %v4420 = vsel %vm4412, %v2872, %v3116
    %v4421 = vsel %vm4412, %v2874, %v3118
    %v4422 = vsel %vm4412, %v2876, %v3120
    %v4423 = vsel %vm4412, %v2878, %v3122
    %v4424 = vsel %vm4412, %v2880, %v3124
    %v4425 = vsel %vm4412, %v2882, %v3126
    %v4426 = vsel %vm4412, %v2884, %v3128
    %v4427 = vsel %vm4412, %v2886, %v3130
    %v4428 = vsel %vm4412, %v2888, %v3132
    %v4429 = vsel %vm4412, %v2890, %v3134
    %v4430 = vsel %vm4412, %v2892, %v3136
    %v4431 = vsel %vm4412, %v2894, %v3138
    %v4432 = vsel %vm4412, %v2896, %v3140
    %v4433 = vsel %vm4412, %v2898, %v3142
    %v4434 = vsel %vm4412, %v2900, %v3144
    %v4435 = vsel %vm4412, %v2902, %v3146
    %v4436 = vsel %vm4412, %v2904, %v3148
    %v4437 = vsel %vm4412, %v2906, %v3150
    %v4438 = vsel %vm4412, %v2908, %v3152
    %v4439 = vsel %vm4412, %v2910, %v3154
    %v4440 = vsel %vm4412, %v2912, %v3156
    %v4441 = vsel %vm4412, %v2914, %v3158
    %v4442 = vsel %vm4412, %v2916, %v3160
    %v4443 = vsel %vm4412, %v2918, %v3162
    %v4444 = vsel %vm4412, %v2920, %v3164
    %v4445 = vsel %vm4412, %v2922, %v3166
    %v4446 = vsel %vm4412, %v2924, %v3168
    %v4447 = vsel %vm4412, %v2926, %v3170
    %v4448 = vsel %vm4412, %v2928, %v3172
    %v4449 = vsel %vm4412, %v2930, %v3174
    %v4450 = vsel %vm4412, %v2932, %v3176
    %v4451 = vsel %vm4412, %v2934, %v3178
    %v4452 = vsel %vm4412, %v2936, %v3180
    %v4453 = vsel %vm4412, %v2938, %v3182
    %v4454 = vsel %vm4412, %v2940, %v3184
    %v4455 = vsel %vm4412, %v2942, %v3186
    %v4456 = vsel %vm4412, %v2944, %v3188
    %v4457 = vsel %vm4412, %v2946, %v3190
    %v4458 = vsel %vm4412, %v2948, %v3192
    %v4459 = vsel %vm4412, %v2950, %v3194
    %v4460 = vsel %vm4412, %v2952, %v3196
    %v4461 = vsel %vm4412, %v2954, %v3198
    %v4462 = vsel %vm4412, %v2956, %v3200
    %v4463 = vsel %vm4412, %v2958, %v3202
    %v4464 = vsel %vm4412, %v2960, %v3204
    %v4465 = vsel %vm4412, %v2962, %v3206
    %v4466 = vsel %vm4412, %v2964, %v3208
    %v4467 = vsel %vm4412, %v2966, %v3210
    %v4468 = vsel %vm4412, %v2968, %v3212
    %v4469 = vsel %vm4412, %v2970, %v3214
    %v4470 = vsel %vm4412, %v2972, %v3216
    %v4471 = vsel %vm4412, %v2974, %v3218
    %v4472 = vsel %vm4412, %v2976, %v3220
    %v4473 = vsel %vm4412, %v2978, %v3222
    %v4474 = vsel %vm4412, %v2980, %v3224
    %v4475 = vsel %vm4412, %v2982, %v3226
    %v4476 = vsel %vm4412, %v2984, %v3228
    %v4477 = vsel %vm4412, %v2986, %v3230
    %v4478 = vsel %vm4412, %v2988, %v3232
    %v4479 = vsel %vm4412, %v2990, %v3234
    %v4480 = vsel %vm4412, %v2992, %v3236
    %v4481 = vsel %vm4412, %v2994, %v3238
    %v4482 = vsel %vm4412, %v2996, %v3240
    %v4483 = vsel %vm4412, %v2998, %v3242
    %v4484 = vsel %vm4412, %v3000, %v3244
    %v4485 = vsel %vm4412, %v3002, %v3246
    %v4486 = vsel %vm4412, %v3004, %v3248
    %v4487 = vsel %vm4412, %v3006, %v3250
    %v4488 = vsel %vm4412, %v3008, %v3252
    %v4489 = vsel %vm4412, %v3010, %v3254
    %v4490 = vsel %vm4412, %v3012, %v3256
    %v4491 = vsel %vm4412, %v3014, %v3258
    %v4492 = vsel %vm4412, %v3016, %v3260
    %v4493 = vsel %vm4412, %v3018, %v3262
    %vm4494 = vcmask 326656
    %v4495 = vsel %vm4494, %v4413, %v3354
    %v4496 = vsel %vm4494, %v4414, %v3356
    %v4497 = vsel %vm4494, %v4415, %v3358
    %v4498 = vsel %vm4494, %v4416, %v3360
    %v4499 = vsel %vm4494, %v4417, %v3362
    %v4500 = vsel %vm4494, %v4418, %v3364
    %v4501 = vsel %vm4494, %v4419, %v3366
    %v4502 = vsel %vm4494, %v4420, %v3368
    %v4503 = vsel %vm4494, %v4421, %v3370
    %v4504 = vsel %vm4494, %v4422, %v3372
    %v4505 = vsel %vm4494, %v4423, %v3374
    %v4506 = vsel %vm4494, %v4424, %v3376
    %v4507 = vsel %vm4494, %v4425, %v3378
    %v4508 = vsel %vm4494, %v4426, %v3380
    %v4509 = vsel %vm4494, %v4427, %v3382
    %v4510 = vsel %vm4494, %v4428, %v3384
    %v4511 = vsel %vm4494, %v4429, %v3386
    %v4512 = vsel %vm4494, %v4430, %v3388
    %v4513 = vsel %vm4494, %v4431, %v3390
    %v4514 = vsel %vm4494, %v4432, %v3392
    %v4515 = vsel %vm4494, %v4433, %v3394
    %v4516 = vsel %vm4494, %v4434, %v3396
    %v4517 = vsel %vm4494, %v4435, %v3398
    %v4518 = vsel %vm4494, %v4436, %v3400
    %v4519 = vsel %vm4494, %v4437, %v3402
    %v4520 = vsel %vm4494, %v4438, %v3404
    %v4521 = vsel %vm4494, %v4439, %v3406
    %v4522 = vsel %vm4494, %v4440, %v3408
    %v4523 = vsel %vm4494, %v4441, %v3410
    %v4524 = vsel %vm4494, %v4442, %v3412
    %v4525 = vsel %vm4494, %v4443, %v3414
    %v4526 = vsel %vm4494, %v4444, %v3416
    %v4527 = vsel %vm4494, %v4445, %v3418
    %v4528 = vsel %vm4494, %v4446, %v3420
    %v4529 = vsel %vm4494, %v4447, %v3422
    %v4530 = vsel %vm4494, %v4448, %v3424
    %v4531 = vsel %vm4494, %v4449, %v3426
    %v4532 = vsel %vm4494, %v4450, %v3428
    %v4533 = vsel %vm4494, %v4451, %v3430
    %v4534 = vsel %vm4494, %v4452, %v3432
    %v4535 = vsel %vm4494, %v4453, %v3434
    %v4536 = vsel %vm4494, %v4454, %v3436
    %v4537 = vsel %vm4494, %v4455, %v3438
    %v4538 = vsel %vm4494, %v4456, %v3440
    %v4539 = vsel %vm4494, %v4457, %v3442
    %v4540 = vsel %vm4494, %v4458, %v3444
    %v4541 = vsel %vm4494, %v4459, %v3446
    %v4542 = vsel %vm4494, %v4460, %v3448
    %v4543 = vsel %vm4494, %v4461, %v3450
    %v4544 = vsel %vm4494, %v4462, %v3452
    %v4545 = vsel %vm4494, %v4463, %v3454
    %v4546 = vsel %vm4494, %v4464, %v3456
    %v4547 = vsel %vm4494, %v4465, %v3458
    %v4548 = vsel %vm4494, %v4466, %v3460
    %v4549 = vsel %vm4494, %v4467, %v3462
    %v4550 = vsel %vm4494, %v4468, %v3464
    %v4551 = vsel %vm4494, %v4469, %v3466
    %v4552 = vsel %vm4494, %v4470, %v3468
    %v4553 = vsel %vm4494, %v4471, %v3470
    %v4554 = vsel %vm4494, %v4472, %v3472
    %v4555 = vsel %vm4494, %v4473, %v3474
    %v4556 = vsel %vm4494, %v4474, %v3476
    %v4557 = vsel %vm4494, %v4475, %v3478
    %v4558 = vsel %vm4494, %v4476, %v3480
    %v4559 = vsel %vm4494, %v4477, %v3482
    %v4560 = vsel %vm4494, %v4478, %v3484
    %v4561 = vsel %vm4494, %v4479, %v3486
    %v4562 = vsel %vm4494, %v4480, %v3488
    %v4563 = vsel %vm4494, %v4481, %v3490
    %v4564 = vsel %vm4494, %v4482, %v3492
    %v4565 = vsel %vm4494, %v4483, %v3494
    %v4566 = vsel %vm4494, %v4484, %v3496
    %v4567 = vsel %vm4494, %v4485, %v3498
    %v4568 = vsel %vm4494, %v4486, %v3500
    %v4569 = vsel %vm4494, %v4487, %v3502
    %v4570 = vsel %vm4494, %v4488, %v3504
    %v4571 = vsel %vm4494, %v4489, %v3506
    %v4572 = vsel %vm4494, %v4490, %v3508
    %v4573 = vsel %vm4494, %v4491, %v3510
    %v4574 = vsel %vm4494, %v4492, %v3512
    %v4575 = vsel %vm4494, %v4493, %v3514
    %vm4576 = vcmask 556032
    %v4577 = vsel %vm4576, %v4495, %v3598
    %v4578 = vsel %vm4576, %v4496, %v3600
    %v4579 = vsel %vm4576, %v4497, %v3602
    %v4580 = vsel %vm4576, %v4498, %v3604
    %v4581 = vsel %vm4576, %v4499, %v3606
    %v4582 = vsel %vm4576, %v4500, %v3608
    %v4583 = vsel %vm4576, %v4501, %v3610
    %v4584 = vsel %vm4576, %v4502, %v3612
    %v4585 = vsel %vm4576, %v4503, %v3614
    %v4586 = vsel %vm4576, %v4504, %v3616
    %v4587 = vsel %vm4576, %v4505, %v3618
    %v4588 = vsel %vm4576, %v4506, %v3620
    %v4589 = vsel %vm4576, %v4507, %v3622
    %v4590 = vsel %vm4576, %v4508, %v3624
    %v4591 = vsel %vm4576, %v4509, %v3626
    %v4592 = vsel %vm4576, %v4510, %v3628
    %v4593 = vsel %vm4576, %v4511, %v3630
    %v4594 = vsel %vm4576, %v4512, %v3632
    %v4595 = vsel %vm4576, %v4513, %v3634
    %v4596 = vsel %vm4576, %v4514, %v3636
    %v4597 = vsel %vm4576, %v4515, %v3638
    %v4598 = vsel %vm4576, %v4516, %v3640
    %v4599 = vsel %vm4576, %v4517, %v3642
    %v4600 = vsel %vm4576, %v4518, %v3644
    %v4601 = vsel %vm4576, %v4519, %v3646
    %v4602 = vsel %vm4576, %v4520, %v3648
    %v4603 = vsel %vm4576, %v4521, %v3650
    %v4604 = vsel %vm4576, %v4522, %v3652
    %v4605 = vsel %vm4576, %v4523, %v3654
    %v4606 = vsel %vm4576, %v4524, %v3656
    %v4607 = vsel %vm4576, %v4525, %v3658
    %v4608 = vsel %vm4576, %v4526, %v3660
    %v4609 = vsel %vm4576, %v4527, %v3662
    %v4610 = vsel %vm4576, %v4528, %v3664
    %v4611 = vsel %vm4576, %v4529, %v3666
    %v4612 = vsel %vm4576, %v4530, %v3668
    %v4613 = vsel %vm4576, %v4531, %v3670
    %v4614 = vsel %vm4576, %v4532, %v3672
    %v4615 = vsel %vm4576, %v4533, %v3674
    %v4616 = vsel %vm4576, %v4534, %v3676
    %v4617 = vsel %vm4576, %v4535, %v3678
    %v4618 = vsel %vm4576, %v4536, %v3680
    %v4619 = vsel %vm4576, %v4537, %v3682
    %v4620 = vsel %vm4576, %v4538, %v3684
    %v4621 = vsel %vm4576, %v4539, %v3686
    %v4622 = vsel %vm4576, %v4540, %v3688
    %v4623 = vsel %vm4576, %v4541, %v3690
    %v4624 = vsel %vm4576, %v4542, %v3692
    %v4625 = vsel %vm4576, %v4543, %v3694
    %v4626 = vsel %vm4576, %v4544, %v3696
    %v4627 = vsel %vm4576, %v4545, %v3698
    %v4628 = vsel %vm4576, %v4546, %v3700
    %v4629 = vsel %vm4576, %v4547, %v3702
    %v4630 = vsel %vm4576, %v4548, %v3704
    %v4631 = vsel %vm4576, %v4549, %v3706
    %v4632 = vsel %vm4576, %v4550, %v3708
    %v4633 = vsel %vm4576, %v4551, %v3710
    %v4634 = vsel %vm4576, %v4552, %v3712
    %v4635 = vsel %vm4576, %v4553, %v3714
    %v4636 = vsel %vm4576, %v4554, %v3716
    %v4637 = vsel %vm4576, %v4555, %v3718
    %v4638 = vsel %vm4576, %v4556, %v3720
    %v4639 = vsel %vm4576, %v4557, %v3722
    %v4640 = vsel %vm4576, %v4558, %v3724
    %v4641 = vsel %vm4576, %v4559, %v3726
    %v4642 = vsel %vm4576, %v4560, %v3728
    %v4643 = vsel %vm4576, %v4561, %v3730
    %v4644 = vsel %vm4576, %v4562, %v3732
    %v4645 = vsel %vm4576, %v4563, %v3734
    %v4646 = vsel %vm4576, %v4564, %v3736
    %v4647 = vsel %vm4576, %v4565, %v3738
    %v4648 = vsel %vm4576, %v4566, %v3740
    %v4649 = vsel %vm4576, %v4567, %v3742
    %v4650 = vsel %vm4576, %v4568, %v3744
    %v4651 = vsel %vm4576, %v4569, %v3746
    %v4652 = vsel %vm4576, %v4570, %v3748
    %v4653 = vsel %vm4576, %v4571, %v3750
    %v4654 = vsel %vm4576, %v4572, %v3752
    %v4655 = vsel %vm4576, %v4573, %v3754
    %v4656 = vsel %vm4576, %v4574, %v3756
    %v4657 = vsel %vm4576, %v4575, %v3758
    %vm4658 = vcmask 785408
    %v4659 = vsel %vm4658, %v4577, %v3842
    %v4660 = vsel %vm4658, %v4578, %v3844
    %v4661 = vsel %vm4658, %v4579, %v3846
    %v4662 = vsel %vm4658, %v4580, %v3848
    %v4663 = vsel %vm4658, %v4581, %v3850
    %v4664 = vsel %vm4658, %v4582, %v3852
    %v4665 = vsel %vm4658, %v4583, %v3854
    %v4666 = vsel %vm4658, %v4584, %v3856
    %v4667 = vsel %vm4658, %v4585, %v3858
    %v4668 = vsel %vm4658, %v4586, %v3860
    %v4669 = vsel %vm4658, %v4587, %v3862
    %v4670 = vsel %vm4658, %v4588, %v3864
    %v4671 = vsel %vm4658, %v4589, %v3866
    %v4672 = vsel %vm4658, %v4590, %v3868
    %v4673 = vsel %vm4658, %v4591, %v3870
    %v4674 = vsel %vm4658, %v4592, %v3872
    %v4675 = vsel %vm4658, %v4593, %v3874
    %v4676 = vsel %vm4658, %v4594, %v3876
    %v4677 = vsel %vm4658, %v4595, %v3878
    %v4678 = vsel %vm4658, %v4596, %v3880
    %v4679 = vsel %vm4658, %v4597, %v3882
    %v4680 = vsel %vm4658, %v4598, %v3884
    %v4681 = vsel %vm4658, %v4599, %v3886
    %v4682 = vsel %vm4658, %v4600, %v3888
    %v4683 = vsel %vm4658, %v4601, %v3890
    %v4684 = vsel %vm4658, %v4602, %v3892
    %v4685 = vsel %vm4658, %v4603, %v3894
    %v4686 = vsel %vm4658, %v4604, %v3896
    %v4687 = vsel %vm4658, %v4605, %v3898
    %v4688 = vsel %vm4658, %v4606, %v3900
    %v4689 = vsel %vm4658, %v4607, %v3902
    %v4690 = vsel %vm4658, %v4608, %v3904
    %v4691 = vsel %vm4658, %v4609, %v3906
    %v4692 = vsel %vm4658, %v4610, %v3908
    %v4693 = vsel %vm4658, %v4611, %v3910
    %v4694 = vsel %vm4658, %v4612, %v3912
    %v4695 = vsel %vm4658, %v4613, %v3914
    %v4696 = vsel %vm4658, %v4614, %v3916
    %v4697 = vsel %vm4658, %v4615, %v3918
    %v4698 = vsel %vm4658, %v4616, %v3920
    %v4699 = vsel %vm4658, %v4617, %v3922
    %v4700 = vsel %vm4658, %v4618, %v3924
    %v4701 = vsel %vm4658, %v4619, %v3926
    %v4702 = vsel %vm4658, %v4620, %v3928
    %v4703 = vsel %vm4658, %v4621, %v3930
    %v4704 = vsel %vm4658, %v4622, %v3932
    %v4705 = vsel %vm4658, %v4623, %v3934
    %v4706 = vsel %vm4658, %v4624, %v3936
    %v4707 = vsel %vm4658, %v4625, %v3938
    %v4708 = vsel %vm4658, %v4626, %v3940
    %v4709 = vsel %vm4658, %v4627, %v3942
    %v4710 = vsel %vm4658, %v4628, %v3944
    %v4711 = vsel %vm4658, %v4629, %v3946
    %v4712 = vsel %vm4658, %v4630, %v3948
    %v4713 = vsel %vm4658, %v4631, %v3950
    %v4714 = vsel %vm4658, %v4632, %v3952
    %v4715 = vsel %vm4658, %v4633, %v3954
    %v4716 = vsel %vm4658, %v4634, %v3956
    %v4717 = vsel %vm4658, %v4635, %v3958
    %v4718 = vsel %vm4658, %v4636, %v3960
    %v4719 = vsel %vm4658, %v4637, %v3962
    %v4720 = vsel %vm4658, %v4638, %v3964
    %v4721 = vsel %vm4658, %v4639, %v3966
    %v4722 = vsel %vm4658, %v4640, %v3968
    %v4723 = vsel %vm4658, %v4641, %v3970
    %v4724 = vsel %vm4658, %v4642, %v3972
    %v4725 = vsel %vm4658, %v4643, %v3974
    %v4726 = vsel %vm4658, %v4644, %v3976
    %v4727 = vsel %vm4658, %v4645, %v3978
    %v4728 = vsel %vm4658, %v4646, %v3980
    %v4729 = vsel %vm4658, %v4647, %v3982
    %v4730 = vsel %vm4658, %v4648, %v3984
    %v4731 = vsel %vm4658, %v4649, %v3986
    %v4732 = vsel %vm4658, %v4650, %v3988
    %v4733 = vsel %vm4658, %v4651, %v3990
    %v4734 = vsel %vm4658, %v4652, %v3992
    %v4735 = vsel %vm4658, %v4653, %v3994
    %v4736 = vsel %vm4658, %v4654, %v3996
    %v4737 = vsel %vm4658, %v4655, %v3998
    %v4738 = vsel %vm4658, %v4656, %v4000
    %v4739 = vsel %vm4658, %v4657, %v4002
    %v4740 = vpack.c.bf16 %v4332, %v4331
    %v4741 = vpack.c.bf16 %v4660, %v4659
    %v4742 = vpack.c.bf16 %v4334, %v4333
    %v4743 = vpack.c.bf16 %v4662, %v4661
    %v4744 = vpack.c.bf16 %v4336, %v4335
    %v4745 = vpack.c.bf16 %v4664, %v4663
    %v4746 = vpack.c.bf16 %v4338, %v4337
    %v4747 = vpack.c.bf16 %v4666, %v4665
    %v4748 = vpack.c.bf16 %v4340, %v4339
    %v4749 = vpack.c.bf16 %v4668, %v4667
    %v4750 = vpack.c.bf16 %v4342, %v4341
    %v4751 = vpack.c.bf16 %v4670, %v4669
    %v4752 = vpack.c.bf16 %v4344, %v4343
    %v4753 = vpack.c.bf16 %v4672, %v4671
    %v4754 = vpack.c.bf16 %v4346, %v4345
    %v4755 = vpack.c.bf16 %v4674, %v4673
    %v4756 = vpack.c.bf16 %v4348, %v4347
    %v4757 = vpack.c.bf16 %v4676, %v4675
    %v4758 = vpack.c.bf16 %v4350, %v4349
    %v4759 = vpack.c.bf16 %v4678, %v4677
    %v4760 = vpack.c.bf16 %v4352, %v4351
    %v4761 = vpack.c.bf16 %v4680, %v4679
    %v4762 = vpack.c.bf16 %v4354, %v4353
    %v4763 = vpack.c.bf16 %v4682, %v4681
    %v4764 = vpack.c.bf16 %v4356, %v4355
    %v4765 = vpack.c.bf16 %v4684, %v4683
    %v4766 = vpack.c.bf16 %v4358, %v4357
    %v4767 = vpack.c.bf16 %v4686, %v4685
    %v4768 = vpack.c.bf16 %v4360, %v4359
    %v4769 = vpack.c.bf16 %v4688, %v4687
    %v4770 = vpack.c.bf16 %v4362, %v4361
    %v4771 = vpack.c.bf16 %v4690, %v4689
    %v4772 = vpack.c.bf16 %v4364, %v4363
    %v4773 = vpack.c.bf16 %v4692, %v4691
    %v4774 = vpack.c.bf16 %v4366, %v4365
    %v4775 = vpack.c.bf16 %v4694, %v4693
    %v4776 = vpack.c.bf16 %v4368, %v4367
    %v4777 = vpack.c.bf16 %v4696, %v4695
    %v4778 = vpack.c.bf16 %v4370, %v4369
    %v4779 = vpack.c.bf16 %v4698, %v4697
    %v4780 = vpack.c.bf16 %v4372, %v4371
    %v4781 = vpack.c.bf16 %v4700, %v4699
    %v4782 = vpack.c.bf16 %v4374, %v4373
    %v4783 = vpack.c.bf16 %v4702, %v4701
    %v4784 = vpack.c.bf16 %v4376, %v4375
    %v4785 = vpack.c.bf16 %v4704, %v4703
    %v4786 = vpack.c.bf16 %v4378, %v4377
    %v4787 = vpack.c.bf16 %v4706, %v4705
    %v4788 = vpack.c.bf16 %v4380, %v4379
    %v4789 = vpack.c.bf16 %v4708, %v4707
    %v4790 = vpack.c.bf16 %v4382, %v4381
    %v4791 = vpack.c.bf16 %v4710, %v4709
    %v4792 = vpack.c.bf16 %v4384, %v4383
    %v4793 = vpack.c.bf16 %v4712, %v4711
    %v4794 = vpack.c.bf16 %v4386, %v4385
    %v4795 = vpack.c.bf16 %v4714, %v4713
    %v4796 = vpack.c.bf16 %v4388, %v4387
    %v4797 = vpack.c.bf16 %v4716, %v4715
    %v4798 = vpack.c.bf16 %v4390, %v4389
    %v4799 = vpack.c.bf16 %v4718, %v4717
    %v4800 = vpack.c.bf16 %v4392, %v4391
    %v4801 = vpack.c.bf16 %v4720, %v4719
    %v4802 = vpack.c.bf16 %v4394, %v4393
    %v4803 = vpack.c.bf16 %v4722, %v4721
    %v4804 = vpack.c.bf16 %v4396, %v4395
    %v4805 = vpack.c.bf16 %v4724, %v4723
    %v4806 = vpack.c.bf16 %v4398, %v4397
    %v4807 = vpack.c.bf16 %v4726, %v4725
    %v4808 = vpack.c.bf16 %v4400, %v4399
    %v4809 = vpack.c.bf16 %v4728, %v4727
    %v4810 = vpack.c.bf16 %v4402, %v4401
    %v4811 = vpack.c.bf16 %v4730, %v4729
    %v4812 = vpack.c.bf16 %v4404, %v4403
    %v4813 = vpack.c.bf16 %v4732, %v4731
    %v4814 = vpack.c.bf16 %v4406, %v4405
    %v4815 = vpack.c.bf16 %v4734, %v4733
    %v4816 = vpack.c.bf16 %v4408, %v4407
    %v4817 = vpack.c.bf16 %v4736, %v4735
    %v4818 = vpack.c.bf16 %v4410, %v4409
    %v4819 = vpack.c.bf16 %v4738, %v4737
    %v4820 = vpack.c.bf16 %v4411, %v4411
    %v4821 = vpack.c.bf16 %v4739, %v4739
    %v4822 = vld [vmem:[%s1] sm:$0xf]
    %v4823 = vld [vmem:[%s1 + $0x4] sm:$0xf]
    %v4824 = vld [vmem:[%s1 + $0x8] sm:$0xf]
    %v4825 = vld [vmem:[%s1 + $0xc] sm:$0xf]
    %v4826 = vld [vmem:[%s1 + $0x10] sm:$0xf]
    %v4827 = vld [vmem:[%s1 + $0x14] sm:$0xf]
    %v4828 = vld [vmem:[%s1 + $0x18] sm:$0xf]
    %v4829 = vld [vmem:[%s1 + $0x1c] sm:$0xf]
    %v4830 = vld [vmem:[%s1 + $0x20] sm:$0xf]
    %v4831 = vld [vmem:[%s1 + $0x24] sm:$0xf]
    %v4832 = vld [vmem:[%s1 + $0x28] sm:$0xf]
    %v4833 = vld [vmem:[%s1 + $0x2c] sm:$0xf]
    %v4834 = vld [vmem:[%s1 + $0x30] sm:$0xf]
    %v4835 = vld [vmem:[%s1 + $0x34] sm:$0xf]
    %v4836 = vld [vmem:[%s1 + $0x38] sm:$0xf]
    %v4837 = vld [vmem:[%s1 + $0x3c] sm:$0xf]
    %v4838 = vld [vmem:[%s1 + $0x40] sm:$0xf]
    %v4839 = vld [vmem:[%s1 + $0x44] sm:$0xf]
    %v4840 = vld [vmem:[%s1 + $0x48] sm:$0xf]
    %v4841 = vld [vmem:[%s1 + $0x4c] sm:$0xf]
    %v4842 = vld [vmem:[%s1 + $0x50] sm:$0xf]
    %v4843 = vld [vmem:[%s1 + $0x54] sm:$0xf]
    %v4844 = vld [vmem:[%s1 + $0x58] sm:$0xf]
    %v4845 = vld [vmem:[%s1 + $0x5c] sm:$0xf]
    %v4846 = vld [vmem:[%s1 + $0x60] sm:$0xf]
    %v4847 = vld [vmem:[%s1 + $0x64] sm:$0xf]
    %v4848 = vld [vmem:[%s1 + $0x68] sm:$0xf]
    %v4849 = vld [vmem:[%s1 + $0x6c] sm:$0xf]
    %v4850 = vld [vmem:[%s1 + $0x70] sm:$0xf]
    %v4851 = vld [vmem:[%s1 + $0x74] sm:$0xf]
    %v4852 = vld [vmem:[%s1 + $0x78] sm:$0xf]
    %v4853 = vld [vmem:[%s1 + $0x7c] sm:$0x3]
    %v4855 = vlaneseq
    %v4856 = vshrl.u32 %v4855, 7
    %v4857 = vsub.s32 0, %v4856
    %v4858 = vrot.slane %v2016, %v4857
    %v4892 = vunpack.c.l.b16 %v4822
    %v4893 = vunpack.c.l.b16 %v4823
    %v4894 = vunpack.c.l.b16 %v4824
    %v4895 = vunpack.c.l.b16 %v4825
    %v4896 = vunpack.c.l.b16 %v4826
    %v4897 = vunpack.c.l.b16 %v4827
    %v4898 = vunpack.c.l.b16 %v4828
    %v4899 = vunpack.c.l.b16 %v4829
    %v4900 = vunpack.c.l.b16 %v4830
    %v4901 = vunpack.c.l.b16 %v4831
    %v4902 = vunpack.c.l.b16 %v4832
    %v4903 = vunpack.c.l.b16 %v4833
    %v4904 = vunpack.c.l.b16 %v4834
    %v4905 = vunpack.c.l.b16 %v4835
    %v4906 = vunpack.c.l.b16 %v4836
    %v4907 = vunpack.c.l.b16 %v4837
    %v4908 = vunpack.c.l.b16 %v4838
    %v4909 = vunpack.c.l.b16 %v4839
    %v4910 = vunpack.c.l.b16 %v4840
    %v4911 = vunpack.c.l.b16 %v4841
    %v4912 = vunpack.c.l.b16 %v4842
    %v4913 = vunpack.c.l.b16 %v4843
    %v4914 = vunpack.c.l.b16 %v4844
    %v4915 = vunpack.c.l.b16 %v4845
    %v4916 = vunpack.c.l.b16 %v4846
    %v4917 = vunpack.c.l.b16 %v4847
    %v4918 = vunpack.c.l.b16 %v4848
    %v4919 = vunpack.c.l.b16 %v4849
    %v4920 = vunpack.c.l.b16 %v4850
    %v4921 = vunpack.c.l.b16 %v4851
    %v4922 = vunpack.c.l.b16 %v4852
    %v4923 = vunpack.c.l.b16 %v4853
    %v4924 = vpack.c.b16 %v4893, %v4892
    %v4925 = vpack.c.b16 %v4895, %v4894
    %v4926 = vpack.c.b16 %v4897, %v4896
    %v4927 = vpack.c.b16 %v4899, %v4898
    %v4928 = vpack.c.b16 %v4901, %v4900
    %v4929 = vpack.c.b16 %v4903, %v4902
    %v4930 = vpack.c.b16 %v4905, %v4904
    %v4931 = vpack.c.b16 %v4907, %v4906
    %v4932 = vpack.c.b16 %v4909, %v4908
    %v4933 = vpack.c.b16 %v4911, %v4910
    %v4934 = vpack.c.b16 %v4913, %v4912
    %v4935 = vpack.c.b16 %v4915, %v4914
    %v4936 = vpack.c.b16 %v4917, %v4916
    %v4937 = vpack.c.b16 %v4919, %v4918
    %v4938 = vpack.c.b16 %v4921, %v4920
    %v4939 = vpack.c.b16 %v4923, %v4922
    %vm4955 = vcmask 1014784
    %v4957 = vsel %vm4955, %v4741, 0
    %v4960 = vsel %vm4955, %v4743, 0
    %v4963 = vsel %vm4955, %v4745, 0
    %v4966 = vsel %vm4955, %v4747, 0
    %v4969 = vsel %vm4955, %v4749, 0
    %v4972 = vsel %vm4955, %v4751, 0
    %v4975 = vsel %vm4955, %v4753, 0
    %v4978 = vsel %vm4955, %v4755, 0
    %v4981 = vsel %vm4955, %v4757, 0
    %v4984 = vsel %vm4955, %v4759, 0
    %v4987 = vsel %vm4955, %v4761, 0
    %v4990 = vsel %vm4955, %v4763, 0
    %v4993 = vsel %vm4955, %v4765, 0
    %v4996 = vsel %vm4955, %v4767, 0
    %v4999 = vsel %vm4955, %v4769, 0
    %v5002 = vsel %vm4955, %v4771, 0
    %v5005 = vsel %vm4955, %v4773, 0
    %v5008 = vsel %vm4955, %v4775, 0
    %v5011 = vsel %vm4955, %v4777, 0
    %v5014 = vsel %vm4955, %v4779, 0
    %v5017 = vsel %vm4955, %v4781, 0
    %v5020 = vsel %vm4955, %v4783, 0
    %v5023 = vsel %vm4955, %v4785, 0
    %v5026 = vsel %vm4955, %v4787, 0
    %v5029 = vsel %vm4955, %v4789, 0
    %v5032 = vsel %vm4955, %v4791, 0
    %v5035 = vsel %vm4955, %v4793, 0
    %v5038 = vsel %vm4955, %v4795, 0
    %v5041 = vsel %vm4955, %v4797, 0
    %v5044 = vsel %vm4955, %v4799, 0
    %v5047 = vsel %vm4955, %v4801, 0
    %v5050 = vsel %vm4955, %v4803, 0
    %v5053 = vsel %vm4955, %v4805, 0
    %v5056 = vsel %vm4955, %v4807, 0
    %v5059 = vsel %vm4955, %v4809, 0
    %v5062 = vsel %vm4955, %v4811, 0
    %v5065 = vsel %vm4955, %v4813, 0
    %v5068 = vsel %vm4955, %v4815, 0
    %v5071 = vsel %vm4955, %v4817, 0
    %v5074 = vsel %vm4955, %v4819, 0
    %v5077 = vsel %vm4955, %v4821, 0
    %vm5079 = vcmask 1045504
    %v5081 = vsel %vm5079, %v4939, 0
    %5083 = vmatprep.subr.bf16.mxu0 0
    %5084 = vmatpush1.bf16.msra.mxu0 %v4924
    %5085 = vmatprep.subr.bf16.mxu0 0
    %5086 = vmatpush1.bf16.msra.mxu0 %v4925
    %5087 = vmatprep.subr.bf16.mxu0 0
    %5088 = vmatpush1.bf16.msra.mxu0 %v4926
    %5089 = vmatprep.subr.bf16.mxu0 0
    %5090 = vmatpush1.bf16.msra.mxu0 %v4927
    %5091 = vmatprep.subr.bf16.mxu0 0
    %5092 = vmatpush1.bf16.msra.mxu0 %v4928
    %5093 = vmatprep.subr.bf16.mxu0 0
    %5094 = vmatpush1.bf16.msra.mxu0 %v4929
    %5095 = vmatprep.subr.bf16.mxu0 0
    %5096 = vmatpush1.bf16.msra.mxu0 %v4930
    %5097 = vmatprep.subr.bf16.mxu0 0
    %5098 = vmatpush1.bf16.msra.mxu0 %v4931
    %5099 = vmatprep.subr.bf16.mxu0 0
    %5100 = vmatpush1.bf16.msra.mxu0 %v4932
    %5101 = vmatprep.subr.bf16.mxu0 0
    %5102 = vmatpush1.bf16.msra.mxu0 %v4933
    %5103 = vmatprep.subr.bf16.mxu0 0
    %5104 = vmatpush1.bf16.msra.mxu0 %v4934
    %5105 = vmatprep.subr.bf16.mxu0 0
    %5106 = vmatpush1.bf16.msra.mxu0 %v4935
    %5107 = vmatprep.subr.bf16.mxu0 0
    %5108 = vmatpush1.bf16.msra.mxu0 %v4936
    %5109 = vmatprep.subr.bf16.mxu0 0
    %5110 = vmatpush1.bf16.msra.mxu0 %v4937
    %5111 = vmatprep.subr.bf16.mxu0 0
    %5112 = vmatpush1.bf16.msra.mxu0 %v4938
    %5113 = vmatprep.subr.bf16.mxu0 0
    %5114 = vmatpush1.bf16.msra.mxu0 %v5081
    %5115 = vmatprep.mubr.bf16.mxu0 %v4957
    %5116 = vmatmul.mubr.bf16.gmra.mrb[0].mxu0 %v4740
    %v5117 = vpop.f32.mrb[0].mxu0
    %v5118 = vadd.f32 %v4858, %v5117
    %v5119 = vpop.f32.mrb[0].mxu0
    %v5120 = vpop.f32.mrb[0].mxu0
    %v5121 = vadd.f32 %v4858, %v5120
    %v5122 = vpop.f32.mrb[0].mxu0
    %5123 = vmatprep.mubr.bf16.mxu0 %v4960
    %5124 = vmatmul.mubr.bf16.gmra.mrb[0].mxu0 %v4742
    %v5125 = vpop.f32.mrb[0].mxu0
    %v5126 = vadd.f32 %v4858, %v5125
    %v5127 = vpop.f32.mrb[0].mxu0
    %v5128 = vpop.f32.mrb[0].mxu0
    %v5129 = vadd.f32 %v4858, %v5128
    %v5130 = vpop.f32.mrb[0].mxu0
    %5131 = vmatprep.mubr.bf16.mxu0 %v4963
    %5132 = vmatmul.mubr.bf16.gmra.mrb[0].mxu0 %v4744
    %v5133 = vpop.f32.mrb[0].mxu0
    %v5134 = vadd.f32 %v4858, %v5133
    %v5135 = vpop.f32.mrb[0].mxu0
    %v5136 = vpop.f32.mrb[0].mxu0
    %v5137 = vadd.f32 %v4858, %v5136
    %v5138 = vpop.f32.mrb[0].mxu0
    %5139 = vmatprep.mubr.bf16.mxu0 %v4966
    %5140 = vmatmul.mubr.bf16.gmra.mrb[0].mxu0 %v4746
    %v5141 = vpop.f32.mrb[0].mxu0
    %v5142 = vadd.f32 %v4858, %v5141
    %v5143 = vpop.f32.mrb[0].mxu0
    %v5144 = vpop.f32.mrb[0].mxu0
    %v5145 = vadd.f32 %v4858, %v5144
    %v5146 = vpop.f32.mrb[0].mxu0
    %5147 = vmatprep.mubr.bf16.mxu0 %v4969
    %5148 = vmatmul.mubr.bf16.gmra.mrb[0].mxu0 %v4748
    %v5149 = vpop.f32.mrb[0].mxu0
    %v5150 = vadd.f32 %v4858, %v5149
    %v5151 = vpop.f32.mrb[0].mxu0
    %v5152 = vpop.f32.mrb[0].mxu0
    %v5153 = vadd.f32 %v4858, %v5152
    %v5154 = vpop.f32.mrb[0].mxu0
    %5155 = vmatprep.mubr.bf16.mxu0 %v4972
    %5156 = vmatmul.mubr.bf16.gmra.mrb[0].mxu0 %v4750
    %v5157 = vpop.f32.mrb[0].mxu0
    %v5158 = vadd.f32 %v4858, %v5157
    %v5159 = vpop.f32.mrb[0].mxu0
    %v5160 = vpop.f32.mrb[0].mxu0
    %v5161 = vadd.f32 %v4858, %v5160
    %v5162 = vpop.f32.mrb[0].mxu0
    %5163 = vmatprep.mubr.bf16.mxu0 %v4975
    %5164 = vmatmul.mubr.bf16.gmra.mrb[0].mxu0 %v4752
    %v5165 = vpop.f32.mrb[0].mxu0
    %v5166 = vadd.f32 %v4858, %v5165
    %v5167 = vpop.f32.mrb[0].mxu0
    %v5168 = vpop.f32.mrb[0].mxu0
    %v5169 = vadd.f32 %v4858, %v5168
    %v5170 = vpop.f32.mrb[0].mxu0
    %5171 = vmatprep.mubr.bf16.mxu0 %v4978
    %5172 = vmatmul.mubr.bf16.gmra.mrb[0].mxu0 %v4754
    %v5173 = vpop.f32.mrb[0].mxu0
    %v5174 = vadd.f32 %v4858, %v5173
    %v5175 = vpop.f32.mrb[0].mxu0
    %v5176 = vpop.f32.mrb[0].mxu0
    %v5177 = vadd.f32 %v4858, %v5176
    %v5178 = vpop.f32.mrb[0].mxu0
    %5179 = vmatprep.mubr.bf16.mxu0 %v4981
    %5180 = vmatmul.mubr.bf16.gmra.mrb[0].mxu0 %v4756
    %v5181 = vpop.f32.mrb[0].mxu0
    %v5182 = vadd.f32 %v4858, %v5181
    %v5183 = vpop.f32.mrb[0].mxu0
    %v5184 = vpop.f32.mrb[0].mxu0
    %v5185 = vadd.f32 %v4858, %v5184
    %v5186 = vpop.f32.mrb[0].mxu0
    %5187 = vmatprep.mubr.bf16.mxu0 %v4984
    %5188 = vmatmul.mubr.bf16.gmra.mrb[0].mxu0 %v4758
    %v5189 = vpop.f32.mrb[0].mxu0
    %v5190 = vadd.f32 %v4858, %v5189
    %v5191 = vpop.f32.mrb[0].mxu0
    %v5192 = vpop.f32.mrb[0].mxu0
    %v5193 = vadd.f32 %v4858, %v5192
    %v5194 = vpop.f32.mrb[0].mxu0
    %5195 = vmatprep.mubr.bf16.mxu0 %v4987
    %5196 = vmatmul.mubr.bf16.gmra.mrb[0].mxu0 %v4760
    %v5197 = vpop.f32.mrb[0].mxu0
    %v5198 = vadd.f32 %v4858, %v5197
    %v5199 = vpop.f32.mrb[0].mxu0
    %v5200 = vpop.f32.mrb[0].mxu0
    %v5201 = vadd.f32 %v4858, %v5200
    %v5202 = vpop.f32.mrb[0].mxu0
    %5203 = vmatprep.mubr.bf16.mxu0 %v4990
    %5204 = vmatmul.mubr.bf16.gmra.mrb[0].mxu0 %v4762
    %v5205 = vpop.f32.mrb[0].mxu0
    %v5206 = vadd.f32 %v4858, %v5205
    %v5207 = vpop.f32.mrb[0].mxu0
    %v5208 = vpop.f32.mrb[0].mxu0
    %v5209 = vadd.f32 %v4858, %v5208
    %v5210 = vpop.f32.mrb[0].mxu0
    %5211 = vmatprep.mubr.bf16.mxu0 %v4993
    %5212 = vmatmul.mubr.bf16.gmra.mrb[0].mxu0 %v4764
    %v5213 = vpop.f32.mrb[0].mxu0
    %v5214 = vadd.f32 %v4858, %v5213
    %v5215 = vpop.f32.mrb[0].mxu0
    %v5216 = vpop.f32.mrb[0].mxu0
    %v5217 = vadd.f32 %v4858, %v5216
    %v5218 = vpop.f32.mrb[0].mxu0
    %5219 = vmatprep.mubr.bf16.mxu0 %v4996
    %5220 = vmatmul.mubr.bf16.gmra.mrb[0].mxu0 %v4766
    %v5221 = vpop.f32.mrb[0].mxu0
    %v5222 = vadd.f32 %v4858, %v5221
    %v5223 = vpop.f32.mrb[0].mxu0
    %v5224 = vpop.f32.mrb[0].mxu0
    %v5225 = vadd.f32 %v4858, %v5224
    %v5226 = vpop.f32.mrb[0].mxu0
    %5227 = vmatprep.mubr.bf16.mxu0 %v4999
    %5228 = vmatmul.mubr.bf16.gmra.mrb[0].mxu0 %v4768
    %v5229 = vpop.f32.mrb[0].mxu0
    %v5230 = vadd.f32 %v4858, %v5229
    %v5231 = vpop.f32.mrb[0].mxu0
    %v5232 = vpop.f32.mrb[0].mxu0
    %v5233 = vadd.f32 %v4858, %v5232
    %v5234 = vpop.f32.mrb[0].mxu0
    %5235 = vmatprep.mubr.bf16.mxu0 %v5002
    %5236 = vmatmul.mubr.bf16.gmra.mrb[0].mxu0 %v4770
    %v5237 = vpop.f32.mrb[0].mxu0
    %v5238 = vadd.f32 %v4858, %v5237
    %v5239 = vpop.f32.mrb[0].mxu0
    %v5240 = vpop.f32.mrb[0].mxu0
    %v5241 = vadd.f32 %v4858, %v5240
    %v5242 = vpop.f32.mrb[0].mxu0
    %5243 = vmatprep.mubr.bf16.mxu0 %v5005
    %5244 = vmatmul.mubr.bf16.gmra.mrb[0].mxu0 %v4772
    %v5245 = vpop.f32.mrb[0].mxu0
    %v5246 = vadd.f32 %v4858, %v5245
    %v5247 = vpop.f32.mrb[0].mxu0
    %v5248 = vpop.f32.mrb[0].mxu0
    %v5249 = vadd.f32 %v4858, %v5248
    %v5250 = vpop.f32.mrb[0].mxu0
    %5251 = vmatprep.mubr.bf16.mxu0 %v5008
    %5252 = vmatmul.mubr.bf16.gmra.mrb[0].mxu0 %v4774
    %v5253 = vpop.f32.mrb[0].mxu0
    %v5254 = vadd.f32 %v4858, %v5253
    %v5255 = vpop.f32.mrb[0].mxu0
    %v5256 = vpop.f32.mrb[0].mxu0
    %v5257 = vadd.f32 %v4858, %v5256
    %v5258 = vpop.f32.mrb[0].mxu0
    %5259 = vmatprep.mubr.bf16.mxu0 %v5011
    %5260 = vmatmul.mubr.bf16.gmra.mrb[0].mxu0 %v4776
    %v5261 = vpop.f32.mrb[0].mxu0
    %v5262 = vadd.f32 %v4858, %v5261
    %v5263 = vpop.f32.mrb[0].mxu0
    %v5264 = vpop.f32.mrb[0].mxu0
    %v5265 = vadd.f32 %v4858, %v5264
    %v5266 = vpop.f32.mrb[0].mxu0
    %5267 = vmatprep.mubr.bf16.mxu0 %v5014
    %5268 = vmatmul.mubr.bf16.gmra.mrb[0].mxu0 %v4778
    %v5269 = vpop.f32.mrb[0].mxu0
    %v5270 = vadd.f32 %v4858, %v5269
    %v5271 = vpop.f32.mrb[0].mxu0
    %v5272 = vpop.f32.mrb[0].mxu0
    %v5273 = vadd.f32 %v4858, %v5272
    %v5274 = vpop.f32.mrb[0].mxu0
    %5275 = vmatprep.mubr.bf16.mxu0 %v5017
    %5276 = vmatmul.mubr.bf16.gmra.mrb[0].mxu0 %v4780
    %v5277 = vpop.f32.mrb[0].mxu0
    %v5278 = vadd.f32 %v4858, %v5277
    %v5279 = vpop.f32.mrb[0].mxu0
    %v5280 = vpop.f32.mrb[0].mxu0
    %v5281 = vadd.f32 %v4858, %v5280
    %v5282 = vpop.f32.mrb[0].mxu0
    %5283 = vmatprep.mubr.bf16.mxu0 %v5020
    %5284 = vmatmul.mubr.bf16.gmra.mrb[0].mxu0 %v4782
    %v5285 = vpop.f32.mrb[0].mxu0
    %v5286 = vadd.f32 %v4858, %v5285
    %v5287 = vpop.f32.mrb[0].mxu0
    %v5288 = vpop.f32.mrb[0].mxu0
    %v5289 = vadd.f32 %v4858, %v5288
    %v5290 = vpop.f32.mrb[0].mxu0
    %5291 = vmatprep.mubr.bf16.mxu0 %v5023
    %5292 = vmatmul.mubr.bf16.gmra.mrb[0].mxu0 %v4784
    %v5293 = vpop.f32.mrb[0].mxu0
    %v5294 = vadd.f32 %v4858, %v5293
    %v5295 = vpop.f32.mrb[0].mxu0
    %v5296 = vpop.f32.mrb[0].mxu0
    %v5297 = vadd.f32 %v4858, %v5296
    %v5298 = vpop.f32.mrb[0].mxu0
    %5299 = vmatprep.mubr.bf16.mxu0 %v5026
    %5300 = vmatmul.mubr.bf16.gmra.mrb[0].mxu0 %v4786
    %v5301 = vpop.f32.mrb[0].mxu0
    %v5302 = vadd.f32 %v4858, %v5301
    %v5303 = vpop.f32.mrb[0].mxu0
    %v5304 = vpop.f32.mrb[0].mxu0
    %v5305 = vadd.f32 %v4858, %v5304
    %v5306 = vpop.f32.mrb[0].mxu0
    %5307 = vmatprep.mubr.bf16.mxu0 %v5029
    %5308 = vmatmul.mubr.bf16.gmra.mrb[0].mxu0 %v4788
    %v5309 = vpop.f32.mrb[0].mxu0
    %v5310 = vadd.f32 %v4858, %v5309
    %v5311 = vpop.f32.mrb[0].mxu0
    %v5312 = vpop.f32.mrb[0].mxu0
    %v5313 = vadd.f32 %v4858, %v5312
    %v5314 = vpop.f32.mrb[0].mxu0
    %5315 = vmatprep.mubr.bf16.mxu0 %v5032
    %5316 = vmatmul.mubr.bf16.gmra.mrb[0].mxu0 %v4790
    %v5317 = vpop.f32.mrb[0].mxu0
    %v5318 = vadd.f32 %v4858, %v5317
    %v5319 = vpop.f32.mrb[0].mxu0
    %v5320 = vpop.f32.mrb[0].mxu0
    %v5321 = vadd.f32 %v4858, %v5320
    %v5322 = vpop.f32.mrb[0].mxu0
    %5323 = vmatprep.mubr.bf16.mxu0 %v5035
    %5324 = vmatmul.mubr.bf16.gmra.mrb[0].mxu0 %v4792
    %v5325 = vpop.f32.mrb[0].mxu0
    %v5326 = vadd.f32 %v4858, %v5325
    %v5327 = vpop.f32.mrb[0].mxu0
    %v5328 = vpop.f32.mrb[0].mxu0
    %v5329 = vadd.f32 %v4858, %v5328
    %v5330 = vpop.f32.mrb[0].mxu0
    %5331 = vmatprep.mubr.bf16.mxu0 %v5038
    %5332 = vmatmul.mubr.bf16.gmra.mrb[0].mxu0 %v4794
    %v5333 = vpop.f32.mrb[0].mxu0
    %v5334 = vadd.f32 %v4858, %v5333
    %v5335 = vpop.f32.mrb[0].mxu0
    %v5336 = vpop.f32.mrb[0].mxu0
    %v5337 = vadd.f32 %v4858, %v5336
    %v5338 = vpop.f32.mrb[0].mxu0
    %5339 = vmatprep.mubr.bf16.mxu0 %v5041
    %5340 = vmatmul.mubr.bf16.gmra.mrb[0].mxu0 %v4796
    %v5341 = vpop.f32.mrb[0].mxu0
    %v5342 = vadd.f32 %v4858, %v5341
    %v5343 = vpop.f32.mrb[0].mxu0
    %v5344 = vpop.f32.mrb[0].mxu0
    %v5345 = vadd.f32 %v4858, %v5344
    %v5346 = vpop.f32.mrb[0].mxu0
    %5347 = vmatprep.mubr.bf16.mxu0 %v5044
    %5348 = vmatmul.mubr.bf16.gmra.mrb[0].mxu0 %v4798
    %v5349 = vpop.f32.mrb[0].mxu0
    %v5350 = vadd.f32 %v4858, %v5349
    %v5351 = vpop.f32.mrb[0].mxu0
    %v5352 = vpop.f32.mrb[0].mxu0
    %v5353 = vadd.f32 %v4858, %v5352
    %v5354 = vpop.f32.mrb[0].mxu0
    %5355 = vmatprep.mubr.bf16.mxu0 %v5047
    %5356 = vmatmul.mubr.bf16.gmra.mrb[0].mxu0 %v4800
    %v5357 = vpop.f32.mrb[0].mxu0
    %v5358 = vadd.f32 %v4858, %v5357
    %v5359 = vpop.f32.mrb[0].mxu0
    %v5360 = vpop.f32.mrb[0].mxu0
    %v5361 = vadd.f32 %v4858, %v5360
    %v5362 = vpop.f32.mrb[0].mxu0
    %5363 = vmatprep.mubr.bf16.mxu0 %v5050
    %5364 = vmatmul.mubr.bf16.gmra.mrb[0].mxu0 %v4802
    %v5365 = vpop.f32.mrb[0].mxu0
    %v5366 = vadd.f32 %v4858, %v5365
    %v5367 = vpop.f32.mrb[0].mxu0
    %v5368 = vpop.f32.mrb[0].mxu0
    %v5369 = vadd.f32 %v4858, %v5368
    %v5370 = vpop.f32.mrb[0].mxu0
    %5371 = vmatprep.mubr.bf16.mxu0 %v5053
    %5372 = vmatmul.mubr.bf16.gmra.mrb[0].mxu0 %v4804
    %v5373 = vpop.f32.mrb[0].mxu0
    %v5374 = vadd.f32 %v4858, %v5373
    %v5375 = vpop.f32.mrb[0].mxu0
    %v5376 = vpop.f32.mrb[0].mxu0
    %v5377 = vadd.f32 %v4858, %v5376
    %v5378 = vpop.f32.mrb[0].mxu0
    %5379 = vmatprep.mubr.bf16.mxu0 %v5056
    %5380 = vmatmul.mubr.bf16.gmra.mrb[0].mxu0 %v4806
    %v5381 = vpop.f32.mrb[0].mxu0
    %v5382 = vadd.f32 %v4858, %v5381
    %v5383 = vpop.f32.mrb[0].mxu0
    %v5384 = vpop.f32.mrb[0].mxu0
    %v5385 = vadd.f32 %v4858, %v5384
    %v5386 = vpop.f32.mrb[0].mxu0
    %5387 = vmatprep.mubr.bf16.mxu0 %v5059
    %5388 = vmatmul.mubr.bf16.gmra.mrb[0].mxu0 %v4808
    %v5389 = vpop.f32.mrb[0].mxu0
    %v5390 = vadd.f32 %v4858, %v5389
    %v5391 = vpop.f32.mrb[0].mxu0
    %v5392 = vpop.f32.mrb[0].mxu0
    %v5393 = vadd.f32 %v4858, %v5392
    %v5394 = vpop.f32.mrb[0].mxu0
    %5395 = vmatprep.mubr.bf16.mxu0 %v5062
    %5396 = vmatmul.mubr.bf16.gmra.mrb[0].mxu0 %v4810
    %v5397 = vpop.f32.mrb[0].mxu0
    %v5398 = vadd.f32 %v4858, %v5397
    %v5399 = vpop.f32.mrb[0].mxu0
    %v5400 = vpop.f32.mrb[0].mxu0
    %v5401 = vadd.f32 %v4858, %v5400
    %v5402 = vpop.f32.mrb[0].mxu0
    %5403 = vmatprep.mubr.bf16.mxu0 %v5065
    %5404 = vmatmul.mubr.bf16.gmra.mrb[0].mxu0 %v4812
    %v5405 = vpop.f32.mrb[0].mxu0
    %v5406 = vadd.f32 %v4858, %v5405
    %v5407 = vpop.f32.mrb[0].mxu0
    %v5408 = vpop.f32.mrb[0].mxu0
    %v5409 = vadd.f32 %v4858, %v5408
    %v5410 = vpop.f32.mrb[0].mxu0
    %5411 = vmatprep.mubr.bf16.mxu0 %v5068
    %5412 = vmatmul.mubr.bf16.gmra.mrb[0].mxu0 %v4814
    %v5413 = vpop.f32.mrb[0].mxu0
    %v5414 = vadd.f32 %v4858, %v5413
    %v5415 = vpop.f32.mrb[0].mxu0
    %v5416 = vpop.f32.mrb[0].mxu0
    %v5417 = vadd.f32 %v4858, %v5416
    %v5418 = vpop.f32.mrb[0].mxu0
    %5419 = vmatprep.mubr.bf16.mxu0 %v5071
    %5420 = vmatmul.mubr.bf16.gmra.mrb[0].mxu0 %v4816
    %v5421 = vpop.f32.mrb[0].mxu0
    %v5422 = vadd.f32 %v4858, %v5421
    %v5423 = vpop.f32.mrb[0].mxu0
    %v5424 = vpop.f32.mrb[0].mxu0
    %v5425 = vadd.f32 %v4858, %v5424
    %v5426 = vpop.f32.mrb[0].mxu0
    %5427 = vmatprep.mubr.bf16.mxu0 %v5074
    %5428 = vmatmul.mubr.bf16.gmra.mrb[0].mxu0 %v4818
    %v5429 = vpop.f32.mrb[0].mxu0
    %v5430 = vadd.f32 %v4858, %v5429
    %v5431 = vpop.f32.mrb[0].mxu0
    %v5432 = vpop.f32.mrb[0].mxu0
    %v5433 = vadd.f32 %v4858, %v5432
    %v5434 = vpop.f32.mrb[0].mxu0
    %5435 = vmatprep.mubr.bf16.mxu0 %v5077
    %5436 = vmatmul.mubr.bf16.gmra.mrb[0].mxu0 %v4820
    %v5437 = vpop.f32.mrb[0].mxu0
    %v5438 = vadd.f32 %v4858, %v5437
    %v5439 = vpop.f32.mrb[0].mxu0
    %v5440 = vpop.f32.mrb[0].mxu0
    %v5441 = vpop.f32.mrb[0].mxu0
    %5442 = vdwg.mxu0
    %vm5443 = vcmp.gt.f32.partialorder %v5118, 0.0
    %vm5444 = vcmp.gt.f32.partialorder %v5121, 0.0
    %vm5445 = vcmp.gt.f32.partialorder %v5126, 0.0
    %vm5446 = vcmp.gt.f32.partialorder %v5129, 0.0
    %vm5447 = vcmp.gt.f32.partialorder %v5134, 0.0
    %vm5448 = vcmp.gt.f32.partialorder %v5137, 0.0
    %vm5449 = vcmp.gt.f32.partialorder %v5142, 0.0
    %vm5450 = vcmp.gt.f32.partialorder %v5145, 0.0
    %vm5451 = vcmp.gt.f32.partialorder %v5150, 0.0
    %vm5452 = vcmp.gt.f32.partialorder %v5153, 0.0
    %vm5453 = vcmp.gt.f32.partialorder %v5158, 0.0
    %vm5454 = vcmp.gt.f32.partialorder %v5161, 0.0
    %vm5455 = vcmp.gt.f32.partialorder %v5166, 0.0
    %vm5456 = vcmp.gt.f32.partialorder %v5169, 0.0
    %vm5457 = vcmp.gt.f32.partialorder %v5174, 0.0
    %vm5458 = vcmp.gt.f32.partialorder %v5177, 0.0
    %vm5459 = vcmp.gt.f32.partialorder %v5182, 0.0
    %vm5460 = vcmp.gt.f32.partialorder %v5185, 0.0
    %vm5461 = vcmp.gt.f32.partialorder %v5190, 0.0
    %vm5462 = vcmp.gt.f32.partialorder %v5193, 0.0
    %vm5463 = vcmp.gt.f32.partialorder %v5198, 0.0
    %vm5464 = vcmp.gt.f32.partialorder %v5201, 0.0
    %vm5465 = vcmp.gt.f32.partialorder %v5206, 0.0
    %vm5466 = vcmp.gt.f32.partialorder %v5209, 0.0
    %vm5467 = vcmp.gt.f32.partialorder %v5214, 0.0
    %vm5468 = vcmp.gt.f32.partialorder %v5217, 0.0
    %vm5469 = vcmp.gt.f32.partialorder %v5222, 0.0
    %vm5470 = vcmp.gt.f32.partialorder %v5225, 0.0
    %vm5471 = vcmp.gt.f32.partialorder %v5230, 0.0
    %vm5472 = vcmp.gt.f32.partialorder %v5233, 0.0
    %vm5473 = vcmp.gt.f32.partialorder %v5238, 0.0
    %vm5474 = vcmp.gt.f32.partialorder %v5241, 0.0
    %vm5475 = vcmp.gt.f32.partialorder %v5246, 0.0
    %vm5476 = vcmp.gt.f32.partialorder %v5249, 0.0
    %vm5477 = vcmp.gt.f32.partialorder %v5254, 0.0
    %vm5478 = vcmp.gt.f32.partialorder %v5257, 0.0
    %vm5479 = vcmp.gt.f32.partialorder %v5262, 0.0
    %vm5480 = vcmp.gt.f32.partialorder %v5265, 0.0
    %vm5481 = vcmp.gt.f32.partialorder %v5270, 0.0
    %vm5482 = vcmp.gt.f32.partialorder %v5273, 0.0
    %vm5483 = vcmp.gt.f32.partialorder %v5278, 0.0
    %vm5484 = vcmp.gt.f32.partialorder %v5281, 0.0
    %vm5485 = vcmp.gt.f32.partialorder %v5286, 0.0
    %vm5486 = vcmp.gt.f32.partialorder %v5289, 0.0
    %vm5487 = vcmp.gt.f32.partialorder %v5294, 0.0
    %vm5488 = vcmp.gt.f32.partialorder %v5297, 0.0
    %vm5489 = vcmp.gt.f32.partialorder %v5302, 0.0
    %vm5490 = vcmp.gt.f32.partialorder %v5305, 0.0
    %vm5491 = vcmp.gt.f32.partialorder %v5310, 0.0
    %vm5492 = vcmp.gt.f32.partialorder %v5313, 0.0
    %vm5493 = vcmp.gt.f32.partialorder %v5318, 0.0
    %vm5494 = vcmp.gt.f32.partialorder %v5321, 0.0
    %vm5495 = vcmp.gt.f32.partialorder %v5326, 0.0
    %vm5496 = vcmp.gt.f32.partialorder %v5329, 0.0
    %vm5497 = vcmp.gt.f32.partialorder %v5334, 0.0
    %vm5498 = vcmp.gt.f32.partialorder %v5337, 0.0
    %vm5499 = vcmp.gt.f32.partialorder %v5342, 0.0
    %vm5500 = vcmp.gt.f32.partialorder %v5345, 0.0
    %vm5501 = vcmp.gt.f32.partialorder %v5350, 0.0
    %vm5502 = vcmp.gt.f32.partialorder %v5353, 0.0
    %vm5503 = vcmp.gt.f32.partialorder %v5358, 0.0
    %vm5504 = vcmp.gt.f32.partialorder %v5361, 0.0
    %vm5505 = vcmp.gt.f32.partialorder %v5366, 0.0
    %vm5506 = vcmp.gt.f32.partialorder %v5369, 0.0
    %vm5507 = vcmp.gt.f32.partialorder %v5374, 0.0
    %vm5508 = vcmp.gt.f32.partialorder %v5377, 0.0
    %vm5509 = vcmp.gt.f32.partialorder %v5382, 0.0
    %vm5510 = vcmp.gt.f32.partialorder %v5385, 0.0
    %vm5511 = vcmp.gt.f32.partialorder %v5390, 0.0
    %vm5512 = vcmp.gt.f32.partialorder %v5393, 0.0
    %vm5513 = vcmp.gt.f32.partialorder %v5398, 0.0
    %vm5514 = vcmp.gt.f32.partialorder %v5401, 0.0
    %vm5515 = vcmp.gt.f32.partialorder %v5406, 0.0
    %vm5516 = vcmp.gt.f32.partialorder %v5409, 0.0
    %vm5517 = vcmp.gt.f32.partialorder %v5414, 0.0
    %vm5518 = vcmp.gt.f32.partialorder %v5417, 0.0
    %vm5519 = vcmp.gt.f32.partialorder %v5422, 0.0
    %vm5520 = vcmp.gt.f32.partialorder %v5425, 0.0
    %vm5521 = vcmp.gt.f32.partialorder %v5430, 0.0
    %vm5522 = vcmp.gt.f32.partialorder %v5433, 0.0
    %vm5523 = vcmp.gt.f32.partialorder %v5438, 0.0
    %v5525 = vlaneseq
    %v5526 = vshrl.u32 %v5525, 7
    %v5527 = vsub.s32 0, %v5526
    %v5528 = vrot.slane %v2017, %v5527
    %5529 = vset.pattern.permute.xlu0 0
    %5530 = vperm.xlu0 %5529, %v5528
    %v5531 = vpop.permute.xlu0 %5530
    %v5533 = vmul.f32 %v5118, %v5531
    %v5534 = vmul.f32 %v5121, %v5531
    %v5535 = vmul.f32 %v5126, %v5531
    %v5536 = vmul.f32 %v5129, %v5531
    %v5537 = vmul.f32 %v5134, %v5531
    %v5538 = vmul.f32 %v5137, %v5531
    %v5539 = vmul.f32 %v5142, %v5531
    %v5540 = vmul.f32 %v5145, %v5531
    %v5541 = vmul.f32 %v5150, %v5531
    %v5542 = vmul.f32 %v5153, %v5531
    %v5543 = vmul.f32 %v5158, %v5531
    %v5544 = vmul.f32 %v5161, %v5531
    %v5545 = vmul.f32 %v5166, %v5531
    %v5546 = vmul.f32 %v5169, %v5531
    %v5547 = vmul.f32 %v5174, %v5531
    %v5548 = vmul.f32 %v5177, %v5531
    %v5549 = vmul.f32 %v5182, %v5531
    %v5550 = vmul.f32 %v5185, %v5531
    %v5551 = vmul.f32 %v5190, %v5531
    %v5552 = vmul.f32 %v5193, %v5531
    %v5553 = vmul.f32 %v5198, %v5531
    %v5554 = vmul.f32 %v5201, %v5531
    %v5555 = vmul.f32 %v5206, %v5531
    %v5556 = vmul.f32 %v5209, %v5531
    %v5557 = vmul.f32 %v5214, %v5531
    %v5558 = vmul.f32 %v5217, %v5531
    %v5559 = vmul.f32 %v5222, %v5531
    %v5560 = vmul.f32 %v5225, %v5531
    %v5561 = vmul.f32 %v5230, %v5531
    %v5562 = vmul.f32 %v5233, %v5531
    %v5563 = vmul.f32 %v5238, %v5531
    %v5564 = vmul.f32 %v5241, %v5531
    %v5565 = vmul.f32 %v5246, %v5531
    %v5566 = vmul.f32 %v5249, %v5531
    %v5567 = vmul.f32 %v5254, %v5531
    %v5568 = vmul.f32 %v5257, %v5531
    %v5569 = vmul.f32 %v5262, %v5531
    %v5570 = vmul.f32 %v5265, %v5531
    %v5571 = vmul.f32 %v5270, %v5531
    %v5572 = vmul.f32 %v5273, %v5531
    %v5573 = vmul.f32 %v5278, %v5531
    %v5574 = vmul.f32 %v5281, %v5531
    %v5575 = vmul.f32 %v5286, %v5531
    %v5576 = vmul.f32 %v5289, %v5531
    %v5577 = vmul.f32 %v5294, %v5531
    %v5578 = vmul.f32 %v5297, %v5531
    %v5579 = vmul.f32 %v5302, %v5531
    %v5580 = vmul.f32 %v5305, %v5531
    %v5581 = vmul.f32 %v5310, %v5531
    %v5582 = vmul.f32 %v5313, %v5531
    %v5583 = vmul.f32 %v5318, %v5531
    %v5584 = vmul.f32 %v5321, %v5531
    %v5585 = vmul.f32 %v5326, %v5531
    %v5586 = vmul.f32 %v5329, %v5531
    %v5587 = vmul.f32 %v5334, %v5531
    %v5588 = vmul.f32 %v5337, %v5531
    %v5589 = vmul.f32 %v5342, %v5531
    %v5590 = vmul.f32 %v5345, %v5531
    %v5591 = vmul.f32 %v5350, %v5531
    %v5592 = vmul.f32 %v5353, %v5531
    %v5593 = vmul.f32 %v5358, %v5531
    %v5594 = vmul.f32 %v5361, %v5531
    %v5595 = vmul.f32 %v5366, %v5531
    %v5596 = vmul.f32 %v5369, %v5531
    %v5597 = vmul.f32 %v5374, %v5531
    %v5598 = vmul.f32 %v5377, %v5531
    %v5599 = vmul.f32 %v5382, %v5531
    %v5600 = vmul.f32 %v5385, %v5531
    %v5601 = vmul.f32 %v5390, %v5531
    %v5602 = vmul.f32 %v5393, %v5531
    %v5603 = vmul.f32 %v5398, %v5531
    %v5604 = vmul.f32 %v5401, %v5531
    %v5605 = vmul.f32 %v5406, %v5531
    %v5606 = vmul.f32 %v5409, %v5531
    %v5607 = vmul.f32 %v5414, %v5531
    %v5608 = vmul.f32 %v5417, %v5531
    %v5609 = vmul.f32 %v5422, %v5531
    %v5610 = vmul.f32 %v5425, %v5531
    %v5611 = vmul.f32 %v5430, %v5531
    %v5612 = vmul.f32 %v5433, %v5531
    %v5613 = vmul.f32 %v5438, %v5531
    %v5614 = vsel %vm5443, %v5118, %v5533
    %v5615 = vsel %vm5444, %v5121, %v5534
    %v5616 = vsel %vm5445, %v5126, %v5535
    %v5617 = vsel %vm5446, %v5129, %v5536
    %v5618 = vsel %vm5447, %v5134, %v5537
    %v5619 = vsel %vm5448, %v5137, %v5538
    %v5620 = vsel %vm5449, %v5142, %v5539
    %v5621 = vsel %vm5450, %v5145, %v5540
    %v5622 = vsel %vm5451, %v5150, %v5541
    %v5623 = vsel %vm5452, %v5153, %v5542
    %v5624 = vsel %vm5453, %v5158, %v5543
    %v5625 = vsel %vm5454, %v5161, %v5544
    %v5626 = vsel %vm5455, %v5166, %v5545
    %v5627 = vsel %vm5456, %v5169, %v5546
    %v5628 = vsel %vm5457, %v5174, %v5547
    %v5629 = vsel %vm5458, %v5177, %v5548
    %v5630 = vsel %vm5459, %v5182, %v5549
    %v5631 = vsel %vm5460, %v5185, %v5550
    %v5632 = vsel %vm5461, %v5190, %v5551
    %v5633 = vsel %vm5462, %v5193, %v5552
    %v5634 = vsel %vm5463, %v5198, %v5553
    %v5635 = vsel %vm5464, %v5201, %v5554
    %v5636 = vsel %vm5465, %v5206, %v5555
    %v5637 = vsel %vm5466, %v5209, %v5556
    %v5638 = vsel %vm5467, %v5214, %v5557
    %v5639 = vsel %vm5468, %v5217, %v5558
    %v5640 = vsel %vm5469, %v5222, %v5559
    %v5641 = vsel %vm5470, %v5225, %v5560
    %v5642 = vsel %vm5471, %v5230, %v5561
    %v5643 = vsel %vm5472, %v5233, %v5562
    %v5644 = vsel %vm5473, %v5238, %v5563
    %v5645 = vsel %vm5474, %v5241, %v5564
    %v5646 = vsel %vm5475, %v5246, %v5565
    %v5647 = vsel %vm5476, %v5249, %v5566
    %v5648 = vsel %vm5477, %v5254, %v5567
    %v5649 = vsel %vm5478, %v5257, %v5568
    %v5650 = vsel %vm5479, %v5262, %v5569
    %v5651 = vsel %vm5480, %v5265, %v5570
    %v5652 = vsel %vm5481, %v5270, %v5571
    %v5653 = vsel %vm5482, %v5273, %v5572
    %v5654 = vsel %vm5483, %v5278, %v5573
    %v5655 = vsel %vm5484, %v5281, %v5574
    %v5656 = vsel %vm5485, %v5286, %v5575
    %v5657 = vsel %vm5486, %v5289, %v5576
    %v5658 = vsel %vm5487, %v5294, %v5577
    %v5659 = vsel %vm5488, %v5297, %v5578
    %v5660 = vsel %vm5489, %v5302, %v5579
    %v5661 = vsel %vm5490, %v5305, %v5580
    %v5662 = vsel %vm5491, %v5310, %v5581
    %v5663 = vsel %vm5492, %v5313, %v5582
    %v5664 = vsel %vm5493, %v5318, %v5583
    %v5665 = vsel %vm5494, %v5321, %v5584
    %v5666 = vsel %vm5495, %v5326, %v5585
    %v5667 = vsel %vm5496, %v5329, %v5586
    %v5668 = vsel %vm5497, %v5334, %v5587
    %v5669 = vsel %vm5498, %v5337, %v5588
    %v5670 = vsel %vm5499, %v5342, %v5589
    %v5671 = vsel %vm5500, %v5345, %v5590
    %v5672 = vsel %vm5501, %v5350, %v5591
    %v5673 = vsel %vm5502, %v5353, %v5592
    %v5674 = vsel %vm5503, %v5358, %v5593
    %v5675 = vsel %vm5504, %v5361, %v5594
    %v5676 = vsel %vm5505, %v5366, %v5595
    %v5677 = vsel %vm5506, %v5369, %v5596
    %v5678 = vsel %vm5507, %v5374, %v5597
    %v5679 = vsel %vm5508, %v5377, %v5598
    %v5680 = vsel %vm5509, %v5382, %v5599
    %v5681 = vsel %vm5510, %v5385, %v5600
    %v5682 = vsel %vm5511, %v5390, %v5601
    %v5683 = vsel %vm5512, %v5393, %v5602
    %v5684 = vsel %vm5513, %v5398, %v5603
    %v5685 = vsel %vm5514, %v5401, %v5604
    %v5686 = vsel %vm5515, %v5406, %v5605
    %v5687 = vsel %vm5516, %v5409, %v5606
    %v5688 = vsel %vm5517, %v5414, %v5607
    %v5689 = vsel %vm5518, %v5417, %v5608
    %v5690 = vsel %vm5519, %v5422, %v5609
    %v5691 = vsel %vm5520, %v5425, %v5610
    %v5692 = vsel %vm5521, %v5430, %v5611
    %v5693 = vsel %vm5522, %v5433, %v5612
    %v5694 = vsel %vm5523, %v5438, %v5613
    %v5696 = vlaneseq
    %v5697 = vshrl.u32 %v5696, 7
    %v5698 = vsub.s32 0, %v5697
    %v5699 = vrot.slane %v2018, %v5698
    %v5701 = vmul.f32 %v5614, %v5699
    %v5702 = vmul.f32 %v5615, %v5699
    %v5703 = vmul.f32 %v5616, %v5699
    %v5704 = vmul.f32 %v5617, %v5699
    %v5705 = vmul.f32 %v5618, %v5699
    %v5706 = vmul.f32 %v5619, %v5699
    %v5707 = vmul.f32 %v5620, %v5699
    %v5708 = vmul.f32 %v5621, %v5699
    %v5709 = vmul.f32 %v5622, %v5699
    %v5710 = vmul.f32 %v5623, %v5699
    %v5711 = vmul.f32 %v5624, %v5699
    %v5712 = vmul.f32 %v5625, %v5699
    %v5713 = vmul.f32 %v5626, %v5699
    %v5714 = vmul.f32 %v5627, %v5699
    %v5715 = vmul.f32 %v5628, %v5699
    %v5716 = vmul.f32 %v5629, %v5699
    %v5717 = vmul.f32 %v5630, %v5699
    %v5718 = vmul.f32 %v5631, %v5699
    %v5719 = vmul.f32 %v5632, %v5699
    %v5720 = vmul.f32 %v5633, %v5699
    %v5721 = vmul.f32 %v5634, %v5699
    %v5722 = vmul.f32 %v5635, %v5699
    %v5723 = vmul.f32 %v5636, %v5699
    %v5724 = vmul.f32 %v5637, %v5699
    %v5725 = vmul.f32 %v5638, %v5699
    %v5726 = vmul.f32 %v5639, %v5699
    %v5727 = vmul.f32 %v5640, %v5699
    %v5728 = vmul.f32 %v5641, %v5699
    %v5729 = vmul.f32 %v5642, %v5699
    %v5730 = vmul.f32 %v5643, %v5699
    %v5731 = vmul.f32 %v5644, %v5699
    %v5732 = vmul.f32 %v5645, %v5699
    %v5733 = vmul.f32 %v5646, %v5699
    %v5734 = vmul.f32 %v5647, %v5699
    %v5735 = vmul.f32 %v5648, %v5699
    %v5736 = vmul.f32 %v5649, %v5699
    %v5737 = vmul.f32 %v5650, %v5699
    %v5738 = vmul.f32 %v5651, %v5699
    %v5739 = vmul.f32 %v5652, %v5699
    %v5740 = vmul.f32 %v5653, %v5699
    %v5741 = vmul.f32 %v5654, %v5699
    %v5742 = vmul.f32 %v5655, %v5699
    %v5743 = vmul.f32 %v5656, %v5699
    %v5744 = vmul.f32 %v5657, %v5699
    %v5745 = vmul.f32 %v5658, %v5699
    %v5746 = vmul.f32 %v5659, %v5699
    %v5747 = vmul.f32 %v5660, %v5699
    %v5748 = vmul.f32 %v5661, %v5699
    %v5749 = vmul.f32 %v5662, %v5699
    %v5750 = vmul.f32 %v5663, %v5699
    %v5751 = vmul.f32 %v5664, %v5699
    %v5752 = vmul.f32 %v5665, %v5699
    %v5753 = vmul.f32 %v5666, %v5699
    %v5754 = vmul.f32 %v5667, %v5699
    %v5755 = vmul.f32 %v5668, %v5699
    %v5756 = vmul.f32 %v5669, %v5699
    %v5757 = vmul.f32 %v5670, %v5699
    %v5758 = vmul.f32 %v5671, %v5699
    %v5759 = vmul.f32 %v5672, %v5699
    %v5760 = vmul.f32 %v5673, %v5699
    %v5761 = vmul.f32 %v5674, %v5699
    %v5762 = vmul.f32 %v5675, %v5699
    %v5763 = vmul.f32 %v5676, %v5699
    %v5764 = vmul.f32 %v5677, %v5699
    %v5765 = vmul.f32 %v5678, %v5699
    %v5766 = vmul.f32 %v5679, %v5699
    %v5767 = vmul.f32 %v5680, %v5699
    %v5768 = vmul.f32 %v5681, %v5699
    %v5769 = vmul.f32 %v5682, %v5699
    %v5770 = vmul.f32 %v5683, %v5699
    %v5771 = vmul.f32 %v5684, %v5699
    %v5772 = vmul.f32 %v5685, %v5699
    %v5773 = vmul.f32 %v5686, %v5699
    %v5774 = vmul.f32 %v5687, %v5699
    %v5775 = vmul.f32 %v5688, %v5699
    %v5776 = vmul.f32 %v5689, %v5699
    %v5777 = vmul.f32 %v5690, %v5699
    %v5778 = vmul.f32 %v5691, %v5699
    %v5779 = vmul.f32 %v5692, %v5699
    %v5780 = vmul.f32 %v5693, %v5699
    %v5781 = vmul.f32 %v5694, %v5699
    %v5783 = vlaneseq
    %v5784 = vshrl.u32 %v5783, 7
    %v5785 = vsub.s32 0, %v5784
    %v5786 = vrot.slane %v2019, %v5785
    %v5788 = vadd.f32 %v5701, %v5786
    %v5789 = vadd.f32 %v5702, %v5786
    %v5790 = vadd.f32 %v5703, %v5786
    %v5791 = vadd.f32 %v5704, %v5786
    %v5792 = vadd.f32 %v5705, %v5786
    %v5793 = vadd.f32 %v5706, %v5786
    %v5794 = vadd.f32 %v5707, %v5786
    %v5795 = vadd.f32 %v5708, %v5786
    %v5796 = vadd.f32 %v5709, %v5786
    %v5797 = vadd.f32 %v5710, %v5786
    %v5798 = vadd.f32 %v5711, %v5786
    %v5799 = vadd.f32 %v5712, %v5786
    %v5800 = vadd.f32 %v5713, %v5786
    %v5801 = vadd.f32 %v5714, %v5786
    %v5802 = vadd.f32 %v5715, %v5786
    %v5803 = vadd.f32 %v5716, %v5786
    %v5804 = vadd.f32 %v5717, %v5786
    %v5805 = vadd.f32 %v5718, %v5786
    %v5806 = vadd.f32 %v5719, %v5786
    %v5807 = vadd.f32 %v5720, %v5786
    %v5808 = vadd.f32 %v5721, %v5786
    %v5809 = vadd.f32 %v5722, %v5786
    %v5810 = vadd.f32 %v5723, %v5786
    %v5811 = vadd.f32 %v5724, %v5786
    %v5812 = vadd.f32 %v5725, %v5786
    %v5813 = vadd.f32 %v5726, %v5786
    %v5814 = vadd.f32 %v5727, %v5786
    %v5815 = vadd.f32 %v5728, %v5786
    %v5816 = vadd.f32 %v5729, %v5786
    %v5817 = vadd.f32 %v5730, %v5786
    %v5818 = vadd.f32 %v5731, %v5786
    %v5819 = vadd.f32 %v5732, %v5786
    %v5820 = vadd.f32 %v5733, %v5786
    %v5821 = vadd.f32 %v5734, %v5786
    %v5822 = vadd.f32 %v5735, %v5786
    %v5823 = vadd.f32 %v5736, %v5786
    %v5824 = vadd.f32 %v5737, %v5786
    %v5825 = vadd.f32 %v5738, %v5786
    %v5826 = vadd.f32 %v5739, %v5786
    %v5827 = vadd.f32 %v5740, %v5786
    %v5828 = vadd.f32 %v5741, %v5786
    %v5829 = vadd.f32 %v5742, %v5786
    %v5830 = vadd.f32 %v5743, %v5786
    %v5831 = vadd.f32 %v5744, %v5786
    %v5832 = vadd.f32 %v5745, %v5786
    %v5833 = vadd.f32 %v5746, %v5786
    %v5834 = vadd.f32 %v5747, %v5786
    %v5835 = vadd.f32 %v5748, %v5786
    %v5836 = vadd.f32 %v5749, %v5786
    %v5837 = vadd.f32 %v5750, %v5786
    %v5838 = vadd.f32 %v5751, %v5786
    %v5839 = vadd.f32 %v5752, %v5786
    %v5840 = vadd.f32 %v5753, %v5786
    %v5841 = vadd.f32 %v5754, %v5786
    %v5842 = vadd.f32 %v5755, %v5786
    %v5843 = vadd.f32 %v5756, %v5786
    %v5844 = vadd.f32 %v5757, %v5786
    %v5845 = vadd.f32 %v5758, %v5786
    %v5846 = vadd.f32 %v5759, %v5786
    %v5847 = vadd.f32 %v5760, %v5786
    %v5848 = vadd.f32 %v5761, %v5786
    %v5849 = vadd.f32 %v5762, %v5786
    %v5850 = vadd.f32 %v5763, %v5786
    %v5851 = vadd.f32 %v5764, %v5786
    %v5852 = vadd.f32 %v5765, %v5786
    %v5853 = vadd.f32 %v5766, %v5786
    %v5854 = vadd.f32 %v5767, %v5786
    %v5855 = vadd.f32 %v5768, %v5786
    %v5856 = vadd.f32 %v5769, %v5786
    %v5857 = vadd.f32 %v5770, %v5786
    %v5858 = vadd.f32 %v5771, %v5786
    %v5859 = vadd.f32 %v5772, %v5786
    %v5860 = vadd.f32 %v5773, %v5786
    %v5861 = vadd.f32 %v5774, %v5786
    %v5862 = vadd.f32 %v5775, %v5786
    %v5863 = vadd.f32 %v5776, %v5786
    %v5864 = vadd.f32 %v5777, %v5786
    %v5865 = vadd.f32 %v5778, %v5786
    %v5866 = vadd.f32 %v5779, %v5786
    %v5867 = vadd.f32 %v5780, %v5786
    %v5868 = vadd.f32 %v5781, %v5786
    %v5869 = vmax.f32 %v5788, %v5797
    %v5870 = vmax.f32 %v5789, %v5798
    %v5871 = vmax.f32 %v5790, %v5799
    %v5872 = vmax.f32 %v5791, %v5800
    %v5873 = vmax.f32 %v5792, %v5801
    %v5874 = vmax.f32 %v5793, %v5802
    %v5875 = vmax.f32 %v5794, %v5803
    %v5876 = vmax.f32 %v5795, %v5804
    %v5877 = vmax.f32 %v5796, %v5805
    %v5878 = vmax.f32 %v5806, %v5815
    %v5879 = vmax.f32 %v5807, %v5816
    %v5880 = vmax.f32 %v5808, %v5817
    %v5881 = vmax.f32 %v5809, %v5818
    %v5882 = vmax.f32 %v5810, %v5819
    %v5883 = vmax.f32 %v5811, %v5820
    %v5884 = vmax.f32 %v5812, %v5821
    %v5885 = vmax.f32 %v5813, %v5822
    %v5886 = vmax.f32 %v5814, %v5823
    %v5887 = vmax.f32 %v5824, %v5833
    %v5888 = vmax.f32 %v5825, %v5834
    %v5889 = vmax.f32 %v5826, %v5835
    %v5890 = vmax.f32 %v5827, %v5836
    %v5891 = vmax.f32 %v5828, %v5837
    %v5892 = vmax.f32 %v5829, %v5838
    %v5893 = vmax.f32 %v5830, %v5839
    %v5894 = vmax.f32 %v5831, %v5840
    %v5895 = vmax.f32 %v5832, %v5841
    %v5896 = vmax.f32 %v5842, %v5851
    %v5897 = vmax.f32 %v5843, %v5852
    %v5898 = vmax.f32 %v5844, %v5853
    %v5899 = vmax.f32 %v5845, %v5854
    %v5900 = vmax.f32 %v5846, %v5855
    %v5901 = vmax.f32 %v5847, %v5856
    %v5902 = vmax.f32 %v5848, %v5857
    %v5903 = vmax.f32 %v5849, %v5858
    %v5904 = vmax.f32 %v5850, %v5859
    %v5905 = vmax.f32 %v5869, %v5806
    %v5906 = vmax.f32 %v5870, %v5807
    %v5907 = vmax.f32 %v5871, %v5808
    %v5908 = vmax.f32 %v5872, %v5809
    %v5909 = vmax.f32 %v5873, %v5810
    %v5910 = vmax.f32 %v5874, %v5811
    %v5911 = vmax.f32 %v5875, %v5812
    %v5912 = vmax.f32 %v5876, %v5813
    %v5913 = vmax.f32 %v5877, %v5814
    %v5914 = vmax.f32 %v5878, %v5824
    %v5915 = vmax.f32 %v5879, %v5825
    %v5916 = vmax.f32 %v5880, %v5826
    %v5917 = vmax.f32 %v5881, %v5827
    %v5918 = vmax.f32 %v5882, %v5828
    %v5919 = vmax.f32 %v5883, %v5829
    %v5920 = vmax.f32 %v5884, %v5830
    %v5921 = vmax.f32 %v5885, %v5831
    %v5922 = vmax.f32 %v5886, %v5832
    %v5923 = vmax.f32 %v5887, %v5842
    %v5924 = vmax.f32 %v5888, %v5843
    %v5925 = vmax.f32 %v5889, %v5844
    %v5926 = vmax.f32 %v5890, %v5845
    %v5927 = vmax.f32 %v5891, %v5846
    %v5928 = vmax.f32 %v5892, %v5847
    %v5929 = vmax.f32 %v5893, %v5848
    %v5930 = vmax.f32 %v5894, %v5849
    %v5931 = vmax.f32 %v5895, %v5850
    %v5932 = vmax.f32 %v5896, %v5860
    %v5933 = vmax.f32 %v5897, %v5861
    %v5934 = vmax.f32 %v5898, %v5862
    %v5935 = vmax.f32 %v5899, %v5863
    %v5936 = vmax.f32 %v5900, %v5864
    %v5937 = vmax.f32 %v5901, %v5865
    %v5938 = vmax.f32 %v5902, %v5866
    %v5939 = vmax.f32 %v5903, %v5867
    %v5940 = vmax.f32 %v5904, %v5868
    %v5941 = vmax.f32 %v5905, %v5906
    %v5942 = vmax.f32 %v5907, %v5908
    %v5943 = vmax.f32 %v5909, %v5910
    %v5944 = vmax.f32 %v5911, %v5912
    %v5945 = vmax.f32 %v5914, %v5915
    %v5946 = vmax.f32 %v5916, %v5917
    %v5947 = vmax.f32 %v5918, %v5919
    %v5948 = vmax.f32 %v5920, %v5921
    %v5949 = vmax.f32 %v5923, %v5924
    %v5950 = vmax.f32 %v5925, %v5926
    %v5951 = vmax.f32 %v5927, %v5928
    %v5952 = vmax.f32 %v5929, %v5930
    %v5953 = vmax.f32 %v5932, %v5933
    %v5954 = vmax.f32 %v5934, %v5935
    %v5955 = vmax.f32 %v5936, %v5937
    %v5956 = vmax.f32 %v5938, %v5939
    %v5957 = vmax.f32 %v5941, %v5907
    %v5958 = vmax.f32 %v5942, %v5909
    %v5959 = vmax.f32 %v5943, %v5911
    %v5960 = vmax.f32 %v5944, %v5913
    %v5961 = vmax.f32 %v5945, %v5916
    %v5962 = vmax.f32 %v5946, %v5918
    %v5963 = vmax.f32 %v5947, %v5920
    %v5964 = vmax.f32 %v5948, %v5922
    %v5965 = vmax.f32 %v5949, %v5925
    %v5966 = vmax.f32 %v5950, %v5927
    %v5967 = vmax.f32 %v5951, %v5929
    %v5968 = vmax.f32 %v5952, %v5931
    %v5969 = vmax.f32 %v5953, %v5934
    %v5970 = vmax.f32 %v5954, %v5936
    %v5971 = vmax.f32 %v5955, %v5938
    %v5972 = vmax.f32 %v5956, %v5940
    %v5973 = vld [vmem:[#allocation13] sm:$0x1]
    %v5974 = vld [vmem:[#allocation3] sm:$0x1]
    %v5975 = vld [vmem:[#allocation14] sm:$0x1]
    %v5976 = vld [vmem:[#allocation16] sm:$0x1]
    %5986 = vrot.lane.b32.xlu0 %v5958, 48
    %v5987 = vpop.permute.xlu0 %5986
    %5988 = vrot.lane.b32.xlu0 %v5959, 48
    %v5989 = vpop.permute.xlu0 %5988
    %5990 = vrot.lane.b32.xlu0 %v5960, 48
    %v5991 = vpop.permute.xlu0 %5990
    %5992 = vrot.lane.b32.xlu0 %v5962, 48
    %v5993 = vpop.permute.xlu0 %5992
    %5994 = vrot.lane.b32.xlu0 %v5963, 48
    %v5995 = vpop.permute.xlu0 %5994
    %5996 = vrot.lane.b32.xlu0 %v5964, 48
    %v5997 = vpop.permute.xlu0 %5996
    %5998 = vrot.lane.b32.xlu0 %v5966, 48
    %v5999 = vpop.permute.xlu0 %5998
    %6000 = vrot.lane.b32.xlu0 %v5967, 48
    %v6001 = vpop.permute.xlu0 %6000
    %6002 = vrot.lane.b32.xlu0 %v5968, 48
    %v6003 = vpop.permute.xlu0 %6002
    %6018 = vrot.lane.b32.xlu0 %v5961, 96
    %v6019 = vpop.permute.xlu0 %6018
    %6020 = vrot.lane.b32.xlu0 %v5962, 96
    %v6021 = vpop.permute.xlu0 %6020
    %6022 = vrot.lane.b32.xlu0 %v5963, 96
    %v6023 = vpop.permute.xlu0 %6022
    %6024 = vrot.lane.b32.xlu0 %v5965, 96
    %v6025 = vpop.permute.xlu0 %6024
    %6026 = vrot.lane.b32.xlu0 %v5966, 96
    %v6027 = vpop.permute.xlu0 %6026
    %6028 = vrot.lane.b32.xlu0 %v5967, 96
    %v6029 = vpop.permute.xlu0 %6028
    %6030 = vrot.lane.b32.xlu0 %v5969, 96
    %v6031 = vpop.permute.xlu0 %6030
    %6032 = vrot.lane.b32.xlu0 %v5970, 96
    %v6033 = vpop.permute.xlu0 %6032
    %6034 = vrot.lane.b32.xlu0 %v5971, 96
    %v6035 = vpop.permute.xlu0 %6034
    %6046 = vrot.lane.b32.xlu0 %v5962, 16
    %v6047 = vpop.permute.xlu0 %6046
    %6048 = vrot.lane.b32.xlu0 %v5963, 16
    %v6049 = vpop.permute.xlu0 %6048
    %6050 = vrot.lane.b32.xlu0 %v5964, 16
    %v6051 = vpop.permute.xlu0 %6050
    %6052 = vrot.lane.b32.xlu0 %v5966, 16
    %v6053 = vpop.permute.xlu0 %6052
    %6054 = vrot.lane.b32.xlu0 %v5967, 16
    %v6055 = vpop.permute.xlu0 %6054
    %6056 = vrot.lane.b32.xlu0 %v5968, 16
    %v6057 = vpop.permute.xlu0 %6056
    %6058 = vrot.lane.b32.xlu0 %v5970, 16
    %v6059 = vpop.permute.xlu0 %6058
    %6060 = vrot.lane.b32.xlu0 %v5971, 16
    %v6061 = vpop.permute.xlu0 %6060
    %6062 = vrot.lane.b32.xlu0 %v5972, 16
    %v6063 = vpop.permute.xlu0 %6062
    %vm6073 = vcmask 392192
    %v6074 = vsel %vm6073, %v5957, %v5987
    %v6075 = vsel %vm6073, %v5958, %v5989
    %v6076 = vsel %vm6073, %v5959, %v5991
    %v6077 = vsel %vm6073, %v5961, %v5993
    %v6078 = vsel %vm6073, %v5962, %v5995
    %v6079 = vsel %vm6073, %v5963, %v5997
    %v6080 = vsel %vm6073, %v5965, %v5999
    %v6081 = vsel %vm6073, %v5966, %v6001
    %v6082 = vsel %vm6073, %v5967, %v6003
    %v6083 = vsel %vm4658, %v6074, %v6019
    %v6084 = vsel %vm4658, %v6075, %v6021
    %v6085 = vsel %vm4658, %v6076, %v6023
    %v6086 = vsel %vm4658, %v6077, %v6025
    %v6087 = vsel %vm4658, %v6078, %v6027
    %v6088 = vsel %vm4658, %v6079, %v6029
    %v6089 = vsel %vm4658, %v6080, %v6031
    %v6090 = vsel %vm4658, %v6081, %v6033
    %v6091 = vsel %vm4658, %v6082, %v6035
    %vm6092 = vcmask 130048
    %v6093 = vsel %vm6092, %v6019, %v6047
    %v6094 = vsel %vm6092, %v6021, %v6049
    %v6095 = vsel %vm6092, %v6023, %v6051
    %v6096 = vsel %vm6092, %v6025, %v6053
    %v6097 = vsel %vm6092, %v6027, %v6055
    %v6098 = vsel %vm6092, %v6029, %v6057
    %v6099 = vsel %vm6092, %v6031, %v6059
    %v6100 = vsel %vm6092, %v6033, %v6061
    %v6101 = vsel %vm6092, %v6035, %v6063
    %v6102 = vpack.c.bf16 %v6084, %v6083
    %v6103 = vpack.c.bf16 %v6094, %v6093
    %v6104 = vpack.c.bf16 %v6086, %v6085
    %v6105 = vpack.c.bf16 %v6096, %v6095
    %v6106 = vpack.c.bf16 %v6088, %v6087
    %v6107 = vpack.c.bf16 %v6098, %v6097
    %v6108 = vpack.c.bf16 %v6090, %v6089
    %v6109 = vpack.c.bf16 %v6100, %v6099
    %v6110 = vpack.c.bf16 %v6091, %v6091
    %v6111 = vpack.c.bf16 %v6101, %v6101
    %v6112 = vld [vmem:[%s6] sm:$0xf]
    %v6113 = vld [vmem:[%s6 + $0x4] sm:$0xf]
    %v6114 = vld [vmem:[%s6 + $0x8] sm:$0xf]
    %v6115 = vld [vmem:[%s6 + $0xc] sm:$0xf]
    %v6116 = vld [vmem:[%s6 + $0x10] sm:$0xf]
    %v6117 = vld [vmem:[%s6 + $0x14] sm:$0xf]
    %v6118 = vld [vmem:[%s6 + $0x18] sm:$0xf]
    %v6119 = vld [vmem:[%s6 + $0x1c] sm:$0xf]
    %v6120 = vld [vmem:[%s6 + $0x20] sm:$0xf]
    %v6121 = vld [vmem:[%s6 + $0x24] sm:$0xf]
    %v6122 = vld [vmem:[%s6 + $0x28] sm:$0xf]
    %v6123 = vld [vmem:[%s6 + $0x2c] sm:$0xf]
    %v6124 = vld [vmem:[%s6 + $0x30] sm:$0xf]
    %v6125 = vld [vmem:[%s6 + $0x34] sm:$0xf]
    %v6126 = vld [vmem:[%s6 + $0x38] sm:$0xf]
    %v6127 = vld [vmem:[%s6 + $0x3c] sm:$0xf]
    %v6128 = vld [vmem:[%s6 + $0x40] sm:$0xf]
    %v6129 = vld [vmem:[%s6 + $0x44] sm:$0xf]
    %v6130 = vld [vmem:[%s6 + $0x48] sm:$0xf]
    %v6131 = vld [vmem:[%s6 + $0x4c] sm:$0xf]
    %v6132 = vld [vmem:[%s6 + $0x50] sm:$0xf]
    %v6133 = vld [vmem:[%s6 + $0x54] sm:$0xf]
    %v6134 = vld [vmem:[%s6 + $0x58] sm:$0xf]
    %v6135 = vld [vmem:[%s6 + $0x5c] sm:$0xf]
    %v6137 = vlaneseq
    %v6138 = vshrl.u32 %v6137, 7
    %v6139 = vsub.s32 0, %v6138
    %v6140 = vrot.slane %v5973, %v6139
    %v6166 = vunpack.c.l.b16 %v6112
    %v6167 = vunpack.c.l.b16 %v6113
    %v6168 = vunpack.c.l.b16 %v6114
    %v6169 = vunpack.c.l.b16 %v6115
    %v6170 = vunpack.c.l.b16 %v6116
    %v6171 = vunpack.c.l.b16 %v6117
    %v6172 = vunpack.c.l.b16 %v6118
    %v6173 = vunpack.c.l.b16 %v6119
    %v6174 = vunpack.c.l.b16 %v6120
    %v6175 = vunpack.c.l.b16 %v6121
    %v6176 = vunpack.c.l.b16 %v6122
    %v6177 = vunpack.c.l.b16 %v6123
    %v6178 = vunpack.c.l.b16 %v6124
    %v6179 = vunpack.c.l.b16 %v6125
    %v6180 = vunpack.c.l.b16 %v6126
    %v6181 = vunpack.c.l.b16 %v6127
    %v6182 = vunpack.c.l.b16 %v6128
    %v6183 = vunpack.c.l.b16 %v6129
    %v6184 = vunpack.c.l.b16 %v6130
    %v6185 = vunpack.c.l.b16 %v6131
    %v6186 = vunpack.c.l.b16 %v6132
    %v6187 = vunpack.c.l.b16 %v6133
    %v6188 = vunpack.c.l.b16 %v6134
    %v6189 = vunpack.c.l.b16 %v6135
    %v6190 = vpack.c.b16 %v6167, %v6166
    %v6191 = vpack.c.b16 %v6169, %v6168
    %v6192 = vpack.c.b16 %v6171, %v6170
    %v6193 = vpack.c.b16 %v6173, %v6172
    %v6194 = vpack.c.b16 %v6175, %v6174
    %v6195 = vpack.c.b16 %v6177, %v6176
    %v6196 = vpack.c.b16 %v6179, %v6178
    %v6197 = vpack.c.b16 %v6181, %v6180
    %v6198 = vpack.c.b16 %v6183, %v6182
    %v6199 = vpack.c.b16 %v6185, %v6184
    %v6200 = vpack.c.b16 %v6187, %v6186
    %v6201 = vpack.c.b16 %v6189, %v6188
    %vm6214 = vcmask 523264
    %v6216 = vsel %vm6214, %v6103, 0
    %v6219 = vsel %vm6214, %v6105, 0
    %v6222 = vsel %vm6214, %v6107, 0
    %v6225 = vsel %vm6214, %v6109, 0
    %v6228 = vsel %vm6214, %v6111, 0
    %6230 = vmatprep.subr.bf16.mxu0 0
    %6231 = vmatpush1.bf16.msra.mxu0 %v6190
    %6232 = vmatprep.subr.bf16.mxu0 0
    %6233 = vmatpush1.bf16.msra.mxu0 %v6191
    %6234 = vmatprep.subr.bf16.mxu0 0
    %6235 = vmatpush1.bf16.msra.mxu0 %v6192
    %6236 = vmatprep.subr.bf16.mxu0 0
    %6237 = vmatpush1.bf16.msra.mxu0 %v6193
    %6238 = vmatprep.subr.bf16.mxu0 0
    %6239 = vmatpush1.bf16.msra.mxu0 %v6194
    %6240 = vmatprep.subr.bf16.mxu0 0
    %6241 = vmatpush1.bf16.msra.mxu0 %v6195
    %6242 = vmatprep.subr.bf16.mxu0 0
    %6243 = vmatpush1.bf16.msra.mxu0 %v6196
    %6244 = vmatprep.subr.bf16.mxu0 0
    %6245 = vmatpush1.bf16.msra.mxu0 %v6197
    %6246 = vmatprep.subr.bf16.mxu0 0
    %6247 = vmatpush1.bf16.msra.mxu0 %v6198
    %6248 = vmatprep.subr.bf16.mxu0 0
    %6249 = vmatpush1.bf16.msra.mxu0 %v6199
    %6250 = vmatprep.subr.bf16.mxu0 0
    %6251 = vmatpush1.bf16.msra.mxu0 %v6200
    %6252 = vmatprep.subr.bf16.mxu0 0
    %6253 = vmatpush1.bf16.msra.mxu0 %v6201
    %6254 = vmatprep.subr.bf16.mxu0 0
    %6255 = vmatpush1.bf16.msra.mxu0 0
    %6256 = vmatprep.subr.bf16.mxu0 0
    %6257 = vmatpush1.bf16.msra.mxu0 0
    %6258 = vmatprep.subr.bf16.mxu0 0
    %6259 = vmatpush1.bf16.msra.mxu0 0
    %6260 = vmatprep.subr.bf16.mxu0 0
    %6261 = vmatpush1.bf16.msra.mxu0 0
    %6262 = vmatprep.mubr.bf16.mxu0 %v6216
    %6263 = vmatmul.mubr.bf16.gmra.mrb[0].mxu0 %v6102
    %v6264 = vpop.f32.mrb[0].mxu0
    %v6265 = vadd.f32 %v6140, %v6264
    %v6266 = vpop.f32.mrb[0].mxu0
    %v6267 = vpop.f32.mrb[0].mxu0
    %v6268 = vadd.f32 %v6140, %v6267
    %v6269 = vpop.f32.mrb[0].mxu0
    %6270 = vmatprep.mubr.bf16.mxu0 %v6219
    %6271 = vmatmul.mubr.bf16.gmra.mrb[0].mxu0 %v6104
    %v6272 = vpop.f32.mrb[0].mxu0
    %v6273 = vadd.f32 %v6140, %v6272
    %v6274 = vpop.f32.mrb[0].mxu0
    %v6275 = vpop.f32.mrb[0].mxu0
    %v6276 = vadd.f32 %v6140, %v6275
    %v6277 = vpop.f32.mrb[0].mxu0
    %6278 = vmatprep.mubr.bf16.mxu0 %v6222
    %6279 = vmatmul.mubr.bf16.gmra.mrb[0].mxu0 %v6106
    %v6280 = vpop.f32.mrb[0].mxu0
    %v6281 = vadd.f32 %v6140, %v6280
    %v6282 = vpop.f32.mrb[0].mxu0
    %v6283 = vpop.f32.mrb[0].mxu0
    %v6284 = vadd.f32 %v6140, %v6283
    %v6285 = vpop.f32.mrb[0].mxu0
    %6286 = vmatprep.mubr.bf16.mxu0 %v6225
    %6287 = vmatmul.mubr.bf16.gmra.mrb[0].mxu0 %v6108
    %v6288 = vpop.f32.mrb[0].mxu0
    %v6289 = vadd.f32 %v6140, %v6288
    %v6290 = vpop.f32.mrb[0].mxu0
    %v6291 = vpop.f32.mrb[0].mxu0
    %v6292 = vadd.f32 %v6140, %v6291
    %v6293 = vpop.f32.mrb[0].mxu0
    %6294 = vmatprep.mubr.bf16.mxu0 %v6228
    %6295 = vmatmul.mubr.bf16.gmra.mrb[0].mxu0 %v6110
    %v6296 = vpop.f32.mrb[0].mxu0
    %v6297 = vadd.f32 %v6140, %v6296
    %v6298 = vpop.f32.mrb[0].mxu0
    %v6299 = vpop.f32.mrb[0].mxu0
    %v6300 = vpop.f32.mrb[0].mxu0
    %6301 = vdwg.mxu0
    %vm6302 = vcmp.gt.f32.partialorder %v6265, 0.0
    %vm6303 = vcmp.gt.f32.partialorder %v6268, 0.0
    %vm6304 = vcmp.gt.f32.partialorder %v6273, 0.0
    %vm6305 = vcmp.gt.f32.partialorder %v6276, 0.0
    %vm6306 = vcmp.gt.f32.partialorder %v6281, 0.0
    %vm6307 = vcmp.gt.f32.partialorder %v6284, 0.0
    %vm6308 = vcmp.gt.f32.partialorder %v6289, 0.0
    %vm6309 = vcmp.gt.f32.partialorder %v6292, 0.0
    %vm6310 = vcmp.gt.f32.partialorder %v6297, 0.0
    %v6312 = vlaneseq
    %v6313 = vshrl.u32 %v6312, 7
    %v6314 = vsub.s32 0, %v6313
    %v6315 = vrot.slane %v5974, %v6314
    %6316 = vset.pattern.permute.xlu0 0
    %6317 = vperm.xlu0 %6316, %v6315
    %v6318 = vpop.permute.xlu0 %6317
    %v6320 = vmul.f32 %v6265, %v6318
    %v6321 = vmul.f32 %v6268, %v6318
    %v6322 = vmul.f32 %v6273, %v6318
    %v6323 = vmul.f32 %v6276, %v6318
    %v6324 = vmul.f32 %v6281, %v6318
    %v6325 = vmul.f32 %v6284, %v6318
    %v6326 = vmul.f32 %v6289, %v6318
    %v6327 = vmul.f32 %v6292, %v6318
    %v6328 = vmul.f32 %v6297, %v6318
    %v6329 = vsel %vm6302, %v6265, %v6320
    %v6330 = vsel %vm6303, %v6268, %v6321
    %v6331 = vsel %vm6304, %v6273, %v6322
    %v6332 = vsel %vm6305, %v6276, %v6323
    %v6333 = vsel %vm6306, %v6281, %v6324
    %v6334 = vsel %vm6307, %v6284, %v6325
    %v6335 = vsel %vm6308, %v6289, %v6326
    %v6336 = vsel %vm6309, %v6292, %v6327
    %v6337 = vsel %vm6310, %v6297, %v6328
    %v6339 = vlaneseq
    %v6340 = vshrl.u32 %v6339, 7
    %v6341 = vsub.s32 0, %v6340
    %v6342 = vrot.slane %v5975, %v6341
    %v6344 = vmul.f32 %v6329, %v6342
    %v6345 = vmul.f32 %v6330, %v6342
    %v6346 = vmul.f32 %v6331, %v6342
    %v6347 = vmul.f32 %v6332, %v6342
    %v6348 = vmul.f32 %v6333, %v6342
    %v6349 = vmul.f32 %v6334, %v6342
    %v6350 = vmul.f32 %v6335, %v6342
    %v6351 = vmul.f32 %v6336, %v6342
    %v6352 = vmul.f32 %v6337, %v6342
    %v6354 = vlaneseq
    %v6355 = vshrl.u32 %v6354, 7
    %v6356 = vsub.s32 0, %v6355
    %v6357 = vrot.slane %v5976, %v6356
    %v6359 = vadd.f32 %v6344, %v6357
    %v6360 = vadd.f32 %v6345, %v6357
    %v6361 = vadd.f32 %v6346, %v6357
    %v6362 = vadd.f32 %v6347, %v6357
    %v6363 = vadd.f32 %v6348, %v6357
    %v6364 = vadd.f32 %v6349, %v6357
    %v6365 = vadd.f32 %v6350, %v6357
    %v6366 = vadd.f32 %v6351, %v6357
    %v6367 = vadd.f32 %v6352, %v6357
    %6369 = vrot.lane.b32.xlu0 %v6360, 64
    %v6370 = vpop.permute.xlu0 %6369
    %6373 = vrot.lane.b32.xlu0 %v6362, 64
    %v6374 = vpop.permute.xlu0 %6373
    %6377 = vrot.lane.b32.xlu0 %v6364, 64
    %v6378 = vpop.permute.xlu0 %6377
    %6381 = vrot.lane.b32.xlu0 %v6366, 64
    %v6382 = vpop.permute.xlu0 %6381
    %v6384 = vsel %vm6214, %v6359, %v6370
    %v6385 = vsel %vm6214, %v6361, %v6374
    %v6386 = vsel %vm6214, %v6363, %v6378
    %v6387 = vsel %vm6214, %v6365, %v6382
    %v6388 = vpack.c.bf16 %v6384, %v6384
    %v6389 = vpack.c.bf16 %v6385, %v6385
    %v6390 = vpack.c.bf16 %v6386, %v6386
    %v6391 = vpack.c.bf16 %v6387, %v6387
    %v6392 = vpack.c.bf16 %v6367, %v6367
    %v6393 = vld [vmem:[#allocation17] sm:$0xf]
    %v6394 = vld [vmem:[#allocation17 + $0x4] sm:$0xf]
    %v6395 = vld [vmem:[#allocation17 + $0x8] sm:$0xf]
    %v6396 = vld [vmem:[#allocation17 + $0xc] sm:$0xf]
    %v6397 = vld [vmem:[#allocation17 + $0x10] sm:$0xf]
    %v6398 = vld [vmem:[#allocation17 + $0x14] sm:$0xf]
    %v6399 = vld [vmem:[#allocation17 + $0x18] sm:$0xf]
    %v6400 = vld [vmem:[#allocation17 + $0x1c] sm:$0xf]
    %v6401 = vld [vmem:[#allocation17 + $0x20] sm:$0xf]
    %v6402 = vld [vmem:[#allocation17 + $0x24] sm:$0xf]
    %v6403 = vld [vmem:[#allocation17 + $0x28] sm:$0xf]
    %v6404 = vld [vmem:[#allocation17 + $0x2c] sm:$0xf]
    %v6405 = vld [vmem:[#allocation17 + $0x30] sm:$0xf]
    %v6406 = vld [vmem:[#allocation17 + $0x34] sm:$0xf]
    %v6407 = vld [vmem:[#allocation17 + $0x38] sm:$0xf]
    %v6408 = vld [vmem:[#allocation17 + $0x3c] sm:$0xf]
    %v6409 = vld [vmem:[#allocation17 + $0x40] sm:$0xf]
    %v6410 = vld [vmem:[#allocation17 + $0x44] sm:$0xf]
    %v6411 = vld [vmem:[#allocation17 + $0x48] sm:$0xf]
    %v6412 = vld [vmem:[#allocation17 + $0x4c] sm:$0xf]
    %v6413 = vld [vmem:[#allocation17 + $0x50] sm:$0xf]
    %v6414 = vld [vmem:[#allocation17 + $0x54] sm:$0xf]
    %v6415 = vld [vmem:[#allocation17 + $0x58] sm:$0xf]
    %v6416 = vld [vmem:[#allocation17 + $0x5c] sm:$0xf]
    %v6417 = vld [vmem:[#allocation17 + $0x60] sm:$0xf]
    %v6418 = vld [vmem:[#allocation17 + $0x64] sm:$0xf]
    %v6419 = vld [vmem:[#allocation17 + $0x68] sm:$0xf]
    %v6420 = vld [vmem:[#allocation17 + $0x6c] sm:$0xf]
    %v6421 = vld [vmem:[#allocation17 + $0x70] sm:$0xf]
    %v6422 = vld [vmem:[#allocation17 + $0x74] sm:$0xf]
    %v6423 = vld [vmem:[#allocation17 + $0x78] sm:$0xf]
    %v6424 = vld [vmem:[#allocation17 + $0x7c] sm:$0xf]
    %v6425 = vld [vmem:[#allocation17 + $0x80] sm:$0xf]
    %v6426 = vld [vmem:[#allocation17 + $0x84] sm:$0xf]
    %v6427 = vld [vmem:[#allocation17 + $0x88] sm:$0xf]
    %v6428 = vld [vmem:[#allocation17 + $0x8c] sm:$0xf]
    %v6429 = vld [vmem:[#allocation17 + $0x90] sm:$0xf]
    %v6430 = vld [vmem:[#allocation17 + $0x94] sm:$0xf]
    %v6431 = vld [vmem:[#allocation17 + $0x98] sm:$0xf]
    %v6432 = vld [vmem:[#allocation17 + $0x9c] sm:$0xf]
    %v6433 = vld [vmem:[#allocation17 + $0xa0] sm:$0xf]
    %v6434 = vld [vmem:[#allocation17 + $0xa4] sm:$0xf]
    %v6435 = vld [vmem:[#allocation17 + $0xa8] sm:$0xf]
    %v6436 = vld [vmem:[#allocation17 + $0xac] sm:$0xf]
    %v6437 = vld [vmem:[#allocation17 + $0xb0] sm:$0xf]
    %v6438 = vld [vmem:[#allocation17 + $0xb4] sm:$0xf]
    %v6439 = vld [vmem:[#allocation17 + $0xb8] sm:$0xf]
    %v6440 = vld [vmem:[#allocation17 + $0xbc] sm:$0xf]
    %v6441 = vld [vmem:[#allocation17 + $0xc0] sm:$0xf]
    %v6442 = vld [vmem:[#allocation17 + $0xc4] sm:$0xf]
    %v6443 = vld [vmem:[#allocation17 + $0xc8] sm:$0xf]
    %v6444 = vld [vmem:[#allocation17 + $0xcc] sm:$0xf]
    %v6445 = vld [vmem:[#allocation17 + $0xd0] sm:$0xf]
    %v6446 = vld [vmem:[#allocation17 + $0xd4] sm:$0xf]
    %v6447 = vld [vmem:[#allocation17 + $0xd8] sm:$0xf]
    %v6448 = vld [vmem:[#allocation17 + $0xdc] sm:$0xf]
    %v6449 = vld [vmem:[#allocation17 + $0xe0] sm:$0xf]
    %v6450 = vld [vmem:[#allocation17 + $0xe4] sm:$0xf]
    %v6451 = vld [vmem:[#allocation17 + $0xe8] sm:$0xf]
    %v6452 = vld [vmem:[#allocation17 + $0xec] sm:$0xf]
    %v6453 = vld [vmem:[#allocation17 + $0xf0] sm:$0xf]
    %v6454 = vld [vmem:[#allocation17 + $0xf4] sm:$0xf]
    %v6455 = vld [vmem:[#allocation17 + $0xf8] sm:$0xf]
    %v6456 = vld [vmem:[#allocation17 + $0xfc] sm:$0xf]
    %v6457 = vld [vmem:[#allocation17 + $0x100] sm:$0xf]
    %v6458 = vld [vmem:[#allocation17 + $0x104] sm:$0xf]
    %v6459 = vld [vmem:[#allocation17 + $0x108] sm:$0xf]
    %v6460 = vld [vmem:[#allocation17 + $0x10c] sm:$0xf]
    %v6461 = vld [vmem:[#allocation17 + $0x110] sm:$0xf]
    %v6462 = vld [vmem:[#allocation17 + $0x114] sm:$0xf]
    %v6463 = vld [vmem:[#allocation17 + $0x118] sm:$0xf]
    %v6464 = vld [vmem:[#allocation17 + $0x11c] sm:$0xf]
    %v6465 = vld [vmem:[#allocation19] sm:$0x1]
    %v6467 = vlaneseq
    %v6468 = vshrl.u32 %v6467, 7
    %v6469 = vsub.s32 0, %v6468
    %v6470 = vrot.slane %v6465, %v6469
    %v6544 = vunpack.c.l.b16 %v6393
    %v6545 = vunpack.c.l.b16 %v6394
    %v6546 = vunpack.c.l.b16 %v6395
    %v6547 = vunpack.c.l.b16 %v6396
    %v6548 = vunpack.c.l.b16 %v6397
    %v6549 = vunpack.c.l.b16 %v6398
    %v6550 = vunpack.c.l.b16 %v6399
    %v6551 = vunpack.c.l.b16 %v6400
    %v6552 = vunpack.c.l.b16 %v6401
    %v6553 = vunpack.c.l.b16 %v6402
    %v6554 = vunpack.c.l.b16 %v6403
    %v6555 = vunpack.c.l.b16 %v6404
    %v6556 = vunpack.c.l.b16 %v6405
    %v6557 = vunpack.c.l.b16 %v6406
    %v6558 = vunpack.c.l.b16 %v6407
    %v6559 = vunpack.c.l.b16 %v6408
    %v6560 = vunpack.c.l.b16 %v6409
    %v6561 = vunpack.c.l.b16 %v6410
    %v6562 = vunpack.c.l.b16 %v6411
    %v6563 = vunpack.c.l.b16 %v6412
    %v6564 = vunpack.c.l.b16 %v6413
    %v6565 = vunpack.c.l.b16 %v6414
    %v6566 = vunpack.c.l.b16 %v6415
    %v6567 = vunpack.c.l.b16 %v6416
    %v6568 = vunpack.c.l.b16 %v6417
    %v6569 = vunpack.c.l.b16 %v6418
    %v6570 = vunpack.c.l.b16 %v6419
    %v6571 = vunpack.c.l.b16 %v6420
    %v6572 = vunpack.c.l.b16 %v6421
    %v6573 = vunpack.c.l.b16 %v6422
    %v6574 = vunpack.c.l.b16 %v6423
    %v6575 = vunpack.c.l.b16 %v6424
    %v6576 = vunpack.c.l.b16 %v6425
    %v6577 = vunpack.c.l.b16 %v6426
    %v6578 = vunpack.c.l.b16 %v6427
    %v6579 = vunpack.c.l.b16 %v6428
    %v6580 = vunpack.c.l.b16 %v6429
    %v6581 = vunpack.c.l.b16 %v6430
    %v6582 = vunpack.c.l.b16 %v6431
    %v6583 = vunpack.c.l.b16 %v6432
    %v6584 = vunpack.c.l.b16 %v6433
    %v6585 = vunpack.c.l.b16 %v6434
    %v6586 = vunpack.c.l.b16 %v6435
    %v6587 = vunpack.c.l.b16 %v6436
    %v6588 = vunpack.c.l.b16 %v6437
    %v6589 = vunpack.c.l.b16 %v6438
    %v6590 = vunpack.c.l.b16 %v6439
    %v6591 = vunpack.c.l.b16 %v6440
    %v6592 = vunpack.c.l.b16 %v6441
    %v6593 = vunpack.c.l.b16 %v6442
    %v6594 = vunpack.c.l.b16 %v6443
    %v6595 = vunpack.c.l.b16 %v6444
    %v6596 = vunpack.c.l.b16 %v6445
    %v6597 = vunpack.c.l.b16 %v6446
    %v6598 = vunpack.c.l.b16 %v6447
    %v6599 = vunpack.c.l.b16 %v6448
    %v6600 = vunpack.c.l.b16 %v6449
    %v6601 = vunpack.c.l.b16 %v6450
    %v6602 = vunpack.c.l.b16 %v6451
    %v6603 = vunpack.c.l.b16 %v6452
    %v6604 = vunpack.c.l.b16 %v6453
    %v6605 = vunpack.c.l.b16 %v6454
    %v6606 = vunpack.c.l.b16 %v6455
    %v6607 = vunpack.c.l.b16 %v6456
    %v6608 = vunpack.c.l.b16 %v6457
    %v6609 = vunpack.c.l.b16 %v6458
    %v6610 = vunpack.c.l.b16 %v6459
    %v6611 = vunpack.c.l.b16 %v6460
    %v6612 = vunpack.c.l.b16 %v6461
    %v6613 = vunpack.c.l.b16 %v6462
    %v6614 = vunpack.c.l.b16 %v6463
    %v6615 = vunpack.c.l.b16 %v6464
    %v6616 = vpack.c.b16 %v6545, %v6544
    %v6617 = vpack.c.b16 %v6547, %v6546
    %v6618 = vpack.c.b16 %v6549, %v6548
    %v6619 = vpack.c.b16 %v6551, %v6550
    %v6620 = vpack.c.b16 %v6553, %v6552
    %v6621 = vpack.c.b16 %v6555, %v6554
    %v6622 = vpack.c.b16 %v6557, %v6556
    %v6623 = vpack.c.b16 %v6559, %v6558
    %v6624 = vpack.c.b16 %v6561, %v6560
    %v6625 = vpack.c.b16 %v6563, %v6562
    %v6626 = vpack.c.b16 %v6565, %v6564
    %v6627 = vpack.c.b16 %v6567, %v6566
    %v6628 = vpack.c.b16 %v6569, %v6568
    %v6629 = vpack.c.b16 %v6571, %v6570
    %v6630 = vpack.c.b16 %v6573, %v6572
    %v6631 = vpack.c.b16 %v6575, %v6574
    %v6632 = vpack.c.b16 %v6577, %v6576
    %v6633 = vpack.c.b16 %v6579, %v6578
    %v6634 = vpack.c.b16 %v6581, %v6580
    %v6635 = vpack.c.b16 %v6583, %v6582
    %v6636 = vpack.c.b16 %v6585, %v6584
    %v6637 = vpack.c.b16 %v6587, %v6586
    %v6638 = vpack.c.b16 %v6589, %v6588
    %v6639 = vpack.c.b16 %v6591, %v6590
    %v6640 = vpack.c.b16 %v6593, %v6592
    %v6641 = vpack.c.b16 %v6595, %v6594
    %v6642 = vpack.c.b16 %v6597, %v6596
    %v6643 = vpack.c.b16 %v6599, %v6598
    %v6644 = vpack.c.b16 %v6601, %v6600
    %v6645 = vpack.c.b16 %v6603, %v6602
    %v6646 = vpack.c.b16 %v6605, %v6604
    %v6647 = vpack.c.b16 %v6607, %v6606
    %v6648 = vpack.c.b16 %v6609, %v6608
    %v6649 = vpack.c.b16 %v6611, %v6610
    %v6650 = vpack.c.b16 %v6613, %v6612
    %v6651 = vpack.c.b16 %v6615, %v6614
    %v6689 = vsel %vm6214, %v6392, 0
    %6691 = vmatprep.subr.bf16.mxu0 0
    %6692 = vmatpush1.bf16.msra.mxu0 %v6616
    %6693 = vmatprep.subr.bf16.mxu0 0
    %6694 = vmatpush1.bf16.msra.mxu0 %v6617
    %6695 = vmatprep.subr.bf16.mxu0 0
    %6696 = vmatpush1.bf16.msra.mxu0 %v6618
    %6697 = vmatprep.subr.bf16.mxu0 0
    %6698 = vmatpush1.bf16.msra.mxu0 %v6619
    %6699 = vmatprep.subr.bf16.mxu0 0
    %6700 = vmatpush1.bf16.msra.mxu0 %v6620
    %6701 = vmatprep.subr.bf16.mxu0 0
    %6702 = vmatpush1.bf16.msra.mxu0 %v6621
    %6703 = vmatprep.subr.bf16.mxu0 0
    %6704 = vmatpush1.bf16.msra.mxu0 %v6622
    %6705 = vmatprep.subr.bf16.mxu0 0
    %6706 = vmatpush1.bf16.msra.mxu0 %v6623
    %6707 = vmatprep.subr.bf16.mxu0 0
    %6708 = vmatpush1.bf16.msra.mxu0 %v6624
    %6709 = vmatprep.subr.bf16.mxu0 0
    %6710 = vmatpush1.bf16.msra.mxu0 %v6625
    %6711 = vmatprep.subr.bf16.mxu0 0
    %6712 = vmatpush1.bf16.msra.mxu0 %v6626
    %6713 = vmatprep.subr.bf16.mxu0 0
    %6714 = vmatpush1.bf16.msra.mxu0 %v6627
    %6715 = vmatprep.subr.bf16.mxu0 0
    %6716 = vmatpush1.bf16.msra.mxu0 %v6628
    %6717 = vmatprep.subr.bf16.mxu0 0
    %6718 = vmatpush1.bf16.msra.mxu0 %v6629
    %6719 = vmatprep.subr.bf16.mxu0 0
    %6720 = vmatpush1.bf16.msra.mxu0 %v6630
    %6721 = vmatprep.subr.bf16.mxu0 0
    %6722 = vmatpush1.bf16.msra.mxu0 %v6631
    %6723 = vmatprep.mubr.bf16.mxu0 %v6389
    %6724 = vmatmul.mubr.bf16.gmra.mrb[0].mxu0 %v6388
    %v6725 = vpop.f32.mrb[0].mxu0
    %v6726 = vadd.f32 %v6470, %v6725
    %v6727 = vpop.f32.mrb[0].mxu0
    %v6728 = vpop.f32.mrb[0].mxu0
    %v6729 = vpop.f32.mrb[0].mxu0
    %6730 = vdwg.mxu0
    %6731 = vmatprep.subr.bf16.mxu0 0
    %6732 = vmatpush1.bf16.msra.mxu0 %v6632
    %6733 = vmatprep.subr.bf16.mxu0 0
    %6734 = vmatpush1.bf16.msra.mxu0 %v6633
    %6735 = vmatprep.subr.bf16.mxu0 0
    %6736 = vmatpush1.bf16.msra.mxu0 %v6634
    %6737 = vmatprep.subr.bf16.mxu0 0
    %6738 = vmatpush1.bf16.msra.mxu0 %v6635
    %6739 = vmatprep.subr.bf16.mxu0 0
    %6740 = vmatpush1.bf16.msra.mxu0 %v6636
    %6741 = vmatprep.subr.bf16.mxu0 0
    %6742 = vmatpush1.bf16.msra.mxu0 %v6637
    %6743 = vmatprep.subr.bf16.mxu0 0
    %6744 = vmatpush1.bf16.msra.mxu0 %v6638
    %6745 = vmatprep.subr.bf16.mxu0 0
    %6746 = vmatpush1.bf16.msra.mxu0 %v6639
    %6747 = vmatprep.subr.bf16.mxu0 0
    %6748 = vmatpush1.bf16.msra.mxu0 %v6640
    %6749 = vmatprep.subr.bf16.mxu0 0
    %6750 = vmatpush1.bf16.msra.mxu0 %v6641
    %6751 = vmatprep.subr.bf16.mxu0 0
    %6752 = vmatpush1.bf16.msra.mxu0 %v6642
    %6753 = vmatprep.subr.bf16.mxu0 0
    %6754 = vmatpush1.bf16.msra.mxu0 %v6643
    %6755 = vmatprep.subr.bf16.mxu0 0
    %6756 = vmatpush1.bf16.msra.mxu0 %v6644
    %6757 = vmatprep.subr.bf16.mxu0 0
    %6758 = vmatpush1.bf16.msra.mxu0 %v6645
    %6759 = vmatprep.subr.bf16.mxu0 0
    %6760 = vmatpush1.bf16.msra.mxu0 %v6646
    %6761 = vmatprep.subr.bf16.mxu0 0
    %6762 = vmatpush1.bf16.msra.mxu0 %v6647
    %6763 = vmatprep.mubr.bf16.mxu0 %v6391
    %6764 = vmatmul.mubr.bf16.gmra.mrb[0].mxu0 %v6390
    %v6765 = vpop.f32.mrb[0].mxu0
    %v6766 = vadd.f32 %v6726, %v6765
    %v6767 = vpop.f32.mrb[0].mxu0
    %v6768 = vpop.f32.mrb[0].mxu0
    %v6769 = vpop.f32.mrb[0].mxu0
    %6770 = vdwg.mxu0
    %6771 = vmatprep.subr.bf16.mxu0 0
    %6772 = vmatpush1.bf16.msra.mxu0 %v6648
    %6773 = vmatprep.subr.bf16.mxu0 0
    %6774 = vmatpush1.bf16.msra.mxu0 %v6649
    %6775 = vmatprep.subr.bf16.mxu0 0
    %6776 = vmatpush1.bf16.msra.mxu0 %v6650
    %6777 = vmatprep.subr.bf16.mxu0 0
    %6778 = vmatpush1.bf16.msra.mxu0 %v6651
    %6779 = vmatprep.subr.bf16.mxu0 0
    %6780 = vmatpush1.bf16.msra.mxu0 0
    %6781 = vmatprep.subr.bf16.mxu0 0
    %6782 = vmatpush1.bf16.msra.mxu0 0
    %6783 = vmatprep.subr.bf16.mxu0 0
    %6784 = vmatpush1.bf16.msra.mxu0 0
    %6785 = vmatprep.subr.bf16.mxu0 0
    %6786 = vmatpush1.bf16.msra.mxu0 0
    %6787 = vmatprep.subr.bf16.mxu0 0
    %6788 = vmatpush1.bf16.msra.mxu0 0
    %6789 = vmatprep.subr.bf16.mxu0 0
    %6790 = vmatpush1.bf16.msra.mxu0 0
    %6791 = vmatprep.subr.bf16.mxu0 0
    %6792 = vmatpush1.bf16.msra.mxu0 0
    %6793 = vmatprep.subr.bf16.mxu0 0
    %6794 = vmatpush1.bf16.msra.mxu0 0
    %6795 = vmatprep.subr.bf16.mxu0 0
    %6796 = vmatpush1.bf16.msra.mxu0 0
    %6797 = vmatprep.subr.bf16.mxu0 0
    %6798 = vmatpush1.bf16.msra.mxu0 0
    %6799 = vmatprep.subr.bf16.mxu0 0
    %6800 = vmatpush1.bf16.msra.mxu0 0
    %6801 = vmatprep.subr.bf16.mxu0 0
    %6802 = vmatpush1.bf16.msra.mxu0 0
    %6803 = vmatprep.mubr.bf16.mxu0 0
    %6804 = vmatmul.mubr.bf16.gmra.mrb[0].mxu0 %v6689
    %v6805 = vpop.f32.mrb[0].mxu0
    %v6806 = vadd.f32 %v6766, %v6805
    %v6807 = vpop.f32.mrb[0].mxu0
    %v6808 = vpop.f32.mrb[0].mxu0
    %v6809 = vpop.f32.mrb[0].mxu0
    %6810 = vdwg.mxu0
    %vm6811 = vcmp.gt.f32.partialorder %v6806, 0.0
    %v6812 = vld [vmem:[#allocation4] sm:$0x1]
    %v6814 = vlaneseq
    %v6815 = vshrl.u32 %v6814, 7
    %v6816 = vsub.s32 0, %v6815
    %v6817 = vrot.slane %v6812, %v6816
    %6818 = vset.pattern.permute.xlu0 0
    %6819 = vperm.xlu0 %6818, %v6817
    %v6820 = vpop.permute.xlu0 %6819
    %v6822 = vmul.f32 %v6806, %v6820
    %v6823 = vsel %vm6811, %v6806, %v6822
    %v6824 = vld [vmem:[#allocation20] sm:$0x1]
    %v6826 = vlaneseq
    %v6827 = vshrl.u32 %v6826, 7
    %v6828 = vsub.s32 0, %v6827
    %v6829 = vrot.slane %v6824, %v6828
    %v6831 = vmul.f32 %v6823, %v6829
    %v6832 = vld [vmem:[#allocation22] sm:$0x1]
    %v6834 = vlaneseq
    %v6835 = vshrl.u32 %v6834, 7
    %v6836 = vsub.s32 0, %v6835
    %v6837 = vrot.slane %v6832, %v6836
    %v6839 = vadd.f32 %v6831, %v6837
    %v6840 = vpack.c.bf16 %v6839, %v6839
    %v6841 = vld [vmem:[%s16] sm:$0xf]
    %v6842 = vld [vmem:[%s16 + $0x4] sm:$0xf]
    %v6843 = vld [vmem:[%s16 + $0x8] sm:$0xf]
    %v6844 = vld [vmem:[%s16 + $0xc] sm:$0xf]
    %v6845 = vld [vmem:[%s16 + $0x10] sm:$0xf]
    %v6846 = vld [vmem:[%s16 + $0x14] sm:$0xf]
    %v6847 = vld [vmem:[%s16 + $0x18] sm:$0xf]
    %v6848 = vld [vmem:[%s16 + $0x1c] sm:$0xf]
    %v6849 = vld [vmem:[%s16 + $0x20] sm:$0xf]
    %v6850 = vld [vmem:[%s16 + $0x24] sm:$0xf]
    %v6851 = vld [vmem:[%s16 + $0x28] sm:$0xf]
    %v6852 = vld [vmem:[%s16 + $0x2c] sm:$0xf]
    %v6853 = vld [vmem:[%s16 + $0x30] sm:$0xf]
    %v6854 = vld [vmem:[%s16 + $0x34] sm:$0xf]
    %v6855 = vld [vmem:[%s16 + $0x38] sm:$0xf]
    %v6856 = vld [vmem:[%s16 + $0x3c] sm:$0xf]
    %v6857 = vld [vmem:[#allocation23] sm:$0x1]
    %v6859 = vlaneseq
    %v6860 = vshrl.u32 %v6859, 7
    %v6861 = vsub.s32 0, %v6860
    %v6862 = vrot.slane %v6857, %v6861
    %v6880 = vunpack.c.l.b16 %v6841
    %v6881 = vunpack.c.l.b16 %v6842
    %v6882 = vunpack.c.l.b16 %v6843
    %v6883 = vunpack.c.l.b16 %v6844
    %v6884 = vunpack.c.l.b16 %v6845
    %v6885 = vunpack.c.l.b16 %v6846
    %v6886 = vunpack.c.l.b16 %v6847
    %v6887 = vunpack.c.l.b16 %v6848
    %v6888 = vunpack.c.l.b16 %v6849
    %v6889 = vunpack.c.l.b16 %v6850
    %v6890 = vunpack.c.l.b16 %v6851
    %v6891 = vunpack.c.l.b16 %v6852
    %v6892 = vunpack.c.l.b16 %v6853
    %v6893 = vunpack.c.l.b16 %v6854
    %v6894 = vunpack.c.l.b16 %v6855
    %v6895 = vunpack.c.l.b16 %v6856
    %v6896 = vpack.c.b16 %v6881, %v6880
    %v6897 = vpack.c.b16 %v6883, %v6882
    %v6898 = vpack.c.b16 %v6885, %v6884
    %v6899 = vpack.c.b16 %v6887, %v6886
    %v6900 = vpack.c.b16 %v6889, %v6888
    %v6901 = vpack.c.b16 %v6891, %v6890
    %v6902 = vpack.c.b16 %v6893, %v6892
    %v6903 = vpack.c.b16 %v6895, %v6894
    %6912 = vmatprep.subr.bf16.mxu0 0
    %6913 = vmatpush1.bf16.msra.mxu0 %v6896
    %6914 = vmatprep.subr.bf16.mxu0 0
    %6915 = vmatpush1.bf16.msra.mxu0 %v6897
    %6916 = vmatprep.subr.bf16.mxu0 0
    %6917 = vmatpush1.bf16.msra.mxu0 %v6898
    %6918 = vmatprep.subr.bf16.mxu0 0
    %6919 = vmatpush1.bf16.msra.mxu0 %v6899
    %6920 = vmatprep.subr.bf16.mxu0 0
    %6921 = vmatpush1.bf16.msra.mxu0 %v6900
    %6922 = vmatprep.subr.bf16.mxu0 0
    %6923 = vmatpush1.bf16.msra.mxu0 %v6901
    %6924 = vmatprep.subr.bf16.mxu0 0
    %6925 = vmatpush1.bf16.msra.mxu0 %v6902
    %6926 = vmatprep.subr.bf16.mxu0 0
    %6927 = vmatpush1.bf16.msra.mxu0 %v6903
    %6928 = vmatprep.subr.bf16.mxu0 0
    %6929 = vmatpush1.bf16.msra.mxu0 0
    %6930 = vmatprep.subr.bf16.mxu0 0
    %6931 = vmatpush1.bf16.msra.mxu0 0
    %6932 = vmatprep.subr.bf16.mxu0 0
    %6933 = vmatpush1.bf16.msra.mxu0 0
    %6934 = vmatprep.subr.bf16.mxu0 0
    %6935 = vmatpush1.bf16.msra.mxu0 0
    %6936 = vmatprep.subr.bf16.mxu0 0
    %6937 = vmatpush1.bf16.msra.mxu0 0
    %6938 = vmatprep.subr.bf16.mxu0 0
    %6939 = vmatpush1.bf16.msra.mxu0 0
    %6940 = vmatprep.subr.bf16.mxu0 0
    %6941 = vmatpush1.bf16.msra.mxu0 0
    %6942 = vmatprep.subr.bf16.mxu0 0
    %6943 = vmatpush1.bf16.msra.mxu0 0
    %6944 = vmatprep.mubr.bf16.mxu0 0
    %6945 = vmatmul.mubr.bf16.gmra.mrb[0].mxu0 %v6840
    %v6946 = vpop.f32.mrb[0].mxu0
    %v6947 = vadd.f32 %v6862, %v6946
    %v6948 = vpop.f32.mrb[0].mxu0
    %v6949 = vpop.f32.mrb[0].mxu0
    %v6950 = vpop.f32.mrb[0].mxu0
    %6951 = vdwg.mxu0
    %v6952 = vlaneseq
    %v6953 = vand.u32 %v6952, 127
    %vm6954 = vcmp.eq.s32.totalorder %v6953, 0
    %v6955 = vand.u32 2147483647, %v6947
    %v6956 = vsub.f32 0.0, %v6955
    %v6957 = vmul.f32 %v6956, 1.442695
    %v6958 = vpow.pop %v6957
    %vm6959 = vcmp.ge.f32.partialorder %v6947, 0.0
    %v6960 = vadd.f32 %v6958, 1.0
    %v6961 = vrcp.pop %v6960
    %v6962 = vmul.f32 1.0, %v6961
    %v6963 = vmul.f32 %v6958, %v6961
    %v6964 = vsel %vm6959, %v6962, %v6963
    %v6965 = vsel %vm6954, %v6964, %v6947
    %vm6966 = vcmask 121856
    %6967 = vst.msk [vmem:[#allocation25] sm:$0xff] %vm6966, %v6965
    // Predicated region
    $region122: #{tpu_custom_call.1} parent=1 // pred_check
      _
    $region123: #{tpu_custom_call.1} parent=1 // pred_check_branch
      %6969 = sbr.rel (0) target = $region125
    $region124: #{tpu_custom_call.1} parent=1 // pred_region
      %s6971 = ssub.s32 128, 128
      %6972 = vsyncadd [#allocation7], %s6971
      %s6974 = sshll.u32 [#allocation25], 4
      %s6975 = int_to_ptr.vmem [resolvable:$true] %s6974
      %6977 = dma.vmem_to_hbm [thread:$0]  %s6975, 128, %s18, [#allocation7]
    $region125: #{tpu_custom_call.1} parent=1 // pred_fallthru
      _
    // Predicated region
    $region126: #{tpu_custom_call.1} parent=1 // pred_check
      _
    $region127: #{tpu_custom_call.1} parent=1 // pred_check_branch
      %6979 = sbr.rel (0) target = $region129
    $region128: #{tpu_custom_call.1} parent=1 // pred_region
      %6980 = dma.done [#allocation7], 128
    $region129: #{tpu_custom_call.1} parent=1 // pred_fallthru
      _
    %6981 = vsyncpa [#allocation6], 1
    %6982 = vsyncpa [#allocation9], 1
    %6983 = vsyncpa [#allocation12], 1
    %6984 = vsyncpa [#allocation15], 1
    %6985 = vsyncpa [#allocation18], 1
    %6986 = vsyncpa [#allocation21], 1
    %6987 = vsyncpa [#allocation24], 1
    %6988 = vsyncpa [#allocation7], 1

</llo_original>
